<compile_context>
chip_gen: v5e
topology: v5e:2x2
jax: 0.10.0
libtpu: 0.0.40
codegen_flags: <defaults>
</compile_context>

<pallas_src>
import functools

import jax
import jax.numpy as jnp
from jax.experimental import pallas as pl
from jax.experimental.pallas import tpu as pltpu


# ----------------------------------------------------------------------------
# Pallas kernels (each runs as one full-block grid=(1,) call)
# ----------------------------------------------------------------------------
def _enc_quant_kernel(x_ref, noise_ref, w_ref, b_ref,
                      y_ref, yt_ref, yt2_ref, *, table_range):
    # y = (x*2 - 1) @ W + b ; noise-quant and STE-quant epilogues in one pass.
    x = x_ref[...] * 2.0 - 1.0
    y = jnp.dot(x, w_ref[...], preferred_element_type=jnp.float32) + b_ref[...]
    y_ref[...] = y
    yt_ref[...] = jnp.clip(y + noise_ref[...], -table_range, table_range)
    yt2_ref[...] = jnp.clip(jnp.round(y), -table_range, table_range)


def _hyper_kernel(zr_ref, noise_ref, hew_ref, heb_ref, hdw_ref, hdb_ref,
                  mu_ref, ls_ref, zt_ref, hd_ref, zp_ref, *, table_range):
    # z = he(zr); z_tilde = noise-quant(z); hd(z_tilde); entropy prob(z_tilde).
    z = jnp.dot(zr_ref[...], hew_ref[...], preferred_element_type=jnp.float32) + heb_ref[...]
    zt = jnp.clip(z + noise_ref[...], -table_range, table_range)
    zt_ref[...] = zt
    hd_ref[...] = (jnp.dot(zt, hdw_ref[...], preferred_element_type=jnp.float32)
                   + hdb_ref[...])
    # Factorized entropy model: P(z) = F(z+.5) - F(z-.5), per channel.
    # TODO(synk): Entropy internals not provided; logistic CDF with (z-mu)/scale used.
    inv_s = jnp.exp(-ls_ref[...])
    zc = zt - mu_ref[...]
    zp_ref[...] = (jax.nn.sigmoid((zc + 0.5) * inv_s)
                   - jax.nn.sigmoid((zc - 0.5) * inv_s))


def _ar_pn_kernel(yt_ref, fh_ref, arw_ref, arb_ref, p1h_ref, p1a_ref, p1b_ref,
                  p2w_ref, p2b_ref, o_ref):
    # feat_ar = ar(y_tilde); pn1 on "cat([feat_hyper, feat_ar], 1)" computed as two
    # matmuls with the split pn1 weight (concat eliminated); leaky_relu(0.2); pn2.
    feat_ar = (jnp.dot(yt_ref[...], arw_ref[...], preferred_element_type=jnp.float32)
               + arb_ref[...])
    h = (jnp.dot(fh_ref[...], p1h_ref[...], preferred_element_type=jnp.float32)
         + jnp.dot(feat_ar, p1a_ref[...], preferred_element_type=jnp.float32)
         + p1b_ref[...])
    h = jnp.maximum(h, 0.2 * h)                           # nn.LeakyReLU(0.2)
    o_ref[...] = (jnp.dot(h, p2w_ref[...], preferred_element_type=jnp.float32)
                  + p2b_ref[...])


def _fc_kernel(flat_ref, ew_ref, eb_ref, dw_ref, db_ref, rec_ref):
    # encoder_fc -> decoder_fc back-to-back; `code` never touches HBM.
    code = (jnp.dot(flat_ref[...], ew_ref[...], preferred_element_type=jnp.float32)
            + eb_ref[...])
    rec_ref[...] = (jnp.dot(code, dw_ref[...], preferred_element_type=jnp.float32)
                    + db_ref[...])


def _dec_kernel(r_ref, w_ref, b_ref, o_ref):
    # decoder stand-in matmul fused with x/2 + 0.5 and clamp to [0, 1].
    v = jnp.dot(r_ref[...], w_ref[...], preferred_element_type=jnp.float32) + b_ref[...]
    o_ref[...] = jnp.clip(v * 0.5 + 0.5, 0.0, 1.0)


def _fused_call(kernel, inputs, out_shapes, *, vmem_limit_bytes=None, **kw):
    """Single full-block pallas_call (all operands here are at most a few MiB)."""
    in_specs = [pl.BlockSpec(arr.shape, lambda i, nd=arr.ndim: (0,) * nd)
                for arr in inputs]
    out_specs = [pl.BlockSpec(s.shape, lambda i, nd=len(s.shape): (0,) * nd)
                 for s in out_shapes]
    body = functools.partial(kernel, **kw) if kw else kernel
    return pl.pallas_call(
        body,
        out_shape=tuple(out_shapes),
        grid_spec=pltpu.PrefetchScalarGridSpec(
            num_scalar_prefetch=0,
            grid=(1,),
            in_specs=in_specs,
            out_specs=out_specs,
        ),
        compiler_params=pltpu.CompilerParams(
            dimension_semantics=("arbitrary",),
            vmem_limit_bytes=vmem_limit_bytes,
        ),
    )(*inputs)


# ----------------------------------------------------------------------------
# Layout glue (plain JAX reshapes / transposes, no compute; fused by XLA under jit)
# ----------------------------------------------------------------------------
def rows_to_nchw(r, n, h, w):               # (N*H*W, C) NHWC rows -> (N,C,H,W)
    c = r.shape[-1]
    return r.reshape(n, h, w, c).transpose(0, 3, 1, 2)


def space_to_depth_rows(x, p):              # NCHW -> (N*(H/p)*(W/p), C*p*p) rows
    n, c, h, w = x.shape
    x = x.reshape(n, c, h // p, p, w // p, p).transpose(0, 2, 4, 1, 3, 5)
    return x.reshape(n * (h // p) * (w // p), c * p * p)


def rows_space_to_depth(r, n, h, w, p):     # NHWC rows -> patch rows (c,py,px) order
    c = r.shape[-1]
    x = r.reshape(n, h // p, p, w // p, p, c).transpose(0, 1, 3, 5, 2, 4)
    return x.reshape(n * (h // p) * (w // p), c * p * p)


def rows_depth_to_space(r, n, hp, wp, c, p):  # patch rows -> NHWC rows, upsampled
    x = r.reshape(n, hp, wp, c, p, p).transpose(0, 1, 4, 2, 5, 3)
    return x.reshape(n * hp * p * wp * p, c)


def depth_to_space_from_rows(r, n, hp, wp, c, p):   # patch rows -> NCHW, upsampled
    x = r.reshape(n, hp, wp, c, p, p).transpose(0, 3, 1, 4, 2, 5)
    return x.reshape(n, c, hp * p, wp * p)


# ----------------------------------------------------------------------------
# Model configuration, parameters, forward
# ----------------------------------------------------------------------------
class Args:
    channels = 4          # input image channels
    last_channels = 4     # latent channels
    hyper_channels = 8
    dim_embed = 16
    mlp_ratio = 2
    K = 3
    num_parameter = 3
    table_range = 16
    cr = 8
    scale = 1
    norm = None


def init_params(key, a):
    total_size = a.last_channels * 1024

    def lin(k, fan_in, fan_out):
        w = jax.random.normal(k, (fan_in, fan_out), jnp.float32) / jnp.sqrt(float(fan_in))
        b = jnp.zeros((1, fan_out), jnp.float32)     # pre-shaped (1, N) bias rows
        return w, b

    ks = jax.random.split(key, 10)
    p = {}
    p["enc_w"], p["enc_b"] = lin(ks[0], a.channels * 4, a.last_channels)
    p["he_w"], p["he_b"] = lin(ks[1], a.last_channels * (2 ** a.scale) ** 2, a.hyper_channels)
    p["hd_w"], p["hd_b"] = lin(ks[2], a.hyper_channels, a.dim_embed * (2 ** a.scale) ** 2)
    p["ar_w"], p["ar_b"] = lin(ks[3], a.last_channels, a.dim_embed)
    p["pn1_w"], p["pn1_b"] = lin(ks[4], a.dim_embed * 2, a.dim_embed * a.mlp_ratio)
    p["pn2_w"], p["pn2_b"] = lin(ks[5], a.dim_embed * a.mlp_ratio,
                                 a.last_channels * a.K * a.num_parameter)
    p["efc_w"], p["efc_b"] = lin(ks[6], total_size // 4, total_size // a.cr)
    p["dfc_w"], p["dfc_b"] = lin(ks[7], total_size // a.cr, total_size // 4)
    p["dec_w"], p["dec_b"] = lin(ks[8], a.channels, a.channels * 4)
    p["ent_mu"] = jnp.zeros((1, a.hyper_channels), jnp.float32)
    p["ent_ls"] = jnp.zeros((1, a.hyper_channels), jnp.float32)
    return p


def mynet_forward(params, x, noise_y, noise_z, a):
    n, c, h, w = x.shape
    hy, wy = h // 2, w // 2
    p = 2 ** a.scale
    hz, wz = hy // p, wy // p
    My = n * hy * wy
    Mz = n * hz * wz
    R = float(a.table_range)
    cl = a.last_channels

    # ---- y = encode_model(x*2 - 1), quant_noise(y), quant_ste(y) -------------
    # TODO(synk): Balle2Encoder definition not provided; stand-in = one stride-2
    # conv expressed as space-to-depth + matmul, fused with both quantizers.
    xr = space_to_depth_rows(x, 2)                                   # (My, C*4)
    y_rows, y_tilde_rows, y_tilde2_rows = _fused_call(
        _enc_quant_kernel,
        [xr, noise_y, params["enc_w"], params["enc_b"]],
        [jax.ShapeDtypeStruct((My, cl), jnp.float32)] * 3,
        table_range=R)

    # ---- hyper path: z = cit_he(y); z_tilde; feat_hyper = cit_hd(z_tilde) ----
    # TODO(synk): TransHyperScale transformer blocks not provided; stand-in =
    # patchified linear down / linear up, fused with noise-quant and prob_model.
    zr = rows_space_to_depth(y_rows, n, hy, wy, p)                   # (Mz, cl*p*p)
    z_tilde_rows, hd_rows, z_prob_rows = _fused_call(
        _hyper_kernel,
        [zr, noise_z,
         params["he_w"], params["he_b"],
         params["hd_w"], params["hd_b"],
         params["ent_mu"], params["ent_ls"]],
        [jax.ShapeDtypeStruct((Mz, a.hyper_channels), jnp.float32),
         jax.ShapeDtypeStruct((Mz, a.dim_embed * p * p), jnp.float32),
         jax.ShapeDtypeStruct((Mz, a.hyper_channels), jnp.float32)],
        table_range=R)
    feat_hyper_rows = rows_depth_to_space(hd_rows, n, hz, wz, a.dim_embed, p)

    # ---- feat_ar = cit_ar(y_tilde); predicted_param = cit_pn(cat(...)) -------
    # TODO(synk): TransDecoder not provided; stand-in = 1x1 projection.
    # concat eliminated: pn1 weight split into hyper / ar halves (same math).
    pn1_w_h = params["pn1_w"][: a.dim_embed]
    pn1_w_a = params["pn1_w"][a.dim_embed:]
    (pn_o,) = _fused_call(
        _ar_pn_kernel,
        [y_tilde_rows, feat_hyper_rows,
         params["ar_w"], params["ar_b"],
         pn1_w_h, pn1_w_a, params["pn1_b"],
         params["pn2_w"], params["pn2_b"]],
        [jax.ShapeDtypeStruct((My, cl * a.K * a.num_parameter), jnp.float32)])
    predicted_param = rows_to_nchw(pn_o, n, hy, wy)

    # ---- encoder_fc / decoder_fc (PyTorch NCHW flatten order) ----------------
    flat = (y_tilde2_rows.reshape(n, hy, wy, cl)
            .transpose(0, 3, 1, 2).reshape(n, -1))                   # (n, total/4)
    (rec,) = _fused_call(
        _fc_kernel,
        [flat, params["efc_w"], params["efc_b"],
         params["dfc_w"], params["dfc_b"]],
        [jax.ShapeDtypeStruct((n, params["dfc_w"].shape[1]), jnp.float32)],
        vmem_limit_bytes=32 * 1024 * 1024)

    # ---- x_tilde = clamp(decode_model(rec)/2 + 0.5, 0, 1) --------------------
    # TODO(synk): Balle2Decoder not provided; stand-in = linear + depth-to-space,
    # fused with the /2 + 0.5 and clamp epilogue.
    rec_rows = (rec.reshape(n, c, hy, wy)
                .transpose(0, 2, 3, 1).reshape(n * hy * wy, c))
    (dec_rows,) = _fused_call(
        _dec_kernel,
        [rec_rows, params["dec_w"], params["dec_b"]],
        [jax.ShapeDtypeStruct((n * hy * wy, c * 4), jnp.float32)])
    x_tilde = depth_to_space_from_rows(dec_rows, n, hy, wy, c, 2)

    # ---- outputs in NCHW (module interface) ----------------------------------
    y_tilde = rows_to_nchw(y_tilde_rows, n, hy, wy)
    z_prob = rows_to_nchw(z_prob_rows, n, hz, wz)
    return x_tilde, y_tilde, z_prob, predicted_param


# ----------------------------------------------------------------------------
if __name__ == "__main__":
    a = Args()
    key = jax.random.PRNGKey(0)
    kp, kx, kn1, kn2 = jax.random.split(key, 4)
    params = init_params(kp, a)

    # Small NCHW input consistent with the module's shape constraints:
    # c*(h/2)*(w/2) == last_channels*1024/4  ->  (2, 4, 32, 32)
    n, c, h, w = 2, a.channels, 32, 32
    x = jax.random.uniform(kx, (n, c, h, w), jnp.float32)

    # Quantization noise U(-0.5, 0.5), generated outside the kernels (NoiseQuant).
    hy, wy = h // 2, w // 2
    p = 2 ** a.scale
    hz, wz = hy // p, wy // p
    noise_y = jax.random.uniform(kn1, (n * hy * wy, a.last_channels), jnp.float32,
                                 minval=-0.5, maxval=0.5)
    noise_z = jax.random.uniform(kn2, (n * hz * wz, a.hyper_channels), jnp.float32,
                                 minval=-0.5, maxval=0.5)

    @jax.jit
    def fwd(params, x, noise_y, noise_z):
        return mynet_forward(params, x, noise_y, noise_z, a)

    x_tilde, y_tilde, z_prob, predicted_param = fwd(params, x, noise_y, noise_z)
    jax.block_until_ready((x_tilde, y_tilde, z_prob, predicted_param))

    assert x_tilde.shape == (n, c, h, w)
    assert y_tilde.shape == (n, a.last_channels, hy, wy)
    assert z_prob.shape == (n, a.hyper_channels, hz, wz)
    assert predicted_param.shape == (n, a.last_channels * a.K * a.num_parameter, hy, wy)
    print("KERNEL_OK")
</pallas_src>

<mosaic_0001>
module attributes {stable_mosaic.version = 11 : i64} {
  func.func @_enc_quant_kernel(%arg0: i32, %arg1: memref<512x16xf32, #tpu.memory_space<vmem>>, %arg2: memref<512x4xf32, #tpu.memory_space<vmem>>, %arg3: memref<16x4xf32, #tpu.memory_space<vmem>>, %arg4: memref<1x4xf32, #tpu.memory_space<vmem>>, %arg5: memref<512x4xf32, #tpu.memory_space<vmem>>, %arg6: memref<512x4xf32, #tpu.memory_space<vmem>>, %arg7: memref<512x4xf32, #tpu.memory_space<vmem>>) attributes {dimension_semantics = [#tpu.dimension_semantics<arbitrary>], iteration_bounds = array<i64: 1>, scalar_prefetch = 0 : i64, scratch_operands = 0 : i64, tpu.core_type = #tpu.core_type<tc>, window_params = [{pipeline_mode = #tpu.pipeline_mode<synchronous>, transform_indices = @transform_0, window_bounds = array<i64: 512, 16>}, {pipeline_mode = #tpu.pipeline_mode<synchronous>, transform_indices = @transform_1, window_bounds = array<i64: 512, 4>}, {pipeline_mode = #tpu.pipeline_mode<synchronous>, transform_indices = @transform_2, window_bounds = array<i64: 16, 4>}, {pipeline_mode = #tpu.pipeline_mode<synchronous>, transform_indices = @transform_3, window_bounds = array<i64: 1, 4>}, {pipeline_mode = #tpu.pipeline_mode<synchronous>, transform_indices = @transform_4, window_bounds = array<i64: 512, 4>}, {pipeline_mode = #tpu.pipeline_mode<synchronous>, transform_indices = @transform_5, window_bounds = array<i64: 512, 4>}, {pipeline_mode = #tpu.pipeline_mode<synchronous>, transform_indices = @transform_6, window_bounds = array<i64: 512, 4>}]} {
    %c0 = arith.constant 0 : index
    %c0_0 = arith.constant 0 : index
    %0 = vector.load %arg1[%c0, %c0_0] : memref<512x16xf32, #tpu.memory_space<vmem>>, vector<512x16xf32>
    %cst = arith.constant 2.000000e+00 : f32
    %1 = vector.broadcast %cst : f32 to vector<512x16xf32>
    %2 = arith.mulf %0, %1 : vector<512x16xf32>
    %cst_1 = arith.constant 1.000000e+00 : f32
    %3 = vector.broadcast %cst_1 : f32 to vector<512x16xf32>
    %4 = arith.subf %2, %3 : vector<512x16xf32>
    %c0_2 = arith.constant 0 : index
    %c0_3 = arith.constant 0 : index
    %5 = vector.load %arg3[%c0_2, %c0_3] : memref<16x4xf32, #tpu.memory_space<vmem>>, vector<16x4xf32>
    %cst_4 = arith.constant dense<0.000000e+00> : vector<512x4xf32>
    %6 = tpu.matmul %4, %5, %cst_4 {dimension_numbers = #tpu.dot_dimension_numbers<[1], [0], [0], [1], [0, 0, 1, 1], [], []>} : vector<512x16xf32>, vector<16x4xf32>, vector<512x4xf32> -> vector<512x4xf32>
    %c0_5 = arith.constant 0 : index
    %c0_6 = arith.constant 0 : index
    %7 = vector.load %arg4[%c0_5, %c0_6] : memref<1x4xf32, #tpu.memory_space<vmem>>, vector<1x4xf32>
    %8 = vector.broadcast %7 : vector<1x4xf32> to vector<512x4xf32>
    %9 = arith.addf %6, %8 : vector<512x4xf32>
    %c0_7 = arith.constant 0 : index
    %c0_8 = arith.constant 0 : index
    %10 = vector.load %arg5[%c0_7, %c0_8] : memref<512x4xf32, #tpu.memory_space<vmem>>, vector<512x4xf32>
    tpu.vector_store %arg5[%c0_7, %c0_8], %9 {strides = array<i32>} : memref<512x4xf32, #tpu.memory_space<vmem>>, vector<512x4xf32>,
    %c0_9 = arith.constant 0 : index
    %c0_10 = arith.constant 0 : index
    %11 = vector.load %arg2[%c0_9, %c0_10] : memref<512x4xf32, #tpu.memory_space<vmem>>, vector<512x4xf32>
    %12 = arith.addf %9, %11 : vector<512x4xf32>
    %cst_11 = arith.constant -1.600000e+01 : f32
    %cst_12 = arith.constant 1.600000e+01 : f32
    %13 = vector.broadcast %cst_11 : f32 to vector<512x4xf32>
    %14 = arith.maximumf %13, %12 : vector<512x4xf32>
    %15 = vector.broadcast %cst_12 : f32 to vector<512x4xf32>
    %16 = arith.minimumf %15, %14 : vector<512x4xf32>
    %c0_13 = arith.constant 0 : index
    %c0_14 = arith.constant 0 : index
    %17 = vector.load %arg6[%c0_13, %c0_14] : memref<512x4xf32, #tpu.memory_space<vmem>>, vector<512x4xf32>
    tpu.vector_store %arg6[%c0_13, %c0_14], %16 {strides = array<i32>} : memref<512x4xf32, #tpu.memory_space<vmem>>, vector<512x4xf32>,
    %18 = math.roundeven %9 : vector<512x4xf32>
    %cst_15 = arith.constant -1.600000e+01 : f32
    %cst_16 = arith.constant 1.600000e+01 : f32
    %19 = vector.broadcast %cst_15 : f32 to vector<512x4xf32>
    %20 = arith.maximumf %19, %18 : vector<512x4xf32>
    %21 = vector.broadcast %cst_16 : f32 to vector<512x4xf32>
    %22 = arith.minimumf %21, %20 : vector<512x4xf32>
    %c0_17 = arith.constant 0 : index
    %c0_18 = arith.constant 0 : index
    %23 = vector.load %arg7[%c0_17, %c0_18] : memref<512x4xf32, #tpu.memory_space<vmem>>, vector<512x4xf32>
    tpu.vector_store %arg7[%c0_17, %c0_18], %22 {strides = array<i32>} : memref<512x4xf32, #tpu.memory_space<vmem>>, vector<512x4xf32>,
    return
  }
  func.func @transform_0(%arg0: i32) -> (i32, i32) {
    %c0_i32 = arith.constant 0 : i32
    %c0_i32_0 = arith.constant 0 : i32
    %c0_i32_1 = arith.constant 0 : i32
    return %c0_i32, %c0_i32_0 : i32, i32
  }
  func.func @transform_1(%arg0: i32) -> (i32, i32) {
    %c0_i32 = arith.constant 0 : i32
    %c0_i32_0 = arith.constant 0 : i32
    %c0_i32_1 = arith.constant 0 : i32
    return %c0_i32, %c0_i32_0 : i32, i32
  }
  func.func @transform_2(%arg0: i32) -> (i32, i32) {
    %c0_i32 = arith.constant 0 : i32
    %c0_i32_0 = arith.constant 0 : i32
    %c0_i32_1 = arith.constant 0 : i32
    return %c0_i32, %c0_i32_0 : i32, i32
  }
  func.func @transform_3(%arg0: i32) -> (i32, i32) {
    %c0_i32 = arith.constant 0 : i32
    %c0_i32_0 = arith.constant 0 : i32
    %c0_i32_1 = arith.constant 0 : i32
    return %c0_i32, %c0_i32_0 : i32, i32
  }
  func.func @transform_4(%arg0: i32) -> (i32, i32) {
    %c0_i32 = arith.constant 0 : i32
    %c0_i32_0 = arith.constant 0 : i32
    %c0_i32_1 = arith.constant 0 : i32
    return %c0_i32, %c0_i32_0 : i32, i32
  }
  func.func @transform_5(%arg0: i32) -> (i32, i32) {
    %c0_i32 = arith.constant 0 : i32
    %c0_i32_0 = arith.constant 0 : i32
    %c0_i32_1 = arith.constant 0 : i32
    return %c0_i32, %c0_i32_0 : i32, i32
  }
  func.func @transform_6(%arg0: i32) -> (i32, i32) {
    %c0_i32 = arith.constant 0 : i32
    %c0_i32_0 = arith.constant 0 : i32
    %c0_i32_1 = arith.constant 0 : i32
    return %c0_i32, %c0_i32_0 : i32, i32
  }
}

module attributes {stable_mosaic.version = 11 : i64} {
  func.func @_fc_kernel(%arg0: i32, %arg1: memref<2x1024xf32, #tpu.memory_space<vmem>>, %arg2: memref<1024x512xf32, #tpu.memory_space<vmem>>, %arg3: memref<1x512xf32, #tpu.memory_space<vmem>>, %arg4: memref<512x1024xf32, #tpu.memory_space<vmem>>, %arg5: memref<1x1024xf32, #tpu.memory_space<vmem>>, %arg6: memref<2x1024xf32, #tpu.memory_space<vmem>>) attributes {dimension_semantics = [#tpu.dimension_semantics<arbitrary>], iteration_bounds = array<i64: 1>, scalar_prefetch = 0 : i64, scratch_operands = 0 : i64, tpu.core_type = #tpu.core_type<tc>, window_params = [{pipeline_mode = #tpu.pipeline_mode<synchronous>, transform_indices = @transform_0, window_bounds = array<i64: 2, 1024>}, {pipeline_mode = #tpu.pipeline_mode<synchronous>, transform_indices = @transform_1, window_bounds = array<i64: 1024, 512>}, {pipeline_mode = #tpu.pipeline_mode<synchronous>, transform_indices = @transform_2, window_bounds = array<i64: 1, 512>}, {pipeline_mode = #tpu.pipeline_mode<synchronous>, transform_indices = @transform_3, window_bounds = array<i64: 512, 1024>}, {pipeline_mode = #tpu.pipeline_mode<synchronous>, transform_indices = @transform_4, window_bounds = array<i64: 1, 1024>}, {pipeline_mode = #tpu.pipeline_mode<synchronous>, transform_indices = @transform_5, window_bounds = array<i64: 2, 1024>}]} {
    %c0 = arith.constant 0 : index
    %c0_0 = arith.constant 0 : index
    %0 = vector.load %arg1[%c0, %c0_0] : memref<2x1024xf32, #tpu.memory_space<vmem>>, vector<2x1024xf32>
    %c0_1 = arith.constant 0 : index
    %c0_2 = arith.constant 0 : index
    %1 = vector.load %arg2[%c0_1, %c0_2] : memref<1024x512xf32, #tpu.memory_space<vmem>>, vector<1024x512xf32>
    %cst = arith.constant dense<0.000000e+00> : vector<2x512xf32>
    %2 = tpu.matmul %0, %1, %cst {dimension_numbers = #tpu.dot_dimension_numbers<[1], [0], [0], [1], [0, 0, 1, 1], [], []>} : vector<2x1024xf32>, vector<1024x512xf32>, vector<2x512xf32> -> vector<2x512xf32>
    %c0_3 = arith.constant 0 : index
    %c0_4 = arith.constant 0 : index
    %3 = vector.load %arg3[%c0_3, %c0_4] : memref<1x512xf32, #tpu.memory_space<vmem>>, vector<1x512xf32>
    %4 = vector.broadcast %3 : vector<1x512xf32> to vector<2x512xf32>
    %5 = arith.addf %2, %4 : vector<2x512xf32>
    %c0_5 = arith.constant 0 : index
    %c0_6 = arith.constant 0 : index
    %6 = vector.load %arg4[%c0_5, %c0_6] : memref<512x1024xf32, #tpu.memory_space<vmem>>, vector<512x1024xf32>
    %cst_7 = arith.constant dense<0.000000e+00> : vector<2x1024xf32>
    %7 = tpu.matmul %5, %6, %cst_7 {dimension_numbers = #tpu.dot_dimension_numbers<[1], [0], [0], [1], [0, 0, 1, 1], [], []>} : vector<2x512xf32>, vector<512x1024xf32>, vector<2x1024xf32> -> vector<2x1024xf32>
    %c0_8 = arith.constant 0 : index
    %c0_9 = arith.constant 0 : index
    %8 = vector.load %arg5[%c0_8, %c0_9] : memref<1x1024xf32, #tpu.memory_space<vmem>>, vector<1x1024xf32>
    %9 = vector.broadcast %8 : vector<1x1024xf32> to vector<2x1024xf32>
    %10 = arith.addf %7, %9 : vector<2x1024xf32>
    %c0_10 = arith.constant 0 : index
    %c0_11 = arith.constant 0 : index
    %11 = vector.load %arg6[%c0_10, %c0_11] : memref<2x1024xf32, #tpu.memory_space<vmem>>, vector<2x1024xf32>
    tpu.vector_store %arg6[%c0_10, %c0_11], %10 {strides = array<i32>} : memref<2x1024xf32, #tpu.memory_space<vmem>>, vector<2x1024xf32>,
    return
  }
  func.func @transform_0(%arg0: i32) -> (i32, i32) {
    %c0_i32 = arith.constant 0 : i32
    %c0_i32_0 = arith.constant 0 : i32
    %c0_i32_1 = arith.constant 0 : i32
    return %c0_i32, %c0_i32_0 : i32, i32
  }
  func.func @transform_1(%arg0: i32) -> (i32, i32) {
    %c0_i32 = arith.constant 0 : i32
    %c0_i32_0 = arith.constant 0 : i32
    %c0_i32_1 = arith.constant 0 : i32
    return %c0_i32, %c0_i32_0 : i32, i32
  }
  func.func @transform_2(%arg0: i32) -> (i32, i32) {
    %c0_i32 = arith.constant 0 : i32
    %c0_i32_0 = arith.constant 0 : i32
    %c0_i32_1 = arith.constant 0 : i32
    return %c0_i32, %c0_i32_0 : i32, i32
  }
  func.func @transform_3(%arg0: i32) -> (i32, i32) {
    %c0_i32 = arith.constant 0 : i32
    %c0_i32_0 = arith.constant 0 : i32
    %c0_i32_1 = arith.constant 0 : i32
    return %c0_i32, %c0_i32_0 : i32, i32
  }
  func.func @transform_4(%arg0: i32) -> (i32, i32) {
    %c0_i32 = arith.constant 0 : i32
    %c0_i32_0 = arith.constant 0 : i32
    %c0_i32_1 = arith.constant 0 : i32
    return %c0_i32, %c0_i32_0 : i32, i32
  }
  func.func @transform_5(%arg0: i32) -> (i32, i32) {
    %c0_i32 = arith.constant 0 : i32
    %c0_i32_0 = arith.constant 0 : i32
    %c0_i32_1 = arith.constant 0 : i32
    return %c0_i32, %c0_i32_0 : i32, i32
  }
}

module attributes {stable_mosaic.version = 11 : i64} {
  func.func @_hyper_kernel(%arg0: i32, %arg1: memref<128x16xf32, #tpu.memory_space<vmem>>, %arg2: memref<128x8xf32, #tpu.memory_space<vmem>>, %arg3: memref<16x8xf32, #tpu.memory_space<vmem>>, %arg4: memref<1x8xf32, #tpu.memory_space<vmem>>, %arg5: memref<8x64xf32, #tpu.memory_space<vmem>>, %arg6: memref<1x64xf32, #tpu.memory_space<vmem>>, %arg7: memref<1x8xf32, #tpu.memory_space<vmem>>, %arg8: memref<1x8xf32, #tpu.memory_space<vmem>>, %arg9: memref<128x8xf32, #tpu.memory_space<vmem>>, %arg10: memref<128x64xf32, #tpu.memory_space<vmem>>, %arg11: memref<128x8xf32, #tpu.memory_space<vmem>>) attributes {dimension_semantics = [#tpu.dimension_semantics<arbitrary>], iteration_bounds = array<i64: 1>, scalar_prefetch = 0 : i64, scratch_operands = 0 : i64, tpu.core_type = #tpu.core_type<tc>, window_params = [{pipeline_mode = #tpu.pipeline_mode<synchronous>, transform_indices = @transform_0, window_bounds = array<i64: 128, 16>}, {pipeline_mode = #tpu.pipeline_mode<synchronous>, transform_indices = @transform_1, window_bounds = array<i64: 128, 8>}, {pipeline_mode = #tpu.pipeline_mode<synchronous>, transform_indices = @transform_2, window_bounds = array<i64: 16, 8>}, {pipeline_mode = #tpu.pipeline_mode<synchronous>, transform_indices = @transform_3, window_bounds = array<i64: 1, 8>}, {pipeline_mode = #tpu.pipeline_mode<synchronous>, transform_indices = @transform_4, window_bounds = array<i64: 8, 64>}, {pipeline_mode = #tpu.pipeline_mode<synchronous>, transform_indices = @transform_5, window_bounds = array<i64: 1, 64>}, {pipeline_mode = #tpu.pipeline_mode<synchronous>, transform_indices = @transform_6, window_bounds = array<i64: 1, 8>}, {pipeline_mode = #tpu.pipeline_mode<synchronous>, transform_indices = @transform_7, window_bounds = array<i64: 1, 8>}, {pipeline_mode = #tpu.pipeline_mode<synchronous>, transform_indices = @transform_8, window_bounds = array<i64: 128, 8>}, {pipeline_mode = #tpu.pipeline_mode<synchronous>, transform_indices = @transform_9, window_bounds = array<i64: 128, 64>}, {pipeline_mode = #tpu.pipeline_mode<synchronous>, transform_indices = @transform_10, window_bounds = array<i64: 128, 8>}]} {
    %c0 = arith.constant 0 : index
    %c0_0 = arith.constant 0 : index
    %0 = vector.load %arg1[%c0, %c0_0] : memref<128x16xf32, #tpu.memory_space<vmem>>, vector<128x16xf32>
    %c0_1 = arith.constant 0 : index
    %c0_2 = arith.constant 0 : index
    %1 = vector.load %arg3[%c0_1, %c0_2] : memref<16x8xf32, #tpu.memory_space<vmem>>, vector<16x8xf32>
    %cst = arith.constant dense<0.000000e+00> : vector<128x8xf32>
    %2 = tpu.matmul %0, %1, %cst {dimension_numbers = #tpu.dot_dimension_numbers<[1], [0], [0], [1], [0, 0, 1, 1], [], []>} : vector<128x16xf32>, vector<16x8xf32>, vector<128x8xf32> -> vector<128x8xf32>
    %c0_3 = arith.constant 0 : index
    %c0_4 = arith.constant 0 : index
    %3 = vector.load %arg4[%c0_3, %c0_4] : memref<1x8xf32, #tpu.memory_space<vmem>>, vector<1x8xf32>
    %4 = vector.broadcast %3 : vector<1x8xf32> to vector<128x8xf32>
    %5 = arith.addf %2, %4 : vector<128x8xf32>
    %c0_5 = arith.constant 0 : index
    %c0_6 = arith.constant 0 : index
    %6 = vector.load %arg2[%c0_5, %c0_6] : memref<128x8xf32, #tpu.memory_space<vmem>>, vector<128x8xf32>
    %7 = arith.addf %5, %6 : vector<128x8xf32>
    %cst_7 = arith.constant -1.600000e+01 : f32
    %cst_8 = arith.constant 1.600000e+01 : f32
    %8 = vector.broadcast %cst_7 : f32 to vector<128x8xf32>
    %9 = arith.maximumf %8, %7 : vector<128x8xf32>
    %10 = vector.broadcast %cst_8 : f32 to vector<128x8xf32>
    %11 = arith.minimumf %10, %9 : vector<128x8xf32>
    %c0_9 = arith.constant 0 : index
    %c0_10 = arith.constant 0 : index
    %12 = vector.load %arg9[%c0_9, %c0_10] : memref<128x8xf32, #tpu.memory_space<vmem>>, vector<128x8xf32>
    tpu.vector_store %arg9[%c0_9, %c0_10], %11 {strides = array<i32>} : memref<128x8xf32, #tpu.memory_space<vmem>>, vector<128x8xf32>,
    %c0_11 = arith.constant 0 : index
    %c0_12 = arith.constant 0 : index
    %13 = vector.load %arg5[%c0_11, %c0_12] : memref<8x64xf32, #tpu.memory_space<vmem>>, vector<8x64xf32>
    %cst_13 = arith.constant dense<0.000000e+00> : vector<128x64xf32>
    %14 = tpu.matmul %11, %13, %cst_13 {dimension_numbers = #tpu.dot_dimension_numbers<[1], [0], [0], [1], [0, 0, 1, 1], [], []>} : vector<128x8xf32>, vector<8x64xf32>, vector<128x64xf32> -> vector<128x64xf32>
    %c0_14 = arith.constant 0 : index
    %c0_15 = arith.constant 0 : index
    %15 = vector.load %arg6[%c0_14, %c0_15] : memref<1x64xf32, #tpu.memory_space<vmem>>, vector<1x64xf32>
    %16 = vector.broadcast %15 : vector<1x64xf32> to vector<128x64xf32>
    %17 = arith.addf %14, %16 : vector<128x64xf32>
    %c0_16 = arith.constant 0 : index
    %c0_17 = arith.constant 0 : index
    %18 = vector.load %arg10[%c0_16, %c0_17] : memref<128x64xf32, #tpu.memory_space<vmem>>, vector<128x64xf32>
    tpu.vector_store %arg10[%c0_16, %c0_17], %17 {strides = array<i32>} : memref<128x64xf32, #tpu.memory_space<vmem>>, vector<128x64xf32>,
    %c0_18 = arith.constant 0 : index
    %c0_19 = arith.constant 0 : index
    %19 = vector.load %arg8[%c0_18, %c0_19] : memref<1x8xf32, #tpu.memory_space<vmem>>, vector<1x8xf32>
    %cst_20 = arith.constant 0.000000e+00 : f32
    %20 = vector.broadcast %cst_20 : f32 to vector<1x8xf32>
    %21 = arith.subf %20, %19 : vector<1x8xf32>
    %22 = math.exp %21 : vector<1x8xf32>
    %c0_21 = arith.constant 0 : index
    %c0_22 = arith.constant 0 : index
    %23 = vector.load %arg7[%c0_21, %c0_22] : memref<1x8xf32, #tpu.memory_space<vmem>>, vector<1x8xf32>
    %24 = vector.broadcast %23 : vector<1x8xf32> to vector<128x8xf32>
    %25 = arith.subf %11, %24 : vector<128x8xf32>
    %cst_23 = arith.constant 5.000000e-01 : f32
    %26 = vector.broadcast %cst_23 : f32 to vector<128x8xf32>
    %27 = arith.addf %25, %26 : vector<128x8xf32>
    %28 = vector.broadcast %22 : vector<1x8xf32> to vector<128x8xf32>
    %29 = arith.mulf %27, %28 : vector<128x8xf32>
    %30 = arith.negf %29 : vector<128x8xf32>
    %31 = math.exp %30 : vector<128x8xf32>
    %cst_24 = arith.constant 1.000000e+00 : f32
    %32 = vector.broadcast %cst_24 : f32 to vector<128x8xf32>
    %33 = arith.addf %32, %31 : vector<128x8xf32>
    %34 = arith.divf %32, %33 : vector<128x8xf32>
    %cst_25 = arith.constant 5.000000e-01 : f32
    %35 = vector.broadcast %cst_25 : f32 to vector<128x8xf32>
    %36 = arith.subf %25, %35 : vector<128x8xf32>
    %37 = vector.broadcast %22 : vector<1x8xf32> to vector<128x8xf32>
    %38 = arith.mulf %36, %37 : vector<128x8xf32>
    %39 = arith.negf %38 : vector<128x8xf32>
    %40 = math.exp %39 : vector<128x8xf32>
    %cst_26 = arith.constant 1.000000e+00 : f32
    %41 = vector.broadcast %cst_26 : f32 to vector<128x8xf32>
    %42 = arith.addf %41, %40 : vector<128x8xf32>
    %43 = arith.divf %41, %42 : vector<128x8xf32>
    %44 = arith.subf %34, %43 : vector<128x8xf32>
    %c0_27 = arith.constant 0 : index
    %c0_28 = arith.constant 0 : index
    %45 = vector.load %arg11[%c0_27, %c0_28] : memref<128x8xf32, #tpu.memory_space<vmem>>, vector<128x8xf32>
    tpu.vector_store %arg11[%c0_27, %c0_28], %44 {strides = array<i32>} : memref<128x8xf32, #tpu.memory_space<vmem>>, vector<128x8xf32>,
    return
  }
  func.func @transform_0(%arg0: i32) -> (i32, i32) {
    %c0_i32 = arith.constant 0 : i32
    %c0_i32_0 = arith.constant 0 : i32
    %c0_i32_1 = arith.constant 0 : i32
    return %c0_i32, %c0_i32_0 : i32, i32
  }
  func.func @transform_1(%arg0: i32) -> (i32, i32) {
    %c0_i32 = arith.constant 0 : i32
    %c0_i32_0 = arith.constant 0 : i32
    %c0_i32_1 = arith.constant 0 : i32
    return %c0_i32, %c0_i32_0 : i32, i32
  }
  func.func @transform_2(%arg0: i32) -> (i32, i32) {
    %c0_i32 = arith.constant 0 : i32
    %c0_i32_0 = arith.constant 0 : i32
    %c0_i32_1 = arith.constant 0 : i32
    return %c0_i32, %c0_i32_0 : i32, i32
  }
  func.func @transform_3(%arg0: i32) -> (i32, i32) {
    %c0_i32 = arith.constant 0 : i32
    %c0_i32_0 = arith.constant 0 : i32
    %c0_i32_1 = arith.constant 0 : i32
    return %c0_i32, %c0_i32_0 : i32, i32
  }
  func.func @transform_4(%arg0: i32) -> (i32, i32) {
    %c0_i32 = arith.constant 0 : i32
    %c0_i32_0 = arith.constant 0 : i32
    %c0_i32_1 = arith.constant 0 : i32
    return %c0_i32, %c0_i32_0 : i32, i32
  }
  func.func @transform_5(%arg0: i32) -> (i32, i32) {
    %c0_i32 = arith.constant 0 : i32
    %c0_i32_0 = arith.constant 0 : i32
    %c0_i32_1 = arith.constant 0 : i32
    return %c0_i32, %c0_i32_0 : i32, i32
  }
  func.func @transform_6(%arg0: i32) -> (i32, i32) {
    %c0_i32 = arith.constant 0 : i32
    %c0_i32_0 = arith.constant 0 : i32
    %c0_i32_1 = arith.constant 0 : i32
    return %c0_i32, %c0_i32_0 : i32, i32
  }
  func.func @transform_7(%arg0: i32) -> (i32, i32) {
    %c0_i32 = arith.constant 0 : i32
    %c0_i32_0 = arith.constant 0 : i32
    %c0_i32_1 = arith.constant 0 : i32
    return %c0_i32, %c0_i32_0 : i32, i32
  }
  func.func @transform_8(%arg0: i32) -> (i32, i32) {
    %c0_i32 = arith.constant 0 : i32
    %c0_i32_0 = arith.constant 0 : i32
    %c0_i32_1 = arith.constant 0 : i32
    return %c0_i32, %c0_i32_0 : i32, i32
  }
  func.func @transform_9(%arg0: i32) -> (i32, i32) {
    %c0_i32 = arith.constant 0 : i32
    %c0_i32_0 = arith.constant 0 : i32
    %c0_i32_1 = arith.constant 0 : i32
    return %c0_i32, %c0_i32_0 : i32, i32
  }
  func.func @transform_10(%arg0: i32) -> (i32, i32) {
    %c0_i32 = arith.constant 0 : i32
    %c0_i32_0 = arith.constant 0 : i32
    %c0_i32_1 = arith.constant 0 : i32
    return %c0_i32, %c0_i32_0 : i32, i32
  }
}

module attributes {stable_mosaic.version = 11 : i64} {
  func.func @_dec_kernel(%arg0: i32, %arg1: memref<512x4xf32, #tpu.memory_space<vmem>>, %arg2: memref<4x16xf32, #tpu.memory_space<vmem>>, %arg3: memref<1x16xf32, #tpu.memory_space<vmem>>, %arg4: memref<512x16xf32, #tpu.memory_space<vmem>>) attributes {dimension_semantics = [#tpu.dimension_semantics<arbitrary>], iteration_bounds = array<i64: 1>, scalar_prefetch = 0 : i64, scratch_operands = 0 : i64, tpu.core_type = #tpu.core_type<tc>, window_params = [{pipeline_mode = #tpu.pipeline_mode<synchronous>, transform_indices = @transform_0, window_bounds = array<i64: 512, 4>}, {pipeline_mode = #tpu.pipeline_mode<synchronous>, transform_indices = @transform_1, window_bounds = array<i64: 4, 16>}, {pipeline_mode = #tpu.pipeline_mode<synchronous>, transform_indices = @transform_2, window_bounds = array<i64: 1, 16>}, {pipeline_mode = #tpu.pipeline_mode<synchronous>, transform_indices = @transform_3, window_bounds = array<i64: 512, 16>}]} {
    %c0 = arith.constant 0 : index
    %c0_0 = arith.constant 0 : index
    %0 = vector.load %arg1[%c0, %c0_0] : memref<512x4xf32, #tpu.memory_space<vmem>>, vector<512x4xf32>
    %c0_1 = arith.constant 0 : index
    %c0_2 = arith.constant 0 : index
    %1 = vector.load %arg2[%c0_1, %c0_2] : memref<4x16xf32, #tpu.memory_space<vmem>>, vector<4x16xf32>
    %cst = arith.constant dense<0.000000e+00> : vector<512x16xf32>
    %2 = tpu.matmul %0, %1, %cst {dimension_numbers = #tpu.dot_dimension_numbers<[1], [0], [0], [1], [0, 0, 1, 1], [], []>} : vector<512x4xf32>, vector<4x16xf32>, vector<512x16xf32> -> vector<512x16xf32>
    %c0_3 = arith.constant 0 : index
    %c0_4 = arith.constant 0 : index
    %3 = vector.load %arg3[%c0_3, %c0_4] : memref<1x16xf32, #tpu.memory_space<vmem>>, vector<1x16xf32>
    %4 = vector.broadcast %3 : vector<1x16xf32> to vector<512x16xf32>
    %5 = arith.addf %2, %4 : vector<512x16xf32>
    %cst_5 = arith.constant 5.000000e-01 : f32
    %6 = vector.broadcast %cst_5 : f32 to vector<512x16xf32>
    %7 = arith.mulf %5, %6 : vector<512x16xf32>
    %cst_6 = arith.constant 5.000000e-01 : f32
    %8 = vector.broadcast %cst_6 : f32 to vector<512x16xf32>
    %9 = arith.addf %7, %8 : vector<512x16xf32>
    %cst_7 = arith.constant 0.000000e+00 : f32
    %cst_8 = arith.constant 1.000000e+00 : f32
    %10 = vector.broadcast %cst_7 : f32 to vector<512x16xf32>
    %11 = arith.maximumf %10, %9 : vector<512x16xf32>
    %12 = vector.broadcast %cst_8 : f32 to vector<512x16xf32>
    %13 = arith.minimumf %12, %11 : vector<512x16xf32>
    %c0_9 = arith.constant 0 : index
    %c0_10 = arith.constant 0 : index
    %14 = vector.load %arg4[%c0_9, %c0_10] : memref<512x16xf32, #tpu.memory_space<vmem>>, vector<512x16xf32>
    tpu.vector_store %arg4[%c0_9, %c0_10], %13 {strides = array<i32>} : memref<512x16xf32, #tpu.memory_space<vmem>>, vector<512x16xf32>,
    return
  }
  func.func @transform_0(%arg0: i32) -> (i32, i32) {
    %c0_i32 = arith.constant 0 : i32
    %c0_i32_0 = arith.constant 0 : i32
    %c0_i32_1 = arith.constant 0 : i32
    return %c0_i32, %c0_i32_0 : i32, i32
  }
  func.func @transform_1(%arg0: i32) -> (i32, i32) {
    %c0_i32 = arith.constant 0 : i32
    %c0_i32_0 = arith.constant 0 : i32
    %c0_i32_1 = arith.constant 0 : i32
    return %c0_i32, %c0_i32_0 : i32, i32
  }
  func.func @transform_2(%arg0: i32) -> (i32, i32) {
    %c0_i32 = arith.constant 0 : i32
    %c0_i32_0 = arith.constant 0 : i32
    %c0_i32_1 = arith.constant 0 : i32
    return %c0_i32, %c0_i32_0 : i32, i32
  }
  func.func @transform_3(%arg0: i32) -> (i32, i32) {
    %c0_i32 = arith.constant 0 : i32
    %c0_i32_0 = arith.constant 0 : i32
    %c0_i32_1 = arith.constant 0 : i32
    return %c0_i32, %c0_i32_0 : i32, i32
  }
}

module attributes {stable_mosaic.version = 11 : i64} {
  func.func @_ar_pn_kernel(%arg0: i32, %arg1: memref<512x4xf32, #tpu.memory_space<vmem>>, %arg2: memref<512x16xf32, #tpu.memory_space<vmem>>, %arg3: memref<4x16xf32, #tpu.memory_space<vmem>>, %arg4: memref<1x16xf32, #tpu.memory_space<vmem>>, %arg5: memref<16x32xf32, #tpu.memory_space<vmem>>, %arg6: memref<16x32xf32, #tpu.memory_space<vmem>>, %arg7: memref<1x32xf32, #tpu.memory_space<vmem>>, %arg8: memref<32x36xf32, #tpu.memory_space<vmem>>, %arg9: memref<1x36xf32, #tpu.memory_space<vmem>>, %arg10: memref<512x36xf32, #tpu.memory_space<vmem>>) attributes {dimension_semantics = [#tpu.dimension_semantics<arbitrary>], iteration_bounds = array<i64: 1>, scalar_prefetch = 0 : i64, scratch_operands = 0 : i64, tpu.core_type = #tpu.core_type<tc>, window_params = [{pipeline_mode = #tpu.pipeline_mode<synchronous>, transform_indices = @transform_0, window_bounds = array<i64: 512, 4>}, {pipeline_mode = #tpu.pipeline_mode<synchronous>, transform_indices = @transform_1, window_bounds = array<i64: 512, 16>}, {pipeline_mode = #tpu.pipeline_mode<synchronous>, transform_indices = @transform_2, window_bounds = array<i64: 4, 16>}, {pipeline_mode = #tpu.pipeline_mode<synchronous>, transform_indices = @transform_3, window_bounds = array<i64: 1, 16>}, {pipeline_mode = #tpu.pipeline_mode<synchronous>, transform_indices = @transform_4, window_bounds = array<i64: 16, 32>}, {pipeline_mode = #tpu.pipeline_mode<synchronous>, transform_indices = @transform_5, window_bounds = array<i64: 16, 32>}, {pipeline_mode = #tpu.pipeline_mode<synchronous>, transform_indices = @transform_6, window_bounds = array<i64: 1, 32>}, {pipeline_mode = #tpu.pipeline_mode<synchronous>, transform_indices = @transform_7, window_bounds = array<i64: 32, 36>}, {pipeline_mode = #tpu.pipeline_mode<synchronous>, transform_indices = @transform_8, window_bounds = array<i64: 1, 36>}, {pipeline_mode = #tpu.pipeline_mode<synchronous>, transform_indices = @transform_9, window_bounds = array<i64: 512, 36>}]} {
    %c0 = arith.constant 0 : index
    %c0_0 = arith.constant 0 : index
    %0 = vector.load %arg1[%c0, %c0_0] : memref<512x4xf32, #tpu.memory_space<vmem>>, vector<512x4xf32>
    %c0_1 = arith.constant 0 : index
    %c0_2 = arith.constant 0 : index
    %1 = vector.load %arg3[%c0_1, %c0_2] : memref<4x16xf32, #tpu.memory_space<vmem>>, vector<4x16xf32>
    %cst = arith.constant dense<0.000000e+00> : vector<512x16xf32>
    %2 = tpu.matmul %0, %1, %cst {dimension_numbers = #tpu.dot_dimension_numbers<[1], [0], [0], [1], [0, 0, 1, 1], [], []>} : vector<512x4xf32>, vector<4x16xf32>, vector<512x16xf32> -> vector<512x16xf32>
    %c0_3 = arith.constant 0 : index
    %c0_4 = arith.constant 0 : index
    %3 = vector.load %arg4[%c0_3, %c0_4] : memref<1x16xf32, #tpu.memory_space<vmem>>, vector<1x16xf32>
    %4 = vector.broadcast %3 : vector<1x16xf32> to vector<512x16xf32>
    %5 = arith.addf %2, %4 : vector<512x16xf32>
    %c0_5 = arith.constant 0 : index
    %c0_6 = arith.constant 0 : index
    %6 = vector.load %arg2[%c0_5, %c0_6] : memref<512x16xf32, #tpu.memory_space<vmem>>, vector<512x16xf32>
    %c0_7 = arith.constant 0 : index
    %c0_8 = arith.constant 0 : index
    %7 = vector.load %arg5[%c0_7, %c0_8] : memref<16x32xf32, #tpu.memory_space<vmem>>, vector<16x32xf32>
    %cst_9 = arith.constant dense<0.000000e+00> : vector<512x32xf32>
    %8 = tpu.matmul %6, %7, %cst_9 {dimension_numbers = #tpu.dot_dimension_numbers<[1], [0], [0], [1], [0, 0, 1, 1], [], []>} : vector<512x16xf32>, vector<16x32xf32>, vector<512x32xf32> -> vector<512x32xf32>
    %c0_10 = arith.constant 0 : index
    %c0_11 = arith.constant 0 : index
    %9 = vector.load %arg6[%c0_10, %c0_11] : memref<16x32xf32, #tpu.memory_space<vmem>>, vector<16x32xf32>
    %cst_12 = arith.constant dense<0.000000e+00> : vector<512x32xf32>
    %10 = tpu.matmul %5, %9, %cst_12 {dimension_numbers = #tpu.dot_dimension_numbers<[1], [0], [0], [1], [0, 0, 1, 1], [], []>} : vector<512x16xf32>, vector<16x32xf32>, vector<512x32xf32> -> vector<512x32xf32>
    %11 = arith.addf %8, %10 : vector<512x32xf32>
    %c0_13 = arith.constant 0 : index
    %c0_14 = arith.constant 0 : index
    %12 = vector.load %arg7[%c0_13, %c0_14] : memref<1x32xf32, #tpu.memory_space<vmem>>, vector<1x32xf32>
    %13 = vector.broadcast %12 : vector<1x32xf32> to vector<512x32xf32>
    %14 = arith.addf %11, %13 : vector<512x32xf32>
    %cst_15 = arith.constant 2.000000e-01 : f32
    %15 = vector.broadcast %cst_15 : f32 to vector<512x32xf32>
    %16 = arith.mulf %15, %14 : vector<512x32xf32>
    %17 = arith.maximumf %14, %16 : vector<512x32xf32>
    %c0_16 = arith.constant 0 : index
    %c0_17 = arith.constant 0 : index
    %18 = vector.load %arg8[%c0_16, %c0_17] : memref<32x36xf32, #tpu.memory_space<vmem>>, vector<32x36xf32>
    %cst_18 = arith.constant dense<0.000000e+00> : vector<512x36xf32>
    %19 = tpu.matmul %17, %18, %cst_18 {dimension_numbers = #tpu.dot_dimension_numbers<[1], [0], [0], [1], [0, 0, 1, 1], [], []>} : vector<512x32xf32>, vector<32x36xf32>, vector<512x36xf32> -> vector<512x36xf32>
    %c0_19 = arith.constant 0 : index
    %c0_20 = arith.constant 0 : index
    %20 = vector.load %arg9[%c0_19, %c0_20] : memref<1x36xf32, #tpu.memory_space<vmem>>, vector<1x36xf32>
    %21 = vector.broadcast %20 : vector<1x36xf32> to vector<512x36xf32>
    %22 = arith.addf %19, %21 : vector<512x36xf32>
    %c0_21 = arith.constant 0 : index
    %c0_22 = arith.constant 0 : index
    %23 = vector.load %arg10[%c0_21, %c0_22] : memref<512x36xf32, #tpu.memory_space<vmem>>, vector<512x36xf32>
    tpu.vector_store %arg10[%c0_21, %c0_22], %22 {strides = array<i32>} : memref<512x36xf32, #tpu.memory_space<vmem>>, vector<512x36xf32>,
    return
  }
  func.func @transform_0(%arg0: i32) -> (i32, i32) {
    %c0_i32 = arith.constant 0 : i32
    %c0_i32_0 = arith.constant 0 : i32
    %c0_i32_1 = arith.constant 0 : i32
    return %c0_i32, %c0_i32_0 : i32, i32
  }
  func.func @transform_1(%arg0: i32) -> (i32, i32) {
    %c0_i32 = arith.constant 0 : i32
    %c0_i32_0 = arith.constant 0 : i32
    %c0_i32_1 = arith.constant 0 : i32
    return %c0_i32, %c0_i32_0 : i32, i32
  }
  func.func @transform_2(%arg0: i32) -> (i32, i32) {
    %c0_i32 = arith.constant 0 : i32
    %c0_i32_0 = arith.constant 0 : i32
    %c0_i32_1 = arith.constant 0 : i32
    return %c0_i32, %c0_i32_0 : i32, i32
  }
  func.func @transform_3(%arg0: i32) -> (i32, i32) {
    %c0_i32 = arith.constant 0 : i32
    %c0_i32_0 = arith.constant 0 : i32
    %c0_i32_1 = arith.constant 0 : i32
    return %c0_i32, %c0_i32_0 : i32, i32
  }
  func.func @transform_4(%arg0: i32) -> (i32, i32) {
    %c0_i32 = arith.constant 0 : i32
    %c0_i32_0 = arith.constant 0 : i32
    %c0_i32_1 = arith.constant 0 : i32
    return %c0_i32, %c0_i32_0 : i32, i32
  }
  func.func @transform_5(%arg0: i32) -> (i32, i32) {
    %c0_i32 = arith.constant 0 : i32
    %c0_i32_0 = arith.constant 0 : i32
    %c0_i32_1 = arith.constant 0 : i32
    return %c0_i32, %c0_i32_0 : i32, i32
  }
  func.func @transform_6(%arg0: i32) -> (i32, i32) {
    %c0_i32 = arith.constant 0 : i32
    %c0_i32_0 = arith.constant 0 : i32
    %c0_i32_1 = arith.constant 0 : i32
    return %c0_i32, %c0_i32_0 : i32, i32
  }
  func.func @transform_7(%arg0: i32) -> (i32, i32) {
    %c0_i32 = arith.constant 0 : i32
    %c0_i32_0 = arith.constant 0 : i32
    %c0_i32_1 = arith.constant 0 : i32
    return %c0_i32, %c0_i32_0 : i32, i32
  }
  func.func @transform_8(%arg0: i32) -> (i32, i32) {
    %c0_i32 = arith.constant 0 : i32
    %c0_i32_0 = arith.constant 0 : i32
    %c0_i32_1 = arith.constant 0 : i32
    return %c0_i32, %c0_i32_0 : i32, i32
  }
  func.func @transform_9(%arg0: i32) -> (i32, i32) {
    %c0_i32 = arith.constant 0 : i32
    %c0_i32_0 = arith.constant 0 : i32
    %c0_i32_1 = arith.constant 0 : i32
    return %c0_i32, %c0_i32_0 : i32, i32
  }
}

</mosaic_0001>

<llo_original>
// kernel: fwd.5
$region0: #{fwd.5}
  #allocation0 [shape = 'u32[]', space=smem, size = 0x4, offset = 0x4, fixed_abs, tag = 'smem constant byte address 0x4 - core index']
  #allocation1 [shape = 'u32[72,128]{1,0:T(1,128)}', space=vmem, size = 0x9000, scoped, tag = 'internal scratch']
  %s0 = inlined_call_operand.vmem [shape: f32[512,16], index: 0, kind: input, shape index: {}]
  %s1 = inlined_call_operand.vmem [shape: f32[512,4], index: 1, kind: input, shape index: {}]
  %s2 = inlined_call_operand.vmem [shape: f32[16,4], index: 2, kind: input, shape index: {}]
  %s3 = inlined_call_operand.vmem [shape: f32[1,4], index: 3, kind: input, shape index: {}]
  %s4 = inlined_call_operand.vmem [shape: f32[512,4], index: 4, kind: output, shape index: {0}]
  %s5 = inlined_call_operand.vmem [shape: f32[512,4], index: 5, kind: output, shape index: {1}]
  %s6 = inlined_call_operand.vmem [shape: f32[512,4], index: 6, kind: output, shape index: {2}]
  %7 = xla_tuple %s4, %s5, %s6
  %s8 = sld [smem:[#allocation0]]
  $region42: #{fwd.5} parent=0
    _
  %s10 = ssub.s32 1, %s8
  %s11 = scalar_select 0, %s10, %s8
  // Predicated region
  $region2: #{fwd.5} parent=0 // pred_check
    _
  $region3: #{fwd.5} parent=0 // pred_check_branch
    %13 = sbr.rel (0) target = $region5
  $region4: #{fwd.5} parent=0 // pred_region
    _
  $region5: #{fwd.5} parent=0 // pred_fallthru
    _
  // Predicated region
  $region6: #{fwd.5} parent=0 // pred_check
    _
  $region7: #{fwd.5} parent=0 // pred_check_branch
    %15 = sbr.rel (0) target = $region9
  $region8: #{fwd.5} parent=0 // pred_region
    _
  $region9: #{fwd.5} parent=0 // pred_fallthru
    _
  // Predicated region
  $region10: #{fwd.5} parent=0 // pred_check
    _
  $region11: #{fwd.5} parent=0 // pred_check_branch
    %17 = sbr.rel (0) target = $region13
  $region12: #{fwd.5} parent=0 // pred_region
    _
  $region13: #{fwd.5} parent=0 // pred_fallthru
    _
  // Predicated region
  $region14: #{fwd.5} parent=0 // pred_check
    _
  $region15: #{fwd.5} parent=0 // pred_check_branch
    %19 = sbr.rel (0) target = $region17
  $region16: #{fwd.5} parent=0 // pred_region
    _
  $region17: #{fwd.5} parent=0 // pred_fallthru
    _
  %v20 = vld [vmem:[%s0] sm:$0xff]
  %v21 = vld [vmem:[%s0 + $0x8] sm:$0xff]
  %v22 = vld [vmem:[%s0 + $0x10] sm:$0xff]
  %v23 = vld [vmem:[%s0 + $0x18] sm:$0xff]
  %v24 = vld [vmem:[%s0 + $0x20] sm:$0xff]
  %v25 = vld [vmem:[%s0 + $0x28] sm:$0xff]
  %v26 = vld [vmem:[%s0 + $0x30] sm:$0xff]
  %v27 = vld [vmem:[%s0 + $0x38] sm:$0xff]
  %v28 = vld [vmem:[%s0 + $0x40] sm:$0xff]
  %v29 = vld [vmem:[%s0 + $0x48] sm:$0xff]
  %v30 = vld [vmem:[%s0 + $0x50] sm:$0xff]
  %v31 = vld [vmem:[%s0 + $0x58] sm:$0xff]
  %v32 = vld [vmem:[%s0 + $0x60] sm:$0xff]
  %v33 = vld [vmem:[%s0 + $0x68] sm:$0xff]
  %v34 = vld [vmem:[%s0 + $0x70] sm:$0xff]
  %v35 = vld [vmem:[%s0 + $0x78] sm:$0xff]
  %v36 = vld [vmem:[%s0 + $0x80] sm:$0xff]
  %v37 = vld [vmem:[%s0 + $0x88] sm:$0xff]
  %v38 = vld [vmem:[%s0 + $0x90] sm:$0xff]
  %v39 = vld [vmem:[%s0 + $0x98] sm:$0xff]
  %v40 = vld [vmem:[%s0 + $0xa0] sm:$0xff]
  %v41 = vld [vmem:[%s0 + $0xa8] sm:$0xff]
  %v42 = vld [vmem:[%s0 + $0xb0] sm:$0xff]
  %v43 = vld [vmem:[%s0 + $0xb8] sm:$0xff]
  %v44 = vld [vmem:[%s0 + $0xc0] sm:$0xff]
  %v45 = vld [vmem:[%s0 + $0xc8] sm:$0xff]
  %v46 = vld [vmem:[%s0 + $0xd0] sm:$0xff]
  %v47 = vld [vmem:[%s0 + $0xd8] sm:$0xff]
  %v48 = vld [vmem:[%s0 + $0xe0] sm:$0xff]
  %v49 = vld [vmem:[%s0 + $0xe8] sm:$0xff]
  %v50 = vld [vmem:[%s0 + $0xf0] sm:$0xff]
  %v51 = vld [vmem:[%s0 + $0xf8] sm:$0xff]
  %v52 = vld [vmem:[%s0 + $0x100] sm:$0xff]
  %v53 = vld [vmem:[%s0 + $0x108] sm:$0xff]
  %v54 = vld [vmem:[%s0 + $0x110] sm:$0xff]
  %v55 = vld [vmem:[%s0 + $0x118] sm:$0xff]
  %v56 = vld [vmem:[%s0 + $0x120] sm:$0xff]
  %v57 = vld [vmem:[%s0 + $0x128] sm:$0xff]
  %v58 = vld [vmem:[%s0 + $0x130] sm:$0xff]
  %v59 = vld [vmem:[%s0 + $0x138] sm:$0xff]
  %v60 = vld [vmem:[%s0 + $0x140] sm:$0xff]
  %v61 = vld [vmem:[%s0 + $0x148] sm:$0xff]
  %v62 = vld [vmem:[%s0 + $0x150] sm:$0xff]
  %v63 = vld [vmem:[%s0 + $0x158] sm:$0xff]
  %v64 = vld [vmem:[%s0 + $0x160] sm:$0xff]
  %v65 = vld [vmem:[%s0 + $0x168] sm:$0xff]
  %v66 = vld [vmem:[%s0 + $0x170] sm:$0xff]
  %v67 = vld [vmem:[%s0 + $0x178] sm:$0xff]
  %v68 = vld [vmem:[%s0 + $0x180] sm:$0xff]
  %v69 = vld [vmem:[%s0 + $0x188] sm:$0xff]
  %v70 = vld [vmem:[%s0 + $0x190] sm:$0xff]
  %v71 = vld [vmem:[%s0 + $0x198] sm:$0xff]
  %v72 = vld [vmem:[%s0 + $0x1a0] sm:$0xff]
  %v73 = vld [vmem:[%s0 + $0x1a8] sm:$0xff]
  %v74 = vld [vmem:[%s0 + $0x1b0] sm:$0xff]
  %v75 = vld [vmem:[%s0 + $0x1b8] sm:$0xff]
  %v76 = vld [vmem:[%s0 + $0x1c0] sm:$0xff]
  %v77 = vld [vmem:[%s0 + $0x1c8] sm:$0xff]
  %v78 = vld [vmem:[%s0 + $0x1d0] sm:$0xff]
  %v79 = vld [vmem:[%s0 + $0x1d8] sm:$0xff]
  %v80 = vld [vmem:[%s0 + $0x1e0] sm:$0xff]
  %v81 = vld [vmem:[%s0 + $0x1e8] sm:$0xff]
  %v82 = vld [vmem:[%s0 + $0x1f0] sm:$0xff]
  %v83 = vld [vmem:[%s0 + $0x1f8] sm:$0xff]
  %v84 = vmul.f32 %v20, 2.0
  %v85 = vmul.f32 %v21, 2.0
  %v86 = vmul.f32 %v22, 2.0
  %v87 = vmul.f32 %v23, 2.0
  %v88 = vmul.f32 %v24, 2.0
  %v89 = vmul.f32 %v25, 2.0
  %v90 = vmul.f32 %v26, 2.0
  %v91 = vmul.f32 %v27, 2.0
  %v92 = vmul.f32 %v28, 2.0
  %v93 = vmul.f32 %v29, 2.0
  %v94 = vmul.f32 %v30, 2.0
  %v95 = vmul.f32 %v31, 2.0
  %v96 = vmul.f32 %v32, 2.0
  %v97 = vmul.f32 %v33, 2.0
  %v98 = vmul.f32 %v34, 2.0
  %v99 = vmul.f32 %v35, 2.0
  %v100 = vmul.f32 %v36, 2.0
  %v101 = vmul.f32 %v37, 2.0
  %v102 = vmul.f32 %v38, 2.0
  %v103 = vmul.f32 %v39, 2.0
  %v104 = vmul.f32 %v40, 2.0
  %v105 = vmul.f32 %v41, 2.0
  %v106 = vmul.f32 %v42, 2.0
  %v107 = vmul.f32 %v43, 2.0
  %v108 = vmul.f32 %v44, 2.0
  %v109 = vmul.f32 %v45, 2.0
  %v110 = vmul.f32 %v46, 2.0
  %v111 = vmul.f32 %v47, 2.0
  %v112 = vmul.f32 %v48, 2.0
  %v113 = vmul.f32 %v49, 2.0
  %v114 = vmul.f32 %v50, 2.0
  %v115 = vmul.f32 %v51, 2.0
  %v116 = vmul.f32 %v52, 2.0
  %v117 = vmul.f32 %v53, 2.0
  %v118 = vmul.f32 %v54, 2.0
  %v119 = vmul.f32 %v55, 2.0
  %v120 = vmul.f32 %v56, 2.0
  %v121 = vmul.f32 %v57, 2.0
  %v122 = vmul.f32 %v58, 2.0
  %v123 = vmul.f32 %v59, 2.0
  %v124 = vmul.f32 %v60, 2.0
  %v125 = vmul.f32 %v61, 2.0
  %v126 = vmul.f32 %v62, 2.0
  %v127 = vmul.f32 %v63, 2.0
  %v128 = vmul.f32 %v64, 2.0
  %v129 = vmul.f32 %v65, 2.0
  %v130 = vmul.f32 %v66, 2.0
  %v131 = vmul.f32 %v67, 2.0
  %v132 = vmul.f32 %v68, 2.0
  %v133 = vmul.f32 %v69, 2.0
  %v134 = vmul.f32 %v70, 2.0
  %v135 = vmul.f32 %v71, 2.0
  %v136 = vmul.f32 %v72, 2.0
  %v137 = vmul.f32 %v73, 2.0
  %v138 = vmul.f32 %v74, 2.0
  %v139 = vmul.f32 %v75, 2.0
  %v140 = vmul.f32 %v76, 2.0
  %v141 = vmul.f32 %v77, 2.0
  %v142 = vmul.f32 %v78, 2.0
  %v143 = vmul.f32 %v79, 2.0
  %v144 = vmul.f32 %v80, 2.0
  %v145 = vmul.f32 %v81, 2.0
  %v146 = vmul.f32 %v82, 2.0
  %v147 = vmul.f32 %v83, 2.0
  %v148 = vsub.f32 %v84, 1.0
  %v149 = vsub.f32 %v85, 1.0
  %v150 = vsub.f32 %v86, 1.0
  %v151 = vsub.f32 %v87, 1.0
  %v152 = vsub.f32 %v88, 1.0
  %v153 = vsub.f32 %v89, 1.0
  %v154 = vsub.f32 %v90, 1.0
  %v155 = vsub.f32 %v91, 1.0
  %v156 = vsub.f32 %v92, 1.0
  %v157 = vsub.f32 %v93, 1.0
  %v158 = vsub.f32 %v94, 1.0
  %v159 = vsub.f32 %v95, 1.0
  %v160 = vsub.f32 %v96, 1.0
  %v161 = vsub.f32 %v97, 1.0
  %v162 = vsub.f32 %v98, 1.0
  %v163 = vsub.f32 %v99, 1.0
  %v164 = vsub.f32 %v100, 1.0
  %v165 = vsub.f32 %v101, 1.0
  %v166 = vsub.f32 %v102, 1.0
  %v167 = vsub.f32 %v103, 1.0
  %v168 = vsub.f32 %v104, 1.0
  %v169 = vsub.f32 %v105, 1.0
  %v170 = vsub.f32 %v106, 1.0
  %v171 = vsub.f32 %v107, 1.0
  %v172 = vsub.f32 %v108, 1.0
  %v173 = vsub.f32 %v109, 1.0
  %v174 = vsub.f32 %v110, 1.0
  %v175 = vsub.f32 %v111, 1.0
  %v176 = vsub.f32 %v112, 1.0
  %v177 = vsub.f32 %v113, 1.0
  %v178 = vsub.f32 %v114, 1.0
  %v179 = vsub.f32 %v115, 1.0
  %v180 = vsub.f32 %v116, 1.0
  %v181 = vsub.f32 %v117, 1.0
  %v182 = vsub.f32 %v118, 1.0
  %v183 = vsub.f32 %v119, 1.0
  %v184 = vsub.f32 %v120, 1.0
  %v185 = vsub.f32 %v121, 1.0
  %v186 = vsub.f32 %v122, 1.0
  %v187 = vsub.f32 %v123, 1.0
  %v188 = vsub.f32 %v124, 1.0
  %v189 = vsub.f32 %v125, 1.0
  %v190 = vsub.f32 %v126, 1.0
  %v191 = vsub.f32 %v127, 1.0
  %v192 = vsub.f32 %v128, 1.0
  %v193 = vsub.f32 %v129, 1.0
  %v194 = vsub.f32 %v130, 1.0
  %v195 = vsub.f32 %v131, 1.0
  %v196 = vsub.f32 %v132, 1.0
  %v197 = vsub.f32 %v133, 1.0
  %v198 = vsub.f32 %v134, 1.0
  %v199 = vsub.f32 %v135, 1.0
  %v200 = vsub.f32 %v136, 1.0
  %v201 = vsub.f32 %v137, 1.0
  %v202 = vsub.f32 %v138, 1.0
  %v203 = vsub.f32 %v139, 1.0
  %v204 = vsub.f32 %v140, 1.0
  %v205 = vsub.f32 %v141, 1.0
  %v206 = vsub.f32 %v142, 1.0
  %v207 = vsub.f32 %v143, 1.0
  %v208 = vsub.f32 %v144, 1.0
  %v209 = vsub.f32 %v145, 1.0
  %v210 = vsub.f32 %v146, 1.0
  %v211 = vsub.f32 %v147, 1.0
  %v212 = vld [vmem:[%s2] sm:$0xff]
  %v213 = vld [vmem:[%s2 + $0x8] sm:$0xff]
  %v214 = vld [vmem:[%s3] sm:$0x1]
  %v216 = vperm.slane %v214, 0
  %vm218 = vcmask 130048
  %v220 = vsel %vm218, %v148, 0
  %v223 = vsel %vm218, %v149, 0
  %v226 = vsel %vm218, %v150, 0
  %v229 = vsel %vm218, %v151, 0
  %v232 = vsel %vm218, %v152, 0
  %v235 = vsel %vm218, %v153, 0
  %v238 = vsel %vm218, %v154, 0
  %v241 = vsel %vm218, %v155, 0
  %v244 = vsel %vm218, %v156, 0
  %v247 = vsel %vm218, %v157, 0
  %v250 = vsel %vm218, %v158, 0
  %v253 = vsel %vm218, %v159, 0
  %v256 = vsel %vm218, %v160, 0
  %v259 = vsel %vm218, %v161, 0
  %v262 = vsel %vm218, %v162, 0
  %v265 = vsel %vm218, %v163, 0
  %v268 = vsel %vm218, %v164, 0
  %v271 = vsel %vm218, %v165, 0
  %v274 = vsel %vm218, %v166, 0
  %v277 = vsel %vm218, %v167, 0
  %v280 = vsel %vm218, %v168, 0
  %v283 = vsel %vm218, %v169, 0
  %v286 = vsel %vm218, %v170, 0
  %v289 = vsel %vm218, %v171, 0
  %v292 = vsel %vm218, %v172, 0
  %v295 = vsel %vm218, %v173, 0
  %v298 = vsel %vm218, %v174, 0
  %v301 = vsel %vm218, %v175, 0
  %v304 = vsel %vm218, %v176, 0
  %v307 = vsel %vm218, %v177, 0
  %v310 = vsel %vm218, %v178, 0
  %v313 = vsel %vm218, %v179, 0
  %v316 = vsel %vm218, %v180, 0
  %v319 = vsel %vm218, %v181, 0
  %v322 = vsel %vm218, %v182, 0
  %v325 = vsel %vm218, %v183, 0
  %v328 = vsel %vm218, %v184, 0
  %v331 = vsel %vm218, %v185, 0
  %v334 = vsel %vm218, %v186, 0
  %v337 = vsel %vm218, %v187, 0
  %v340 = vsel %vm218, %v188, 0
  %v343 = vsel %vm218, %v189, 0
  %v346 = vsel %vm218, %v190, 0
  %v349 = vsel %vm218, %v191, 0
  %v352 = vsel %vm218, %v192, 0
  %v355 = vsel %vm218, %v193, 0
  %v358 = vsel %vm218, %v194, 0
  %v361 = vsel %vm218, %v195, 0
  %v364 = vsel %vm218, %v196, 0
  %v367 = vsel %vm218, %v197, 0
  %v370 = vsel %vm218, %v198, 0
  %v373 = vsel %vm218, %v199, 0
  %v376 = vsel %vm218, %v200, 0
  %v379 = vsel %vm218, %v201, 0
  %v382 = vsel %vm218, %v202, 0
  %v385 = vsel %vm218, %v203, 0
  %v388 = vsel %vm218, %v204, 0
  %v391 = vsel %vm218, %v205, 0
  %v394 = vsel %vm218, %v206, 0
  %v397 = vsel %vm218, %v207, 0
  %v400 = vsel %vm218, %v208, 0
  %v403 = vsel %vm218, %v209, 0
  %v406 = vsel %vm218, %v210, 0
  %v409 = vsel %vm218, %v211, 0
  %411 = vmatpush.msra.mxu0 0.0
  %412 = vmatpush.msra.mxu0 0.0
  %413 = vmatpush.msra.mxu0 0.0
  %414 = vmatpush.msra.mxu0 0.0
  %415 = vmatpush.msra.mxu0 0.0
  %416 = vmatpush.msra.mxu0 0.0
  %417 = vmatpush.msra.mxu0 0.0
  %418 = vmatpush.msra.mxu0 0.0
  %419 = vmatpush.msra.mxu0 0.0
  %420 = vmatpush.msra.mxu0 0.0
  %421 = vmatpush.msra.mxu0 0.0
  %422 = vmatpush.msra.mxu0 0.0
  %423 = vmatpush.msra.mxu0 0.0
  %424 = vmatpush.msra.mxu0 0.0
  %425 = vmatpush.msra.mxu0 %v213
  %426 = vmatpush.msra.mxu0 %v212
  %427 = vmatmul.f32.gmra.mxu0 %v220
  %v428 = vpop.f32.mrf.mxu0
  %v429 = vadd.f32 %v216, %v428
  %430 = vmatmul.f32.gmra.mxu0 %v223
  %v431 = vpop.f32.mrf.mxu0
  %v432 = vadd.f32 %v216, %v431
  %433 = vmatmul.f32.gmra.mxu0 %v226
  %v434 = vpop.f32.mrf.mxu0
  %v435 = vadd.f32 %v216, %v434
  %436 = vmatmul.f32.gmra.mxu0 %v229
  %v437 = vpop.f32.mrf.mxu0
  %v438 = vadd.f32 %v216, %v437
  %439 = vmatmul.f32.gmra.mxu0 %v232
  %v440 = vpop.f32.mrf.mxu0
  %v441 = vadd.f32 %v216, %v440
  %442 = vmatmul.f32.gmra.mxu0 %v235
  %v443 = vpop.f32.mrf.mxu0
  %v444 = vadd.f32 %v216, %v443
  %445 = vmatmul.f32.gmra.mxu0 %v238
  %v446 = vpop.f32.mrf.mxu0
  %v447 = vadd.f32 %v216, %v446
  %448 = vmatmul.f32.gmra.mxu0 %v241
  %v449 = vpop.f32.mrf.mxu0
  %v450 = vadd.f32 %v216, %v449
  %451 = vmatmul.f32.gmra.mxu0 %v244
  %v452 = vpop.f32.mrf.mxu0
  %v453 = vadd.f32 %v216, %v452
  %454 = vmatmul.f32.gmra.mxu0 %v247
  %v455 = vpop.f32.mrf.mxu0
  %v456 = vadd.f32 %v216, %v455
  %457 = vmatmul.f32.gmra.mxu0 %v250
  %v458 = vpop.f32.mrf.mxu0
  %v459 = vadd.f32 %v216, %v458
  %460 = vmatmul.f32.gmra.mxu0 %v253
  %v461 = vpop.f32.mrf.mxu0
  %v462 = vadd.f32 %v216, %v461
  %463 = vmatmul.f32.gmra.mxu0 %v256
  %v464 = vpop.f32.mrf.mxu0
  %v465 = vadd.f32 %v216, %v464
  %466 = vmatmul.f32.gmra.mxu0 %v259
  %v467 = vpop.f32.mrf.mxu0
  %v468 = vadd.f32 %v216, %v467
  %469 = vmatmul.f32.gmra.mxu0 %v262
  %v470 = vpop.f32.mrf.mxu0
  %v471 = vadd.f32 %v216, %v470
  %472 = vmatmul.f32.gmra.mxu0 %v265
  %v473 = vpop.f32.mrf.mxu0
  %v474 = vadd.f32 %v216, %v473
  %475 = vmatmul.f32.gmra.mxu0 %v268
  %v476 = vpop.f32.mrf.mxu0
  %v477 = vadd.f32 %v216, %v476
  %478 = vmatmul.f32.gmra.mxu0 %v271
  %v479 = vpop.f32.mrf.mxu0
  %v480 = vadd.f32 %v216, %v479
  %481 = vmatmul.f32.gmra.mxu0 %v274
  %v482 = vpop.f32.mrf.mxu0
  %v483 = vadd.f32 %v216, %v482
  %484 = vmatmul.f32.gmra.mxu0 %v277
  %v485 = vpop.f32.mrf.mxu0
  %v486 = vadd.f32 %v216, %v485
  %487 = vmatmul.f32.gmra.mxu0 %v280
  %v488 = vpop.f32.mrf.mxu0
  %v489 = vadd.f32 %v216, %v488
  %490 = vmatmul.f32.gmra.mxu0 %v283
  %v491 = vpop.f32.mrf.mxu0
  %v492 = vadd.f32 %v216, %v491
  %493 = vmatmul.f32.gmra.mxu0 %v286
  %v494 = vpop.f32.mrf.mxu0
  %v495 = vadd.f32 %v216, %v494
  %496 = vmatmul.f32.gmra.mxu0 %v289
  %v497 = vpop.f32.mrf.mxu0
  %v498 = vadd.f32 %v216, %v497
  %499 = vmatmul.f32.gmra.mxu0 %v292
  %v500 = vpop.f32.mrf.mxu0
  %v501 = vadd.f32 %v216, %v500
  %502 = vmatmul.f32.gmra.mxu0 %v295
  %v503 = vpop.f32.mrf.mxu0
  %v504 = vadd.f32 %v216, %v503
  %505 = vmatmul.f32.gmra.mxu0 %v298
  %v506 = vpop.f32.mrf.mxu0
  %v507 = vadd.f32 %v216, %v506
  %508 = vmatmul.f32.gmra.mxu0 %v301
  %v509 = vpop.f32.mrf.mxu0
  %v510 = vadd.f32 %v216, %v509
  %511 = vmatmul.f32.gmra.mxu0 %v304
  %v512 = vpop.f32.mrf.mxu0
  %v513 = vadd.f32 %v216, %v512
  %514 = vmatmul.f32.gmra.mxu0 %v307
  %v515 = vpop.f32.mrf.mxu0
  %v516 = vadd.f32 %v216, %v515
  %517 = vmatmul.f32.gmra.mxu0 %v310
  %v518 = vpop.f32.mrf.mxu0
  %v519 = vadd.f32 %v216, %v518
  %520 = vmatmul.f32.gmra.mxu0 %v313
  %v521 = vpop.f32.mrf.mxu0
  %v522 = vadd.f32 %v216, %v521
  %523 = vmatmul.f32.gmra.mxu0 %v316
  %v524 = vpop.f32.mrf.mxu0
  %v525 = vadd.f32 %v216, %v524
  %526 = vmatmul.f32.gmra.mxu0 %v319
  %v527 = vpop.f32.mrf.mxu0
  %v528 = vadd.f32 %v216, %v527
  %529 = vmatmul.f32.gmra.mxu0 %v322
  %v530 = vpop.f32.mrf.mxu0
  %v531 = vadd.f32 %v216, %v530
  %532 = vmatmul.f32.gmra.mxu0 %v325
  %v533 = vpop.f32.mrf.mxu0
  %v534 = vadd.f32 %v216, %v533
  %535 = vmatmul.f32.gmra.mxu0 %v328
  %v536 = vpop.f32.mrf.mxu0
  %v537 = vadd.f32 %v216, %v536
  %538 = vmatmul.f32.gmra.mxu0 %v331
  %v539 = vpop.f32.mrf.mxu0
  %v540 = vadd.f32 %v216, %v539
  %541 = vmatmul.f32.gmra.mxu0 %v334
  %v542 = vpop.f32.mrf.mxu0
  %v543 = vadd.f32 %v216, %v542
  %544 = vmatmul.f32.gmra.mxu0 %v337
  %v545 = vpop.f32.mrf.mxu0
  %v546 = vadd.f32 %v216, %v545
  %547 = vmatmul.f32.gmra.mxu0 %v340
  %v548 = vpop.f32.mrf.mxu0
  %v549 = vadd.f32 %v216, %v548
  %550 = vmatmul.f32.gmra.mxu0 %v343
  %v551 = vpop.f32.mrf.mxu0
  %v552 = vadd.f32 %v216, %v551
  %553 = vmatmul.f32.gmra.mxu0 %v346
  %v554 = vpop.f32.mrf.mxu0
  %v555 = vadd.f32 %v216, %v554
  %556 = vmatmul.f32.gmra.mxu0 %v349
  %v557 = vpop.f32.mrf.mxu0
  %v558 = vadd.f32 %v216, %v557
  %559 = vmatmul.f32.gmra.mxu0 %v352
  %v560 = vpop.f32.mrf.mxu0
  %v561 = vadd.f32 %v216, %v560
  %562 = vmatmul.f32.gmra.mxu0 %v355
  %v563 = vpop.f32.mrf.mxu0
  %v564 = vadd.f32 %v216, %v563
  %565 = vmatmul.f32.gmra.mxu0 %v358
  %v566 = vpop.f32.mrf.mxu0
  %v567 = vadd.f32 %v216, %v566
  %568 = vmatmul.f32.gmra.mxu0 %v361
  %v569 = vpop.f32.mrf.mxu0
  %v570 = vadd.f32 %v216, %v569
  %571 = vmatmul.f32.gmra.mxu0 %v364
  %v572 = vpop.f32.mrf.mxu0
  %v573 = vadd.f32 %v216, %v572
  %574 = vmatmul.f32.gmra.mxu0 %v367
  %v575 = vpop.f32.mrf.mxu0
  %v576 = vadd.f32 %v216, %v575
  %577 = vmatmul.f32.gmra.mxu0 %v370
  %v578 = vpop.f32.mrf.mxu0
  %v579 = vadd.f32 %v216, %v578
  %580 = vmatmul.f32.gmra.mxu0 %v373
  %v581 = vpop.f32.mrf.mxu0
  %v582 = vadd.f32 %v216, %v581
  %583 = vmatmul.f32.gmra.mxu0 %v376
  %v584 = vpop.f32.mrf.mxu0
  %v585 = vadd.f32 %v216, %v584
  %586 = vmatmul.f32.gmra.mxu0 %v379
  %v587 = vpop.f32.mrf.mxu0
  %v588 = vadd.f32 %v216, %v587
  %589 = vmatmul.f32.gmra.mxu0 %v382
  %v590 = vpop.f32.mrf.mxu0
  %v591 = vadd.f32 %v216, %v590
  %592 = vmatmul.f32.gmra.mxu0 %v385
  %v593 = vpop.f32.mrf.mxu0
  %v594 = vadd.f32 %v216, %v593
  %595 = vmatmul.f32.gmra.mxu0 %v388
  %v596 = vpop.f32.mrf.mxu0
  %v597 = vadd.f32 %v216, %v596
  %598 = vmatmul.f32.gmra.mxu0 %v391
  %v599 = vpop.f32.mrf.mxu0
  %v600 = vadd.f32 %v216, %v599
  %601 = vmatmul.f32.gmra.mxu0 %v394
  %v602 = vpop.f32.mrf.mxu0
  %v603 = vadd.f32 %v216, %v602
  %604 = vmatmul.f32.gmra.mxu0 %v397
  %v605 = vpop.f32.mrf.mxu0
  %v606 = vadd.f32 %v216, %v605
  %607 = vmatmul.f32.gmra.mxu0 %v400
  %v608 = vpop.f32.mrf.mxu0
  %v609 = vadd.f32 %v216, %v608
  %610 = vmatmul.f32.gmra.mxu0 %v403
  %v611 = vpop.f32.mrf.mxu0
  %v612 = vadd.f32 %v216, %v611
  %613 = vmatmul.f32.gmra.mxu0 %v406
  %v614 = vpop.f32.mrf.mxu0
  %v615 = vadd.f32 %v216, %v614
  %616 = vmatmul.f32.gmra.mxu0 %v409
  %v617 = vpop.f32.mrf.mxu0
  %v618 = vadd.f32 %v216, %v617
  %619 = vdwg.mxu0
  %vm620 = vcmask 31744
  %621 = vst.msk [vmem:[%s4] sm:$0xff] %vm620, %v429
  %622 = vst.msk [vmem:[%s4 + $0x8] sm:$0xff] %vm620, %v432
  %623 = vst.msk [vmem:[%s4 + $0x10] sm:$0xff] %vm620, %v435
  %624 = vst.msk [vmem:[%s4 + $0x18] sm:$0xff] %vm620, %v438
  %625 = vst.msk [vmem:[%s4 + $0x20] sm:$0xff] %vm620, %v441
  %626 = vst.msk [vmem:[%s4 + $0x28] sm:$0xff] %vm620, %v444
  %627 = vst.msk [vmem:[%s4 + $0x30] sm:$0xff] %vm620, %v447
  %628 = vst.msk [vmem:[%s4 + $0x38] sm:$0xff] %vm620, %v450
  %629 = vst.msk [vmem:[%s4 + $0x40] sm:$0xff] %vm620, %v453
  %630 = vst.msk [vmem:[%s4 + $0x48] sm:$0xff] %vm620, %v456
  %631 = vst.msk [vmem:[%s4 + $0x50] sm:$0xff] %vm620, %v459
  %632 = vst.msk [vmem:[%s4 + $0x58] sm:$0xff] %vm620, %v462
  %633 = vst.msk [vmem:[%s4 + $0x60] sm:$0xff] %vm620, %v465
  %634 = vst.msk [vmem:[%s4 + $0x68] sm:$0xff] %vm620, %v468
  %635 = vst.msk [vmem:[%s4 + $0x70] sm:$0xff] %vm620, %v471
  %636 = vst.msk [vmem:[%s4 + $0x78] sm:$0xff] %vm620, %v474
  %637 = vst.msk [vmem:[%s4 + $0x80] sm:$0xff] %vm620, %v477
  %638 = vst.msk [vmem:[%s4 + $0x88] sm:$0xff] %vm620, %v480
  %639 = vst.msk [vmem:[%s4 + $0x90] sm:$0xff] %vm620, %v483
  %640 = vst.msk [vmem:[%s4 + $0x98] sm:$0xff] %vm620, %v486
  %641 = vst.msk [vmem:[%s4 + $0xa0] sm:$0xff] %vm620, %v489
  %642 = vst.msk [vmem:[%s4 + $0xa8] sm:$0xff] %vm620, %v492
  %643 = vst.msk [vmem:[%s4 + $0xb0] sm:$0xff] %vm620, %v495
  %644 = vst.msk [vmem:[%s4 + $0xb8] sm:$0xff] %vm620, %v498
  %645 = vst.msk [vmem:[%s4 + $0xc0] sm:$0xff] %vm620, %v501
  %646 = vst.msk [vmem:[%s4 + $0xc8] sm:$0xff] %vm620, %v504
  %647 = vst.msk [vmem:[%s4 + $0xd0] sm:$0xff] %vm620, %v507
  %648 = vst.msk [vmem:[%s4 + $0xd8] sm:$0xff] %vm620, %v510
  %649 = vst.msk [vmem:[%s4 + $0xe0] sm:$0xff] %vm620, %v513
  %650 = vst.msk [vmem:[%s4 + $0xe8] sm:$0xff] %vm620, %v516
  %651 = vst.msk [vmem:[%s4 + $0xf0] sm:$0xff] %vm620, %v519
  %652 = vst.msk [vmem:[%s4 + $0xf8] sm:$0xff] %vm620, %v522
  %653 = vst.msk [vmem:[%s4 + $0x100] sm:$0xff] %vm620, %v525
  %654 = vst.msk [vmem:[%s4 + $0x108] sm:$0xff] %vm620, %v528
  %655 = vst.msk [vmem:[%s4 + $0x110] sm:$0xff] %vm620, %v531
  %656 = vst.msk [vmem:[%s4 + $0x118] sm:$0xff] %vm620, %v534
  %657 = vst.msk [vmem:[%s4 + $0x120] sm:$0xff] %vm620, %v537
  %658 = vst.msk [vmem:[%s4 + $0x128] sm:$0xff] %vm620, %v540
  %659 = vst.msk [vmem:[%s4 + $0x130] sm:$0xff] %vm620, %v543
  %660 = vst.msk [vmem:[%s4 + $0x138] sm:$0xff] %vm620, %v546
  %661 = vst.msk [vmem:[%s4 + $0x140] sm:$0xff] %vm620, %v549
  %662 = vst.msk [vmem:[%s4 + $0x148] sm:$0xff] %vm620, %v552
  %663 = vst.msk [vmem:[%s4 + $0x150] sm:$0xff] %vm620, %v555
  %664 = vst.msk [vmem:[%s4 + $0x158] sm:$0xff] %vm620, %v558
  %665 = vst.msk [vmem:[%s4 + $0x160] sm:$0xff] %vm620, %v561
  %666 = vst.msk [vmem:[%s4 + $0x168] sm:$0xff] %vm620, %v564
  %667 = vst.msk [vmem:[%s4 + $0x170] sm:$0xff] %vm620, %v567
  %668 = vst.msk [vmem:[%s4 + $0x178] sm:$0xff] %vm620, %v570
  %669 = vst.msk [vmem:[%s4 + $0x180] sm:$0xff] %vm620, %v573
  %670 = vst.msk [vmem:[%s4 + $0x188] sm:$0xff] %vm620, %v576
  %671 = vst.msk [vmem:[%s4 + $0x190] sm:$0xff] %vm620, %v579
  %672 = vst.msk [vmem:[%s4 + $0x198] sm:$0xff] %vm620, %v582
  %673 = vst.msk [vmem:[%s4 + $0x1a0] sm:$0xff] %vm620, %v585
  %674 = vst.msk [vmem:[%s4 + $0x1a8] sm:$0xff] %vm620, %v588
  %675 = vst.msk [vmem:[%s4 + $0x1b0] sm:$0xff] %vm620, %v591
  %676 = vst.msk [vmem:[%s4 + $0x1b8] sm:$0xff] %vm620, %v594
  %677 = vst.msk [vmem:[%s4 + $0x1c0] sm:$0xff] %vm620, %v597
  %678 = vst.msk [vmem:[%s4 + $0x1c8] sm:$0xff] %vm620, %v600
  %679 = vst.msk [vmem:[%s4 + $0x1d0] sm:$0xff] %vm620, %v603
  %680 = vst.msk [vmem:[%s4 + $0x1d8] sm:$0xff] %vm620, %v606
  %681 = vst.msk [vmem:[%s4 + $0x1e0] sm:$0xff] %vm620, %v609
  %682 = vst.msk [vmem:[%s4 + $0x1e8] sm:$0xff] %vm620, %v612
  %683 = vst.msk [vmem:[%s4 + $0x1f0] sm:$0xff] %vm620, %v615
  %684 = vst.msk [vmem:[%s4 + $0x1f8] sm:$0xff] %vm620, %v618
  %v685 = vld [vmem:[%s1] sm:$0xff]
  %v686 = vld [vmem:[%s1 + $0x8] sm:$0xff]
  %v687 = vld [vmem:[%s1 + $0x10] sm:$0xff]
  %v688 = vld [vmem:[%s1 + $0x18] sm:$0xff]
  %v689 = vld [vmem:[%s1 + $0x20] sm:$0xff]
  %v690 = vld [vmem:[%s1 + $0x28] sm:$0xff]
  %v691 = vld [vmem:[%s1 + $0x30] sm:$0xff]
  %v692 = vld [vmem:[%s1 + $0x38] sm:$0xff]
  %v693 = vld [vmem:[%s1 + $0x40] sm:$0xff]
  %v694 = vld [vmem:[%s1 + $0x48] sm:$0xff]
  %v695 = vld [vmem:[%s1 + $0x50] sm:$0xff]
  %v696 = vld [vmem:[%s1 + $0x58] sm:$0xff]
  %v697 = vld [vmem:[%s1 + $0x60] sm:$0xff]
  %v698 = vld [vmem:[%s1 + $0x68] sm:$0xff]
  %v699 = vld [vmem:[%s1 + $0x70] sm:$0xff]
  %v700 = vld [vmem:[%s1 + $0x78] sm:$0xff]
  %v701 = vld [vmem:[%s1 + $0x80] sm:$0xff]
  %v702 = vld [vmem:[%s1 + $0x88] sm:$0xff]
  %v703 = vld [vmem:[%s1 + $0x90] sm:$0xff]
  %v704 = vld [vmem:[%s1 + $0x98] sm:$0xff]
  %v705 = vld [vmem:[%s1 + $0xa0] sm:$0xff]
  %v706 = vld [vmem:[%s1 + $0xa8] sm:$0xff]
  %v707 = vld [vmem:[%s1 + $0xb0] sm:$0xff]
  %v708 = vld [vmem:[%s1 + $0xb8] sm:$0xff]
  %v709 = vld [vmem:[%s1 + $0xc0] sm:$0xff]
  %v710 = vld [vmem:[%s1 + $0xc8] sm:$0xff]
  %v711 = vld [vmem:[%s1 + $0xd0] sm:$0xff]
  %v712 = vld [vmem:[%s1 + $0xd8] sm:$0xff]
  %v713 = vld [vmem:[%s1 + $0xe0] sm:$0xff]
  %v714 = vld [vmem:[%s1 + $0xe8] sm:$0xff]
  %v715 = vld [vmem:[%s1 + $0xf0] sm:$0xff]
  %v716 = vld [vmem:[%s1 + $0xf8] sm:$0xff]
  %v717 = vld [vmem:[%s1 + $0x100] sm:$0xff]
  %v718 = vld [vmem:[%s1 + $0x108] sm:$0xff]
  %v719 = vld [vmem:[%s1 + $0x110] sm:$0xff]
  %v720 = vld [vmem:[%s1 + $0x118] sm:$0xff]
  %v721 = vld [vmem:[%s1 + $0x120] sm:$0xff]
  %v722 = vld [vmem:[%s1 + $0x128] sm:$0xff]
  %v723 = vld [vmem:[%s1 + $0x130] sm:$0xff]
  %v724 = vld [vmem:[%s1 + $0x138] sm:$0xff]
  %v725 = vld [vmem:[%s1 + $0x140] sm:$0xff]
  %v726 = vld [vmem:[%s1 + $0x148] sm:$0xff]
  %v727 = vld [vmem:[%s1 + $0x150] sm:$0xff]
  %v728 = vld [vmem:[%s1 + $0x158] sm:$0xff]
  %v729 = vld [vmem:[%s1 + $0x160] sm:$0xff]
  %v730 = vld [vmem:[%s1 + $0x168] sm:$0xff]
  %v731 = vld [vmem:[%s1 + $0x170] sm:$0xff]
  %v732 = vld [vmem:[%s1 + $0x178] sm:$0xff]
  %v733 = vld [vmem:[%s1 + $0x180] sm:$0xff]
  %v734 = vld [vmem:[%s1 + $0x188] sm:$0xff]
  %v735 = vld [vmem:[%s1 + $0x190] sm:$0xff]
  %v736 = vld [vmem:[%s1 + $0x198] sm:$0xff]
  %v737 = vld [vmem:[%s1 + $0x1a0] sm:$0xff]
  %v738 = vld [vmem:[%s1 + $0x1a8] sm:$0xff]
  %v739 = vld [vmem:[%s1 + $0x1b0] sm:$0xff]
  %v740 = vld [vmem:[%s1 + $0x1b8] sm:$0xff]
  %v741 = vld [vmem:[%s1 + $0x1c0] sm:$0xff]
  %v742 = vld [vmem:[%s1 + $0x1c8] sm:$0xff]
  %v743 = vld [vmem:[%s1 + $0x1d0] sm:$0xff]
  %v744 = vld [vmem:[%s1 + $0x1d8] sm:$0xff]
  %v745 = vld [vmem:[%s1 + $0x1e0] sm:$0xff]
  %v746 = vld [vmem:[%s1 + $0x1e8] sm:$0xff]
  %v747 = vld [vmem:[%s1 + $0x1f0] sm:$0xff]
  %v748 = vld [vmem:[%s1 + $0x1f8] sm:$0xff]
  %v749 = vadd.f32 %v429, %v685
  %v750 = vadd.f32 %v432, %v686
  %v751 = vadd.f32 %v435, %v687
  %v752 = vadd.f32 %v438, %v688
  %v753 = vadd.f32 %v441, %v689
  %v754 = vadd.f32 %v444, %v690
  %v755 = vadd.f32 %v447, %v691
  %v756 = vadd.f32 %v450, %v692
  %v757 = vadd.f32 %v453, %v693
  %v758 = vadd.f32 %v456, %v694
  %v759 = vadd.f32 %v459, %v695
  %v760 = vadd.f32 %v462, %v696
  %v761 = vadd.f32 %v465, %v697
  %v762 = vadd.f32 %v468, %v698
  %v763 = vadd.f32 %v471, %v699
  %v764 = vadd.f32 %v474, %v700
  %v765 = vadd.f32 %v477, %v701
  %v766 = vadd.f32 %v480, %v702
  %v767 = vadd.f32 %v483, %v703
  %v768 = vadd.f32 %v486, %v704
  %v769 = vadd.f32 %v489, %v705
  %v770 = vadd.f32 %v492, %v706
  %v771 = vadd.f32 %v495, %v707
  %v772 = vadd.f32 %v498, %v708
  %v773 = vadd.f32 %v501, %v709
  %v774 = vadd.f32 %v504, %v710
  %v775 = vadd.f32 %v507, %v711
  %v776 = vadd.f32 %v510, %v712
  %v777 = vadd.f32 %v513, %v713
  %v778 = vadd.f32 %v516, %v714
  %v779 = vadd.f32 %v519, %v715
  %v780 = vadd.f32 %v522, %v716
  %v781 = vadd.f32 %v525, %v717
  %v782 = vadd.f32 %v528, %v718
  %v783 = vadd.f32 %v531, %v719
  %v784 = vadd.f32 %v534, %v720
  %v785 = vadd.f32 %v537, %v721
  %v786 = vadd.f32 %v540, %v722
  %v787 = vadd.f32 %v543, %v723
  %v788 = vadd.f32 %v546, %v724
  %v789 = vadd.f32 %v549, %v725
  %v790 = vadd.f32 %v552, %v726
  %v791 = vadd.f32 %v555, %v727
  %v792 = vadd.f32 %v558, %v728
  %v793 = vadd.f32 %v561, %v729
  %v794 = vadd.f32 %v564, %v730
  %v795 = vadd.f32 %v567, %v731
  %v796 = vadd.f32 %v570, %v732
  %v797 = vadd.f32 %v573, %v733
  %v798 = vadd.f32 %v576, %v734
  %v799 = vadd.f32 %v579, %v735
  %v800 = vadd.f32 %v582, %v736
  %v801 = vadd.f32 %v585, %v737
  %v802 = vadd.f32 %v588, %v738
  %v803 = vadd.f32 %v591, %v739
  %v804 = vadd.f32 %v594, %v740
  %v805 = vadd.f32 %v597, %v741
  %v806 = vadd.f32 %v600, %v742
  %v807 = vadd.f32 %v603, %v743
  %v808 = vadd.f32 %v606, %v744
  %v809 = vadd.f32 %v609, %v745
  %v810 = vadd.f32 %v612, %v746
  %v811 = vadd.f32 %v615, %v747
  %v812 = vadd.f32 %v618, %v748
  %v813 = vmax.f32 %v749, -16.0
  %v814 = vmax.f32 %v750, -16.0
  %v815 = vmax.f32 %v751, -16.0
  %v816 = vmax.f32 %v752, -16.0
  %v817 = vmax.f32 %v753, -16.0
  %v818 = vmax.f32 %v754, -16.0
  %v819 = vmax.f32 %v755, -16.0
  %v820 = vmax.f32 %v756, -16.0
  %v821 = vmax.f32 %v757, -16.0
  %v822 = vmax.f32 %v758, -16.0
  %v823 = vmax.f32 %v759, -16.0
  %v824 = vmax.f32 %v760, -16.0
  %v825 = vmax.f32 %v761, -16.0
  %v826 = vmax.f32 %v762, -16.0
  %v827 = vmax.f32 %v763, -16.0
  %v828 = vmax.f32 %v764, -16.0
  %v829 = vmax.f32 %v765, -16.0
  %v830 = vmax.f32 %v766, -16.0
  %v831 = vmax.f32 %v767, -16.0
  %v832 = vmax.f32 %v768, -16.0
  %v833 = vmax.f32 %v769, -16.0
  %v834 = vmax.f32 %v770, -16.0
  %v835 = vmax.f32 %v771, -16.0
  %v836 = vmax.f32 %v772, -16.0
  %v837 = vmax.f32 %v773, -16.0
  %v838 = vmax.f32 %v774, -16.0
  %v839 = vmax.f32 %v775, -16.0
  %v840 = vmax.f32 %v776, -16.0
  %v841 = vmax.f32 %v777, -16.0
  %v842 = vmax.f32 %v778, -16.0
  %v843 = vmax.f32 %v779, -16.0
  %v844 = vmax.f32 %v780, -16.0
  %v845 = vmax.f32 %v781, -16.0
  %v846 = vmax.f32 %v782, -16.0
  %v847 = vmax.f32 %v783, -16.0
  %v848 = vmax.f32 %v784, -16.0
  %v849 = vmax.f32 %v785, -16.0
  %v850 = vmax.f32 %v786, -16.0
  %v851 = vmax.f32 %v787, -16.0
  %v852 = vmax.f32 %v788, -16.0
  %v853 = vmax.f32 %v789, -16.0
  %v854 = vmax.f32 %v790, -16.0
  %v855 = vmax.f32 %v791, -16.0
  %v856 = vmax.f32 %v792, -16.0
  %v857 = vmax.f32 %v793, -16.0
  %v858 = vmax.f32 %v794, -16.0
  %v859 = vmax.f32 %v795, -16.0
  %v860 = vmax.f32 %v796, -16.0
  %v861 = vmax.f32 %v797, -16.0
  %v862 = vmax.f32 %v798, -16.0
  %v863 = vmax.f32 %v799, -16.0
  %v864 = vmax.f32 %v800, -16.0
  %v865 = vmax.f32 %v801, -16.0
  %v866 = vmax.f32 %v802, -16.0
  %v867 = vmax.f32 %v803, -16.0
  %v868 = vmax.f32 %v804, -16.0
  %v869 = vmax.f32 %v805, -16.0
  %v870 = vmax.f32 %v806, -16.0
  %v871 = vmax.f32 %v807, -16.0
  %v872 = vmax.f32 %v808, -16.0
  %v873 = vmax.f32 %v809, -16.0
  %v874 = vmax.f32 %v810, -16.0
  %v875 = vmax.f32 %v811, -16.0
  %v876 = vmax.f32 %v812, -16.0
  %v877 = vmin.f32 %v813, 16.0
  %v878 = vmin.f32 %v814, 16.0
  %v879 = vmin.f32 %v815, 16.0
  %v880 = vmin.f32 %v816, 16.0
  %v881 = vmin.f32 %v817, 16.0
  %v882 = vmin.f32 %v818, 16.0
  %v883 = vmin.f32 %v819, 16.0
  %v884 = vmin.f32 %v820, 16.0
  %v885 = vmin.f32 %v821, 16.0
  %v886 = vmin.f32 %v822, 16.0
  %v887 = vmin.f32 %v823, 16.0
  %v888 = vmin.f32 %v824, 16.0
  %v889 = vmin.f32 %v825, 16.0
  %v890 = vmin.f32 %v826, 16.0
  %v891 = vmin.f32 %v827, 16.0
  %v892 = vmin.f32 %v828, 16.0
  %v893 = vmin.f32 %v829, 16.0
  %v894 = vmin.f32 %v830, 16.0
  %v895 = vmin.f32 %v831, 16.0
  %v896 = vmin.f32 %v832, 16.0
  %v897 = vmin.f32 %v833, 16.0
  %v898 = vmin.f32 %v834, 16.0
  %v899 = vmin.f32 %v835, 16.0
  %v900 = vmin.f32 %v836, 16.0
  %v901 = vmin.f32 %v837, 16.0
  %v902 = vmin.f32 %v838, 16.0
  %v903 = vmin.f32 %v839, 16.0
  %v904 = vmin.f32 %v840, 16.0
  %v905 = vmin.f32 %v841, 16.0
  %v906 = vmin.f32 %v842, 16.0
  %v907 = vmin.f32 %v843, 16.0
  %v908 = vmin.f32 %v844, 16.0
  %v909 = vmin.f32 %v845, 16.0
  %v910 = vmin.f32 %v846, 16.0
  %v911 = vmin.f32 %v847, 16.0
  %v912 = vmin.f32 %v848, 16.0
  %v913 = vmin.f32 %v849, 16.0
  %v914 = vmin.f32 %v850, 16.0
  %v915 = vmin.f32 %v851, 16.0
  %v916 = vmin.f32 %v852, 16.0
  %v917 = vmin.f32 %v853, 16.0
  %v918 = vmin.f32 %v854, 16.0
  %v919 = vmin.f32 %v855, 16.0
  %v920 = vmin.f32 %v856, 16.0
  %v921 = vmin.f32 %v857, 16.0
  %v922 = vmin.f32 %v858, 16.0
  %v923 = vmin.f32 %v859, 16.0
  %v924 = vmin.f32 %v860, 16.0
  %v925 = vmin.f32 %v861, 16.0
  %v926 = vmin.f32 %v862, 16.0
  %v927 = vmin.f32 %v863, 16.0
  %v928 = vmin.f32 %v864, 16.0
  %v929 = vmin.f32 %v865, 16.0
  %v930 = vmin.f32 %v866, 16.0
  %v931 = vmin.f32 %v867, 16.0
  %v932 = vmin.f32 %v868, 16.0
  %v933 = vmin.f32 %v869, 16.0
  %v934 = vmin.f32 %v870, 16.0
  %v935 = vmin.f32 %v871, 16.0
  %v936 = vmin.f32 %v872, 16.0
  %v937 = vmin.f32 %v873, 16.0
  %v938 = vmin.f32 %v874, 16.0
  %v939 = vmin.f32 %v875, 16.0
  %v940 = vmin.f32 %v876, 16.0
  %941 = vst.msk [vmem:[%s5] sm:$0xff] %vm620, %v877
  %942 = vst.msk [vmem:[%s5 + $0x8] sm:$0xff] %vm620, %v878
  %943 = vst.msk [vmem:[%s5 + $0x10] sm:$0xff] %vm620, %v879
  %944 = vst.msk [vmem:[%s5 + $0x18] sm:$0xff] %vm620, %v880
  %945 = vst.msk [vmem:[%s5 + $0x20] sm:$0xff] %vm620, %v881
  %946 = vst.msk [vmem:[%s5 + $0x28] sm:$0xff] %vm620, %v882
  %947 = vst.msk [vmem:[%s5 + $0x30] sm:$0xff] %vm620, %v883
  %948 = vst.msk [vmem:[%s5 + $0x38] sm:$0xff] %vm620, %v884
  %949 = vst.msk [vmem:[%s5 + $0x40] sm:$0xff] %vm620, %v885
  %950 = vst.msk [vmem:[%s5 + $0x48] sm:$0xff] %vm620, %v886
  %951 = vst.msk [vmem:[%s5 + $0x50] sm:$0xff] %vm620, %v887
  %952 = vst.msk [vmem:[%s5 + $0x58] sm:$0xff] %vm620, %v888
  %953 = vst.msk [vmem:[%s5 + $0x60] sm:$0xff] %vm620, %v889
  %954 = vst.msk [vmem:[%s5 + $0x68] sm:$0xff] %vm620, %v890
  %955 = vst.msk [vmem:[%s5 + $0x70] sm:$0xff] %vm620, %v891
  %956 = vst.msk [vmem:[%s5 + $0x78] sm:$0xff] %vm620, %v892
  %957 = vst.msk [vmem:[%s5 + $0x80] sm:$0xff] %vm620, %v893
  %958 = vst.msk [vmem:[%s5 + $0x88] sm:$0xff] %vm620, %v894
  %959 = vst.msk [vmem:[%s5 + $0x90] sm:$0xff] %vm620, %v895
  %960 = vst.msk [vmem:[%s5 + $0x98] sm:$0xff] %vm620, %v896
  %961 = vst.msk [vmem:[%s5 + $0xa0] sm:$0xff] %vm620, %v897
  %962 = vst.msk [vmem:[%s5 + $0xa8] sm:$0xff] %vm620, %v898
  %963 = vst.msk [vmem:[%s5 + $0xb0] sm:$0xff] %vm620, %v899
  %964 = vst.msk [vmem:[%s5 + $0xb8] sm:$0xff] %vm620, %v900
  %965 = vst.msk [vmem:[%s5 + $0xc0] sm:$0xff] %vm620, %v901
  %966 = vst.msk [vmem:[%s5 + $0xc8] sm:$0xff] %vm620, %v902
  %967 = vst.msk [vmem:[%s5 + $0xd0] sm:$0xff] %vm620, %v903
  %968 = vst.msk [vmem:[%s5 + $0xd8] sm:$0xff] %vm620, %v904
  %969 = vst.msk [vmem:[%s5 + $0xe0] sm:$0xff] %vm620, %v905
  %970 = vst.msk [vmem:[%s5 + $0xe8] sm:$0xff] %vm620, %v906
  %971 = vst.msk [vmem:[%s5 + $0xf0] sm:$0xff] %vm620, %v907
  %972 = vst.msk [vmem:[%s5 + $0xf8] sm:$0xff] %vm620, %v908
  %973 = vst.msk [vmem:[%s5 + $0x100] sm:$0xff] %vm620, %v909
  %974 = vst.msk [vmem:[%s5 + $0x108] sm:$0xff] %vm620, %v910
  %975 = vst.msk [vmem:[%s5 + $0x110] sm:$0xff] %vm620, %v911
  %976 = vst.msk [vmem:[%s5 + $0x118] sm:$0xff] %vm620, %v912
  %977 = vst.msk [vmem:[%s5 + $0x120] sm:$0xff] %vm620, %v913
  %978 = vst.msk [vmem:[%s5 + $0x128] sm:$0xff] %vm620, %v914
  %979 = vst.msk [vmem:[%s5 + $0x130] sm:$0xff] %vm620, %v915
  %980 = vst.msk [vmem:[%s5 + $0x138] sm:$0xff] %vm620, %v916
  %981 = vst.msk [vmem:[%s5 + $0x140] sm:$0xff] %vm620, %v917
  %982 = vst.msk [vmem:[%s5 + $0x148] sm:$0xff] %vm620, %v918
  %983 = vst.msk [vmem:[%s5 + $0x150] sm:$0xff] %vm620, %v919
  %984 = vst.msk [vmem:[%s5 + $0x158] sm:$0xff] %vm620, %v920
  %985 = vst.msk [vmem:[%s5 + $0x160] sm:$0xff] %vm620, %v921
  %986 = vst.msk [vmem:[%s5 + $0x168] sm:$0xff] %vm620, %v922
  %987 = vst.msk [vmem:[%s5 + $0x170] sm:$0xff] %vm620, %v923
  %988 = vst.msk [vmem:[%s5 + $0x178] sm:$0xff] %vm620, %v924
  %989 = vst.msk [vmem:[%s5 + $0x180] sm:$0xff] %vm620, %v925
  %990 = vst.msk [vmem:[%s5 + $0x188] sm:$0xff] %vm620, %v926
  %991 = vst.msk [vmem:[%s5 + $0x190] sm:$0xff] %vm620, %v927
  %992 = vst.msk [vmem:[%s5 + $0x198] sm:$0xff] %vm620, %v928
  %993 = vst.msk [vmem:[%s5 + $0x1a0] sm:$0xff] %vm620, %v929
  %994 = vst.msk [vmem:[%s5 + $0x1a8] sm:$0xff] %vm620, %v930
  %995 = vst.msk [vmem:[%s5 + $0x1b0] sm:$0xff] %vm620, %v931
  %996 = vst.msk [vmem:[%s5 + $0x1b8] sm:$0xff] %vm620, %v932
  %997 = vst.msk [vmem:[%s5 + $0x1c0] sm:$0xff] %vm620, %v933
  %998 = vst.msk [vmem:[%s5 + $0x1c8] sm:$0xff] %vm620, %v934
  %999 = vst.msk [vmem:[%s5 + $0x1d0] sm:$0xff] %vm620, %v935
  %1000 = vst.msk [vmem:[%s5 + $0x1d8] sm:$0xff] %vm620, %v936
  %1001 = vst.msk [vmem:[%s5 + $0x1e0] sm:$0xff] %vm620, %v937
  %1002 = vst.msk [vmem:[%s5 + $0x1e8] sm:$0xff] %vm620, %v938
  %1003 = vst.msk [vmem:[%s5 + $0x1f0] sm:$0xff] %vm620, %v939
  %1004 = vst.msk [vmem:[%s5 + $0x1f8] sm:$0xff] %vm620, %v940
  %v1005 = vround.ne.pseudo %v429
  %v1006 = vround.ne.pseudo %v432
  %v1007 = vround.ne.pseudo %v435
  %v1008 = vround.ne.pseudo %v438
  %v1009 = vround.ne.pseudo %v441
  %v1010 = vround.ne.pseudo %v444
  %v1011 = vround.ne.pseudo %v447
  %v1012 = vround.ne.pseudo %v450
  %v1013 = vround.ne.pseudo %v453
  %v1014 = vround.ne.pseudo %v456
  %v1015 = vround.ne.pseudo %v459
  %v1016 = vround.ne.pseudo %v462
  %v1017 = vround.ne.pseudo %v465
  %v1018 = vround.ne.pseudo %v468
  %v1019 = vround.ne.pseudo %v471
  %v1020 = vround.ne.pseudo %v474
  %v1021 = vround.ne.pseudo %v477
  %v1022 = vround.ne.pseudo %v480
  %v1023 = vround.ne.pseudo %v483
  %v1024 = vround.ne.pseudo %v486
  %v1025 = vround.ne.pseudo %v489
  %v1026 = vround.ne.pseudo %v492
  %v1027 = vround.ne.pseudo %v495
  %v1028 = vround.ne.pseudo %v498
  %v1029 = vround.ne.pseudo %v501
  %v1030 = vround.ne.pseudo %v504
  %v1031 = vround.ne.pseudo %v507
  %v1032 = vround.ne.pseudo %v510
  %v1033 = vround.ne.pseudo %v513
  %v1034 = vround.ne.pseudo %v516
  %v1035 = vround.ne.pseudo %v519
  %v1036 = vround.ne.pseudo %v522
  %v1037 = vround.ne.pseudo %v525
  %v1038 = vround.ne.pseudo %v528
  %v1039 = vround.ne.pseudo %v531
  %v1040 = vround.ne.pseudo %v534
  %v1041 = vround.ne.pseudo %v537
  %v1042 = vround.ne.pseudo %v540
  %v1043 = vround.ne.pseudo %v543
  %v1044 = vround.ne.pseudo %v546
  %v1045 = vround.ne.pseudo %v549
  %v1046 = vround.ne.pseudo %v552
  %v1047 = vround.ne.pseudo %v555
  %v1048 = vround.ne.pseudo %v558
  %v1049 = vround.ne.pseudo %v561
  %v1050 = vround.ne.pseudo %v564
  %v1051 = vround.ne.pseudo %v567
  %v1052 = vround.ne.pseudo %v570
  %v1053 = vround.ne.pseudo %v573
  %v1054 = vround.ne.pseudo %v576
  %v1055 = vround.ne.pseudo %v579
  %v1056 = vround.ne.pseudo %v582
  %v1057 = vround.ne.pseudo %v585
  %v1058 = vround.ne.pseudo %v588
  %v1059 = vround.ne.pseudo %v591
  %v1060 = vround.ne.pseudo %v594
  %v1061 = vround.ne.pseudo %v597
  %v1062 = vround.ne.pseudo %v600
  %v1063 = vround.ne.pseudo %v603
  %v1064 = vround.ne.pseudo %v606
  %v1065 = vround.ne.pseudo %v609
  %v1066 = vround.ne.pseudo %v612
  %v1067 = vround.ne.pseudo %v615
  %v1068 = vround.ne.pseudo %v618
  %v1069 = vmax.f32 %v1005, -16.0
  %v1070 = vmax.f32 %v1006, -16.0
  %v1071 = vmax.f32 %v1007, -16.0
  %v1072 = vmax.f32 %v1008, -16.0
  %v1073 = vmax.f32 %v1009, -16.0
  %v1074 = vmax.f32 %v1010, -16.0
  %v1075 = vmax.f32 %v1011, -16.0
  %v1076 = vmax.f32 %v1012, -16.0
  %v1077 = vmax.f32 %v1013, -16.0
  %v1078 = vmax.f32 %v1014, -16.0
  %v1079 = vmax.f32 %v1015, -16.0
  %v1080 = vmax.f32 %v1016, -16.0
  %v1081 = vmax.f32 %v1017, -16.0
  %v1082 = vmax.f32 %v1018, -16.0
  %v1083 = vmax.f32 %v1019, -16.0
  %v1084 = vmax.f32 %v1020, -16.0
  %v1085 = vmax.f32 %v1021, -16.0
  %v1086 = vmax.f32 %v1022, -16.0
  %v1087 = vmax.f32 %v1023, -16.0
  %v1088 = vmax.f32 %v1024, -16.0
  %v1089 = vmax.f32 %v1025, -16.0
  %v1090 = vmax.f32 %v1026, -16.0
  %v1091 = vmax.f32 %v1027, -16.0
  %v1092 = vmax.f32 %v1028, -16.0
  %v1093 = vmax.f32 %v1029, -16.0
  %v1094 = vmax.f32 %v1030, -16.0
  %v1095 = vmax.f32 %v1031, -16.0
  %v1096 = vmax.f32 %v1032, -16.0
  %v1097 = vmax.f32 %v1033, -16.0
  %v1098 = vmax.f32 %v1034, -16.0
  %v1099 = vmax.f32 %v1035, -16.0
  %v1100 = vmax.f32 %v1036, -16.0
  %v1101 = vmax.f32 %v1037, -16.0
  %v1102 = vmax.f32 %v1038, -16.0
  %v1103 = vmax.f32 %v1039, -16.0
  %v1104 = vmax.f32 %v1040, -16.0
  %v1105 = vmax.f32 %v1041, -16.0
  %v1106 = vmax.f32 %v1042, -16.0
  %v1107 = vmax.f32 %v1043, -16.0
  %v1108 = vmax.f32 %v1044, -16.0
  %v1109 = vmax.f32 %v1045, -16.0
  %v1110 = vmax.f32 %v1046, -16.0
  %v1111 = vmax.f32 %v1047, -16.0
  %v1112 = vmax.f32 %v1048, -16.0
  %v1113 = vmax.f32 %v1049, -16.0
  %v1114 = vmax.f32 %v1050, -16.0
  %v1115 = vmax.f32 %v1051, -16.0
  %v1116 = vmax.f32 %v1052, -16.0
  %v1117 = vmax.f32 %v1053, -16.0
  %v1118 = vmax.f32 %v1054, -16.0
  %v1119 = vmax.f32 %v1055, -16.0
  %v1120 = vmax.f32 %v1056, -16.0
  %v1121 = vmax.f32 %v1057, -16.0
  %v1122 = vmax.f32 %v1058, -16.0
  %v1123 = vmax.f32 %v1059, -16.0
  %v1124 = vmax.f32 %v1060, -16.0
  %v1125 = vmax.f32 %v1061, -16.0
  %v1126 = vmax.f32 %v1062, -16.0
  %v1127 = vmax.f32 %v1063, -16.0
  %v1128 = vmax.f32 %v1064, -16.0
  %v1129 = vmax.f32 %v1065, -16.0
  %v1130 = vmax.f32 %v1066, -16.0
  %v1131 = vmax.f32 %v1067, -16.0
  %v1132 = vmax.f32 %v1068, -16.0
  %v1133 = vmin.f32 %v1069, 16.0
  %v1134 = vmin.f32 %v1070, 16.0
  %v1135 = vmin.f32 %v1071, 16.0
  %v1136 = vmin.f32 %v1072, 16.0
  %v1137 = vmin.f32 %v1073, 16.0
  %v1138 = vmin.f32 %v1074, 16.0
  %v1139 = vmin.f32 %v1075, 16.0
  %v1140 = vmin.f32 %v1076, 16.0
  %v1141 = vmin.f32 %v1077, 16.0
  %v1142 = vmin.f32 %v1078, 16.0
  %v1143 = vmin.f32 %v1079, 16.0
  %v1144 = vmin.f32 %v1080, 16.0
  %v1145 = vmin.f32 %v1081, 16.0
  %v1146 = vmin.f32 %v1082, 16.0
  %v1147 = vmin.f32 %v1083, 16.0
  %v1148 = vmin.f32 %v1084, 16.0
  %v1149 = vmin.f32 %v1085, 16.0
  %v1150 = vmin.f32 %v1086, 16.0
  %v1151 = vmin.f32 %v1087, 16.0
  %v1152 = vmin.f32 %v1088, 16.0
  %v1153 = vmin.f32 %v1089, 16.0
  %v1154 = vmin.f32 %v1090, 16.0
  %v1155 = vmin.f32 %v1091, 16.0
  %v1156 = vmin.f32 %v1092, 16.0
  %v1157 = vmin.f32 %v1093, 16.0
  %v1158 = vmin.f32 %v1094, 16.0
  %v1159 = vmin.f32 %v1095, 16.0
  %v1160 = vmin.f32 %v1096, 16.0
  %v1161 = vmin.f32 %v1097, 16.0
  %v1162 = vmin.f32 %v1098, 16.0
  %v1163 = vmin.f32 %v1099, 16.0
  %v1164 = vmin.f32 %v1100, 16.0
  %v1165 = vmin.f32 %v1101, 16.0
  %v1166 = vmin.f32 %v1102, 16.0
  %v1167 = vmin.f32 %v1103, 16.0
  %v1168 = vmin.f32 %v1104, 16.0
  %v1169 = vmin.f32 %v1105, 16.0
  %v1170 = vmin.f32 %v1106, 16.0
  %v1171 = vmin.f32 %v1107, 16.0
  %v1172 = vmin.f32 %v1108, 16.0
  %v1173 = vmin.f32 %v1109, 16.0
  %v1174 = vmin.f32 %v1110, 16.0
  %v1175 = vmin.f32 %v1111, 16.0
  %v1176 = vmin.f32 %v1112, 16.0
  %v1177 = vmin.f32 %v1113, 16.0
  %v1178 = vmin.f32 %v1114, 16.0
  %v1179 = vmin.f32 %v1115, 16.0
  %v1180 = vmin.f32 %v1116, 16.0
  %v1181 = vmin.f32 %v1117, 16.0
  %v1182 = vmin.f32 %v1118, 16.0
  %v1183 = vmin.f32 %v1119, 16.0
  %v1184 = vmin.f32 %v1120, 16.0
  %v1185 = vmin.f32 %v1121, 16.0
  %v1186 = vmin.f32 %v1122, 16.0
  %v1187 = vmin.f32 %v1123, 16.0
  %v1188 = vmin.f32 %v1124, 16.0
  %v1189 = vmin.f32 %v1125, 16.0
  %v1190 = vmin.f32 %v1126, 16.0
  %v1191 = vmin.f32 %v1127, 16.0
  %v1192 = vmin.f32 %v1128, 16.0
  %v1193 = vmin.f32 %v1129, 16.0
  %v1194 = vmin.f32 %v1130, 16.0
  %v1195 = vmin.f32 %v1131, 16.0
  %v1196 = vmin.f32 %v1132, 16.0
  %1197 = vst.msk [vmem:[%s6] sm:$0xff] %vm620, %v1133
  %1198 = vst.msk [vmem:[%s6 + $0x8] sm:$0xff] %vm620, %v1134
  %1199 = vst.msk [vmem:[%s6 + $0x10] sm:$0xff] %vm620, %v1135
  %1200 = vst.msk [vmem:[%s6 + $0x18] sm:$0xff] %vm620, %v1136
  %1201 = vst.msk [vmem:[%s6 + $0x20] sm:$0xff] %vm620, %v1137
  %1202 = vst.msk [vmem:[%s6 + $0x28] sm:$0xff] %vm620, %v1138
  %1203 = vst.msk [vmem:[%s6 + $0x30] sm:$0xff] %vm620, %v1139
  %1204 = vst.msk [vmem:[%s6 + $0x38] sm:$0xff] %vm620, %v1140
  %1205 = vst.msk [vmem:[%s6 + $0x40] sm:$0xff] %vm620, %v1141
  %1206 = vst.msk [vmem:[%s6 + $0x48] sm:$0xff] %vm620, %v1142
  %1207 = vst.msk [vmem:[%s6 + $0x50] sm:$0xff] %vm620, %v1143
  %1208 = vst.msk [vmem:[%s6 + $0x58] sm:$0xff] %vm620, %v1144
  %1209 = vst.msk [vmem:[%s6 + $0x60] sm:$0xff] %vm620, %v1145
  %1210 = vst.msk [vmem:[%s6 + $0x68] sm:$0xff] %vm620, %v1146
  %1211 = vst.msk [vmem:[%s6 + $0x70] sm:$0xff] %vm620, %v1147
  %1212 = vst.msk [vmem:[%s6 + $0x78] sm:$0xff] %vm620, %v1148
  %1213 = vst.msk [vmem:[%s6 + $0x80] sm:$0xff] %vm620, %v1149
  %1214 = vst.msk [vmem:[%s6 + $0x88] sm:$0xff] %vm620, %v1150
  %1215 = vst.msk [vmem:[%s6 + $0x90] sm:$0xff] %vm620, %v1151
  %1216 = vst.msk [vmem:[%s6 + $0x98] sm:$0xff] %vm620, %v1152
  %1217 = vst.msk [vmem:[%s6 + $0xa0] sm:$0xff] %vm620, %v1153
  %1218 = vst.msk [vmem:[%s6 + $0xa8] sm:$0xff] %vm620, %v1154
  %1219 = vst.msk [vmem:[%s6 + $0xb0] sm:$0xff] %vm620, %v1155
  %1220 = vst.msk [vmem:[%s6 + $0xb8] sm:$0xff] %vm620, %v1156
  %1221 = vst.msk [vmem:[%s6 + $0xc0] sm:$0xff] %vm620, %v1157
  %1222 = vst.msk [vmem:[%s6 + $0xc8] sm:$0xff] %vm620, %v1158
  %1223 = vst.msk [vmem:[%s6 + $0xd0] sm:$0xff] %vm620, %v1159
  %1224 = vst.msk [vmem:[%s6 + $0xd8] sm:$0xff] %vm620, %v1160
  %1225 = vst.msk [vmem:[%s6 + $0xe0] sm:$0xff] %vm620, %v1161
  %1226 = vst.msk [vmem:[%s6 + $0xe8] sm:$0xff] %vm620, %v1162
  %1227 = vst.msk [vmem:[%s6 + $0xf0] sm:$0xff] %vm620, %v1163
  %1228 = vst.msk [vmem:[%s6 + $0xf8] sm:$0xff] %vm620, %v1164
  %1229 = vst.msk [vmem:[%s6 + $0x100] sm:$0xff] %vm620, %v1165
  %1230 = vst.msk [vmem:[%s6 + $0x108] sm:$0xff] %vm620, %v1166
  %1231 = vst.msk [vmem:[%s6 + $0x110] sm:$0xff] %vm620, %v1167
  %1232 = vst.msk [vmem:[%s6 + $0x118] sm:$0xff] %vm620, %v1168
  %1233 = vst.msk [vmem:[%s6 + $0x120] sm:$0xff] %vm620, %v1169
  %1234 = vst.msk [vmem:[%s6 + $0x128] sm:$0xff] %vm620, %v1170
  %1235 = vst.msk [vmem:[%s6 + $0x130] sm:$0xff] %vm620, %v1171
  %1236 = vst.msk [vmem:[%s6 + $0x138] sm:$0xff] %vm620, %v1172
  %1237 = vst.msk [vmem:[%s6 + $0x140] sm:$0xff] %vm620, %v1173
  %1238 = vst.msk [vmem:[%s6 + $0x148] sm:$0xff] %vm620, %v1174
  %1239 = vst.msk [vmem:[%s6 + $0x150] sm:$0xff] %vm620, %v1175
  %1240 = vst.msk [vmem:[%s6 + $0x158] sm:$0xff] %vm620, %v1176
  %1241 = vst.msk [vmem:[%s6 + $0x160] sm:$0xff] %vm620, %v1177
  %1242 = vst.msk [vmem:[%s6 + $0x168] sm:$0xff] %vm620, %v1178
  %1243 = vst.msk [vmem:[%s6 + $0x170] sm:$0xff] %vm620, %v1179
  %1244 = vst.msk [vmem:[%s6 + $0x178] sm:$0xff] %vm620, %v1180
  %1245 = vst.msk [vmem:[%s6 + $0x180] sm:$0xff] %vm620, %v1181
  %1246 = vst.msk [vmem:[%s6 + $0x188] sm:$0xff] %vm620, %v1182
  %1247 = vst.msk [vmem:[%s6 + $0x190] sm:$0xff] %vm620, %v1183
  %1248 = vst.msk [vmem:[%s6 + $0x198] sm:$0xff] %vm620, %v1184
  %1249 = vst.msk [vmem:[%s6 + $0x1a0] sm:$0xff] %vm620, %v1185
  %1250 = vst.msk [vmem:[%s6 + $0x1a8] sm:$0xff] %vm620, %v1186
  %1251 = vst.msk [vmem:[%s6 + $0x1b0] sm:$0xff] %vm620, %v1187
  %1252 = vst.msk [vmem:[%s6 + $0x1b8] sm:$0xff] %vm620, %v1188
  %1253 = vst.msk [vmem:[%s6 + $0x1c0] sm:$0xff] %vm620, %v1189
  %1254 = vst.msk [vmem:[%s6 + $0x1c8] sm:$0xff] %vm620, %v1190
  %1255 = vst.msk [vmem:[%s6 + $0x1d0] sm:$0xff] %vm620, %v1191
  %1256 = vst.msk [vmem:[%s6 + $0x1d8] sm:$0xff] %vm620, %v1192
  %1257 = vst.msk [vmem:[%s6 + $0x1e0] sm:$0xff] %vm620, %v1193
  %1258 = vst.msk [vmem:[%s6 + $0x1e8] sm:$0xff] %vm620, %v1194
  %1259 = vst.msk [vmem:[%s6 + $0x1f0] sm:$0xff] %vm620, %v1195
  %1260 = vst.msk [vmem:[%s6 + $0x1f8] sm:$0xff] %vm620, %v1196
  // Predicated region
  $region18: #{fwd.5} parent=0 // pred_check
    _
  $region19: #{fwd.5} parent=0 // pred_check_branch
    %1262 = sbr.rel (0) target = $region21
  $region20: #{fwd.5} parent=0 // pred_region
    _
  $region21: #{fwd.5} parent=0 // pred_fallthru
    _
  // Predicated region
  $region22: #{fwd.5} parent=0 // pred_check
    _
  $region23: #{fwd.5} parent=0 // pred_check_branch
    %1264 = sbr.rel (0) target = $region25
  $region24: #{fwd.5} parent=0 // pred_region
    _
  $region25: #{fwd.5} parent=0 // pred_fallthru
    _
  // Predicated region
  $region26: #{fwd.5} parent=0 // pred_check
    _
  $region27: #{fwd.5} parent=0 // pred_check_branch
    %1266 = sbr.rel (0) target = $region29
  $region28: #{fwd.5} parent=0 // pred_region
    _
  $region29: #{fwd.5} parent=0 // pred_fallthru
    _
  // Predicated region
  $region30: #{fwd.5} parent=0 // pred_check
    _
  $region31: #{fwd.5} parent=0 // pred_check_branch
    %1268 = sbr.rel (0) target = $region33
  $region32: #{fwd.5} parent=0 // pred_region
    _
  $region33: #{fwd.5} parent=0 // pred_fallthru
    _
  // Predicated region
  $region34: #{fwd.5} parent=0 // pred_check
    _
  $region35: #{fwd.5} parent=0 // pred_check_branch
    %1270 = sbr.rel (0) target = $region37
  $region36: #{fwd.5} parent=0 // pred_region
    _
  $region37: #{fwd.5} parent=0 // pred_fallthru
    _
  // Predicated region
  $region38: #{fwd.5} parent=0 // pred_check
    _
  $region39: #{fwd.5} parent=0 // pred_check_branch
    %1272 = sbr.rel (0) target = $region41
  $region40: #{fwd.5} parent=0 // pred_region
    _
  $region41: #{fwd.5} parent=0 // pred_fallthru
    _

// kernel: fwd.6
$region0: #{fwd.6}
  #allocation0 [shape = 'u32[]', space=smem, size = 0x4, offset = 0x4, fixed_abs, tag = 'smem constant byte address 0x4 - core index']
  #allocation1 [shape = 'u32[72,128]{1,0:T(1,128)}', space=vmem, size = 0x9000, scoped, tag = 'internal scratch']
  %s0 = inlined_call_operand.vmem [shape: f32[128,16], index: 0, kind: input, shape index: {}]
  %s1 = inlined_call_operand.vmem [shape: f32[128,8], index: 1, kind: input, shape index: {}]
  %s2 = inlined_call_operand.vmem [shape: f32[16,8], index: 2, kind: input, shape index: {}]
  %s3 = inlined_call_operand.vmem [shape: f32[1,8], index: 3, kind: input, shape index: {}]
  %s4 = inlined_call_operand.vmem [shape: f32[8,64], index: 4, kind: input, shape index: {}]
  %s5 = inlined_call_operand.vmem [shape: f32[1,64], index: 5, kind: input, shape index: {}]
  %s6 = inlined_call_operand.vmem [shape: f32[1,8], index: 6, kind: input, shape index: {}]
  %s7 = inlined_call_operand.vmem [shape: f32[1,8], index: 7, kind: input, shape index: {}]
  %s8 = inlined_call_operand.hbm [shape: f32[128,8], index: 8, kind: output, shape index: {0}]
  %s9 = inlined_call_operand.vmem [shape: f32[128,64], index: 9, kind: output, shape index: {1}]
  %s10 = inlined_call_operand.vmem [shape: f32[128,8], index: 10, kind: output, shape index: {2}]
  %11 = xla_tuple %s8, %s9, %s10
  %s12 = sld [smem:[#allocation0]]
  $region58: #{fwd.6} parent=0
    _
  %s14 = ssub.s32 1, %s12
  %s15 = scalar_select 0, %s14, %s12
  $region1: #{fwd.6} parent=0
    #allocation2 [shape = 'u8[65536]{0}', space=vmem, size = 0x10000, scoped, tag = 'output window, operand 0, single buffered']
    #allocation3 [shape = 's32[1]{0}', space=sflag, size = 0x4, scoped, tag = 'scoped memory for fwd.6']
    %16 = vsyncpa [#allocation3], 0
    // Predicated region
    $region2: #{fwd.6} parent=1 // pred_check
      _
    $region3: #{fwd.6} parent=1 // pred_check_branch
      %18 = sbr.rel (0) target = $region5
    $region4: #{fwd.6} parent=1 // pred_region
      _
    $region5: #{fwd.6} parent=1 // pred_fallthru
      _
    // Predicated region
    $region6: #{fwd.6} parent=1 // pred_check
      _
    $region7: #{fwd.6} parent=1 // pred_check_branch
      %20 = sbr.rel (0) target = $region9
    $region8: #{fwd.6} parent=1 // pred_region
      _
    $region9: #{fwd.6} parent=1 // pred_fallthru
      _
    // Predicated region
    $region10: #{fwd.6} parent=1 // pred_check
      _
    $region11: #{fwd.6} parent=1 // pred_check_branch
      %22 = sbr.rel (0) target = $region13
    $region12: #{fwd.6} parent=1 // pred_region
      _
    $region13: #{fwd.6} parent=1 // pred_fallthru
      _
    // Predicated region
    $region14: #{fwd.6} parent=1 // pred_check
      _
    $region15: #{fwd.6} parent=1 // pred_check_branch
      %24 = sbr.rel (0) target = $region17
    $region16: #{fwd.6} parent=1 // pred_region
      _
    $region17: #{fwd.6} parent=1 // pred_fallthru
      _
    // Predicated region
    $region18: #{fwd.6} parent=1 // pred_check
      _
    $region19: #{fwd.6} parent=1 // pred_check_branch
      %26 = sbr.rel (0) target = $region21
    $region20: #{fwd.6} parent=1 // pred_region
      _
    $region21: #{fwd.6} parent=1 // pred_fallthru
      _
    // Predicated region
    $region22: #{fwd.6} parent=1 // pred_check
      _
    $region23: #{fwd.6} parent=1 // pred_check_branch
      %28 = sbr.rel (0) target = $region25
    $region24: #{fwd.6} parent=1 // pred_region
      _
    $region25: #{fwd.6} parent=1 // pred_fallthru
      _
    // Predicated region
    $region26: #{fwd.6} parent=1 // pred_check
      _
    $region27: #{fwd.6} parent=1 // pred_check_branch
      %30 = sbr.rel (0) target = $region29
    $region28: #{fwd.6} parent=1 // pred_region
      _
    $region29: #{fwd.6} parent=1 // pred_fallthru
      _
    // Predicated region
    $region30: #{fwd.6} parent=1 // pred_check
      _
    $region31: #{fwd.6} parent=1 // pred_check_branch
      %32 = sbr.rel (0) target = $region33
    $region32: #{fwd.6} parent=1 // pred_region
      _
    $region33: #{fwd.6} parent=1 // pred_fallthru
      _
    %v33 = vld [vmem:[%s0] sm:$0xff]
    %v34 = vld [vmem:[%s0 + $0x8] sm:$0xff]
    %v35 = vld [vmem:[%s0 + $0x10] sm:$0xff]
    %v36 = vld [vmem:[%s0 + $0x18] sm:$0xff]
    %v37 = vld [vmem:[%s0 + $0x20] sm:$0xff]
    %v38 = vld [vmem:[%s0 + $0x28] sm:$0xff]
    %v39 = vld [vmem:[%s0 + $0x30] sm:$0xff]
    %v40 = vld [vmem:[%s0 + $0x38] sm:$0xff]
    %v41 = vld [vmem:[%s0 + $0x40] sm:$0xff]
    %v42 = vld [vmem:[%s0 + $0x48] sm:$0xff]
    %v43 = vld [vmem:[%s0 + $0x50] sm:$0xff]
    %v44 = vld [vmem:[%s0 + $0x58] sm:$0xff]
    %v45 = vld [vmem:[%s0 + $0x60] sm:$0xff]
    %v46 = vld [vmem:[%s0 + $0x68] sm:$0xff]
    %v47 = vld [vmem:[%s0 + $0x70] sm:$0xff]
    %v48 = vld [vmem:[%s0 + $0x78] sm:$0xff]
    %v49 = vld [vmem:[%s2] sm:$0xff]
    %v50 = vld [vmem:[%s2 + $0x8] sm:$0xff]
    %v51 = vld [vmem:[%s3] sm:$0x1]
    %v53 = vperm.slane %v51, 0
    %vm55 = vcmask 130048
    %v57 = vsel %vm55, %v33, 0
    %v60 = vsel %vm55, %v34, 0
    %v63 = vsel %vm55, %v35, 0
    %v66 = vsel %vm55, %v36, 0
    %v69 = vsel %vm55, %v37, 0
    %v72 = vsel %vm55, %v38, 0
    %v75 = vsel %vm55, %v39, 0
    %v78 = vsel %vm55, %v40, 0
    %v81 = vsel %vm55, %v41, 0
    %v84 = vsel %vm55, %v42, 0
    %v87 = vsel %vm55, %v43, 0
    %v90 = vsel %vm55, %v44, 0
    %v93 = vsel %vm55, %v45, 0
    %v96 = vsel %vm55, %v46, 0
    %v99 = vsel %vm55, %v47, 0
    %v102 = vsel %vm55, %v48, 0
    %104 = vmatpush.msra.mxu0 0.0
    %105 = vmatpush.msra.mxu0 0.0
    %106 = vmatpush.msra.mxu0 0.0
    %107 = vmatpush.msra.mxu0 0.0
    %108 = vmatpush.msra.mxu0 0.0
    %109 = vmatpush.msra.mxu0 0.0
    %110 = vmatpush.msra.mxu0 0.0
    %111 = vmatpush.msra.mxu0 0.0
    %112 = vmatpush.msra.mxu0 0.0
    %113 = vmatpush.msra.mxu0 0.0
    %114 = vmatpush.msra.mxu0 0.0
    %115 = vmatpush.msra.mxu0 0.0
    %116 = vmatpush.msra.mxu0 0.0
    %117 = vmatpush.msra.mxu0 0.0
    %118 = vmatpush.msra.mxu0 %v50
    %119 = vmatpush.msra.mxu0 %v49
    %120 = vmatmul.f32.gmra.mxu0 %v57
    %v121 = vpop.f32.mrf.mxu0
    %v122 = vadd.f32 %v53, %v121
    %123 = vmatmul.f32.gmra.mxu0 %v60
    %v124 = vpop.f32.mrf.mxu0
    %v125 = vadd.f32 %v53, %v124
    %126 = vmatmul.f32.gmra.mxu0 %v63
    %v127 = vpop.f32.mrf.mxu0
    %v128 = vadd.f32 %v53, %v127
    %129 = vmatmul.f32.gmra.mxu0 %v66
    %v130 = vpop.f32.mrf.mxu0
    %v131 = vadd.f32 %v53, %v130
    %132 = vmatmul.f32.gmra.mxu0 %v69
    %v133 = vpop.f32.mrf.mxu0
    %v134 = vadd.f32 %v53, %v133
    %135 = vmatmul.f32.gmra.mxu0 %v72
    %v136 = vpop.f32.mrf.mxu0
    %v137 = vadd.f32 %v53, %v136
    %138 = vmatmul.f32.gmra.mxu0 %v75
    %v139 = vpop.f32.mrf.mxu0
    %v140 = vadd.f32 %v53, %v139
    %141 = vmatmul.f32.gmra.mxu0 %v78
    %v142 = vpop.f32.mrf.mxu0
    %v143 = vadd.f32 %v53, %v142
    %144 = vmatmul.f32.gmra.mxu0 %v81
    %v145 = vpop.f32.mrf.mxu0
    %v146 = vadd.f32 %v53, %v145
    %147 = vmatmul.f32.gmra.mxu0 %v84
    %v148 = vpop.f32.mrf.mxu0
    %v149 = vadd.f32 %v53, %v148
    %150 = vmatmul.f32.gmra.mxu0 %v87
    %v151 = vpop.f32.mrf.mxu0
    %v152 = vadd.f32 %v53, %v151
    %153 = vmatmul.f32.gmra.mxu0 %v90
    %v154 = vpop.f32.mrf.mxu0
    %v155 = vadd.f32 %v53, %v154
    %156 = vmatmul.f32.gmra.mxu0 %v93
    %v157 = vpop.f32.mrf.mxu0
    %v158 = vadd.f32 %v53, %v157
    %159 = vmatmul.f32.gmra.mxu0 %v96
    %v160 = vpop.f32.mrf.mxu0
    %v161 = vadd.f32 %v53, %v160
    %162 = vmatmul.f32.gmra.mxu0 %v99
    %v163 = vpop.f32.mrf.mxu0
    %v164 = vadd.f32 %v53, %v163
    %165 = vmatmul.f32.gmra.mxu0 %v102
    %v166 = vpop.f32.mrf.mxu0
    %v167 = vadd.f32 %v53, %v166
    %168 = vdwg.mxu0
    %v169 = vld [vmem:[%s1] sm:$0xff]
    %v170 = vld [vmem:[%s1 + $0x8] sm:$0xff]
    %v171 = vld [vmem:[%s1 + $0x10] sm:$0xff]
    %v172 = vld [vmem:[%s1 + $0x18] sm:$0xff]
    %v173 = vld [vmem:[%s1 + $0x20] sm:$0xff]
    %v174 = vld [vmem:[%s1 + $0x28] sm:$0xff]
    %v175 = vld [vmem:[%s1 + $0x30] sm:$0xff]
    %v176 = vld [vmem:[%s1 + $0x38] sm:$0xff]
    %v177 = vld [vmem:[%s1 + $0x40] sm:$0xff]
    %v178 = vld [vmem:[%s1 + $0x48] sm:$0xff]
    %v179 = vld [vmem:[%s1 + $0x50] sm:$0xff]
    %v180 = vld [vmem:[%s1 + $0x58] sm:$0xff]
    %v181 = vld [vmem:[%s1 + $0x60] sm:$0xff]
    %v182 = vld [vmem:[%s1 + $0x68] sm:$0xff]
    %v183 = vld [vmem:[%s1 + $0x70] sm:$0xff]
    %v184 = vld [vmem:[%s1 + $0x78] sm:$0xff]
    %v185 = vadd.f32 %v122, %v169
    %v186 = vadd.f32 %v125, %v170
    %v187 = vadd.f32 %v128, %v171
    %v188 = vadd.f32 %v131, %v172
    %v189 = vadd.f32 %v134, %v173
    %v190 = vadd.f32 %v137, %v174
    %v191 = vadd.f32 %v140, %v175
    %v192 = vadd.f32 %v143, %v176
    %v193 = vadd.f32 %v146, %v177
    %v194 = vadd.f32 %v149, %v178
    %v195 = vadd.f32 %v152, %v179
    %v196 = vadd.f32 %v155, %v180
    %v197 = vadd.f32 %v158, %v181
    %v198 = vadd.f32 %v161, %v182
    %v199 = vadd.f32 %v164, %v183
    %v200 = vadd.f32 %v167, %v184
    %v201 = vmax.f32 %v185, -16.0
    %v202 = vmax.f32 %v186, -16.0
    %v203 = vmax.f32 %v187, -16.0
    %v204 = vmax.f32 %v188, -16.0
    %v205 = vmax.f32 %v189, -16.0
    %v206 = vmax.f32 %v190, -16.0
    %v207 = vmax.f32 %v191, -16.0
    %v208 = vmax.f32 %v192, -16.0
    %v209 = vmax.f32 %v193, -16.0
    %v210 = vmax.f32 %v194, -16.0
    %v211 = vmax.f32 %v195, -16.0
    %v212 = vmax.f32 %v196, -16.0
    %v213 = vmax.f32 %v197, -16.0
    %v214 = vmax.f32 %v198, -16.0
    %v215 = vmax.f32 %v199, -16.0
    %v216 = vmax.f32 %v200, -16.0
    %v217 = vmin.f32 %v201, 16.0
    %v218 = vmin.f32 %v202, 16.0
    %v219 = vmin.f32 %v203, 16.0
    %v220 = vmin.f32 %v204, 16.0
    %v221 = vmin.f32 %v205, 16.0
    %v222 = vmin.f32 %v206, 16.0
    %v223 = vmin.f32 %v207, 16.0
    %v224 = vmin.f32 %v208, 16.0
    %v225 = vmin.f32 %v209, 16.0
    %v226 = vmin.f32 %v210, 16.0
    %v227 = vmin.f32 %v211, 16.0
    %v228 = vmin.f32 %v212, 16.0
    %v229 = vmin.f32 %v213, 16.0
    %v230 = vmin.f32 %v214, 16.0
    %v231 = vmin.f32 %v215, 16.0
    %v232 = vmin.f32 %v216, 16.0
    %vm233 = vcmask 64512
    %234 = vst.msk [vmem:[#allocation2] sm:$0xff] %vm233, %v217
    %235 = vst.msk [vmem:[#allocation2 + $0x8] sm:$0xff] %vm233, %v218
    %236 = vst.msk [vmem:[#allocation2 + $0x10] sm:$0xff] %vm233, %v219
    %237 = vst.msk [vmem:[#allocation2 + $0x18] sm:$0xff] %vm233, %v220
    %238 = vst.msk [vmem:[#allocation2 + $0x20] sm:$0xff] %vm233, %v221
    %239 = vst.msk [vmem:[#allocation2 + $0x28] sm:$0xff] %vm233, %v222
    %240 = vst.msk [vmem:[#allocation2 + $0x30] sm:$0xff] %vm233, %v223
    %241 = vst.msk [vmem:[#allocation2 + $0x38] sm:$0xff] %vm233, %v224
    %242 = vst.msk [vmem:[#allocation2 + $0x40] sm:$0xff] %vm233, %v225
    %243 = vst.msk [vmem:[#allocation2 + $0x48] sm:$0xff] %vm233, %v226
    %244 = vst.msk [vmem:[#allocation2 + $0x50] sm:$0xff] %vm233, %v227
    %245 = vst.msk [vmem:[#allocation2 + $0x58] sm:$0xff] %vm233, %v228
    %246 = vst.msk [vmem:[#allocation2 + $0x60] sm:$0xff] %vm233, %v229
    %247 = vst.msk [vmem:[#allocation2 + $0x68] sm:$0xff] %vm233, %v230
    %248 = vst.msk [vmem:[#allocation2 + $0x70] sm:$0xff] %vm233, %v231
    %249 = vst.msk [vmem:[#allocation2 + $0x78] sm:$0xff] %vm233, %v232
    %v250 = vld [vmem:[%s4] sm:$0xff]
    %v251 = vld [vmem:[%s5] sm:$0x1]
    %v253 = vperm.slane %v251, 0
    %v256 = vsel %vm233, %v217, 0
    %v259 = vsel %vm233, %v218, 0
    %v262 = vsel %vm233, %v219, 0
    %v265 = vsel %vm233, %v220, 0
    %v268 = vsel %vm233, %v221, 0
    %v271 = vsel %vm233, %v222, 0
    %v274 = vsel %vm233, %v223, 0
    %v277 = vsel %vm233, %v224, 0
    %v280 = vsel %vm233, %v225, 0
    %v283 = vsel %vm233, %v226, 0
    %v286 = vsel %vm233, %v227, 0
    %v289 = vsel %vm233, %v228, 0
    %v292 = vsel %vm233, %v229, 0
    %v295 = vsel %vm233, %v230, 0
    %v298 = vsel %vm233, %v231, 0
    %v301 = vsel %vm233, %v232, 0
    %303 = vmatpush.msra.mxu0 0.0
    %304 = vmatpush.msra.mxu0 0.0
    %305 = vmatpush.msra.mxu0 0.0
    %306 = vmatpush.msra.mxu0 0.0
    %307 = vmatpush.msra.mxu0 0.0
    %308 = vmatpush.msra.mxu0 0.0
    %309 = vmatpush.msra.mxu0 0.0
    %310 = vmatpush.msra.mxu0 0.0
    %311 = vmatpush.msra.mxu0 0.0
    %312 = vmatpush.msra.mxu0 0.0
    %313 = vmatpush.msra.mxu0 0.0
    %314 = vmatpush.msra.mxu0 0.0
    %315 = vmatpush.msra.mxu0 0.0
    %316 = vmatpush.msra.mxu0 0.0
    %317 = vmatpush.msra.mxu0 0.0
    %318 = vmatpush.msra.mxu0 %v250
    %319 = vmatmul.f32.gmra.mxu0 %v256
    %v320 = vpop.f32.mrf.mxu0
    %v321 = vadd.f32 %v253, %v320
    %322 = vmatmul.f32.gmra.mxu0 %v259
    %v323 = vpop.f32.mrf.mxu0
    %v324 = vadd.f32 %v253, %v323
    %325 = vmatmul.f32.gmra.mxu0 %v262
    %v326 = vpop.f32.mrf.mxu0
    %v327 = vadd.f32 %v253, %v326
    %328 = vmatmul.f32.gmra.mxu0 %v265
    %v329 = vpop.f32.mrf.mxu0
    %v330 = vadd.f32 %v253, %v329
    %331 = vmatmul.f32.gmra.mxu0 %v268
    %v332 = vpop.f32.mrf.mxu0
    %v333 = vadd.f32 %v253, %v332
    %334 = vmatmul.f32.gmra.mxu0 %v271
    %v335 = vpop.f32.mrf.mxu0
    %v336 = vadd.f32 %v253, %v335
    %337 = vmatmul.f32.gmra.mxu0 %v274
    %v338 = vpop.f32.mrf.mxu0
    %v339 = vadd.f32 %v253, %v338
    %340 = vmatmul.f32.gmra.mxu0 %v277
    %v341 = vpop.f32.mrf.mxu0
    %v342 = vadd.f32 %v253, %v341
    %343 = vmatmul.f32.gmra.mxu0 %v280
    %v344 = vpop.f32.mrf.mxu0
    %v345 = vadd.f32 %v253, %v344
    %346 = vmatmul.f32.gmra.mxu0 %v283
    %v347 = vpop.f32.mrf.mxu0
    %v348 = vadd.f32 %v253, %v347
    %349 = vmatmul.f32.gmra.mxu0 %v286
    %v350 = vpop.f32.mrf.mxu0
    %v351 = vadd.f32 %v253, %v350
    %352 = vmatmul.f32.gmra.mxu0 %v289
    %v353 = vpop.f32.mrf.mxu0
    %v354 = vadd.f32 %v253, %v353
    %355 = vmatmul.f32.gmra.mxu0 %v292
    %v356 = vpop.f32.mrf.mxu0
    %v357 = vadd.f32 %v253, %v356
    %358 = vmatmul.f32.gmra.mxu0 %v295
    %v359 = vpop.f32.mrf.mxu0
    %v360 = vadd.f32 %v253, %v359
    %361 = vmatmul.f32.gmra.mxu0 %v298
    %v362 = vpop.f32.mrf.mxu0
    %v363 = vadd.f32 %v253, %v362
    %364 = vmatmul.f32.gmra.mxu0 %v301
    %v365 = vpop.f32.mrf.mxu0
    %v366 = vadd.f32 %v253, %v365
    %367 = vdwg.mxu0
    %vm368 = vcmask 523264
    %369 = vst.msk [vmem:[%s9] sm:$0xff] %vm368, %v321
    %370 = vst.msk [vmem:[%s9 + $0x8] sm:$0xff] %vm368, %v324
    %371 = vst.msk [vmem:[%s9 + $0x10] sm:$0xff] %vm368, %v327
    %372 = vst.msk [vmem:[%s9 + $0x18] sm:$0xff] %vm368, %v330
    %373 = vst.msk [vmem:[%s9 + $0x20] sm:$0xff] %vm368, %v333
    %374 = vst.msk [vmem:[%s9 + $0x28] sm:$0xff] %vm368, %v336
    %375 = vst.msk [vmem:[%s9 + $0x30] sm:$0xff] %vm368, %v339
    %376 = vst.msk [vmem:[%s9 + $0x38] sm:$0xff] %vm368, %v342
    %377 = vst.msk [vmem:[%s9 + $0x40] sm:$0xff] %vm368, %v345
    %378 = vst.msk [vmem:[%s9 + $0x48] sm:$0xff] %vm368, %v348
    %379 = vst.msk [vmem:[%s9 + $0x50] sm:$0xff] %vm368, %v351
    %380 = vst.msk [vmem:[%s9 + $0x58] sm:$0xff] %vm368, %v354
    %381 = vst.msk [vmem:[%s9 + $0x60] sm:$0xff] %vm368, %v357
    %382 = vst.msk [vmem:[%s9 + $0x68] sm:$0xff] %vm368, %v360
    %383 = vst.msk [vmem:[%s9 + $0x70] sm:$0xff] %vm368, %v363
    %384 = vst.msk [vmem:[%s9 + $0x78] sm:$0xff] %vm368, %v366
    %v385 = vld [vmem:[%s7] sm:$0x1]
    %v386 = vsub.f32 0.0, %v385
    %v387 = vmul.f32 %v386, 1.442695
    %v388 = vpow.pop %v387
    %v389 = vld [vmem:[%s6] sm:$0x1]
    %v391 = vperm.slane %v389, 0
    %v393 = vsub.f32 %v217, %v391
    %v394 = vsub.f32 %v218, %v391
    %v395 = vsub.f32 %v219, %v391
    %v396 = vsub.f32 %v220, %v391
    %v397 = vsub.f32 %v221, %v391
    %v398 = vsub.f32 %v222, %v391
    %v399 = vsub.f32 %v223, %v391
    %v400 = vsub.f32 %v224, %v391
    %v401 = vsub.f32 %v225, %v391
    %v402 = vsub.f32 %v226, %v391
    %v403 = vsub.f32 %v227, %v391
    %v404 = vsub.f32 %v228, %v391
    %v405 = vsub.f32 %v229, %v391
    %v406 = vsub.f32 %v230, %v391
    %v407 = vsub.f32 %v231, %v391
    %v408 = vsub.f32 %v232, %v391
    %v409 = vadd.f32 %v393, 0.5
    %v410 = vadd.f32 %v394, 0.5
    %v411 = vadd.f32 %v395, 0.5
    %v412 = vadd.f32 %v396, 0.5
    %v413 = vadd.f32 %v397, 0.5
    %v414 = vadd.f32 %v398, 0.5
    %v415 = vadd.f32 %v399, 0.5
    %v416 = vadd.f32 %v400, 0.5
    %v417 = vadd.f32 %v401, 0.5
    %v418 = vadd.f32 %v402, 0.5
    %v419 = vadd.f32 %v403, 0.5
    %v420 = vadd.f32 %v404, 0.5
    %v421 = vadd.f32 %v405, 0.5
    %v422 = vadd.f32 %v406, 0.5
    %v423 = vadd.f32 %v407, 0.5
    %v424 = vadd.f32 %v408, 0.5
    %v426 = vperm.slane %v388, 0
    %v428 = vmul.f32 %v409, %v426
    %v429 = vmul.f32 %v410, %v426
    %v430 = vmul.f32 %v411, %v426
    %v431 = vmul.f32 %v412, %v426
    %v432 = vmul.f32 %v413, %v426
    %v433 = vmul.f32 %v414, %v426
    %v434 = vmul.f32 %v415, %v426
    %v435 = vmul.f32 %v416, %v426
    %v436 = vmul.f32 %v417, %v426
    %v437 = vmul.f32 %v418, %v426
    %v438 = vmul.f32 %v419, %v426
    %v439 = vmul.f32 %v420, %v426
    %v440 = vmul.f32 %v421, %v426
    %v441 = vmul.f32 %v422, %v426
    %v442 = vmul.f32 %v423, %v426
    %v443 = vmul.f32 %v424, %v426
    %v444 = vxor.u32 %v428, 2147483648
    %v445 = vxor.u32 %v429, 2147483648
    %v446 = vxor.u32 %v430, 2147483648
    %v447 = vxor.u32 %v431, 2147483648
    %v448 = vxor.u32 %v432, 2147483648
    %v449 = vxor.u32 %v433, 2147483648
    %v450 = vxor.u32 %v434, 2147483648
    %v451 = vxor.u32 %v435, 2147483648
    %v452 = vxor.u32 %v436, 2147483648
    %v453 = vxor.u32 %v437, 2147483648
    %v454 = vxor.u32 %v438, 2147483648
    %v455 = vxor.u32 %v439, 2147483648
    %v456 = vxor.u32 %v440, 2147483648
    %v457 = vxor.u32 %v441, 2147483648
    %v458 = vxor.u32 %v442, 2147483648
    %v459 = vxor.u32 %v443, 2147483648
    %v460 = vmul.f32 %v444, 1.442695
    %v461 = vpow.pop %v460
    %v462 = vmul.f32 %v445, 1.442695
    %v463 = vpow.pop %v462
    %v464 = vmul.f32 %v446, 1.442695
    %v465 = vpow.pop %v464
    %v466 = vmul.f32 %v447, 1.442695
    %v467 = vpow.pop %v466
    %v468 = vmul.f32 %v448, 1.442695
    %v469 = vpow.pop %v468
    %v470 = vmul.f32 %v449, 1.442695
    %v471 = vpow.pop %v470
    %v472 = vmul.f32 %v450, 1.442695
    %v473 = vpow.pop %v472
    %v474 = vmul.f32 %v451, 1.442695
    %v475 = vpow.pop %v474
    %v476 = vmul.f32 %v452, 1.442695
    %v477 = vpow.pop %v476
    %v478 = vmul.f32 %v453, 1.442695
    %v479 = vpow.pop %v478
    %v480 = vmul.f32 %v454, 1.442695
    %v481 = vpow.pop %v480
    %v482 = vmul.f32 %v455, 1.442695
    %v483 = vpow.pop %v482
    %v484 = vmul.f32 %v456, 1.442695
    %v485 = vpow.pop %v484
    %v486 = vmul.f32 %v457, 1.442695
    %v487 = vpow.pop %v486
    %v488 = vmul.f32 %v458, 1.442695
    %v489 = vpow.pop %v488
    %v490 = vmul.f32 %v459, 1.442695
    %v491 = vpow.pop %v490
    %v492 = vadd.f32 %v461, 1.0
    %v493 = vadd.f32 %v463, 1.0
    %v494 = vadd.f32 %v465, 1.0
    %v495 = vadd.f32 %v467, 1.0
    %v496 = vadd.f32 %v469, 1.0
    %v497 = vadd.f32 %v471, 1.0
    %v498 = vadd.f32 %v473, 1.0
    %v499 = vadd.f32 %v475, 1.0
    %v500 = vadd.f32 %v477, 1.0
    %v501 = vadd.f32 %v479, 1.0
    %v502 = vadd.f32 %v481, 1.0
    %v503 = vadd.f32 %v483, 1.0
    %v504 = vadd.f32 %v485, 1.0
    %v505 = vadd.f32 %v487, 1.0
    %v506 = vadd.f32 %v489, 1.0
    %v507 = vadd.f32 %v491, 1.0
    %v508 = vrcp.pop %v492
    %v509 = vmul.f32 %v492, %v508
    %v510 = vsub.f32 1.0, %v509
    %v511 = vmul.f32 %v508, %v510
    %v512 = vadd.f32 %v508, %v511
    %vm513 = vweird.f32 %v492
    %vm514 = vweird.f32 %v508
    %vm515 = vmor %vm513, %vm514
    %v516 = vsel %vm515, %v508, %v512
    %v517 = vand.u32 2147483647, %v492
    %vm518 = vcmp.eq.f32.partialorder %v517, 8.507059e+37
    %v519 = vand.u32 %v492, 2147483648
    %v520 = vor.u32 1.1754944e-38, %v519
    %v521 = vsel %vm518, %v520, %v516
    %v522 = vmul.f32 1.0, %v521
    %v523 = vrcp.pop %v493
    %v524 = vmul.f32 %v493, %v523
    %v525 = vsub.f32 1.0, %v524
    %v526 = vmul.f32 %v523, %v525
    %v527 = vadd.f32 %v523, %v526
    %vm528 = vweird.f32 %v493
    %vm529 = vweird.f32 %v523
    %vm530 = vmor %vm528, %vm529
    %v531 = vsel %vm530, %v523, %v527
    %v532 = vand.u32 2147483647, %v493
    %vm533 = vcmp.eq.f32.partialorder %v532, 8.507059e+37
    %v534 = vand.u32 %v493, 2147483648
    %v535 = vor.u32 1.1754944e-38, %v534
    %v536 = vsel %vm533, %v535, %v531
    %v537 = vmul.f32 1.0, %v536
    %v538 = vrcp.pop %v494
    %v539 = vmul.f32 %v494, %v538
    %v540 = vsub.f32 1.0, %v539
    %v541 = vmul.f32 %v538, %v540
    %v542 = vadd.f32 %v538, %v541
    %vm543 = vweird.f32 %v494
    %vm544 = vweird.f32 %v538
    %vm545 = vmor %vm543, %vm544
    %v546 = vsel %vm545, %v538, %v542
    %v547 = vand.u32 2147483647, %v494
    %vm548 = vcmp.eq.f32.partialorder %v547, 8.507059e+37
    %v549 = vand.u32 %v494, 2147483648
    %v550 = vor.u32 1.1754944e-38, %v549
    %v551 = vsel %vm548, %v550, %v546
    %v552 = vmul.f32 1.0, %v551
    %v553 = vrcp.pop %v495
    %v554 = vmul.f32 %v495, %v553
    %v555 = vsub.f32 1.0, %v554
    %v556 = vmul.f32 %v553, %v555
    %v557 = vadd.f32 %v553, %v556
    %vm558 = vweird.f32 %v495
    %vm559 = vweird.f32 %v553
    %vm560 = vmor %vm558, %vm559
    %v561 = vsel %vm560, %v553, %v557
    %v562 = vand.u32 2147483647, %v495
    %vm563 = vcmp.eq.f32.partialorder %v562, 8.507059e+37
    %v564 = vand.u32 %v495, 2147483648
    %v565 = vor.u32 1.1754944e-38, %v564
    %v566 = vsel %vm563, %v565, %v561
    %v567 = vmul.f32 1.0, %v566
    %v568 = vrcp.pop %v496
    %v569 = vmul.f32 %v496, %v568
    %v570 = vsub.f32 1.0, %v569
    %v571 = vmul.f32 %v568, %v570
    %v572 = vadd.f32 %v568, %v571
    %vm573 = vweird.f32 %v496
    %vm574 = vweird.f32 %v568
    %vm575 = vmor %vm573, %vm574
    %v576 = vsel %vm575, %v568, %v572
    %v577 = vand.u32 2147483647, %v496
    %vm578 = vcmp.eq.f32.partialorder %v577, 8.507059e+37
    %v579 = vand.u32 %v496, 2147483648
    %v580 = vor.u32 1.1754944e-38, %v579
    %v581 = vsel %vm578, %v580, %v576
    %v582 = vmul.f32 1.0, %v581
    %v583 = vrcp.pop %v497
    %v584 = vmul.f32 %v497, %v583
    %v585 = vsub.f32 1.0, %v584
    %v586 = vmul.f32 %v583, %v585
    %v587 = vadd.f32 %v583, %v586
    %vm588 = vweird.f32 %v497
    %vm589 = vweird.f32 %v583
    %vm590 = vmor %vm588, %vm589
    %v591 = vsel %vm590, %v583, %v587
    %v592 = vand.u32 2147483647, %v497
    %vm593 = vcmp.eq.f32.partialorder %v592, 8.507059e+37
    %v594 = vand.u32 %v497, 2147483648
    %v595 = vor.u32 1.1754944e-38, %v594
    %v596 = vsel %vm593, %v595, %v591
    %v597 = vmul.f32 1.0, %v596
    %v598 = vrcp.pop %v498
    %v599 = vmul.f32 %v498, %v598
    %v600 = vsub.f32 1.0, %v599
    %v601 = vmul.f32 %v598, %v600
    %v602 = vadd.f32 %v598, %v601
    %vm603 = vweird.f32 %v498
    %vm604 = vweird.f32 %v598
    %vm605 = vmor %vm603, %vm604
    %v606 = vsel %vm605, %v598, %v602
    %v607 = vand.u32 2147483647, %v498
    %vm608 = vcmp.eq.f32.partialorder %v607, 8.507059e+37
    %v609 = vand.u32 %v498, 2147483648
    %v610 = vor.u32 1.1754944e-38, %v609
    %v611 = vsel %vm608, %v610, %v606
    %v612 = vmul.f32 1.0, %v611
    %v613 = vrcp.pop %v499
    %v614 = vmul.f32 %v499, %v613
    %v615 = vsub.f32 1.0, %v614
    %v616 = vmul.f32 %v613, %v615
    %v617 = vadd.f32 %v613, %v616
    %vm618 = vweird.f32 %v499
    %vm619 = vweird.f32 %v613
    %vm620 = vmor %vm618, %vm619
    %v621 = vsel %vm620, %v613, %v617
    %v622 = vand.u32 2147483647, %v499
    %vm623 = vcmp.eq.f32.partialorder %v622, 8.507059e+37
    %v624 = vand.u32 %v499, 2147483648
    %v625 = vor.u32 1.1754944e-38, %v624
    %v626 = vsel %vm623, %v625, %v621
    %v627 = vmul.f32 1.0, %v626
    %v628 = vrcp.pop %v500
    %v629 = vmul.f32 %v500, %v628
    %v630 = vsub.f32 1.0, %v629
    %v631 = vmul.f32 %v628, %v630
    %v632 = vadd.f32 %v628, %v631
    %vm633 = vweird.f32 %v500
    %vm634 = vweird.f32 %v628
    %vm635 = vmor %vm633, %vm634
    %v636 = vsel %vm635, %v628, %v632
    %v637 = vand.u32 2147483647, %v500
    %vm638 = vcmp.eq.f32.partialorder %v637, 8.507059e+37
    %v639 = vand.u32 %v500, 2147483648
    %v640 = vor.u32 1.1754944e-38, %v639
    %v641 = vsel %vm638, %v640, %v636
    %v642 = vmul.f32 1.0, %v641
    %v643 = vrcp.pop %v501
    %v644 = vmul.f32 %v501, %v643
    %v645 = vsub.f32 1.0, %v644
    %v646 = vmul.f32 %v643, %v645
    %v647 = vadd.f32 %v643, %v646
    %vm648 = vweird.f32 %v501
    %vm649 = vweird.f32 %v643
    %vm650 = vmor %vm648, %vm649
    %v651 = vsel %vm650, %v643, %v647
    %v652 = vand.u32 2147483647, %v501
    %vm653 = vcmp.eq.f32.partialorder %v652, 8.507059e+37
    %v654 = vand.u32 %v501, 2147483648
    %v655 = vor.u32 1.1754944e-38, %v654
    %v656 = vsel %vm653, %v655, %v651
    %v657 = vmul.f32 1.0, %v656
    %v658 = vrcp.pop %v502
    %v659 = vmul.f32 %v502, %v658
    %v660 = vsub.f32 1.0, %v659
    %v661 = vmul.f32 %v658, %v660
    %v662 = vadd.f32 %v658, %v661
    %vm663 = vweird.f32 %v502
    %vm664 = vweird.f32 %v658
    %vm665 = vmor %vm663, %vm664
    %v666 = vsel %vm665, %v658, %v662
    %v667 = vand.u32 2147483647, %v502
    %vm668 = vcmp.eq.f32.partialorder %v667, 8.507059e+37
    %v669 = vand.u32 %v502, 2147483648
    %v670 = vor.u32 1.1754944e-38, %v669
    %v671 = vsel %vm668, %v670, %v666
    %v672 = vmul.f32 1.0, %v671
    %v673 = vrcp.pop %v503
    %v674 = vmul.f32 %v503, %v673
    %v675 = vsub.f32 1.0, %v674
    %v676 = vmul.f32 %v673, %v675
    %v677 = vadd.f32 %v673, %v676
    %vm678 = vweird.f32 %v503
    %vm679 = vweird.f32 %v673
    %vm680 = vmor %vm678, %vm679
    %v681 = vsel %vm680, %v673, %v677
    %v682 = vand.u32 2147483647, %v503
    %vm683 = vcmp.eq.f32.partialorder %v682, 8.507059e+37
    %v684 = vand.u32 %v503, 2147483648
    %v685 = vor.u32 1.1754944e-38, %v684
    %v686 = vsel %vm683, %v685, %v681
    %v687 = vmul.f32 1.0, %v686
    %v688 = vrcp.pop %v504
    %v689 = vmul.f32 %v504, %v688
    %v690 = vsub.f32 1.0, %v689
    %v691 = vmul.f32 %v688, %v690
    %v692 = vadd.f32 %v688, %v691
    %vm693 = vweird.f32 %v504
    %vm694 = vweird.f32 %v688
    %vm695 = vmor %vm693, %vm694
    %v696 = vsel %vm695, %v688, %v692
    %v697 = vand.u32 2147483647, %v504
    %vm698 = vcmp.eq.f32.partialorder %v697, 8.507059e+37
    %v699 = vand.u32 %v504, 2147483648
    %v700 = vor.u32 1.1754944e-38, %v699
    %v701 = vsel %vm698, %v700, %v696
    %v702 = vmul.f32 1.0, %v701
    %v703 = vrcp.pop %v505
    %v704 = vmul.f32 %v505, %v703
    %v705 = vsub.f32 1.0, %v704
    %v706 = vmul.f32 %v703, %v705
    %v707 = vadd.f32 %v703, %v706
    %vm708 = vweird.f32 %v505
    %vm709 = vweird.f32 %v703
    %vm710 = vmor %vm708, %vm709
    %v711 = vsel %vm710, %v703, %v707
    %v712 = vand.u32 2147483647, %v505
    %vm713 = vcmp.eq.f32.partialorder %v712, 8.507059e+37
    %v714 = vand.u32 %v505, 2147483648
    %v715 = vor.u32 1.1754944e-38, %v714
    %v716 = vsel %vm713, %v715, %v711
    %v717 = vmul.f32 1.0, %v716
    %v718 = vrcp.pop %v506
    %v719 = vmul.f32 %v506, %v718
    %v720 = vsub.f32 1.0, %v719
    %v721 = vmul.f32 %v718, %v720
    %v722 = vadd.f32 %v718, %v721
    %vm723 = vweird.f32 %v506
    %vm724 = vweird.f32 %v718
    %vm725 = vmor %vm723, %vm724
    %v726 = vsel %vm725, %v718, %v722
    %v727 = vand.u32 2147483647, %v506
    %vm728 = vcmp.eq.f32.partialorder %v727, 8.507059e+37
    %v729 = vand.u32 %v506, 2147483648
    %v730 = vor.u32 1.1754944e-38, %v729
    %v731 = vsel %vm728, %v730, %v726
    %v732 = vmul.f32 1.0, %v731
    %v733 = vrcp.pop %v507
    %v734 = vmul.f32 %v507, %v733
    %v735 = vsub.f32 1.0, %v734
    %v736 = vmul.f32 %v733, %v735
    %v737 = vadd.f32 %v733, %v736
    %vm738 = vweird.f32 %v507
    %vm739 = vweird.f32 %v733
    %vm740 = vmor %vm738, %vm739
    %v741 = vsel %vm740, %v733, %v737
    %v742 = vand.u32 2147483647, %v507
    %vm743 = vcmp.eq.f32.partialorder %v742, 8.507059e+37
    %v744 = vand.u32 %v507, 2147483648
    %v745 = vor.u32 1.1754944e-38, %v744
    %v746 = vsel %vm743, %v745, %v741
    %v747 = vmul.f32 1.0, %v746
    %v748 = vsub.f32 %v393, 0.5
    %v749 = vsub.f32 %v394, 0.5
    %v750 = vsub.f32 %v395, 0.5
    %v751 = vsub.f32 %v396, 0.5
    %v752 = vsub.f32 %v397, 0.5
    %v753 = vsub.f32 %v398, 0.5
    %v754 = vsub.f32 %v399, 0.5
    %v755 = vsub.f32 %v400, 0.5
    %v756 = vsub.f32 %v401, 0.5
    %v757 = vsub.f32 %v402, 0.5
    %v758 = vsub.f32 %v403, 0.5
    %v759 = vsub.f32 %v404, 0.5
    %v760 = vsub.f32 %v405, 0.5
    %v761 = vsub.f32 %v406, 0.5
    %v762 = vsub.f32 %v407, 0.5
    %v763 = vsub.f32 %v408, 0.5
    %v764 = vmul.f32 %v748, %v426
    %v765 = vmul.f32 %v749, %v426
    %v766 = vmul.f32 %v750, %v426
    %v767 = vmul.f32 %v751, %v426
    %v768 = vmul.f32 %v752, %v426
    %v769 = vmul.f32 %v753, %v426
    %v770 = vmul.f32 %v754, %v426
    %v771 = vmul.f32 %v755, %v426
    %v772 = vmul.f32 %v756, %v426
    %v773 = vmul.f32 %v757, %v426
    %v774 = vmul.f32 %v758, %v426
    %v775 = vmul.f32 %v759, %v426
    %v776 = vmul.f32 %v760, %v426
    %v777 = vmul.f32 %v761, %v426
    %v778 = vmul.f32 %v762, %v426
    %v779 = vmul.f32 %v763, %v426
    %v780 = vxor.u32 %v764, 2147483648
    %v781 = vxor.u32 %v765, 2147483648
    %v782 = vxor.u32 %v766, 2147483648
    %v783 = vxor.u32 %v767, 2147483648
    %v784 = vxor.u32 %v768, 2147483648
    %v785 = vxor.u32 %v769, 2147483648
    %v786 = vxor.u32 %v770, 2147483648
    %v787 = vxor.u32 %v771, 2147483648
    %v788 = vxor.u32 %v772, 2147483648
    %v789 = vxor.u32 %v773, 2147483648
    %v790 = vxor.u32 %v774, 2147483648
    %v791 = vxor.u32 %v775, 2147483648
    %v792 = vxor.u32 %v776, 2147483648
    %v793 = vxor.u32 %v777, 2147483648
    %v794 = vxor.u32 %v778, 2147483648
    %v795 = vxor.u32 %v779, 2147483648
    %v796 = vmul.f32 %v780, 1.442695
    %v797 = vpow.pop %v796
    %v798 = vmul.f32 %v781, 1.442695
    %v799 = vpow.pop %v798
    %v800 = vmul.f32 %v782, 1.442695
    %v801 = vpow.pop %v800
    %v802 = vmul.f32 %v783, 1.442695
    %v803 = vpow.pop %v802
    %v804 = vmul.f32 %v784, 1.442695
    %v805 = vpow.pop %v804
    %v806 = vmul.f32 %v785, 1.442695
    %v807 = vpow.pop %v806
    %v808 = vmul.f32 %v786, 1.442695
    %v809 = vpow.pop %v808
    %v810 = vmul.f32 %v787, 1.442695
    %v811 = vpow.pop %v810
    %v812 = vmul.f32 %v788, 1.442695
    %v813 = vpow.pop %v812
    %v814 = vmul.f32 %v789, 1.442695
    %v815 = vpow.pop %v814
    %v816 = vmul.f32 %v790, 1.442695
    %v817 = vpow.pop %v816
    %v818 = vmul.f32 %v791, 1.442695
    %v819 = vpow.pop %v818
    %v820 = vmul.f32 %v792, 1.442695
    %v821 = vpow.pop %v820
    %v822 = vmul.f32 %v793, 1.442695
    %v823 = vpow.pop %v822
    %v824 = vmul.f32 %v794, 1.442695
    %v825 = vpow.pop %v824
    %v826 = vmul.f32 %v795, 1.442695
    %v827 = vpow.pop %v826
    %v828 = vadd.f32 %v797, 1.0
    %v829 = vadd.f32 %v799, 1.0
    %v830 = vadd.f32 %v801, 1.0
    %v831 = vadd.f32 %v803, 1.0
    %v832 = vadd.f32 %v805, 1.0
    %v833 = vadd.f32 %v807, 1.0
    %v834 = vadd.f32 %v809, 1.0
    %v835 = vadd.f32 %v811, 1.0
    %v836 = vadd.f32 %v813, 1.0
    %v837 = vadd.f32 %v815, 1.0
    %v838 = vadd.f32 %v817, 1.0
    %v839 = vadd.f32 %v819, 1.0
    %v840 = vadd.f32 %v821, 1.0
    %v841 = vadd.f32 %v823, 1.0
    %v842 = vadd.f32 %v825, 1.0
    %v843 = vadd.f32 %v827, 1.0
    %v844 = vrcp.pop %v828
    %v845 = vmul.f32 %v828, %v844
    %v846 = vsub.f32 1.0, %v845
    %v847 = vmul.f32 %v844, %v846
    %v848 = vadd.f32 %v844, %v847
    %vm849 = vweird.f32 %v828
    %vm850 = vweird.f32 %v844
    %vm851 = vmor %vm849, %vm850
    %v852 = vsel %vm851, %v844, %v848
    %v853 = vand.u32 2147483647, %v828
    %vm854 = vcmp.eq.f32.partialorder %v853, 8.507059e+37
    %v855 = vand.u32 %v828, 2147483648
    %v856 = vor.u32 1.1754944e-38, %v855
    %v857 = vsel %vm854, %v856, %v852
    %v858 = vmul.f32 1.0, %v857
    %v859 = vrcp.pop %v829
    %v860 = vmul.f32 %v829, %v859
    %v861 = vsub.f32 1.0, %v860
    %v862 = vmul.f32 %v859, %v861
    %v863 = vadd.f32 %v859, %v862
    %vm864 = vweird.f32 %v829
    %vm865 = vweird.f32 %v859
    %vm866 = vmor %vm864, %vm865
    %v867 = vsel %vm866, %v859, %v863
    %v868 = vand.u32 2147483647, %v829
    %vm869 = vcmp.eq.f32.partialorder %v868, 8.507059e+37
    %v870 = vand.u32 %v829, 2147483648
    %v871 = vor.u32 1.1754944e-38, %v870
    %v872 = vsel %vm869, %v871, %v867
    %v873 = vmul.f32 1.0, %v872
    %v874 = vrcp.pop %v830
    %v875 = vmul.f32 %v830, %v874
    %v876 = vsub.f32 1.0, %v875
    %v877 = vmul.f32 %v874, %v876
    %v878 = vadd.f32 %v874, %v877
    %vm879 = vweird.f32 %v830
    %vm880 = vweird.f32 %v874
    %vm881 = vmor %vm879, %vm880
    %v882 = vsel %vm881, %v874, %v878
    %v883 = vand.u32 2147483647, %v830
    %vm884 = vcmp.eq.f32.partialorder %v883, 8.507059e+37
    %v885 = vand.u32 %v830, 2147483648
    %v886 = vor.u32 1.1754944e-38, %v885
    %v887 = vsel %vm884, %v886, %v882
    %v888 = vmul.f32 1.0, %v887
    %v889 = vrcp.pop %v831
    %v890 = vmul.f32 %v831, %v889
    %v891 = vsub.f32 1.0, %v890
    %v892 = vmul.f32 %v889, %v891
    %v893 = vadd.f32 %v889, %v892
    %vm894 = vweird.f32 %v831
    %vm895 = vweird.f32 %v889
    %vm896 = vmor %vm894, %vm895
    %v897 = vsel %vm896, %v889, %v893
    %v898 = vand.u32 2147483647, %v831
    %vm899 = vcmp.eq.f32.partialorder %v898, 8.507059e+37
    %v900 = vand.u32 %v831, 2147483648
    %v901 = vor.u32 1.1754944e-38, %v900
    %v902 = vsel %vm899, %v901, %v897
    %v903 = vmul.f32 1.0, %v902
    %v904 = vrcp.pop %v832
    %v905 = vmul.f32 %v832, %v904
    %v906 = vsub.f32 1.0, %v905
    %v907 = vmul.f32 %v904, %v906
    %v908 = vadd.f32 %v904, %v907
    %vm909 = vweird.f32 %v832
    %vm910 = vweird.f32 %v904
    %vm911 = vmor %vm909, %vm910
    %v912 = vsel %vm911, %v904, %v908
    %v913 = vand.u32 2147483647, %v832
    %vm914 = vcmp.eq.f32.partialorder %v913, 8.507059e+37
    %v915 = vand.u32 %v832, 2147483648
    %v916 = vor.u32 1.1754944e-38, %v915
    %v917 = vsel %vm914, %v916, %v912
    %v918 = vmul.f32 1.0, %v917
    %v919 = vrcp.pop %v833
    %v920 = vmul.f32 %v833, %v919
    %v921 = vsub.f32 1.0, %v920
    %v922 = vmul.f32 %v919, %v921
    %v923 = vadd.f32 %v919, %v922
    %vm924 = vweird.f32 %v833
    %vm925 = vweird.f32 %v919
    %vm926 = vmor %vm924, %vm925
    %v927 = vsel %vm926, %v919, %v923
    %v928 = vand.u32 2147483647, %v833
    %vm929 = vcmp.eq.f32.partialorder %v928, 8.507059e+37
    %v930 = vand.u32 %v833, 2147483648
    %v931 = vor.u32 1.1754944e-38, %v930
    %v932 = vsel %vm929, %v931, %v927
    %v933 = vmul.f32 1.0, %v932
    %v934 = vrcp.pop %v834
    %v935 = vmul.f32 %v834, %v934
    %v936 = vsub.f32 1.0, %v935
    %v937 = vmul.f32 %v934, %v936
    %v938 = vadd.f32 %v934, %v937
    %vm939 = vweird.f32 %v834
    %vm940 = vweird.f32 %v934
    %vm941 = vmor %vm939, %vm940
    %v942 = vsel %vm941, %v934, %v938
    %v943 = vand.u32 2147483647, %v834
    %vm944 = vcmp.eq.f32.partialorder %v943, 8.507059e+37
    %v945 = vand.u32 %v834, 2147483648
    %v946 = vor.u32 1.1754944e-38, %v945
    %v947 = vsel %vm944, %v946, %v942
    %v948 = vmul.f32 1.0, %v947
    %v949 = vrcp.pop %v835
    %v950 = vmul.f32 %v835, %v949
    %v951 = vsub.f32 1.0, %v950
    %v952 = vmul.f32 %v949, %v951
    %v953 = vadd.f32 %v949, %v952
    %vm954 = vweird.f32 %v835
    %vm955 = vweird.f32 %v949
    %vm956 = vmor %vm954, %vm955
    %v957 = vsel %vm956, %v949, %v953
    %v958 = vand.u32 2147483647, %v835
    %vm959 = vcmp.eq.f32.partialorder %v958, 8.507059e+37
    %v960 = vand.u32 %v835, 2147483648
    %v961 = vor.u32 1.1754944e-38, %v960
    %v962 = vsel %vm959, %v961, %v957
    %v963 = vmul.f32 1.0, %v962
    %v964 = vrcp.pop %v836
    %v965 = vmul.f32 %v836, %v964
    %v966 = vsub.f32 1.0, %v965
    %v967 = vmul.f32 %v964, %v966
    %v968 = vadd.f32 %v964, %v967
    %vm969 = vweird.f32 %v836
    %vm970 = vweird.f32 %v964
    %vm971 = vmor %vm969, %vm970
    %v972 = vsel %vm971, %v964, %v968
    %v973 = vand.u32 2147483647, %v836
    %vm974 = vcmp.eq.f32.partialorder %v973, 8.507059e+37
    %v975 = vand.u32 %v836, 2147483648
    %v976 = vor.u32 1.1754944e-38, %v975
    %v977 = vsel %vm974, %v976, %v972
    %v978 = vmul.f32 1.0, %v977
    %v979 = vrcp.pop %v837
    %v980 = vmul.f32 %v837, %v979
    %v981 = vsub.f32 1.0, %v980
    %v982 = vmul.f32 %v979, %v981
    %v983 = vadd.f32 %v979, %v982
    %vm984 = vweird.f32 %v837
    %vm985 = vweird.f32 %v979
    %vm986 = vmor %vm984, %vm985
    %v987 = vsel %vm986, %v979, %v983
    %v988 = vand.u32 2147483647, %v837
    %vm989 = vcmp.eq.f32.partialorder %v988, 8.507059e+37
    %v990 = vand.u32 %v837, 2147483648
    %v991 = vor.u32 1.1754944e-38, %v990
    %v992 = vsel %vm989, %v991, %v987
    %v993 = vmul.f32 1.0, %v992
    %v994 = vrcp.pop %v838
    %v995 = vmul.f32 %v838, %v994
    %v996 = vsub.f32 1.0, %v995
    %v997 = vmul.f32 %v994, %v996
    %v998 = vadd.f32 %v994, %v997
    %vm999 = vweird.f32 %v838
    %vm1000 = vweird.f32 %v994
    %vm1001 = vmor %vm999, %vm1000
    %v1002 = vsel %vm1001, %v994, %v998
    %v1003 = vand.u32 2147483647, %v838
    %vm1004 = vcmp.eq.f32.partialorder %v1003, 8.507059e+37
    %v1005 = vand.u32 %v838, 2147483648
    %v1006 = vor.u32 1.1754944e-38, %v1005
    %v1007 = vsel %vm1004, %v1006, %v1002
    %v1008 = vmul.f32 1.0, %v1007
    %v1009 = vrcp.pop %v839
    %v1010 = vmul.f32 %v839, %v1009
    %v1011 = vsub.f32 1.0, %v1010
    %v1012 = vmul.f32 %v1009, %v1011
    %v1013 = vadd.f32 %v1009, %v1012
    %vm1014 = vweird.f32 %v839
    %vm1015 = vweird.f32 %v1009
    %vm1016 = vmor %vm1014, %vm1015
    %v1017 = vsel %vm1016, %v1009, %v1013
    %v1018 = vand.u32 2147483647, %v839
    %vm1019 = vcmp.eq.f32.partialorder %v1018, 8.507059e+37
    %v1020 = vand.u32 %v839, 2147483648
    %v1021 = vor.u32 1.1754944e-38, %v1020
    %v1022 = vsel %vm1019, %v1021, %v1017
    %v1023 = vmul.f32 1.0, %v1022
    %v1024 = vrcp.pop %v840
    %v1025 = vmul.f32 %v840, %v1024
    %v1026 = vsub.f32 1.0, %v1025
    %v1027 = vmul.f32 %v1024, %v1026
    %v1028 = vadd.f32 %v1024, %v1027
    %vm1029 = vweird.f32 %v840
    %vm1030 = vweird.f32 %v1024
    %vm1031 = vmor %vm1029, %vm1030
    %v1032 = vsel %vm1031, %v1024, %v1028
    %v1033 = vand.u32 2147483647, %v840
    %vm1034 = vcmp.eq.f32.partialorder %v1033, 8.507059e+37
    %v1035 = vand.u32 %v840, 2147483648
    %v1036 = vor.u32 1.1754944e-38, %v1035
    %v1037 = vsel %vm1034, %v1036, %v1032
    %v1038 = vmul.f32 1.0, %v1037
    %v1039 = vrcp.pop %v841
    %v1040 = vmul.f32 %v841, %v1039
    %v1041 = vsub.f32 1.0, %v1040
    %v1042 = vmul.f32 %v1039, %v1041
    %v1043 = vadd.f32 %v1039, %v1042
    %vm1044 = vweird.f32 %v841
    %vm1045 = vweird.f32 %v1039
    %vm1046 = vmor %vm1044, %vm1045
    %v1047 = vsel %vm1046, %v1039, %v1043
    %v1048 = vand.u32 2147483647, %v841
    %vm1049 = vcmp.eq.f32.partialorder %v1048, 8.507059e+37
    %v1050 = vand.u32 %v841, 2147483648
    %v1051 = vor.u32 1.1754944e-38, %v1050
    %v1052 = vsel %vm1049, %v1051, %v1047
    %v1053 = vmul.f32 1.0, %v1052
    %v1054 = vrcp.pop %v842
    %v1055 = vmul.f32 %v842, %v1054
    %v1056 = vsub.f32 1.0, %v1055
    %v1057 = vmul.f32 %v1054, %v1056
    %v1058 = vadd.f32 %v1054, %v1057
    %vm1059 = vweird.f32 %v842
    %vm1060 = vweird.f32 %v1054
    %vm1061 = vmor %vm1059, %vm1060
    %v1062 = vsel %vm1061, %v1054, %v1058
    %v1063 = vand.u32 2147483647, %v842
    %vm1064 = vcmp.eq.f32.partialorder %v1063, 8.507059e+37
    %v1065 = vand.u32 %v842, 2147483648
    %v1066 = vor.u32 1.1754944e-38, %v1065
    %v1067 = vsel %vm1064, %v1066, %v1062
    %v1068 = vmul.f32 1.0, %v1067
    %v1069 = vrcp.pop %v843
    %v1070 = vmul.f32 %v843, %v1069
    %v1071 = vsub.f32 1.0, %v1070
    %v1072 = vmul.f32 %v1069, %v1071
    %v1073 = vadd.f32 %v1069, %v1072
    %vm1074 = vweird.f32 %v843
    %vm1075 = vweird.f32 %v1069
    %vm1076 = vmor %vm1074, %vm1075
    %v1077 = vsel %vm1076, %v1069, %v1073
    %v1078 = vand.u32 2147483647, %v843
    %vm1079 = vcmp.eq.f32.partialorder %v1078, 8.507059e+37
    %v1080 = vand.u32 %v843, 2147483648
    %v1081 = vor.u32 1.1754944e-38, %v1080
    %v1082 = vsel %vm1079, %v1081, %v1077
    %v1083 = vmul.f32 1.0, %v1082
    %v1084 = vsub.f32 %v522, %v858
    %v1085 = vsub.f32 %v537, %v873
    %v1086 = vsub.f32 %v552, %v888
    %v1087 = vsub.f32 %v567, %v903
    %v1088 = vsub.f32 %v582, %v918
    %v1089 = vsub.f32 %v597, %v933
    %v1090 = vsub.f32 %v612, %v948
    %v1091 = vsub.f32 %v627, %v963
    %v1092 = vsub.f32 %v642, %v978
    %v1093 = vsub.f32 %v657, %v993
    %v1094 = vsub.f32 %v672, %v1008
    %v1095 = vsub.f32 %v687, %v1023
    %v1096 = vsub.f32 %v702, %v1038
    %v1097 = vsub.f32 %v717, %v1053
    %v1098 = vsub.f32 %v732, %v1068
    %v1099 = vsub.f32 %v747, %v1083
    %1100 = vst.msk [vmem:[%s10] sm:$0xff] %vm233, %v1084
    %1101 = vst.msk [vmem:[%s10 + $0x8] sm:$0xff] %vm233, %v1085
    %1102 = vst.msk [vmem:[%s10 + $0x10] sm:$0xff] %vm233, %v1086
    %1103 = vst.msk [vmem:[%s10 + $0x18] sm:$0xff] %vm233, %v1087
    %1104 = vst.msk [vmem:[%s10 + $0x20] sm:$0xff] %vm233, %v1088
    %1105 = vst.msk [vmem:[%s10 + $0x28] sm:$0xff] %vm233, %v1089
    %1106 = vst.msk [vmem:[%s10 + $0x30] sm:$0xff] %vm233, %v1090
    %1107 = vst.msk [vmem:[%s10 + $0x38] sm:$0xff] %vm233, %v1091
    %1108 = vst.msk [vmem:[%s10 + $0x40] sm:$0xff] %vm233, %v1092
    %1109 = vst.msk [vmem:[%s10 + $0x48] sm:$0xff] %vm233, %v1093
    %1110 = vst.msk [vmem:[%s10 + $0x50] sm:$0xff] %vm233, %v1094
    %1111 = vst.msk [vmem:[%s10 + $0x58] sm:$0xff] %vm233, %v1095
    %1112 = vst.msk [vmem:[%s10 + $0x60] sm:$0xff] %vm233, %v1096
    %1113 = vst.msk [vmem:[%s10 + $0x68] sm:$0xff] %vm233, %v1097
    %1114 = vst.msk [vmem:[%s10 + $0x70] sm:$0xff] %vm233, %v1098
    %1115 = vst.msk [vmem:[%s10 + $0x78] sm:$0xff] %vm233, %v1099
    // Predicated region
    $region34: #{fwd.6} parent=1 // pred_check
      _
    $region35: #{fwd.6} parent=1 // pred_check_branch
      %1117 = sbr.rel (0) target = $region37
    $region36: #{fwd.6} parent=1 // pred_region
      %1119 = vsyncadd [#allocation3], 0
      %s1120 = sshll.u32 [#allocation2], 4
      %s1121 = int_to_ptr.vmem [resolvable:$true] %s1120
      %s1122 = sshll.u32 %s8, 4
      %s1123 = int_to_ptr.hbm [resolvable:$true] %s1122
      %1128 = dma.vmem_to_hbm [thread:$0]  %s1121, 2048, %s1123, [#allocation3], 128, 128, 8
    $region37: #{fwd.6} parent=1 // pred_fallthru
      _
    // Predicated region
    $region38: #{fwd.6} parent=1 // pred_check
      _
    $region39: #{fwd.6} parent=1 // pred_check_branch
      %1130 = sbr.rel (0) target = $region41
    $region40: #{fwd.6} parent=1 // pred_region
      _
    $region41: #{fwd.6} parent=1 // pred_fallthru
      _
    // Predicated region
    $region42: #{fwd.6} parent=1 // pred_check
      _
    $region43: #{fwd.6} parent=1 // pred_check_branch
      %1132 = sbr.rel (0) target = $region45
    $region44: #{fwd.6} parent=1 // pred_region
      _
    $region45: #{fwd.6} parent=1 // pred_fallthru
      _
    // Predicated region
    $region46: #{fwd.6} parent=1 // pred_check
      _
    $region47: #{fwd.6} parent=1 // pred_check_branch
      %1134 = sbr.rel (0) target = $region49
    $region48: #{fwd.6} parent=1 // pred_region
      %1136 = dma.done [#allocation3], 2048
    $region49: #{fwd.6} parent=1 // pred_fallthru
      _
    // Predicated region
    $region50: #{fwd.6} parent=1 // pred_check
      _
    $region51: #{fwd.6} parent=1 // pred_check_branch
      %1138 = sbr.rel (0) target = $region53
    $region52: #{fwd.6} parent=1 // pred_region
      _
    $region53: #{fwd.6} parent=1 // pred_fallthru
      _
    // Predicated region
    $region54: #{fwd.6} parent=1 // pred_check
      _
    $region55: #{fwd.6} parent=1 // pred_check_branch
      %1140 = sbr.rel (0) target = $region57
    $region56: #{fwd.6} parent=1 // pred_region
      _
    $region57: #{fwd.6} parent=1 // pred_fallthru
      _
    %1141 = vsyncpa [#allocation3], 1

// kernel: fwd.9
$region0: #{fwd.9}
  #allocation0 [shape = 'u32[]', space=smem, size = 0x4, offset = 0x4, fixed_abs, tag = 'smem constant byte address 0x4 - core index']
  #allocation1 [shape = 'u32[72,128]{1,0:T(1,128)}', space=vmem, size = 0x9000, scoped, tag = 'internal scratch']
  %s0 = inlined_call_operand.vmem [shape: f32[512,4], index: 0, kind: input, shape index: {}]
  %s1 = inlined_call_operand.vmem [shape: f32[4,16], index: 1, kind: input, shape index: {}]
  %s2 = inlined_call_operand.vmem [shape: f32[1,16], index: 2, kind: input, shape index: {}]
  %s3 = inlined_call_operand.vmem [shape: f32[512,16], index: 3, kind: output, shape index: {}]
  %s4 = sld [smem:[#allocation0]]
  $region22: #{fwd.9} parent=0
    _
  %s6 = ssub.s32 1, %s4
  %s7 = scalar_select 0, %s6, %s4
  // Predicated region
  $region2: #{fwd.9} parent=0 // pred_check
    _
  $region3: #{fwd.9} parent=0 // pred_check_branch
    %9 = sbr.rel (0) target = $region5
  $region4: #{fwd.9} parent=0 // pred_region
    _
  $region5: #{fwd.9} parent=0 // pred_fallthru
    _
  // Predicated region
  $region6: #{fwd.9} parent=0 // pred_check
    _
  $region7: #{fwd.9} parent=0 // pred_check_branch
    %11 = sbr.rel (0) target = $region9
  $region8: #{fwd.9} parent=0 // pred_region
    _
  $region9: #{fwd.9} parent=0 // pred_fallthru
    _
  // Predicated region
  $region10: #{fwd.9} parent=0 // pred_check
    _
  $region11: #{fwd.9} parent=0 // pred_check_branch
    %13 = sbr.rel (0) target = $region13
  $region12: #{fwd.9} parent=0 // pred_region
    _
  $region13: #{fwd.9} parent=0 // pred_fallthru
    _
  %v14 = vld [vmem:[%s0] sm:$0xff]
  %v15 = vld [vmem:[%s0 + $0x8] sm:$0xff]
  %v16 = vld [vmem:[%s0 + $0x10] sm:$0xff]
  %v17 = vld [vmem:[%s0 + $0x18] sm:$0xff]
  %v18 = vld [vmem:[%s0 + $0x20] sm:$0xff]
  %v19 = vld [vmem:[%s0 + $0x28] sm:$0xff]
  %v20 = vld [vmem:[%s0 + $0x30] sm:$0xff]
  %v21 = vld [vmem:[%s0 + $0x38] sm:$0xff]
  %v22 = vld [vmem:[%s0 + $0x40] sm:$0xff]
  %v23 = vld [vmem:[%s0 + $0x48] sm:$0xff]
  %v24 = vld [vmem:[%s0 + $0x50] sm:$0xff]
  %v25 = vld [vmem:[%s0 + $0x58] sm:$0xff]
  %v26 = vld [vmem:[%s0 + $0x60] sm:$0xff]
  %v27 = vld [vmem:[%s0 + $0x68] sm:$0xff]
  %v28 = vld [vmem:[%s0 + $0x70] sm:$0xff]
  %v29 = vld [vmem:[%s0 + $0x78] sm:$0xff]
  %v30 = vld [vmem:[%s0 + $0x80] sm:$0xff]
  %v31 = vld [vmem:[%s0 + $0x88] sm:$0xff]
  %v32 = vld [vmem:[%s0 + $0x90] sm:$0xff]
  %v33 = vld [vmem:[%s0 + $0x98] sm:$0xff]
  %v34 = vld [vmem:[%s0 + $0xa0] sm:$0xff]
  %v35 = vld [vmem:[%s0 + $0xa8] sm:$0xff]
  %v36 = vld [vmem:[%s0 + $0xb0] sm:$0xff]
  %v37 = vld [vmem:[%s0 + $0xb8] sm:$0xff]
  %v38 = vld [vmem:[%s0 + $0xc0] sm:$0xff]
  %v39 = vld [vmem:[%s0 + $0xc8] sm:$0xff]
  %v40 = vld [vmem:[%s0 + $0xd0] sm:$0xff]
  %v41 = vld [vmem:[%s0 + $0xd8] sm:$0xff]
  %v42 = vld [vmem:[%s0 + $0xe0] sm:$0xff]
  %v43 = vld [vmem:[%s0 + $0xe8] sm:$0xff]
  %v44 = vld [vmem:[%s0 + $0xf0] sm:$0xff]
  %v45 = vld [vmem:[%s0 + $0xf8] sm:$0xff]
  %v46 = vld [vmem:[%s0 + $0x100] sm:$0xff]
  %v47 = vld [vmem:[%s0 + $0x108] sm:$0xff]
  %v48 = vld [vmem:[%s0 + $0x110] sm:$0xff]
  %v49 = vld [vmem:[%s0 + $0x118] sm:$0xff]
  %v50 = vld [vmem:[%s0 + $0x120] sm:$0xff]
  %v51 = vld [vmem:[%s0 + $0x128] sm:$0xff]
  %v52 = vld [vmem:[%s0 + $0x130] sm:$0xff]
  %v53 = vld [vmem:[%s0 + $0x138] sm:$0xff]
  %v54 = vld [vmem:[%s0 + $0x140] sm:$0xff]
  %v55 = vld [vmem:[%s0 + $0x148] sm:$0xff]
  %v56 = vld [vmem:[%s0 + $0x150] sm:$0xff]
  %v57 = vld [vmem:[%s0 + $0x158] sm:$0xff]
  %v58 = vld [vmem:[%s0 + $0x160] sm:$0xff]
  %v59 = vld [vmem:[%s0 + $0x168] sm:$0xff]
  %v60 = vld [vmem:[%s0 + $0x170] sm:$0xff]
  %v61 = vld [vmem:[%s0 + $0x178] sm:$0xff]
  %v62 = vld [vmem:[%s0 + $0x180] sm:$0xff]
  %v63 = vld [vmem:[%s0 + $0x188] sm:$0xff]
  %v64 = vld [vmem:[%s0 + $0x190] sm:$0xff]
  %v65 = vld [vmem:[%s0 + $0x198] sm:$0xff]
  %v66 = vld [vmem:[%s0 + $0x1a0] sm:$0xff]
  %v67 = vld [vmem:[%s0 + $0x1a8] sm:$0xff]
  %v68 = vld [vmem:[%s0 + $0x1b0] sm:$0xff]
  %v69 = vld [vmem:[%s0 + $0x1b8] sm:$0xff]
  %v70 = vld [vmem:[%s0 + $0x1c0] sm:$0xff]
  %v71 = vld [vmem:[%s0 + $0x1c8] sm:$0xff]
  %v72 = vld [vmem:[%s0 + $0x1d0] sm:$0xff]
  %v73 = vld [vmem:[%s0 + $0x1d8] sm:$0xff]
  %v74 = vld [vmem:[%s0 + $0x1e0] sm:$0xff]
  %v75 = vld [vmem:[%s0 + $0x1e8] sm:$0xff]
  %v76 = vld [vmem:[%s0 + $0x1f0] sm:$0xff]
  %v77 = vld [vmem:[%s0 + $0x1f8] sm:$0xff]
  %v78 = vld [vmem:[%s1] sm:$0xf]
  %v79 = vld [vmem:[%s2] sm:$0x1]
  %v81 = vperm.slane %v79, 0
  %vm83 = vcmask 31744
  %v85 = vsel %vm83, %v14, 0
  %v88 = vsel %vm83, %v15, 0
  %v91 = vsel %vm83, %v16, 0
  %v94 = vsel %vm83, %v17, 0
  %v97 = vsel %vm83, %v18, 0
  %v100 = vsel %vm83, %v19, 0
  %v103 = vsel %vm83, %v20, 0
  %v106 = vsel %vm83, %v21, 0
  %v109 = vsel %vm83, %v22, 0
  %v112 = vsel %vm83, %v23, 0
  %v115 = vsel %vm83, %v24, 0
  %v118 = vsel %vm83, %v25, 0
  %v121 = vsel %vm83, %v26, 0
  %v124 = vsel %vm83, %v27, 0
  %v127 = vsel %vm83, %v28, 0
  %v130 = vsel %vm83, %v29, 0
  %v133 = vsel %vm83, %v30, 0
  %v136 = vsel %vm83, %v31, 0
  %v139 = vsel %vm83, %v32, 0
  %v142 = vsel %vm83, %v33, 0
  %v145 = vsel %vm83, %v34, 0
  %v148 = vsel %vm83, %v35, 0
  %v151 = vsel %vm83, %v36, 0
  %v154 = vsel %vm83, %v37, 0
  %v157 = vsel %vm83, %v38, 0
  %v160 = vsel %vm83, %v39, 0
  %v163 = vsel %vm83, %v40, 0
  %v166 = vsel %vm83, %v41, 0
  %v169 = vsel %vm83, %v42, 0
  %v172 = vsel %vm83, %v43, 0
  %v175 = vsel %vm83, %v44, 0
  %v178 = vsel %vm83, %v45, 0
  %v181 = vsel %vm83, %v46, 0
  %v184 = vsel %vm83, %v47, 0
  %v187 = vsel %vm83, %v48, 0
  %v190 = vsel %vm83, %v49, 0
  %v193 = vsel %vm83, %v50, 0
  %v196 = vsel %vm83, %v51, 0
  %v199 = vsel %vm83, %v52, 0
  %v202 = vsel %vm83, %v53, 0
  %v205 = vsel %vm83, %v54, 0
  %v208 = vsel %vm83, %v55, 0
  %v211 = vsel %vm83, %v56, 0
  %v214 = vsel %vm83, %v57, 0
  %v217 = vsel %vm83, %v58, 0
  %v220 = vsel %vm83, %v59, 0
  %v223 = vsel %vm83, %v60, 0
  %v226 = vsel %vm83, %v61, 0
  %v229 = vsel %vm83, %v62, 0
  %v232 = vsel %vm83, %v63, 0
  %v235 = vsel %vm83, %v64, 0
  %v238 = vsel %vm83, %v65, 0
  %v241 = vsel %vm83, %v66, 0
  %v244 = vsel %vm83, %v67, 0
  %v247 = vsel %vm83, %v68, 0
  %v250 = vsel %vm83, %v69, 0
  %v253 = vsel %vm83, %v70, 0
  %v256 = vsel %vm83, %v71, 0
  %v259 = vsel %vm83, %v72, 0
  %v262 = vsel %vm83, %v73, 0
  %v265 = vsel %vm83, %v74, 0
  %v268 = vsel %vm83, %v75, 0
  %v271 = vsel %vm83, %v76, 0
  %v274 = vsel %vm83, %v77, 0
  %vm276 = vcmask 1043456
  %v278 = vsel %vm276, %v78, 0
  %280 = vmatpush.msra.mxu0 0.0
  %281 = vmatpush.msra.mxu0 0.0
  %282 = vmatpush.msra.mxu0 0.0
  %283 = vmatpush.msra.mxu0 0.0
  %284 = vmatpush.msra.mxu0 0.0
  %285 = vmatpush.msra.mxu0 0.0
  %286 = vmatpush.msra.mxu0 0.0
  %287 = vmatpush.msra.mxu0 0.0
  %288 = vmatpush.msra.mxu0 0.0
  %289 = vmatpush.msra.mxu0 0.0
  %290 = vmatpush.msra.mxu0 0.0
  %291 = vmatpush.msra.mxu0 0.0
  %292 = vmatpush.msra.mxu0 0.0
  %293 = vmatpush.msra.mxu0 0.0
  %294 = vmatpush.msra.mxu0 0.0
  %295 = vmatpush.msra.mxu0 %v278
  %296 = vmatmul.f32.gmra.mxu0 %v85
  %v297 = vpop.f32.mrf.mxu0
  %v298 = vadd.f32 %v81, %v297
  %299 = vmatmul.f32.gmra.mxu0 %v88
  %v300 = vpop.f32.mrf.mxu0
  %v301 = vadd.f32 %v81, %v300
  %302 = vmatmul.f32.gmra.mxu0 %v91
  %v303 = vpop.f32.mrf.mxu0
  %v304 = vadd.f32 %v81, %v303
  %305 = vmatmul.f32.gmra.mxu0 %v94
  %v306 = vpop.f32.mrf.mxu0
  %v307 = vadd.f32 %v81, %v306
  %308 = vmatmul.f32.gmra.mxu0 %v97
  %v309 = vpop.f32.mrf.mxu0
  %v310 = vadd.f32 %v81, %v309
  %311 = vmatmul.f32.gmra.mxu0 %v100
  %v312 = vpop.f32.mrf.mxu0
  %v313 = vadd.f32 %v81, %v312
  %314 = vmatmul.f32.gmra.mxu0 %v103
  %v315 = vpop.f32.mrf.mxu0
  %v316 = vadd.f32 %v81, %v315
  %317 = vmatmul.f32.gmra.mxu0 %v106
  %v318 = vpop.f32.mrf.mxu0
  %v319 = vadd.f32 %v81, %v318
  %320 = vmatmul.f32.gmra.mxu0 %v109
  %v321 = vpop.f32.mrf.mxu0
  %v322 = vadd.f32 %v81, %v321
  %323 = vmatmul.f32.gmra.mxu0 %v112
  %v324 = vpop.f32.mrf.mxu0
  %v325 = vadd.f32 %v81, %v324
  %326 = vmatmul.f32.gmra.mxu0 %v115
  %v327 = vpop.f32.mrf.mxu0
  %v328 = vadd.f32 %v81, %v327
  %329 = vmatmul.f32.gmra.mxu0 %v118
  %v330 = vpop.f32.mrf.mxu0
  %v331 = vadd.f32 %v81, %v330
  %332 = vmatmul.f32.gmra.mxu0 %v121
  %v333 = vpop.f32.mrf.mxu0
  %v334 = vadd.f32 %v81, %v333
  %335 = vmatmul.f32.gmra.mxu0 %v124
  %v336 = vpop.f32.mrf.mxu0
  %v337 = vadd.f32 %v81, %v336
  %338 = vmatmul.f32.gmra.mxu0 %v127
  %v339 = vpop.f32.mrf.mxu0
  %v340 = vadd.f32 %v81, %v339
  %341 = vmatmul.f32.gmra.mxu0 %v130
  %v342 = vpop.f32.mrf.mxu0
  %v343 = vadd.f32 %v81, %v342
  %344 = vmatmul.f32.gmra.mxu0 %v133
  %v345 = vpop.f32.mrf.mxu0
  %v346 = vadd.f32 %v81, %v345
  %347 = vmatmul.f32.gmra.mxu0 %v136
  %v348 = vpop.f32.mrf.mxu0
  %v349 = vadd.f32 %v81, %v348
  %350 = vmatmul.f32.gmra.mxu0 %v139
  %v351 = vpop.f32.mrf.mxu0
  %v352 = vadd.f32 %v81, %v351
  %353 = vmatmul.f32.gmra.mxu0 %v142
  %v354 = vpop.f32.mrf.mxu0
  %v355 = vadd.f32 %v81, %v354
  %356 = vmatmul.f32.gmra.mxu0 %v145
  %v357 = vpop.f32.mrf.mxu0
  %v358 = vadd.f32 %v81, %v357
  %359 = vmatmul.f32.gmra.mxu0 %v148
  %v360 = vpop.f32.mrf.mxu0
  %v361 = vadd.f32 %v81, %v360
  %362 = vmatmul.f32.gmra.mxu0 %v151
  %v363 = vpop.f32.mrf.mxu0
  %v364 = vadd.f32 %v81, %v363
  %365 = vmatmul.f32.gmra.mxu0 %v154
  %v366 = vpop.f32.mrf.mxu0
  %v367 = vadd.f32 %v81, %v366
  %368 = vmatmul.f32.gmra.mxu0 %v157
  %v369 = vpop.f32.mrf.mxu0
  %v370 = vadd.f32 %v81, %v369
  %371 = vmatmul.f32.gmra.mxu0 %v160
  %v372 = vpop.f32.mrf.mxu0
  %v373 = vadd.f32 %v81, %v372
  %374 = vmatmul.f32.gmra.mxu0 %v163
  %v375 = vpop.f32.mrf.mxu0
  %v376 = vadd.f32 %v81, %v375
  %377 = vmatmul.f32.gmra.mxu0 %v166
  %v378 = vpop.f32.mrf.mxu0
  %v379 = vadd.f32 %v81, %v378
  %380 = vmatmul.f32.gmra.mxu0 %v169
  %v381 = vpop.f32.mrf.mxu0
  %v382 = vadd.f32 %v81, %v381
  %383 = vmatmul.f32.gmra.mxu0 %v172
  %v384 = vpop.f32.mrf.mxu0
  %v385 = vadd.f32 %v81, %v384
  %386 = vmatmul.f32.gmra.mxu0 %v175
  %v387 = vpop.f32.mrf.mxu0
  %v388 = vadd.f32 %v81, %v387
  %389 = vmatmul.f32.gmra.mxu0 %v178
  %v390 = vpop.f32.mrf.mxu0
  %v391 = vadd.f32 %v81, %v390
  %392 = vmatmul.f32.gmra.mxu0 %v181
  %v393 = vpop.f32.mrf.mxu0
  %v394 = vadd.f32 %v81, %v393
  %395 = vmatmul.f32.gmra.mxu0 %v184
  %v396 = vpop.f32.mrf.mxu0
  %v397 = vadd.f32 %v81, %v396
  %398 = vmatmul.f32.gmra.mxu0 %v187
  %v399 = vpop.f32.mrf.mxu0
  %v400 = vadd.f32 %v81, %v399
  %401 = vmatmul.f32.gmra.mxu0 %v190
  %v402 = vpop.f32.mrf.mxu0
  %v403 = vadd.f32 %v81, %v402
  %404 = vmatmul.f32.gmra.mxu0 %v193
  %v405 = vpop.f32.mrf.mxu0
  %v406 = vadd.f32 %v81, %v405
  %407 = vmatmul.f32.gmra.mxu0 %v196
  %v408 = vpop.f32.mrf.mxu0
  %v409 = vadd.f32 %v81, %v408
  %410 = vmatmul.f32.gmra.mxu0 %v199
  %v411 = vpop.f32.mrf.mxu0
  %v412 = vadd.f32 %v81, %v411
  %413 = vmatmul.f32.gmra.mxu0 %v202
  %v414 = vpop.f32.mrf.mxu0
  %v415 = vadd.f32 %v81, %v414
  %416 = vmatmul.f32.gmra.mxu0 %v205
  %v417 = vpop.f32.mrf.mxu0
  %v418 = vadd.f32 %v81, %v417
  %419 = vmatmul.f32.gmra.mxu0 %v208
  %v420 = vpop.f32.mrf.mxu0
  %v421 = vadd.f32 %v81, %v420
  %422 = vmatmul.f32.gmra.mxu0 %v211
  %v423 = vpop.f32.mrf.mxu0
  %v424 = vadd.f32 %v81, %v423
  %425 = vmatmul.f32.gmra.mxu0 %v214
  %v426 = vpop.f32.mrf.mxu0
  %v427 = vadd.f32 %v81, %v426
  %428 = vmatmul.f32.gmra.mxu0 %v217
  %v429 = vpop.f32.mrf.mxu0
  %v430 = vadd.f32 %v81, %v429
  %431 = vmatmul.f32.gmra.mxu0 %v220
  %v432 = vpop.f32.mrf.mxu0
  %v433 = vadd.f32 %v81, %v432
  %434 = vmatmul.f32.gmra.mxu0 %v223
  %v435 = vpop.f32.mrf.mxu0
  %v436 = vadd.f32 %v81, %v435
  %437 = vmatmul.f32.gmra.mxu0 %v226
  %v438 = vpop.f32.mrf.mxu0
  %v439 = vadd.f32 %v81, %v438
  %440 = vmatmul.f32.gmra.mxu0 %v229
  %v441 = vpop.f32.mrf.mxu0
  %v442 = vadd.f32 %v81, %v441
  %443 = vmatmul.f32.gmra.mxu0 %v232
  %v444 = vpop.f32.mrf.mxu0
  %v445 = vadd.f32 %v81, %v444
  %446 = vmatmul.f32.gmra.mxu0 %v235
  %v447 = vpop.f32.mrf.mxu0
  %v448 = vadd.f32 %v81, %v447
  %449 = vmatmul.f32.gmra.mxu0 %v238
  %v450 = vpop.f32.mrf.mxu0
  %v451 = vadd.f32 %v81, %v450
  %452 = vmatmul.f32.gmra.mxu0 %v241
  %v453 = vpop.f32.mrf.mxu0
  %v454 = vadd.f32 %v81, %v453
  %455 = vmatmul.f32.gmra.mxu0 %v244
  %v456 = vpop.f32.mrf.mxu0
  %v457 = vadd.f32 %v81, %v456
  %458 = vmatmul.f32.gmra.mxu0 %v247
  %v459 = vpop.f32.mrf.mxu0
  %v460 = vadd.f32 %v81, %v459
  %461 = vmatmul.f32.gmra.mxu0 %v250
  %v462 = vpop.f32.mrf.mxu0
  %v463 = vadd.f32 %v81, %v462
  %464 = vmatmul.f32.gmra.mxu0 %v253
  %v465 = vpop.f32.mrf.mxu0
  %v466 = vadd.f32 %v81, %v465
  %467 = vmatmul.f32.gmra.mxu0 %v256
  %v468 = vpop.f32.mrf.mxu0
  %v469 = vadd.f32 %v81, %v468
  %470 = vmatmul.f32.gmra.mxu0 %v259
  %v471 = vpop.f32.mrf.mxu0
  %v472 = vadd.f32 %v81, %v471
  %473 = vmatmul.f32.gmra.mxu0 %v262
  %v474 = vpop.f32.mrf.mxu0
  %v475 = vadd.f32 %v81, %v474
  %476 = vmatmul.f32.gmra.mxu0 %v265
  %v477 = vpop.f32.mrf.mxu0
  %v478 = vadd.f32 %v81, %v477
  %479 = vmatmul.f32.gmra.mxu0 %v268
  %v480 = vpop.f32.mrf.mxu0
  %v481 = vadd.f32 %v81, %v480
  %482 = vmatmul.f32.gmra.mxu0 %v271
  %v483 = vpop.f32.mrf.mxu0
  %v484 = vadd.f32 %v81, %v483
  %485 = vmatmul.f32.gmra.mxu0 %v274
  %v486 = vpop.f32.mrf.mxu0
  %v487 = vadd.f32 %v81, %v486
  %488 = vdwg.mxu0
  %v489 = vmul.f32 %v298, 0.5
  %v490 = vmul.f32 %v301, 0.5
  %v491 = vmul.f32 %v304, 0.5
  %v492 = vmul.f32 %v307, 0.5
  %v493 = vmul.f32 %v310, 0.5
  %v494 = vmul.f32 %v313, 0.5
  %v495 = vmul.f32 %v316, 0.5
  %v496 = vmul.f32 %v319, 0.5
  %v497 = vmul.f32 %v322, 0.5
  %v498 = vmul.f32 %v325, 0.5
  %v499 = vmul.f32 %v328, 0.5
  %v500 = vmul.f32 %v331, 0.5
  %v501 = vmul.f32 %v334, 0.5
  %v502 = vmul.f32 %v337, 0.5
  %v503 = vmul.f32 %v340, 0.5
  %v504 = vmul.f32 %v343, 0.5
  %v505 = vmul.f32 %v346, 0.5
  %v506 = vmul.f32 %v349, 0.5
  %v507 = vmul.f32 %v352, 0.5
  %v508 = vmul.f32 %v355, 0.5
  %v509 = vmul.f32 %v358, 0.5
  %v510 = vmul.f32 %v361, 0.5
  %v511 = vmul.f32 %v364, 0.5
  %v512 = vmul.f32 %v367, 0.5
  %v513 = vmul.f32 %v370, 0.5
  %v514 = vmul.f32 %v373, 0.5
  %v515 = vmul.f32 %v376, 0.5
  %v516 = vmul.f32 %v379, 0.5
  %v517 = vmul.f32 %v382, 0.5
  %v518 = vmul.f32 %v385, 0.5
  %v519 = vmul.f32 %v388, 0.5
  %v520 = vmul.f32 %v391, 0.5
  %v521 = vmul.f32 %v394, 0.5
  %v522 = vmul.f32 %v397, 0.5
  %v523 = vmul.f32 %v400, 0.5
  %v524 = vmul.f32 %v403, 0.5
  %v525 = vmul.f32 %v406, 0.5
  %v526 = vmul.f32 %v409, 0.5
  %v527 = vmul.f32 %v412, 0.5
  %v528 = vmul.f32 %v415, 0.5
  %v529 = vmul.f32 %v418, 0.5
  %v530 = vmul.f32 %v421, 0.5
  %v531 = vmul.f32 %v424, 0.5
  %v532 = vmul.f32 %v427, 0.5
  %v533 = vmul.f32 %v430, 0.5
  %v534 = vmul.f32 %v433, 0.5
  %v535 = vmul.f32 %v436, 0.5
  %v536 = vmul.f32 %v439, 0.5
  %v537 = vmul.f32 %v442, 0.5
  %v538 = vmul.f32 %v445, 0.5
  %v539 = vmul.f32 %v448, 0.5
  %v540 = vmul.f32 %v451, 0.5
  %v541 = vmul.f32 %v454, 0.5
  %v542 = vmul.f32 %v457, 0.5
  %v543 = vmul.f32 %v460, 0.5
  %v544 = vmul.f32 %v463, 0.5
  %v545 = vmul.f32 %v466, 0.5
  %v546 = vmul.f32 %v469, 0.5
  %v547 = vmul.f32 %v472, 0.5
  %v548 = vmul.f32 %v475, 0.5
  %v549 = vmul.f32 %v478, 0.5
  %v550 = vmul.f32 %v481, 0.5
  %v551 = vmul.f32 %v484, 0.5
  %v552 = vmul.f32 %v487, 0.5
  %v553 = vadd.f32 %v489, 0.5
  %v554 = vadd.f32 %v490, 0.5
  %v555 = vadd.f32 %v491, 0.5
  %v556 = vadd.f32 %v492, 0.5
  %v557 = vadd.f32 %v493, 0.5
  %v558 = vadd.f32 %v494, 0.5
  %v559 = vadd.f32 %v495, 0.5
  %v560 = vadd.f32 %v496, 0.5
  %v561 = vadd.f32 %v497, 0.5
  %v562 = vadd.f32 %v498, 0.5
  %v563 = vadd.f32 %v499, 0.5
  %v564 = vadd.f32 %v500, 0.5
  %v565 = vadd.f32 %v501, 0.5
  %v566 = vadd.f32 %v502, 0.5
  %v567 = vadd.f32 %v503, 0.5
  %v568 = vadd.f32 %v504, 0.5
  %v569 = vadd.f32 %v505, 0.5
  %v570 = vadd.f32 %v506, 0.5
  %v571 = vadd.f32 %v507, 0.5
  %v572 = vadd.f32 %v508, 0.5
  %v573 = vadd.f32 %v509, 0.5
  %v574 = vadd.f32 %v510, 0.5
  %v575 = vadd.f32 %v511, 0.5
  %v576 = vadd.f32 %v512, 0.5
  %v577 = vadd.f32 %v513, 0.5
  %v578 = vadd.f32 %v514, 0.5
  %v579 = vadd.f32 %v515, 0.5
  %v580 = vadd.f32 %v516, 0.5
  %v581 = vadd.f32 %v517, 0.5
  %v582 = vadd.f32 %v518, 0.5
  %v583 = vadd.f32 %v519, 0.5
  %v584 = vadd.f32 %v520, 0.5
  %v585 = vadd.f32 %v521, 0.5
  %v586 = vadd.f32 %v522, 0.5
  %v587 = vadd.f32 %v523, 0.5
  %v588 = vadd.f32 %v524, 0.5
  %v589 = vadd.f32 %v525, 0.5
  %v590 = vadd.f32 %v526, 0.5
  %v591 = vadd.f32 %v527, 0.5
  %v592 = vadd.f32 %v528, 0.5
  %v593 = vadd.f32 %v529, 0.5
  %v594 = vadd.f32 %v530, 0.5
  %v595 = vadd.f32 %v531, 0.5
  %v596 = vadd.f32 %v532, 0.5
  %v597 = vadd.f32 %v533, 0.5
  %v598 = vadd.f32 %v534, 0.5
  %v599 = vadd.f32 %v535, 0.5
  %v600 = vadd.f32 %v536, 0.5
  %v601 = vadd.f32 %v537, 0.5
  %v602 = vadd.f32 %v538, 0.5
  %v603 = vadd.f32 %v539, 0.5
  %v604 = vadd.f32 %v540, 0.5
  %v605 = vadd.f32 %v541, 0.5
  %v606 = vadd.f32 %v542, 0.5
  %v607 = vadd.f32 %v543, 0.5
  %v608 = vadd.f32 %v544, 0.5
  %v609 = vadd.f32 %v545, 0.5
  %v610 = vadd.f32 %v546, 0.5
  %v611 = vadd.f32 %v547, 0.5
  %v612 = vadd.f32 %v548, 0.5
  %v613 = vadd.f32 %v549, 0.5
  %v614 = vadd.f32 %v550, 0.5
  %v615 = vadd.f32 %v551, 0.5
  %v616 = vadd.f32 %v552, 0.5
  %v617 = vmax.f32 %v553, 0.0
  %v618 = vmax.f32 %v554, 0.0
  %v619 = vmax.f32 %v555, 0.0
  %v620 = vmax.f32 %v556, 0.0
  %v621 = vmax.f32 %v557, 0.0
  %v622 = vmax.f32 %v558, 0.0
  %v623 = vmax.f32 %v559, 0.0
  %v624 = vmax.f32 %v560, 0.0
  %v625 = vmax.f32 %v561, 0.0
  %v626 = vmax.f32 %v562, 0.0
  %v627 = vmax.f32 %v563, 0.0
  %v628 = vmax.f32 %v564, 0.0
  %v629 = vmax.f32 %v565, 0.0
  %v630 = vmax.f32 %v566, 0.0
  %v631 = vmax.f32 %v567, 0.0
  %v632 = vmax.f32 %v568, 0.0
  %v633 = vmax.f32 %v569, 0.0
  %v634 = vmax.f32 %v570, 0.0
  %v635 = vmax.f32 %v571, 0.0
  %v636 = vmax.f32 %v572, 0.0
  %v637 = vmax.f32 %v573, 0.0
  %v638 = vmax.f32 %v574, 0.0
  %v639 = vmax.f32 %v575, 0.0
  %v640 = vmax.f32 %v576, 0.0
  %v641 = vmax.f32 %v577, 0.0
  %v642 = vmax.f32 %v578, 0.0
  %v643 = vmax.f32 %v579, 0.0
  %v644 = vmax.f32 %v580, 0.0
  %v645 = vmax.f32 %v581, 0.0
  %v646 = vmax.f32 %v582, 0.0
  %v647 = vmax.f32 %v583, 0.0
  %v648 = vmax.f32 %v584, 0.0
  %v649 = vmax.f32 %v585, 0.0
  %v650 = vmax.f32 %v586, 0.0
  %v651 = vmax.f32 %v587, 0.0
  %v652 = vmax.f32 %v588, 0.0
  %v653 = vmax.f32 %v589, 0.0
  %v654 = vmax.f32 %v590, 0.0
  %v655 = vmax.f32 %v591, 0.0
  %v656 = vmax.f32 %v592, 0.0
  %v657 = vmax.f32 %v593, 0.0
  %v658 = vmax.f32 %v594, 0.0
  %v659 = vmax.f32 %v595, 0.0
  %v660 = vmax.f32 %v596, 0.0
  %v661 = vmax.f32 %v597, 0.0
  %v662 = vmax.f32 %v598, 0.0
  %v663 = vmax.f32 %v599, 0.0
  %v664 = vmax.f32 %v600, 0.0
  %v665 = vmax.f32 %v601, 0.0
  %v666 = vmax.f32 %v602, 0.0
  %v667 = vmax.f32 %v603, 0.0
  %v668 = vmax.f32 %v604, 0.0
  %v669 = vmax.f32 %v605, 0.0
  %v670 = vmax.f32 %v606, 0.0
  %v671 = vmax.f32 %v607, 0.0
  %v672 = vmax.f32 %v608, 0.0
  %v673 = vmax.f32 %v609, 0.0
  %v674 = vmax.f32 %v610, 0.0
  %v675 = vmax.f32 %v611, 0.0
  %v676 = vmax.f32 %v612, 0.0
  %v677 = vmax.f32 %v613, 0.0
  %v678 = vmax.f32 %v614, 0.0
  %v679 = vmax.f32 %v615, 0.0
  %v680 = vmax.f32 %v616, 0.0
  %v681 = vmin.f32 %v617, 1.0
  %v682 = vmin.f32 %v618, 1.0
  %v683 = vmin.f32 %v619, 1.0
  %v684 = vmin.f32 %v620, 1.0
  %v685 = vmin.f32 %v621, 1.0
  %v686 = vmin.f32 %v622, 1.0
  %v687 = vmin.f32 %v623, 1.0
  %v688 = vmin.f32 %v624, 1.0
  %v689 = vmin.f32 %v625, 1.0
  %v690 = vmin.f32 %v626, 1.0
  %v691 = vmin.f32 %v627, 1.0
  %v692 = vmin.f32 %v628, 1.0
  %v693 = vmin.f32 %v629, 1.0
  %v694 = vmin.f32 %v630, 1.0
  %v695 = vmin.f32 %v631, 1.0
  %v696 = vmin.f32 %v632, 1.0
  %v697 = vmin.f32 %v633, 1.0
  %v698 = vmin.f32 %v634, 1.0
  %v699 = vmin.f32 %v635, 1.0
  %v700 = vmin.f32 %v636, 1.0
  %v701 = vmin.f32 %v637, 1.0
  %v702 = vmin.f32 %v638, 1.0
  %v703 = vmin.f32 %v639, 1.0
  %v704 = vmin.f32 %v640, 1.0
  %v705 = vmin.f32 %v641, 1.0
  %v706 = vmin.f32 %v642, 1.0
  %v707 = vmin.f32 %v643, 1.0
  %v708 = vmin.f32 %v644, 1.0
  %v709 = vmin.f32 %v645, 1.0
  %v710 = vmin.f32 %v646, 1.0
  %v711 = vmin.f32 %v647, 1.0
  %v712 = vmin.f32 %v648, 1.0
  %v713 = vmin.f32 %v649, 1.0
  %v714 = vmin.f32 %v650, 1.0
  %v715 = vmin.f32 %v651, 1.0
  %v716 = vmin.f32 %v652, 1.0
  %v717 = vmin.f32 %v653, 1.0
  %v718 = vmin.f32 %v654, 1.0
  %v719 = vmin.f32 %v655, 1.0
  %v720 = vmin.f32 %v656, 1.0
  %v721 = vmin.f32 %v657, 1.0
  %v722 = vmin.f32 %v658, 1.0
  %v723 = vmin.f32 %v659, 1.0
  %v724 = vmin.f32 %v660, 1.0
  %v725 = vmin.f32 %v661, 1.0
  %v726 = vmin.f32 %v662, 1.0
  %v727 = vmin.f32 %v663, 1.0
  %v728 = vmin.f32 %v664, 1.0
  %v729 = vmin.f32 %v665, 1.0
  %v730 = vmin.f32 %v666, 1.0
  %v731 = vmin.f32 %v667, 1.0
  %v732 = vmin.f32 %v668, 1.0
  %v733 = vmin.f32 %v669, 1.0
  %v734 = vmin.f32 %v670, 1.0
  %v735 = vmin.f32 %v671, 1.0
  %v736 = vmin.f32 %v672, 1.0
  %v737 = vmin.f32 %v673, 1.0
  %v738 = vmin.f32 %v674, 1.0
  %v739 = vmin.f32 %v675, 1.0
  %v740 = vmin.f32 %v676, 1.0
  %v741 = vmin.f32 %v677, 1.0
  %v742 = vmin.f32 %v678, 1.0
  %v743 = vmin.f32 %v679, 1.0
  %v744 = vmin.f32 %v680, 1.0
  %vm745 = vcmask 130048
  %746 = vst.msk [vmem:[%s3] sm:$0xff] %vm745, %v681
  %747 = vst.msk [vmem:[%s3 + $0x8] sm:$0xff] %vm745, %v682
  %748 = vst.msk [vmem:[%s3 + $0x10] sm:$0xff] %vm745, %v683
  %749 = vst.msk [vmem:[%s3 + $0x18] sm:$0xff] %vm745, %v684
  %750 = vst.msk [vmem:[%s3 + $0x20] sm:$0xff] %vm745, %v685
  %751 = vst.msk [vmem:[%s3 + $0x28] sm:$0xff] %vm745, %v686
  %752 = vst.msk [vmem:[%s3 + $0x30] sm:$0xff] %vm745, %v687
  %753 = vst.msk [vmem:[%s3 + $0x38] sm:$0xff] %vm745, %v688
  %754 = vst.msk [vmem:[%s3 + $0x40] sm:$0xff] %vm745, %v689
  %755 = vst.msk [vmem:[%s3 + $0x48] sm:$0xff] %vm745, %v690
  %756 = vst.msk [vmem:[%s3 + $0x50] sm:$0xff] %vm745, %v691
  %757 = vst.msk [vmem:[%s3 + $0x58] sm:$0xff] %vm745, %v692
  %758 = vst.msk [vmem:[%s3 + $0x60] sm:$0xff] %vm745, %v693
  %759 = vst.msk [vmem:[%s3 + $0x68] sm:$0xff] %vm745, %v694
  %760 = vst.msk [vmem:[%s3 + $0x70] sm:$0xff] %vm745, %v695
  %761 = vst.msk [vmem:[%s3 + $0x78] sm:$0xff] %vm745, %v696
  %762 = vst.msk [vmem:[%s3 + $0x80] sm:$0xff] %vm745, %v697
  %763 = vst.msk [vmem:[%s3 + $0x88] sm:$0xff] %vm745, %v698
  %764 = vst.msk [vmem:[%s3 + $0x90] sm:$0xff] %vm745, %v699
  %765 = vst.msk [vmem:[%s3 + $0x98] sm:$0xff] %vm745, %v700
  %766 = vst.msk [vmem:[%s3 + $0xa0] sm:$0xff] %vm745, %v701
  %767 = vst.msk [vmem:[%s3 + $0xa8] sm:$0xff] %vm745, %v702
  %768 = vst.msk [vmem:[%s3 + $0xb0] sm:$0xff] %vm745, %v703
  %769 = vst.msk [vmem:[%s3 + $0xb8] sm:$0xff] %vm745, %v704
  %770 = vst.msk [vmem:[%s3 + $0xc0] sm:$0xff] %vm745, %v705
  %771 = vst.msk [vmem:[%s3 + $0xc8] sm:$0xff] %vm745, %v706
  %772 = vst.msk [vmem:[%s3 + $0xd0] sm:$0xff] %vm745, %v707
  %773 = vst.msk [vmem:[%s3 + $0xd8] sm:$0xff] %vm745, %v708
  %774 = vst.msk [vmem:[%s3 + $0xe0] sm:$0xff] %vm745, %v709
  %775 = vst.msk [vmem:[%s3 + $0xe8] sm:$0xff] %vm745, %v710
  %776 = vst.msk [vmem:[%s3 + $0xf0] sm:$0xff] %vm745, %v711
  %777 = vst.msk [vmem:[%s3 + $0xf8] sm:$0xff] %vm745, %v712
  %778 = vst.msk [vmem:[%s3 + $0x100] sm:$0xff] %vm745, %v713
  %779 = vst.msk [vmem:[%s3 + $0x108] sm:$0xff] %vm745, %v714
  %780 = vst.msk [vmem:[%s3 + $0x110] sm:$0xff] %vm745, %v715
  %781 = vst.msk [vmem:[%s3 + $0x118] sm:$0xff] %vm745, %v716
  %782 = vst.msk [vmem:[%s3 + $0x120] sm:$0xff] %vm745, %v717
  %783 = vst.msk [vmem:[%s3 + $0x128] sm:$0xff] %vm745, %v718
  %784 = vst.msk [vmem:[%s3 + $0x130] sm:$0xff] %vm745, %v719
  %785 = vst.msk [vmem:[%s3 + $0x138] sm:$0xff] %vm745, %v720
  %786 = vst.msk [vmem:[%s3 + $0x140] sm:$0xff] %vm745, %v721
  %787 = vst.msk [vmem:[%s3 + $0x148] sm:$0xff] %vm745, %v722
  %788 = vst.msk [vmem:[%s3 + $0x150] sm:$0xff] %vm745, %v723
  %789 = vst.msk [vmem:[%s3 + $0x158] sm:$0xff] %vm745, %v724
  %790 = vst.msk [vmem:[%s3 + $0x160] sm:$0xff] %vm745, %v725
  %791 = vst.msk [vmem:[%s3 + $0x168] sm:$0xff] %vm745, %v726
  %792 = vst.msk [vmem:[%s3 + $0x170] sm:$0xff] %vm745, %v727
  %793 = vst.msk [vmem:[%s3 + $0x178] sm:$0xff] %vm745, %v728
  %794 = vst.msk [vmem:[%s3 + $0x180] sm:$0xff] %vm745, %v729
  %795 = vst.msk [vmem:[%s3 + $0x188] sm:$0xff] %vm745, %v730
  %796 = vst.msk [vmem:[%s3 + $0x190] sm:$0xff] %vm745, %v731
  %797 = vst.msk [vmem:[%s3 + $0x198] sm:$0xff] %vm745, %v732
  %798 = vst.msk [vmem:[%s3 + $0x1a0] sm:$0xff] %vm745, %v733
  %799 = vst.msk [vmem:[%s3 + $0x1a8] sm:$0xff] %vm745, %v734
  %800 = vst.msk [vmem:[%s3 + $0x1b0] sm:$0xff] %vm745, %v735
  %801 = vst.msk [vmem:[%s3 + $0x1b8] sm:$0xff] %vm745, %v736
  %802 = vst.msk [vmem:[%s3 + $0x1c0] sm:$0xff] %vm745, %v737
  %803 = vst.msk [vmem:[%s3 + $0x1c8] sm:$0xff] %vm745, %v738
  %804 = vst.msk [vmem:[%s3 + $0x1d0] sm:$0xff] %vm745, %v739
  %805 = vst.msk [vmem:[%s3 + $0x1d8] sm:$0xff] %vm745, %v740
  %806 = vst.msk [vmem:[%s3 + $0x1e0] sm:$0xff] %vm745, %v741
  %807 = vst.msk [vmem:[%s3 + $0x1e8] sm:$0xff] %vm745, %v742
  %808 = vst.msk [vmem:[%s3 + $0x1f0] sm:$0xff] %vm745, %v743
  %809 = vst.msk [vmem:[%s3 + $0x1f8] sm:$0xff] %vm745, %v744
  // Predicated region
  $region14: #{fwd.9} parent=0 // pred_check
    _
  $region15: #{fwd.9} parent=0 // pred_check_branch
    %811 = sbr.rel (0) target = $region17
  $region16: #{fwd.9} parent=0 // pred_region
    _
  $region17: #{fwd.9} parent=0 // pred_fallthru
    _
  // Predicated region
  $region18: #{fwd.9} parent=0 // pred_check
    _
  $region19: #{fwd.9} parent=0 // pred_check_branch
    %813 = sbr.rel (0) target = $region21
  $region20: #{fwd.9} parent=0 // pred_region
    _
  $region21: #{fwd.9} parent=0 // pred_fallthru
    _

// kernel: fwd.8
$region0: #{fwd.8}
  #allocation0 [shape = 'u32[]', space=smem, size = 0x4, offset = 0x4, fixed_abs, tag = 'smem constant byte address 0x4 - core index']
  #allocation1 [shape = 'u32[72,128]{1,0:T(1,128)}', space=vmem, size = 0x9000, scoped, tag = 'internal scratch']
  %s0 = inlined_call_operand.vmem [shape: f32[2,1024], index: 0, kind: input, shape index: {}]
  %s1 = inlined_call_operand.vmem [shape: f32[1024,512], index: 1, kind: input, shape index: {}]
  %s2 = inlined_call_operand.vmem [shape: f32[1,512], index: 2, kind: input, shape index: {}]
  %s3 = inlined_call_operand.vmem [shape: f32[512,1024], index: 3, kind: input, shape index: {}]
  %s4 = inlined_call_operand.vmem [shape: f32[1,1024], index: 4, kind: input, shape index: {}]
  %s5 = inlined_call_operand.vmem [shape: f32[2,1024], index: 5, kind: output, shape index: {}]
  %s6 = sld [smem:[#allocation0]]
  $region30: #{fwd.8} parent=0
    _
  %s8 = ssub.s32 1, %s6
  %s9 = scalar_select 0, %s8, %s6
  // Predicated region
  $region2: #{fwd.8} parent=0 // pred_check
    _
  $region3: #{fwd.8} parent=0 // pred_check_branch
    %11 = sbr.rel (0) target = $region5
  $region4: #{fwd.8} parent=0 // pred_region
    _
  $region5: #{fwd.8} parent=0 // pred_fallthru
    _
  // Predicated region
  $region6: #{fwd.8} parent=0 // pred_check
    _
  $region7: #{fwd.8} parent=0 // pred_check_branch
    %13 = sbr.rel (0) target = $region9
  $region8: #{fwd.8} parent=0 // pred_region
    _
  $region9: #{fwd.8} parent=0 // pred_fallthru
    _
  // Predicated region
  $region10: #{fwd.8} parent=0 // pred_check
    _
  $region11: #{fwd.8} parent=0 // pred_check_branch
    %15 = sbr.rel (0) target = $region13
  $region12: #{fwd.8} parent=0 // pred_region
    _
  $region13: #{fwd.8} parent=0 // pred_fallthru
    _
  // Predicated region
  $region14: #{fwd.8} parent=0 // pred_check
    _
  $region15: #{fwd.8} parent=0 // pred_check_branch
    %17 = sbr.rel (0) target = $region17
  $region16: #{fwd.8} parent=0 // pred_region
    _
  $region17: #{fwd.8} parent=0 // pred_fallthru
    _
  // Predicated region
  $region18: #{fwd.8} parent=0 // pred_check
    _
  $region19: #{fwd.8} parent=0 // pred_check_branch
    %19 = sbr.rel (0) target = $region21
  $region20: #{fwd.8} parent=0 // pred_region
    _
  $region21: #{fwd.8} parent=0 // pred_fallthru
    _
  %v20 = vld [vmem:[%s0] sm:$0xff]
  %v21 = vld [vmem:[%s0 + $0x8] sm:$0xff]
  %v22 = vld [vmem:[%s1] sm:$0xff]
  %v23 = vld [vmem:[%s1 + $0x8] sm:$0xff]
  %v24 = vld [vmem:[%s1 + $0x10] sm:$0xff]
  %v25 = vld [vmem:[%s1 + $0x18] sm:$0xff]
  %v26 = vld [vmem:[%s1 + $0x20] sm:$0xff]
  %v27 = vld [vmem:[%s1 + $0x28] sm:$0xff]
  %v28 = vld [vmem:[%s1 + $0x30] sm:$0xff]
  %v29 = vld [vmem:[%s1 + $0x38] sm:$0xff]
  %v30 = vld [vmem:[%s1 + $0x40] sm:$0xff]
  %v31 = vld [vmem:[%s1 + $0x48] sm:$0xff]
  %v32 = vld [vmem:[%s1 + $0x50] sm:$0xff]
  %v33 = vld [vmem:[%s1 + $0x58] sm:$0xff]
  %v34 = vld [vmem:[%s1 + $0x60] sm:$0xff]
  %v35 = vld [vmem:[%s1 + $0x68] sm:$0xff]
  %v36 = vld [vmem:[%s1 + $0x70] sm:$0xff]
  %v37 = vld [vmem:[%s1 + $0x78] sm:$0xff]
  %v38 = vld [vmem:[%s1 + $0x80] sm:$0xff]
  %v39 = vld [vmem:[%s1 + $0x88] sm:$0xff]
  %v40 = vld [vmem:[%s1 + $0x90] sm:$0xff]
  %v41 = vld [vmem:[%s1 + $0x98] sm:$0xff]
  %v42 = vld [vmem:[%s1 + $0xa0] sm:$0xff]
  %v43 = vld [vmem:[%s1 + $0xa8] sm:$0xff]
  %v44 = vld [vmem:[%s1 + $0xb0] sm:$0xff]
  %v45 = vld [vmem:[%s1 + $0xb8] sm:$0xff]
  %v46 = vld [vmem:[%s1 + $0xc0] sm:$0xff]
  %v47 = vld [vmem:[%s1 + $0xc8] sm:$0xff]
  %v48 = vld [vmem:[%s1 + $0xd0] sm:$0xff]
  %v49 = vld [vmem:[%s1 + $0xd8] sm:$0xff]
  %v50 = vld [vmem:[%s1 + $0xe0] sm:$0xff]
  %v51 = vld [vmem:[%s1 + $0xe8] sm:$0xff]
  %v52 = vld [vmem:[%s1 + $0xf0] sm:$0xff]
  %v53 = vld [vmem:[%s1 + $0xf8] sm:$0xff]
  %v54 = vld [vmem:[%s1 + $0x100] sm:$0xff]
  %v55 = vld [vmem:[%s1 + $0x108] sm:$0xff]
  %v56 = vld [vmem:[%s1 + $0x110] sm:$0xff]
  %v57 = vld [vmem:[%s1 + $0x118] sm:$0xff]
  %v58 = vld [vmem:[%s1 + $0x120] sm:$0xff]
  %v59 = vld [vmem:[%s1 + $0x128] sm:$0xff]
  %v60 = vld [vmem:[%s1 + $0x130] sm:$0xff]
  %v61 = vld [vmem:[%s1 + $0x138] sm:$0xff]
  %v62 = vld [vmem:[%s1 + $0x140] sm:$0xff]
  %v63 = vld [vmem:[%s1 + $0x148] sm:$0xff]
  %v64 = vld [vmem:[%s1 + $0x150] sm:$0xff]
  %v65 = vld [vmem:[%s1 + $0x158] sm:$0xff]
  %v66 = vld [vmem:[%s1 + $0x160] sm:$0xff]
  %v67 = vld [vmem:[%s1 + $0x168] sm:$0xff]
  %v68 = vld [vmem:[%s1 + $0x170] sm:$0xff]
  %v69 = vld [vmem:[%s1 + $0x178] sm:$0xff]
  %v70 = vld [vmem:[%s1 + $0x180] sm:$0xff]
  %v71 = vld [vmem:[%s1 + $0x188] sm:$0xff]
  %v72 = vld [vmem:[%s1 + $0x190] sm:$0xff]
  %v73 = vld [vmem:[%s1 + $0x198] sm:$0xff]
  %v74 = vld [vmem:[%s1 + $0x1a0] sm:$0xff]
  %v75 = vld [vmem:[%s1 + $0x1a8] sm:$0xff]
  %v76 = vld [vmem:[%s1 + $0x1b0] sm:$0xff]
  %v77 = vld [vmem:[%s1 + $0x1b8] sm:$0xff]
  %v78 = vld [vmem:[%s1 + $0x1c0] sm:$0xff]
  %v79 = vld [vmem:[%s1 + $0x1c8] sm:$0xff]
  %v80 = vld [vmem:[%s1 + $0x1d0] sm:$0xff]
  %v81 = vld [vmem:[%s1 + $0x1d8] sm:$0xff]
  %v82 = vld [vmem:[%s1 + $0x1e0] sm:$0xff]
  %v83 = vld [vmem:[%s1 + $0x1e8] sm:$0xff]
  %v84 = vld [vmem:[%s1 + $0x1f0] sm:$0xff]
  %v85 = vld [vmem:[%s1 + $0x1f8] sm:$0xff]
  %v86 = vld [vmem:[%s1 + $0x200] sm:$0xff]
  %v87 = vld [vmem:[%s1 + $0x208] sm:$0xff]
  %v88 = vld [vmem:[%s1 + $0x210] sm:$0xff]
  %v89 = vld [vmem:[%s1 + $0x218] sm:$0xff]
  %v90 = vld [vmem:[%s1 + $0x220] sm:$0xff]
  %v91 = vld [vmem:[%s1 + $0x228] sm:$0xff]
  %v92 = vld [vmem:[%s1 + $0x230] sm:$0xff]
  %v93 = vld [vmem:[%s1 + $0x238] sm:$0xff]
  %v94 = vld [vmem:[%s1 + $0x240] sm:$0xff]
  %v95 = vld [vmem:[%s1 + $0x248] sm:$0xff]
  %v96 = vld [vmem:[%s1 + $0x250] sm:$0xff]
  %v97 = vld [vmem:[%s1 + $0x258] sm:$0xff]
  %v98 = vld [vmem:[%s1 + $0x260] sm:$0xff]
  %v99 = vld [vmem:[%s1 + $0x268] sm:$0xff]
  %v100 = vld [vmem:[%s1 + $0x270] sm:$0xff]
  %v101 = vld [vmem:[%s1 + $0x278] sm:$0xff]
  %v102 = vld [vmem:[%s1 + $0x280] sm:$0xff]
  %v103 = vld [vmem:[%s1 + $0x288] sm:$0xff]
  %v104 = vld [vmem:[%s1 + $0x290] sm:$0xff]
  %v105 = vld [vmem:[%s1 + $0x298] sm:$0xff]
  %v106 = vld [vmem:[%s1 + $0x2a0] sm:$0xff]
  %v107 = vld [vmem:[%s1 + $0x2a8] sm:$0xff]
  %v108 = vld [vmem:[%s1 + $0x2b0] sm:$0xff]
  %v109 = vld [vmem:[%s1 + $0x2b8] sm:$0xff]
  %v110 = vld [vmem:[%s1 + $0x2c0] sm:$0xff]
  %v111 = vld [vmem:[%s1 + $0x2c8] sm:$0xff]
  %v112 = vld [vmem:[%s1 + $0x2d0] sm:$0xff]
  %v113 = vld [vmem:[%s1 + $0x2d8] sm:$0xff]
  %v114 = vld [vmem:[%s1 + $0x2e0] sm:$0xff]
  %v115 = vld [vmem:[%s1 + $0x2e8] sm:$0xff]
  %v116 = vld [vmem:[%s1 + $0x2f0] sm:$0xff]
  %v117 = vld [vmem:[%s1 + $0x2f8] sm:$0xff]
  %v118 = vld [vmem:[%s1 + $0x300] sm:$0xff]
  %v119 = vld [vmem:[%s1 + $0x308] sm:$0xff]
  %v120 = vld [vmem:[%s1 + $0x310] sm:$0xff]
  %v121 = vld [vmem:[%s1 + $0x318] sm:$0xff]
  %v122 = vld [vmem:[%s1 + $0x320] sm:$0xff]
  %v123 = vld [vmem:[%s1 + $0x328] sm:$0xff]
  %v124 = vld [vmem:[%s1 + $0x330] sm:$0xff]
  %v125 = vld [vmem:[%s1 + $0x338] sm:$0xff]
  %v126 = vld [vmem:[%s1 + $0x340] sm:$0xff]
  %v127 = vld [vmem:[%s1 + $0x348] sm:$0xff]
  %v128 = vld [vmem:[%s1 + $0x350] sm:$0xff]
  %v129 = vld [vmem:[%s1 + $0x358] sm:$0xff]
  %v130 = vld [vmem:[%s1 + $0x360] sm:$0xff]
  %v131 = vld [vmem:[%s1 + $0x368] sm:$0xff]
  %v132 = vld [vmem:[%s1 + $0x370] sm:$0xff]
  %v133 = vld [vmem:[%s1 + $0x378] sm:$0xff]
  %v134 = vld [vmem:[%s1 + $0x380] sm:$0xff]
  %v135 = vld [vmem:[%s1 + $0x388] sm:$0xff]
  %v136 = vld [vmem:[%s1 + $0x390] sm:$0xff]
  %v137 = vld [vmem:[%s1 + $0x398] sm:$0xff]
  %v138 = vld [vmem:[%s1 + $0x3a0] sm:$0xff]
  %v139 = vld [vmem:[%s1 + $0x3a8] sm:$0xff]
  %v140 = vld [vmem:[%s1 + $0x3b0] sm:$0xff]
  %v141 = vld [vmem:[%s1 + $0x3b8] sm:$0xff]
  %v142 = vld [vmem:[%s1 + $0x3c0] sm:$0xff]
  %v143 = vld [vmem:[%s1 + $0x3c8] sm:$0xff]
  %v144 = vld [vmem:[%s1 + $0x3d0] sm:$0xff]
  %v145 = vld [vmem:[%s1 + $0x3d8] sm:$0xff]
  %v146 = vld [vmem:[%s1 + $0x3e0] sm:$0xff]
  %v147 = vld [vmem:[%s1 + $0x3e8] sm:$0xff]
  %v148 = vld [vmem:[%s1 + $0x3f0] sm:$0xff]
  %v149 = vld [vmem:[%s1 + $0x3f8] sm:$0xff]
  %v150 = vld [vmem:[%s1 + $0x400] sm:$0xff]
  %v151 = vld [vmem:[%s1 + $0x408] sm:$0xff]
  %v152 = vld [vmem:[%s1 + $0x410] sm:$0xff]
  %v153 = vld [vmem:[%s1 + $0x418] sm:$0xff]
  %v154 = vld [vmem:[%s1 + $0x420] sm:$0xff]
  %v155 = vld [vmem:[%s1 + $0x428] sm:$0xff]
  %v156 = vld [vmem:[%s1 + $0x430] sm:$0xff]
  %v157 = vld [vmem:[%s1 + $0x438] sm:$0xff]
  %v158 = vld [vmem:[%s1 + $0x440] sm:$0xff]
  %v159 = vld [vmem:[%s1 + $0x448] sm:$0xff]
  %v160 = vld [vmem:[%s1 + $0x450] sm:$0xff]
  %v161 = vld [vmem:[%s1 + $0x458] sm:$0xff]
  %v162 = vld [vmem:[%s1 + $0x460] sm:$0xff]
  %v163 = vld [vmem:[%s1 + $0x468] sm:$0xff]
  %v164 = vld [vmem:[%s1 + $0x470] sm:$0xff]
  %v165 = vld [vmem:[%s1 + $0x478] sm:$0xff]
  %v166 = vld [vmem:[%s1 + $0x480] sm:$0xff]
  %v167 = vld [vmem:[%s1 + $0x488] sm:$0xff]
  %v168 = vld [vmem:[%s1 + $0x490] sm:$0xff]
  %v169 = vld [vmem:[%s1 + $0x498] sm:$0xff]
  %v170 = vld [vmem:[%s1 + $0x4a0] sm:$0xff]
  %v171 = vld [vmem:[%s1 + $0x4a8] sm:$0xff]
  %v172 = vld [vmem:[%s1 + $0x4b0] sm:$0xff]
  %v173 = vld [vmem:[%s1 + $0x4b8] sm:$0xff]
  %v174 = vld [vmem:[%s1 + $0x4c0] sm:$0xff]
  %v175 = vld [vmem:[%s1 + $0x4c8] sm:$0xff]
  %v176 = vld [vmem:[%s1 + $0x4d0] sm:$0xff]
  %v177 = vld [vmem:[%s1 + $0x4d8] sm:$0xff]
  %v178 = vld [vmem:[%s1 + $0x4e0] sm:$0xff]
  %v179 = vld [vmem:[%s1 + $0x4e8] sm:$0xff]
  %v180 = vld [vmem:[%s1 + $0x4f0] sm:$0xff]
  %v181 = vld [vmem:[%s1 + $0x4f8] sm:$0xff]
  %v182 = vld [vmem:[%s1 + $0x500] sm:$0xff]
  %v183 = vld [vmem:[%s1 + $0x508] sm:$0xff]
  %v184 = vld [vmem:[%s1 + $0x510] sm:$0xff]
  %v185 = vld [vmem:[%s1 + $0x518] sm:$0xff]
  %v186 = vld [vmem:[%s1 + $0x520] sm:$0xff]
  %v187 = vld [vmem:[%s1 + $0x528] sm:$0xff]
  %v188 = vld [vmem:[%s1 + $0x530] sm:$0xff]
  %v189 = vld [vmem:[%s1 + $0x538] sm:$0xff]
  %v190 = vld [vmem:[%s1 + $0x540] sm:$0xff]
  %v191 = vld [vmem:[%s1 + $0x548] sm:$0xff]
  %v192 = vld [vmem:[%s1 + $0x550] sm:$0xff]
  %v193 = vld [vmem:[%s1 + $0x558] sm:$0xff]
  %v194 = vld [vmem:[%s1 + $0x560] sm:$0xff]
  %v195 = vld [vmem:[%s1 + $0x568] sm:$0xff]
  %v196 = vld [vmem:[%s1 + $0x570] sm:$0xff]
  %v197 = vld [vmem:[%s1 + $0x578] sm:$0xff]
  %v198 = vld [vmem:[%s1 + $0x580] sm:$0xff]
  %v199 = vld [vmem:[%s1 + $0x588] sm:$0xff]
  %v200 = vld [vmem:[%s1 + $0x590] sm:$0xff]
  %v201 = vld [vmem:[%s1 + $0x598] sm:$0xff]
  %v202 = vld [vmem:[%s1 + $0x5a0] sm:$0xff]
  %v203 = vld [vmem:[%s1 + $0x5a8] sm:$0xff]
  %v204 = vld [vmem:[%s1 + $0x5b0] sm:$0xff]
  %v205 = vld [vmem:[%s1 + $0x5b8] sm:$0xff]
  %v206 = vld [vmem:[%s1 + $0x5c0] sm:$0xff]
  %v207 = vld [vmem:[%s1 + $0x5c8] sm:$0xff]
  %v208 = vld [vmem:[%s1 + $0x5d0] sm:$0xff]
  %v209 = vld [vmem:[%s1 + $0x5d8] sm:$0xff]
  %v210 = vld [vmem:[%s1 + $0x5e0] sm:$0xff]
  %v211 = vld [vmem:[%s1 + $0x5e8] sm:$0xff]
  %v212 = vld [vmem:[%s1 + $0x5f0] sm:$0xff]
  %v213 = vld [vmem:[%s1 + $0x5f8] sm:$0xff]
  %v214 = vld [vmem:[%s1 + $0x600] sm:$0xff]
  %v215 = vld [vmem:[%s1 + $0x608] sm:$0xff]
  %v216 = vld [vmem:[%s1 + $0x610] sm:$0xff]
  %v217 = vld [vmem:[%s1 + $0x618] sm:$0xff]
  %v218 = vld [vmem:[%s1 + $0x620] sm:$0xff]
  %v219 = vld [vmem:[%s1 + $0x628] sm:$0xff]
  %v220 = vld [vmem:[%s1 + $0x630] sm:$0xff]
  %v221 = vld [vmem:[%s1 + $0x638] sm:$0xff]
  %v222 = vld [vmem:[%s1 + $0x640] sm:$0xff]
  %v223 = vld [vmem:[%s1 + $0x648] sm:$0xff]
  %v224 = vld [vmem:[%s1 + $0x650] sm:$0xff]
  %v225 = vld [vmem:[%s1 + $0x658] sm:$0xff]
  %v226 = vld [vmem:[%s1 + $0x660] sm:$0xff]
  %v227 = vld [vmem:[%s1 + $0x668] sm:$0xff]
  %v228 = vld [vmem:[%s1 + $0x670] sm:$0xff]
  %v229 = vld [vmem:[%s1 + $0x678] sm:$0xff]
  %v230 = vld [vmem:[%s1 + $0x680] sm:$0xff]
  %v231 = vld [vmem:[%s1 + $0x688] sm:$0xff]
  %v232 = vld [vmem:[%s1 + $0x690] sm:$0xff]
  %v233 = vld [vmem:[%s1 + $0x698] sm:$0xff]
  %v234 = vld [vmem:[%s1 + $0x6a0] sm:$0xff]
  %v235 = vld [vmem:[%s1 + $0x6a8] sm:$0xff]
  %v236 = vld [vmem:[%s1 + $0x6b0] sm:$0xff]
  %v237 = vld [vmem:[%s1 + $0x6b8] sm:$0xff]
  %v238 = vld [vmem:[%s1 + $0x6c0] sm:$0xff]
  %v239 = vld [vmem:[%s1 + $0x6c8] sm:$0xff]
  %v240 = vld [vmem:[%s1 + $0x6d0] sm:$0xff]
  %v241 = vld [vmem:[%s1 + $0x6d8] sm:$0xff]
  %v242 = vld [vmem:[%s1 + $0x6e0] sm:$0xff]
  %v243 = vld [vmem:[%s1 + $0x6e8] sm:$0xff]
  %v244 = vld [vmem:[%s1 + $0x6f0] sm:$0xff]
  %v245 = vld [vmem:[%s1 + $0x6f8] sm:$0xff]
  %v246 = vld [vmem:[%s1 + $0x700] sm:$0xff]
  %v247 = vld [vmem:[%s1 + $0x708] sm:$0xff]
  %v248 = vld [vmem:[%s1 + $0x710] sm:$0xff]
  %v249 = vld [vmem:[%s1 + $0x718] sm:$0xff]
  %v250 = vld [vmem:[%s1 + $0x720] sm:$0xff]
  %v251 = vld [vmem:[%s1 + $0x728] sm:$0xff]
  %v252 = vld [vmem:[%s1 + $0x730] sm:$0xff]
  %v253 = vld [vmem:[%s1 + $0x738] sm:$0xff]
  %v254 = vld [vmem:[%s1 + $0x740] sm:$0xff]
  %v255 = vld [vmem:[%s1 + $0x748] sm:$0xff]
  %v256 = vld [vmem:[%s1 + $0x750] sm:$0xff]
  %v257 = vld [vmem:[%s1 + $0x758] sm:$0xff]
  %v258 = vld [vmem:[%s1 + $0x760] sm:$0xff]
  %v259 = vld [vmem:[%s1 + $0x768] sm:$0xff]
  %v260 = vld [vmem:[%s1 + $0x770] sm:$0xff]
  %v261 = vld [vmem:[%s1 + $0x778] sm:$0xff]
  %v262 = vld [vmem:[%s1 + $0x780] sm:$0xff]
  %v263 = vld [vmem:[%s1 + $0x788] sm:$0xff]
  %v264 = vld [vmem:[%s1 + $0x790] sm:$0xff]
  %v265 = vld [vmem:[%s1 + $0x798] sm:$0xff]
  %v266 = vld [vmem:[%s1 + $0x7a0] sm:$0xff]
  %v267 = vld [vmem:[%s1 + $0x7a8] sm:$0xff]
  %v268 = vld [vmem:[%s1 + $0x7b0] sm:$0xff]
  %v269 = vld [vmem:[%s1 + $0x7b8] sm:$0xff]
  %v270 = vld [vmem:[%s1 + $0x7c0] sm:$0xff]
  %v271 = vld [vmem:[%s1 + $0x7c8] sm:$0xff]
  %v272 = vld [vmem:[%s1 + $0x7d0] sm:$0xff]
  %v273 = vld [vmem:[%s1 + $0x7d8] sm:$0xff]
  %v274 = vld [vmem:[%s1 + $0x7e0] sm:$0xff]
  %v275 = vld [vmem:[%s1 + $0x7e8] sm:$0xff]
  %v276 = vld [vmem:[%s1 + $0x7f0] sm:$0xff]
  %v277 = vld [vmem:[%s1 + $0x7f8] sm:$0xff]
  %v278 = vld [vmem:[%s1 + $0x800] sm:$0xff]
  %v279 = vld [vmem:[%s1 + $0x808] sm:$0xff]
  %v280 = vld [vmem:[%s1 + $0x810] sm:$0xff]
  %v281 = vld [vmem:[%s1 + $0x818] sm:$0xff]
  %v282 = vld [vmem:[%s1 + $0x820] sm:$0xff]
  %v283 = vld [vmem:[%s1 + $0x828] sm:$0xff]
  %v284 = vld [vmem:[%s1 + $0x830] sm:$0xff]
  %v285 = vld [vmem:[%s1 + $0x838] sm:$0xff]
  %v286 = vld [vmem:[%s1 + $0x840] sm:$0xff]
  %v287 = vld [vmem:[%s1 + $0x848] sm:$0xff]
  %v288 = vld [vmem:[%s1 + $0x850] sm:$0xff]
  %v289 = vld [vmem:[%s1 + $0x858] sm:$0xff]
  %v290 = vld [vmem:[%s1 + $0x860] sm:$0xff]
  %v291 = vld [vmem:[%s1 + $0x868] sm:$0xff]
  %v292 = vld [vmem:[%s1 + $0x870] sm:$0xff]
  %v293 = vld [vmem:[%s1 + $0x878] sm:$0xff]
  %v294 = vld [vmem:[%s1 + $0x880] sm:$0xff]
  %v295 = vld [vmem:[%s1 + $0x888] sm:$0xff]
  %v296 = vld [vmem:[%s1 + $0x890] sm:$0xff]
  %v297 = vld [vmem:[%s1 + $0x898] sm:$0xff]
  %v298 = vld [vmem:[%s1 + $0x8a0] sm:$0xff]
  %v299 = vld [vmem:[%s1 + $0x8a8] sm:$0xff]
  %v300 = vld [vmem:[%s1 + $0x8b0] sm:$0xff]
  %v301 = vld [vmem:[%s1 + $0x8b8] sm:$0xff]
  %v302 = vld [vmem:[%s1 + $0x8c0] sm:$0xff]
  %v303 = vld [vmem:[%s1 + $0x8c8] sm:$0xff]
  %v304 = vld [vmem:[%s1 + $0x8d0] sm:$0xff]
  %v305 = vld [vmem:[%s1 + $0x8d8] sm:$0xff]
  %v306 = vld [vmem:[%s1 + $0x8e0] sm:$0xff]
  %v307 = vld [vmem:[%s1 + $0x8e8] sm:$0xff]
  %v308 = vld [vmem:[%s1 + $0x8f0] sm:$0xff]
  %v309 = vld [vmem:[%s1 + $0x8f8] sm:$0xff]
  %v310 = vld [vmem:[%s1 + $0x900] sm:$0xff]
  %v311 = vld [vmem:[%s1 + $0x908] sm:$0xff]
  %v312 = vld [vmem:[%s1 + $0x910] sm:$0xff]
  %v313 = vld [vmem:[%s1 + $0x918] sm:$0xff]
  %v314 = vld [vmem:[%s1 + $0x920] sm:$0xff]
  %v315 = vld [vmem:[%s1 + $0x928] sm:$0xff]
  %v316 = vld [vmem:[%s1 + $0x930] sm:$0xff]
  %v317 = vld [vmem:[%s1 + $0x938] sm:$0xff]
  %v318 = vld [vmem:[%s1 + $0x940] sm:$0xff]
  %v319 = vld [vmem:[%s1 + $0x948] sm:$0xff]
  %v320 = vld [vmem:[%s1 + $0x950] sm:$0xff]
  %v321 = vld [vmem:[%s1 + $0x958] sm:$0xff]
  %v322 = vld [vmem:[%s1 + $0x960] sm:$0xff]
  %v323 = vld [vmem:[%s1 + $0x968] sm:$0xff]
  %v324 = vld [vmem:[%s1 + $0x970] sm:$0xff]
  %v325 = vld [vmem:[%s1 + $0x978] sm:$0xff]
  %v326 = vld [vmem:[%s1 + $0x980] sm:$0xff]
  %v327 = vld [vmem:[%s1 + $0x988] sm:$0xff]
  %v328 = vld [vmem:[%s1 + $0x990] sm:$0xff]
  %v329 = vld [vmem:[%s1 + $0x998] sm:$0xff]
  %v330 = vld [vmem:[%s1 + $0x9a0] sm:$0xff]
  %v331 = vld [vmem:[%s1 + $0x9a8] sm:$0xff]
  %v332 = vld [vmem:[%s1 + $0x9b0] sm:$0xff]
  %v333 = vld [vmem:[%s1 + $0x9b8] sm:$0xff]
  %v334 = vld [vmem:[%s1 + $0x9c0] sm:$0xff]
  %v335 = vld [vmem:[%s1 + $0x9c8] sm:$0xff]
  %v336 = vld [vmem:[%s1 + $0x9d0] sm:$0xff]
  %v337 = vld [vmem:[%s1 + $0x9d8] sm:$0xff]
  %v338 = vld [vmem:[%s1 + $0x9e0] sm:$0xff]
  %v339 = vld [vmem:[%s1 + $0x9e8] sm:$0xff]
  %v340 = vld [vmem:[%s1 + $0x9f0] sm:$0xff]
  %v341 = vld [vmem:[%s1 + $0x9f8] sm:$0xff]
  %v342 = vld [vmem:[%s1 + $0xa00] sm:$0xff]
  %v343 = vld [vmem:[%s1 + $0xa08] sm:$0xff]
  %v344 = vld [vmem:[%s1 + $0xa10] sm:$0xff]
  %v345 = vld [vmem:[%s1 + $0xa18] sm:$0xff]
  %v346 = vld [vmem:[%s1 + $0xa20] sm:$0xff]
  %v347 = vld [vmem:[%s1 + $0xa28] sm:$0xff]
  %v348 = vld [vmem:[%s1 + $0xa30] sm:$0xff]
  %v349 = vld [vmem:[%s1 + $0xa38] sm:$0xff]
  %v350 = vld [vmem:[%s1 + $0xa40] sm:$0xff]
  %v351 = vld [vmem:[%s1 + $0xa48] sm:$0xff]
  %v352 = vld [vmem:[%s1 + $0xa50] sm:$0xff]
  %v353 = vld [vmem:[%s1 + $0xa58] sm:$0xff]
  %v354 = vld [vmem:[%s1 + $0xa60] sm:$0xff]
  %v355 = vld [vmem:[%s1 + $0xa68] sm:$0xff]
  %v356 = vld [vmem:[%s1 + $0xa70] sm:$0xff]
  %v357 = vld [vmem:[%s1 + $0xa78] sm:$0xff]
  %v358 = vld [vmem:[%s1 + $0xa80] sm:$0xff]
  %v359 = vld [vmem:[%s1 + $0xa88] sm:$0xff]
  %v360 = vld [vmem:[%s1 + $0xa90] sm:$0xff]
  %v361 = vld [vmem:[%s1 + $0xa98] sm:$0xff]
  %v362 = vld [vmem:[%s1 + $0xaa0] sm:$0xff]
  %v363 = vld [vmem:[%s1 + $0xaa8] sm:$0xff]
  %v364 = vld [vmem:[%s1 + $0xab0] sm:$0xff]
  %v365 = vld [vmem:[%s1 + $0xab8] sm:$0xff]
  %v366 = vld [vmem:[%s1 + $0xac0] sm:$0xff]
  %v367 = vld [vmem:[%s1 + $0xac8] sm:$0xff]
  %v368 = vld [vmem:[%s1 + $0xad0] sm:$0xff]
  %v369 = vld [vmem:[%s1 + $0xad8] sm:$0xff]
  %v370 = vld [vmem:[%s1 + $0xae0] sm:$0xff]
  %v371 = vld [vmem:[%s1 + $0xae8] sm:$0xff]
  %v372 = vld [vmem:[%s1 + $0xaf0] sm:$0xff]
  %v373 = vld [vmem:[%s1 + $0xaf8] sm:$0xff]
  %v374 = vld [vmem:[%s1 + $0xb00] sm:$0xff]
  %v375 = vld [vmem:[%s1 + $0xb08] sm:$0xff]
  %v376 = vld [vmem:[%s1 + $0xb10] sm:$0xff]
  %v377 = vld [vmem:[%s1 + $0xb18] sm:$0xff]
  %v378 = vld [vmem:[%s1 + $0xb20] sm:$0xff]
  %v379 = vld [vmem:[%s1 + $0xb28] sm:$0xff]
  %v380 = vld [vmem:[%s1 + $0xb30] sm:$0xff]
  %v381 = vld [vmem:[%s1 + $0xb38] sm:$0xff]
  %v382 = vld [vmem:[%s1 + $0xb40] sm:$0xff]
  %v383 = vld [vmem:[%s1 + $0xb48] sm:$0xff]
  %v384 = vld [vmem:[%s1 + $0xb50] sm:$0xff]
  %v385 = vld [vmem:[%s1 + $0xb58] sm:$0xff]
  %v386 = vld [vmem:[%s1 + $0xb60] sm:$0xff]
  %v387 = vld [vmem:[%s1 + $0xb68] sm:$0xff]
  %v388 = vld [vmem:[%s1 + $0xb70] sm:$0xff]
  %v389 = vld [vmem:[%s1 + $0xb78] sm:$0xff]
  %v390 = vld [vmem:[%s1 + $0xb80] sm:$0xff]
  %v391 = vld [vmem:[%s1 + $0xb88] sm:$0xff]
  %v392 = vld [vmem:[%s1 + $0xb90] sm:$0xff]
  %v393 = vld [vmem:[%s1 + $0xb98] sm:$0xff]
  %v394 = vld [vmem:[%s1 + $0xba0] sm:$0xff]
  %v395 = vld [vmem:[%s1 + $0xba8] sm:$0xff]
  %v396 = vld [vmem:[%s1 + $0xbb0] sm:$0xff]
  %v397 = vld [vmem:[%s1 + $0xbb8] sm:$0xff]
  %v398 = vld [vmem:[%s1 + $0xbc0] sm:$0xff]
  %v399 = vld [vmem:[%s1 + $0xbc8] sm:$0xff]
  %v400 = vld [vmem:[%s1 + $0xbd0] sm:$0xff]
  %v401 = vld [vmem:[%s1 + $0xbd8] sm:$0xff]
  %v402 = vld [vmem:[%s1 + $0xbe0] sm:$0xff]
  %v403 = vld [vmem:[%s1 + $0xbe8] sm:$0xff]
  %v404 = vld [vmem:[%s1 + $0xbf0] sm:$0xff]
  %v405 = vld [vmem:[%s1 + $0xbf8] sm:$0xff]
  %v406 = vld [vmem:[%s1 + $0xc00] sm:$0xff]
  %v407 = vld [vmem:[%s1 + $0xc08] sm:$0xff]
  %v408 = vld [vmem:[%s1 + $0xc10] sm:$0xff]
  %v409 = vld [vmem:[%s1 + $0xc18] sm:$0xff]
  %v410 = vld [vmem:[%s1 + $0xc20] sm:$0xff]
  %v411 = vld [vmem:[%s1 + $0xc28] sm:$0xff]
  %v412 = vld [vmem:[%s1 + $0xc30] sm:$0xff]
  %v413 = vld [vmem:[%s1 + $0xc38] sm:$0xff]
  %v414 = vld [vmem:[%s1 + $0xc40] sm:$0xff]
  %v415 = vld [vmem:[%s1 + $0xc48] sm:$0xff]
  %v416 = vld [vmem:[%s1 + $0xc50] sm:$0xff]
  %v417 = vld [vmem:[%s1 + $0xc58] sm:$0xff]
  %v418 = vld [vmem:[%s1 + $0xc60] sm:$0xff]
  %v419 = vld [vmem:[%s1 + $0xc68] sm:$0xff]
  %v420 = vld [vmem:[%s1 + $0xc70] sm:$0xff]
  %v421 = vld [vmem:[%s1 + $0xc78] sm:$0xff]
  %v422 = vld [vmem:[%s1 + $0xc80] sm:$0xff]
  %v423 = vld [vmem:[%s1 + $0xc88] sm:$0xff]
  %v424 = vld [vmem:[%s1 + $0xc90] sm:$0xff]
  %v425 = vld [vmem:[%s1 + $0xc98] sm:$0xff]
  %v426 = vld [vmem:[%s1 + $0xca0] sm:$0xff]
  %v427 = vld [vmem:[%s1 + $0xca8] sm:$0xff]
  %v428 = vld [vmem:[%s1 + $0xcb0] sm:$0xff]
  %v429 = vld [vmem:[%s1 + $0xcb8] sm:$0xff]
  %v430 = vld [vmem:[%s1 + $0xcc0] sm:$0xff]
  %v431 = vld [vmem:[%s1 + $0xcc8] sm:$0xff]
  %v432 = vld [vmem:[%s1 + $0xcd0] sm:$0xff]
  %v433 = vld [vmem:[%s1 + $0xcd8] sm:$0xff]
  %v434 = vld [vmem:[%s1 + $0xce0] sm:$0xff]
  %v435 = vld [vmem:[%s1 + $0xce8] sm:$0xff]
  %v436 = vld [vmem:[%s1 + $0xcf0] sm:$0xff]
  %v437 = vld [vmem:[%s1 + $0xcf8] sm:$0xff]
  %v438 = vld [vmem:[%s1 + $0xd00] sm:$0xff]
  %v439 = vld [vmem:[%s1 + $0xd08] sm:$0xff]
  %v440 = vld [vmem:[%s1 + $0xd10] sm:$0xff]
  %v441 = vld [vmem:[%s1 + $0xd18] sm:$0xff]
  %v442 = vld [vmem:[%s1 + $0xd20] sm:$0xff]
  %v443 = vld [vmem:[%s1 + $0xd28] sm:$0xff]
  %v444 = vld [vmem:[%s1 + $0xd30] sm:$0xff]
  %v445 = vld [vmem:[%s1 + $0xd38] sm:$0xff]
  %v446 = vld [vmem:[%s1 + $0xd40] sm:$0xff]
  %v447 = vld [vmem:[%s1 + $0xd48] sm:$0xff]
  %v448 = vld [vmem:[%s1 + $0xd50] sm:$0xff]
  %v449 = vld [vmem:[%s1 + $0xd58] sm:$0xff]
  %v450 = vld [vmem:[%s1 + $0xd60] sm:$0xff]
  %v451 = vld [vmem:[%s1 + $0xd68] sm:$0xff]
  %v452 = vld [vmem:[%s1 + $0xd70] sm:$0xff]
  %v453 = vld [vmem:[%s1 + $0xd78] sm:$0xff]
  %v454 = vld [vmem:[%s1 + $0xd80] sm:$0xff]
  %v455 = vld [vmem:[%s1 + $0xd88] sm:$0xff]
  %v456 = vld [vmem:[%s1 + $0xd90] sm:$0xff]
  %v457 = vld [vmem:[%s1 + $0xd98] sm:$0xff]
  %v458 = vld [vmem:[%s1 + $0xda0] sm:$0xff]
  %v459 = vld [vmem:[%s1 + $0xda8] sm:$0xff]
  %v460 = vld [vmem:[%s1 + $0xdb0] sm:$0xff]
  %v461 = vld [vmem:[%s1 + $0xdb8] sm:$0xff]
  %v462 = vld [vmem:[%s1 + $0xdc0] sm:$0xff]
  %v463 = vld [vmem:[%s1 + $0xdc8] sm:$0xff]
  %v464 = vld [vmem:[%s1 + $0xdd0] sm:$0xff]
  %v465 = vld [vmem:[%s1 + $0xdd8] sm:$0xff]
  %v466 = vld [vmem:[%s1 + $0xde0] sm:$0xff]
  %v467 = vld [vmem:[%s1 + $0xde8] sm:$0xff]
  %v468 = vld [vmem:[%s1 + $0xdf0] sm:$0xff]
  %v469 = vld [vmem:[%s1 + $0xdf8] sm:$0xff]
  %v470 = vld [vmem:[%s1 + $0xe00] sm:$0xff]
  %v471 = vld [vmem:[%s1 + $0xe08] sm:$0xff]
  %v472 = vld [vmem:[%s1 + $0xe10] sm:$0xff]
  %v473 = vld [vmem:[%s1 + $0xe18] sm:$0xff]
  %v474 = vld [vmem:[%s1 + $0xe20] sm:$0xff]
  %v475 = vld [vmem:[%s1 + $0xe28] sm:$0xff]
  %v476 = vld [vmem:[%s1 + $0xe30] sm:$0xff]
  %v477 = vld [vmem:[%s1 + $0xe38] sm:$0xff]
  %v478 = vld [vmem:[%s1 + $0xe40] sm:$0xff]
  %v479 = vld [vmem:[%s1 + $0xe48] sm:$0xff]
  %v480 = vld [vmem:[%s1 + $0xe50] sm:$0xff]
  %v481 = vld [vmem:[%s1 + $0xe58] sm:$0xff]
  %v482 = vld [vmem:[%s1 + $0xe60] sm:$0xff]
  %v483 = vld [vmem:[%s1 + $0xe68] sm:$0xff]
  %v484 = vld [vmem:[%s1 + $0xe70] sm:$0xff]
  %v485 = vld [vmem:[%s1 + $0xe78] sm:$0xff]
  %v486 = vld [vmem:[%s1 + $0xe80] sm:$0xff]
  %v487 = vld [vmem:[%s1 + $0xe88] sm:$0xff]
  %v488 = vld [vmem:[%s1 + $0xe90] sm:$0xff]
  %v489 = vld [vmem:[%s1 + $0xe98] sm:$0xff]
  %v490 = vld [vmem:[%s1 + $0xea0] sm:$0xff]
  %v491 = vld [vmem:[%s1 + $0xea8] sm:$0xff]
  %v492 = vld [vmem:[%s1 + $0xeb0] sm:$0xff]
  %v493 = vld [vmem:[%s1 + $0xeb8] sm:$0xff]
  %v494 = vld [vmem:[%s1 + $0xec0] sm:$0xff]
  %v495 = vld [vmem:[%s1 + $0xec8] sm:$0xff]
  %v496 = vld [vmem:[%s1 + $0xed0] sm:$0xff]
  %v497 = vld [vmem:[%s1 + $0xed8] sm:$0xff]
  %v498 = vld [vmem:[%s1 + $0xee0] sm:$0xff]
  %v499 = vld [vmem:[%s1 + $0xee8] sm:$0xff]
  %v500 = vld [vmem:[%s1 + $0xef0] sm:$0xff]
  %v501 = vld [vmem:[%s1 + $0xef8] sm:$0xff]
  %v502 = vld [vmem:[%s1 + $0xf00] sm:$0xff]
  %v503 = vld [vmem:[%s1 + $0xf08] sm:$0xff]
  %v504 = vld [vmem:[%s1 + $0xf10] sm:$0xff]
  %v505 = vld [vmem:[%s1 + $0xf18] sm:$0xff]
  %v506 = vld [vmem:[%s1 + $0xf20] sm:$0xff]
  %v507 = vld [vmem:[%s1 + $0xf28] sm:$0xff]
  %v508 = vld [vmem:[%s1 + $0xf30] sm:$0xff]
  %v509 = vld [vmem:[%s1 + $0xf38] sm:$0xff]
  %v510 = vld [vmem:[%s1 + $0xf40] sm:$0xff]
  %v511 = vld [vmem:[%s1 + $0xf48] sm:$0xff]
  %v512 = vld [vmem:[%s1 + $0xf50] sm:$0xff]
  %v513 = vld [vmem:[%s1 + $0xf58] sm:$0xff]
  %v514 = vld [vmem:[%s1 + $0xf60] sm:$0xff]
  %v515 = vld [vmem:[%s1 + $0xf68] sm:$0xff]
  %v516 = vld [vmem:[%s1 + $0xf70] sm:$0xff]
  %v517 = vld [vmem:[%s1 + $0xf78] sm:$0xff]
  %v518 = vld [vmem:[%s1 + $0xf80] sm:$0xff]
  %v519 = vld [vmem:[%s1 + $0xf88] sm:$0xff]
  %v520 = vld [vmem:[%s1 + $0xf90] sm:$0xff]
  %v521 = vld [vmem:[%s1 + $0xf98] sm:$0xff]
  %v522 = vld [vmem:[%s1 + $0xfa0] sm:$0xff]
  %v523 = vld [vmem:[%s1 + $0xfa8] sm:$0xff]
  %v524 = vld [vmem:[%s1 + $0xfb0] sm:$0xff]
  %v525 = vld [vmem:[%s1 + $0xfb8] sm:$0xff]
  %v526 = vld [vmem:[%s1 + $0xfc0] sm:$0xff]
  %v527 = vld [vmem:[%s1 + $0xfc8] sm:$0xff]
  %v528 = vld [vmem:[%s1 + $0xfd0] sm:$0xff]
  %v529 = vld [vmem:[%s1 + $0xfd8] sm:$0xff]
  %v530 = vld [vmem:[%s1 + $0xfe0] sm:$0xff]
  %v531 = vld [vmem:[%s1 + $0xfe8] sm:$0xff]
  %v532 = vld [vmem:[%s1 + $0xff0] sm:$0xff]
  %v533 = vld [vmem:[%s1 + $0xff8] sm:$0xff]
  %v534 = vld [vmem:[%s2] sm:$0xf]
  %v536 = vperm.slane %v534, 0
  %v537 = vperm.slane %v534, 1
  %v538 = vperm.slane %v534, 2
  %v539 = vperm.slane %v534, 3
  %546 = vst [vmem:[#allocation1] ss:$4 sm:$0xff] %v20
  %s547 = scalar_lea.vmem [#allocation1], 32
  %548 = vst [vmem:[%s547] ss:$4 sm:$0xff] %v21
  %v549 = vld.sshfl [vmem:[#allocation1] sm:$0xff pattern:$0x73625140]
  %v550 = vld.sshfl [vmem:[#allocation1 + $0x8] sm:$0xff pattern:$0x73625140]
  %v551 = vld.sshfl [vmem:[#allocation1 + $0x10] sm:$0xff pattern:$0x73625140]
  %v552 = vld.sshfl [vmem:[#allocation1 + $0x18] sm:$0xff pattern:$0x73625140]
  %v553 = vld.sshfl [vmem:[#allocation1 + $0x20] sm:$0xff pattern:$0x73625140]
  %v554 = vld.sshfl [vmem:[#allocation1 + $0x28] sm:$0xff pattern:$0x73625140]
  %v555 = vld.sshfl [vmem:[#allocation1 + $0x30] sm:$0xff pattern:$0x73625140]
  %v556 = vld.sshfl [vmem:[#allocation1 + $0x38] sm:$0xff pattern:$0x73625140]
  %565 = vmatpush.msra.mxu0 %v82
  %566 = vmatpush.msra.mxu0 %v78
  %567 = vmatpush.msra.mxu0 %v74
  %568 = vmatpush.msra.mxu0 %v70
  %569 = vmatpush.msra.mxu0 %v66
  %570 = vmatpush.msra.mxu0 %v62
  %571 = vmatpush.msra.mxu0 %v58
  %572 = vmatpush.msra.mxu0 %v54
  %573 = vmatpush.msra.mxu0 %v50
  %574 = vmatpush.msra.mxu0 %v46
  %575 = vmatpush.msra.mxu0 %v42
  %576 = vmatpush.msra.mxu0 %v38
  %577 = vmatpush.msra.mxu0 %v34
  %578 = vmatpush.msra.mxu0 %v30
  %579 = vmatpush.msra.mxu0 %v26
  %580 = vmatpush.msra.mxu0 %v22
  %581 = vmatmul.f32.gmra.mxu0 %v549
  %v582 = vpop.f32.mrf.mxu0
  %v583 = vadd.f32 %v536, %v582
  %584 = vdwg.mxu0
  %585 = vmatpush.msra.mxu0 %v146
  %586 = vmatpush.msra.mxu0 %v142
  %587 = vmatpush.msra.mxu0 %v138
  %588 = vmatpush.msra.mxu0 %v134
  %589 = vmatpush.msra.mxu0 %v130
  %590 = vmatpush.msra.mxu0 %v126
  %591 = vmatpush.msra.mxu0 %v122
  %592 = vmatpush.msra.mxu0 %v118
  %593 = vmatpush.msra.mxu0 %v114
  %594 = vmatpush.msra.mxu0 %v110
  %595 = vmatpush.msra.mxu0 %v106
  %596 = vmatpush.msra.mxu0 %v102
  %597 = vmatpush.msra.mxu0 %v98
  %598 = vmatpush.msra.mxu0 %v94
  %599 = vmatpush.msra.mxu0 %v90
  %600 = vmatpush.msra.mxu0 %v86
  %601 = vmatmul.f32.gmra.mxu0 %v550
  %v602 = vpop.f32.mrf.mxu0
  %v603 = vadd.f32 %v583, %v602
  %604 = vdwg.mxu0
  %605 = vmatpush.msra.mxu0 %v210
  %606 = vmatpush.msra.mxu0 %v206
  %607 = vmatpush.msra.mxu0 %v202
  %608 = vmatpush.msra.mxu0 %v198
  %609 = vmatpush.msra.mxu0 %v194
  %610 = vmatpush.msra.mxu0 %v190
  %611 = vmatpush.msra.mxu0 %v186
  %612 = vmatpush.msra.mxu0 %v182
  %613 = vmatpush.msra.mxu0 %v178
  %614 = vmatpush.msra.mxu0 %v174
  %615 = vmatpush.msra.mxu0 %v170
  %616 = vmatpush.msra.mxu0 %v166
  %617 = vmatpush.msra.mxu0 %v162
  %618 = vmatpush.msra.mxu0 %v158
  %619 = vmatpush.msra.mxu0 %v154
  %620 = vmatpush.msra.mxu0 %v150
  %621 = vmatmul.f32.gmra.mxu0 %v551
  %v622 = vpop.f32.mrf.mxu0
  %v623 = vadd.f32 %v603, %v622
  %624 = vdwg.mxu0
  %625 = vmatpush.msra.mxu0 %v274
  %626 = vmatpush.msra.mxu0 %v270
  %627 = vmatpush.msra.mxu0 %v266
  %628 = vmatpush.msra.mxu0 %v262
  %629 = vmatpush.msra.mxu0 %v258
  %630 = vmatpush.msra.mxu0 %v254
  %631 = vmatpush.msra.mxu0 %v250
  %632 = vmatpush.msra.mxu0 %v246
  %633 = vmatpush.msra.mxu0 %v242
  %634 = vmatpush.msra.mxu0 %v238
  %635 = vmatpush.msra.mxu0 %v234
  %636 = vmatpush.msra.mxu0 %v230
  %637 = vmatpush.msra.mxu0 %v226
  %638 = vmatpush.msra.mxu0 %v222
  %639 = vmatpush.msra.mxu0 %v218
  %640 = vmatpush.msra.mxu0 %v214
  %641 = vmatmul.f32.gmra.mxu0 %v552
  %v642 = vpop.f32.mrf.mxu0
  %v643 = vadd.f32 %v623, %v642
  %644 = vdwg.mxu0
  %645 = vmatpush.msra.mxu0 %v338
  %646 = vmatpush.msra.mxu0 %v334
  %647 = vmatpush.msra.mxu0 %v330
  %648 = vmatpush.msra.mxu0 %v326
  %649 = vmatpush.msra.mxu0 %v322
  %650 = vmatpush.msra.mxu0 %v318
  %651 = vmatpush.msra.mxu0 %v314
  %652 = vmatpush.msra.mxu0 %v310
  %653 = vmatpush.msra.mxu0 %v306
  %654 = vmatpush.msra.mxu0 %v302
  %655 = vmatpush.msra.mxu0 %v298
  %656 = vmatpush.msra.mxu0 %v294
  %657 = vmatpush.msra.mxu0 %v290
  %658 = vmatpush.msra.mxu0 %v286
  %659 = vmatpush.msra.mxu0 %v282
  %660 = vmatpush.msra.mxu0 %v278
  %661 = vmatmul.f32.gmra.mxu0 %v553
  %v662 = vpop.f32.mrf.mxu0
  %v663 = vadd.f32 %v643, %v662
  %664 = vdwg.mxu0
  %665 = vmatpush.msra.mxu0 %v402
  %666 = vmatpush.msra.mxu0 %v398
  %667 = vmatpush.msra.mxu0 %v394
  %668 = vmatpush.msra.mxu0 %v390
  %669 = vmatpush.msra.mxu0 %v386
  %670 = vmatpush.msra.mxu0 %v382
  %671 = vmatpush.msra.mxu0 %v378
  %672 = vmatpush.msra.mxu0 %v374
  %673 = vmatpush.msra.mxu0 %v370
  %674 = vmatpush.msra.mxu0 %v366
  %675 = vmatpush.msra.mxu0 %v362
  %676 = vmatpush.msra.mxu0 %v358
  %677 = vmatpush.msra.mxu0 %v354
  %678 = vmatpush.msra.mxu0 %v350
  %679 = vmatpush.msra.mxu0 %v346
  %680 = vmatpush.msra.mxu0 %v342
  %681 = vmatmul.f32.gmra.mxu0 %v554
  %v682 = vpop.f32.mrf.mxu0
  %v683 = vadd.f32 %v663, %v682
  %684 = vdwg.mxu0
  %685 = vmatpush.msra.mxu0 %v466
  %686 = vmatpush.msra.mxu0 %v462
  %687 = vmatpush.msra.mxu0 %v458
  %688 = vmatpush.msra.mxu0 %v454
  %689 = vmatpush.msra.mxu0 %v450
  %690 = vmatpush.msra.mxu0 %v446
  %691 = vmatpush.msra.mxu0 %v442
  %692 = vmatpush.msra.mxu0 %v438
  %693 = vmatpush.msra.mxu0 %v434
  %694 = vmatpush.msra.mxu0 %v430
  %695 = vmatpush.msra.mxu0 %v426
  %696 = vmatpush.msra.mxu0 %v422
  %697 = vmatpush.msra.mxu0 %v418
  %698 = vmatpush.msra.mxu0 %v414
  %699 = vmatpush.msra.mxu0 %v410
  %700 = vmatpush.msra.mxu0 %v406
  %701 = vmatmul.f32.gmra.mxu0 %v555
  %v702 = vpop.f32.mrf.mxu0
  %v703 = vadd.f32 %v683, %v702
  %704 = vdwg.mxu0
  %705 = vmatpush.msra.mxu0 %v530
  %706 = vmatpush.msra.mxu0 %v526
  %707 = vmatpush.msra.mxu0 %v522
  %708 = vmatpush.msra.mxu0 %v518
  %709 = vmatpush.msra.mxu0 %v514
  %710 = vmatpush.msra.mxu0 %v510
  %711 = vmatpush.msra.mxu0 %v506
  %712 = vmatpush.msra.mxu0 %v502
  %713 = vmatpush.msra.mxu0 %v498
  %714 = vmatpush.msra.mxu0 %v494
  %715 = vmatpush.msra.mxu0 %v490
  %716 = vmatpush.msra.mxu0 %v486
  %717 = vmatpush.msra.mxu0 %v482
  %718 = vmatpush.msra.mxu0 %v478
  %719 = vmatpush.msra.mxu0 %v474
  %720 = vmatpush.msra.mxu0 %v470
  %721 = vmatmul.f32.gmra.mxu0 %v556
  %v722 = vpop.f32.mrf.mxu0
  %v723 = vadd.f32 %v703, %v722
  %724 = vdwg.mxu0
  %725 = vmatpush.msra.mxu0 %v83
  %726 = vmatpush.msra.mxu0 %v79
  %727 = vmatpush.msra.mxu0 %v75
  %728 = vmatpush.msra.mxu0 %v71
  %729 = vmatpush.msra.mxu0 %v67
  %730 = vmatpush.msra.mxu0 %v63
  %731 = vmatpush.msra.mxu0 %v59
  %732 = vmatpush.msra.mxu0 %v55
  %733 = vmatpush.msra.mxu0 %v51
  %734 = vmatpush.msra.mxu0 %v47
  %735 = vmatpush.msra.mxu0 %v43
  %736 = vmatpush.msra.mxu0 %v39
  %737 = vmatpush.msra.mxu0 %v35
  %738 = vmatpush.msra.mxu0 %v31
  %739 = vmatpush.msra.mxu0 %v27
  %740 = vmatpush.msra.mxu0 %v23
  %741 = vmatmul.f32.gmra.mxu0 %v549
  %v742 = vpop.f32.mrf.mxu0
  %v743 = vadd.f32 %v537, %v742
  %744 = vdwg.mxu0
  %745 = vmatpush.msra.mxu0 %v147
  %746 = vmatpush.msra.mxu0 %v143
  %747 = vmatpush.msra.mxu0 %v139
  %748 = vmatpush.msra.mxu0 %v135
  %749 = vmatpush.msra.mxu0 %v131
  %750 = vmatpush.msra.mxu0 %v127
  %751 = vmatpush.msra.mxu0 %v123
  %752 = vmatpush.msra.mxu0 %v119
  %753 = vmatpush.msra.mxu0 %v115
  %754 = vmatpush.msra.mxu0 %v111
  %755 = vmatpush.msra.mxu0 %v107
  %756 = vmatpush.msra.mxu0 %v103
  %757 = vmatpush.msra.mxu0 %v99
  %758 = vmatpush.msra.mxu0 %v95
  %759 = vmatpush.msra.mxu0 %v91
  %760 = vmatpush.msra.mxu0 %v87
  %761 = vmatmul.f32.gmra.mxu0 %v550
  %v762 = vpop.f32.mrf.mxu0
  %v763 = vadd.f32 %v743, %v762
  %764 = vdwg.mxu0
  %765 = vmatpush.msra.mxu0 %v211
  %766 = vmatpush.msra.mxu0 %v207
  %767 = vmatpush.msra.mxu0 %v203
  %768 = vmatpush.msra.mxu0 %v199
  %769 = vmatpush.msra.mxu0 %v195
  %770 = vmatpush.msra.mxu0 %v191
  %771 = vmatpush.msra.mxu0 %v187
  %772 = vmatpush.msra.mxu0 %v183
  %773 = vmatpush.msra.mxu0 %v179
  %774 = vmatpush.msra.mxu0 %v175
  %775 = vmatpush.msra.mxu0 %v171
  %776 = vmatpush.msra.mxu0 %v167
  %777 = vmatpush.msra.mxu0 %v163
  %778 = vmatpush.msra.mxu0 %v159
  %779 = vmatpush.msra.mxu0 %v155
  %780 = vmatpush.msra.mxu0 %v151
  %781 = vmatmul.f32.gmra.mxu0 %v551
  %v782 = vpop.f32.mrf.mxu0
  %v783 = vadd.f32 %v763, %v782
  %784 = vdwg.mxu0
  %785 = vmatpush.msra.mxu0 %v275
  %786 = vmatpush.msra.mxu0 %v271
  %787 = vmatpush.msra.mxu0 %v267
  %788 = vmatpush.msra.mxu0 %v263
  %789 = vmatpush.msra.mxu0 %v259
  %790 = vmatpush.msra.mxu0 %v255
  %791 = vmatpush.msra.mxu0 %v251
  %792 = vmatpush.msra.mxu0 %v247
  %793 = vmatpush.msra.mxu0 %v243
  %794 = vmatpush.msra.mxu0 %v239
  %795 = vmatpush.msra.mxu0 %v235
  %796 = vmatpush.msra.mxu0 %v231
  %797 = vmatpush.msra.mxu0 %v227
  %798 = vmatpush.msra.mxu0 %v223
  %799 = vmatpush.msra.mxu0 %v219
  %800 = vmatpush.msra.mxu0 %v215
  %801 = vmatmul.f32.gmra.mxu0 %v552
  %v802 = vpop.f32.mrf.mxu0
  %v803 = vadd.f32 %v783, %v802
  %804 = vdwg.mxu0
  %805 = vmatpush.msra.mxu0 %v339
  %806 = vmatpush.msra.mxu0 %v335
  %807 = vmatpush.msra.mxu0 %v331
  %808 = vmatpush.msra.mxu0 %v327
  %809 = vmatpush.msra.mxu0 %v323
  %810 = vmatpush.msra.mxu0 %v319
  %811 = vmatpush.msra.mxu0 %v315
  %812 = vmatpush.msra.mxu0 %v311
  %813 = vmatpush.msra.mxu0 %v307
  %814 = vmatpush.msra.mxu0 %v303
  %815 = vmatpush.msra.mxu0 %v299
  %816 = vmatpush.msra.mxu0 %v295
  %817 = vmatpush.msra.mxu0 %v291
  %818 = vmatpush.msra.mxu0 %v287
  %819 = vmatpush.msra.mxu0 %v283
  %820 = vmatpush.msra.mxu0 %v279
  %821 = vmatmul.f32.gmra.mxu0 %v553
  %v822 = vpop.f32.mrf.mxu0
  %v823 = vadd.f32 %v803, %v822
  %824 = vdwg.mxu0
  %825 = vmatpush.msra.mxu0 %v403
  %826 = vmatpush.msra.mxu0 %v399
  %827 = vmatpush.msra.mxu0 %v395
  %828 = vmatpush.msra.mxu0 %v391
  %829 = vmatpush.msra.mxu0 %v387
  %830 = vmatpush.msra.mxu0 %v383
  %831 = vmatpush.msra.mxu0 %v379
  %832 = vmatpush.msra.mxu0 %v375
  %833 = vmatpush.msra.mxu0 %v371
  %834 = vmatpush.msra.mxu0 %v367
  %835 = vmatpush.msra.mxu0 %v363
  %836 = vmatpush.msra.mxu0 %v359
  %837 = vmatpush.msra.mxu0 %v355
  %838 = vmatpush.msra.mxu0 %v351
  %839 = vmatpush.msra.mxu0 %v347
  %840 = vmatpush.msra.mxu0 %v343
  %841 = vmatmul.f32.gmra.mxu0 %v554
  %v842 = vpop.f32.mrf.mxu0
  %v843 = vadd.f32 %v823, %v842
  %844 = vdwg.mxu0
  %845 = vmatpush.msra.mxu0 %v467
  %846 = vmatpush.msra.mxu0 %v463
  %847 = vmatpush.msra.mxu0 %v459
  %848 = vmatpush.msra.mxu0 %v455
  %849 = vmatpush.msra.mxu0 %v451
  %850 = vmatpush.msra.mxu0 %v447
  %851 = vmatpush.msra.mxu0 %v443
  %852 = vmatpush.msra.mxu0 %v439
  %853 = vmatpush.msra.mxu0 %v435
  %854 = vmatpush.msra.mxu0 %v431
  %855 = vmatpush.msra.mxu0 %v427
  %856 = vmatpush.msra.mxu0 %v423
  %857 = vmatpush.msra.mxu0 %v419
  %858 = vmatpush.msra.mxu0 %v415
  %859 = vmatpush.msra.mxu0 %v411
  %860 = vmatpush.msra.mxu0 %v407
  %861 = vmatmul.f32.gmra.mxu0 %v555
  %v862 = vpop.f32.mrf.mxu0
  %v863 = vadd.f32 %v843, %v862
  %864 = vdwg.mxu0
  %865 = vmatpush.msra.mxu0 %v531
  %866 = vmatpush.msra.mxu0 %v527
  %867 = vmatpush.msra.mxu0 %v523
  %868 = vmatpush.msra.mxu0 %v519
  %869 = vmatpush.msra.mxu0 %v515
  %870 = vmatpush.msra.mxu0 %v511
  %871 = vmatpush.msra.mxu0 %v507
  %872 = vmatpush.msra.mxu0 %v503
  %873 = vmatpush.msra.mxu0 %v499
  %874 = vmatpush.msra.mxu0 %v495
  %875 = vmatpush.msra.mxu0 %v491
  %876 = vmatpush.msra.mxu0 %v487
  %877 = vmatpush.msra.mxu0 %v483
  %878 = vmatpush.msra.mxu0 %v479
  %879 = vmatpush.msra.mxu0 %v475
  %880 = vmatpush.msra.mxu0 %v471
  %881 = vmatmul.f32.gmra.mxu0 %v556
  %v882 = vpop.f32.mrf.mxu0
  %v883 = vadd.f32 %v863, %v882
  %884 = vdwg.mxu0
  %885 = vmatpush.msra.mxu0 %v84
  %886 = vmatpush.msra.mxu0 %v80
  %887 = vmatpush.msra.mxu0 %v76
  %888 = vmatpush.msra.mxu0 %v72
  %889 = vmatpush.msra.mxu0 %v68
  %890 = vmatpush.msra.mxu0 %v64
  %891 = vmatpush.msra.mxu0 %v60
  %892 = vmatpush.msra.mxu0 %v56
  %893 = vmatpush.msra.mxu0 %v52
  %894 = vmatpush.msra.mxu0 %v48
  %895 = vmatpush.msra.mxu0 %v44
  %896 = vmatpush.msra.mxu0 %v40
  %897 = vmatpush.msra.mxu0 %v36
  %898 = vmatpush.msra.mxu0 %v32
  %899 = vmatpush.msra.mxu0 %v28
  %900 = vmatpush.msra.mxu0 %v24
  %901 = vmatmul.f32.gmra.mxu0 %v549
  %v902 = vpop.f32.mrf.mxu0
  %v903 = vadd.f32 %v538, %v902
  %904 = vdwg.mxu0
  %905 = vmatpush.msra.mxu0 %v148
  %906 = vmatpush.msra.mxu0 %v144
  %907 = vmatpush.msra.mxu0 %v140
  %908 = vmatpush.msra.mxu0 %v136
  %909 = vmatpush.msra.mxu0 %v132
  %910 = vmatpush.msra.mxu0 %v128
  %911 = vmatpush.msra.mxu0 %v124
  %912 = vmatpush.msra.mxu0 %v120
  %913 = vmatpush.msra.mxu0 %v116
  %914 = vmatpush.msra.mxu0 %v112
  %915 = vmatpush.msra.mxu0 %v108
  %916 = vmatpush.msra.mxu0 %v104
  %917 = vmatpush.msra.mxu0 %v100
  %918 = vmatpush.msra.mxu0 %v96
  %919 = vmatpush.msra.mxu0 %v92
  %920 = vmatpush.msra.mxu0 %v88
  %921 = vmatmul.f32.gmra.mxu0 %v550
  %v922 = vpop.f32.mrf.mxu0
  %v923 = vadd.f32 %v903, %v922
  %924 = vdwg.mxu0
  %925 = vmatpush.msra.mxu0 %v212
  %926 = vmatpush.msra.mxu0 %v208
  %927 = vmatpush.msra.mxu0 %v204
  %928 = vmatpush.msra.mxu0 %v200
  %929 = vmatpush.msra.mxu0 %v196
  %930 = vmatpush.msra.mxu0 %v192
  %931 = vmatpush.msra.mxu0 %v188
  %932 = vmatpush.msra.mxu0 %v184
  %933 = vmatpush.msra.mxu0 %v180
  %934 = vmatpush.msra.mxu0 %v176
  %935 = vmatpush.msra.mxu0 %v172
  %936 = vmatpush.msra.mxu0 %v168
  %937 = vmatpush.msra.mxu0 %v164
  %938 = vmatpush.msra.mxu0 %v160
  %939 = vmatpush.msra.mxu0 %v156
  %940 = vmatpush.msra.mxu0 %v152
  %941 = vmatmul.f32.gmra.mxu0 %v551
  %v942 = vpop.f32.mrf.mxu0
  %v943 = vadd.f32 %v923, %v942
  %944 = vdwg.mxu0
  %945 = vmatpush.msra.mxu0 %v276
  %946 = vmatpush.msra.mxu0 %v272
  %947 = vmatpush.msra.mxu0 %v268
  %948 = vmatpush.msra.mxu0 %v264
  %949 = vmatpush.msra.mxu0 %v260
  %950 = vmatpush.msra.mxu0 %v256
  %951 = vmatpush.msra.mxu0 %v252
  %952 = vmatpush.msra.mxu0 %v248
  %953 = vmatpush.msra.mxu0 %v244
  %954 = vmatpush.msra.mxu0 %v240
  %955 = vmatpush.msra.mxu0 %v236
  %956 = vmatpush.msra.mxu0 %v232
  %957 = vmatpush.msra.mxu0 %v228
  %958 = vmatpush.msra.mxu0 %v224
  %959 = vmatpush.msra.mxu0 %v220
  %960 = vmatpush.msra.mxu0 %v216
  %961 = vmatmul.f32.gmra.mxu0 %v552
  %v962 = vpop.f32.mrf.mxu0
  %v963 = vadd.f32 %v943, %v962
  %964 = vdwg.mxu0
  %965 = vmatpush.msra.mxu0 %v340
  %966 = vmatpush.msra.mxu0 %v336
  %967 = vmatpush.msra.mxu0 %v332
  %968 = vmatpush.msra.mxu0 %v328
  %969 = vmatpush.msra.mxu0 %v324
  %970 = vmatpush.msra.mxu0 %v320
  %971 = vmatpush.msra.mxu0 %v316
  %972 = vmatpush.msra.mxu0 %v312
  %973 = vmatpush.msra.mxu0 %v308
  %974 = vmatpush.msra.mxu0 %v304
  %975 = vmatpush.msra.mxu0 %v300
  %976 = vmatpush.msra.mxu0 %v296
  %977 = vmatpush.msra.mxu0 %v292
  %978 = vmatpush.msra.mxu0 %v288
  %979 = vmatpush.msra.mxu0 %v284
  %980 = vmatpush.msra.mxu0 %v280
  %981 = vmatmul.f32.gmra.mxu0 %v553
  %v982 = vpop.f32.mrf.mxu0
  %v983 = vadd.f32 %v963, %v982
  %984 = vdwg.mxu0
  %985 = vmatpush.msra.mxu0 %v404
  %986 = vmatpush.msra.mxu0 %v400
  %987 = vmatpush.msra.mxu0 %v396
  %988 = vmatpush.msra.mxu0 %v392
  %989 = vmatpush.msra.mxu0 %v388
  %990 = vmatpush.msra.mxu0 %v384
  %991 = vmatpush.msra.mxu0 %v380
  %992 = vmatpush.msra.mxu0 %v376
  %993 = vmatpush.msra.mxu0 %v372
  %994 = vmatpush.msra.mxu0 %v368
  %995 = vmatpush.msra.mxu0 %v364
  %996 = vmatpush.msra.mxu0 %v360
  %997 = vmatpush.msra.mxu0 %v356
  %998 = vmatpush.msra.mxu0 %v352
  %999 = vmatpush.msra.mxu0 %v348
  %1000 = vmatpush.msra.mxu0 %v344
  %1001 = vmatmul.f32.gmra.mxu0 %v554
  %v1002 = vpop.f32.mrf.mxu0
  %v1003 = vadd.f32 %v983, %v1002
  %1004 = vdwg.mxu0
  %1005 = vmatpush.msra.mxu0 %v468
  %1006 = vmatpush.msra.mxu0 %v464
  %1007 = vmatpush.msra.mxu0 %v460
  %1008 = vmatpush.msra.mxu0 %v456
  %1009 = vmatpush.msra.mxu0 %v452
  %1010 = vmatpush.msra.mxu0 %v448
  %1011 = vmatpush.msra.mxu0 %v444
  %1012 = vmatpush.msra.mxu0 %v440
  %1013 = vmatpush.msra.mxu0 %v436
  %1014 = vmatpush.msra.mxu0 %v432
  %1015 = vmatpush.msra.mxu0 %v428
  %1016 = vmatpush.msra.mxu0 %v424
  %1017 = vmatpush.msra.mxu0 %v420
  %1018 = vmatpush.msra.mxu0 %v416
  %1019 = vmatpush.msra.mxu0 %v412
  %1020 = vmatpush.msra.mxu0 %v408
  %1021 = vmatmul.f32.gmra.mxu0 %v555
  %v1022 = vpop.f32.mrf.mxu0
  %v1023 = vadd.f32 %v1003, %v1022
  %1024 = vdwg.mxu0
  %1025 = vmatpush.msra.mxu0 %v532
  %1026 = vmatpush.msra.mxu0 %v528
  %1027 = vmatpush.msra.mxu0 %v524
  %1028 = vmatpush.msra.mxu0 %v520
  %1029 = vmatpush.msra.mxu0 %v516
  %1030 = vmatpush.msra.mxu0 %v512
  %1031 = vmatpush.msra.mxu0 %v508
  %1032 = vmatpush.msra.mxu0 %v504
  %1033 = vmatpush.msra.mxu0 %v500
  %1034 = vmatpush.msra.mxu0 %v496
  %1035 = vmatpush.msra.mxu0 %v492
  %1036 = vmatpush.msra.mxu0 %v488
  %1037 = vmatpush.msra.mxu0 %v484
  %1038 = vmatpush.msra.mxu0 %v480
  %1039 = vmatpush.msra.mxu0 %v476
  %1040 = vmatpush.msra.mxu0 %v472
  %1041 = vmatmul.f32.gmra.mxu0 %v556
  %v1042 = vpop.f32.mrf.mxu0
  %v1043 = vadd.f32 %v1023, %v1042
  %1044 = vdwg.mxu0
  %1045 = vmatpush.msra.mxu0 %v85
  %1046 = vmatpush.msra.mxu0 %v81
  %1047 = vmatpush.msra.mxu0 %v77
  %1048 = vmatpush.msra.mxu0 %v73
  %1049 = vmatpush.msra.mxu0 %v69
  %1050 = vmatpush.msra.mxu0 %v65
  %1051 = vmatpush.msra.mxu0 %v61
  %1052 = vmatpush.msra.mxu0 %v57
  %1053 = vmatpush.msra.mxu0 %v53
  %1054 = vmatpush.msra.mxu0 %v49
  %1055 = vmatpush.msra.mxu0 %v45
  %1056 = vmatpush.msra.mxu0 %v41
  %1057 = vmatpush.msra.mxu0 %v37
  %1058 = vmatpush.msra.mxu0 %v33
  %1059 = vmatpush.msra.mxu0 %v29
  %1060 = vmatpush.msra.mxu0 %v25
  %1061 = vmatmul.f32.gmra.mxu0 %v549
  %v1062 = vpop.f32.mrf.mxu0
  %v1063 = vadd.f32 %v539, %v1062
  %1064 = vdwg.mxu0
  %1065 = vmatpush.msra.mxu0 %v149
  %1066 = vmatpush.msra.mxu0 %v145
  %1067 = vmatpush.msra.mxu0 %v141
  %1068 = vmatpush.msra.mxu0 %v137
  %1069 = vmatpush.msra.mxu0 %v133
  %1070 = vmatpush.msra.mxu0 %v129
  %1071 = vmatpush.msra.mxu0 %v125
  %1072 = vmatpush.msra.mxu0 %v121
  %1073 = vmatpush.msra.mxu0 %v117
  %1074 = vmatpush.msra.mxu0 %v113
  %1075 = vmatpush.msra.mxu0 %v109
  %1076 = vmatpush.msra.mxu0 %v105
  %1077 = vmatpush.msra.mxu0 %v101
  %1078 = vmatpush.msra.mxu0 %v97
  %1079 = vmatpush.msra.mxu0 %v93
  %1080 = vmatpush.msra.mxu0 %v89
  %1081 = vmatmul.f32.gmra.mxu0 %v550
  %v1082 = vpop.f32.mrf.mxu0
  %v1083 = vadd.f32 %v1063, %v1082
  %1084 = vdwg.mxu0
  %1085 = vmatpush.msra.mxu0 %v213
  %1086 = vmatpush.msra.mxu0 %v209
  %1087 = vmatpush.msra.mxu0 %v205
  %1088 = vmatpush.msra.mxu0 %v201
  %1089 = vmatpush.msra.mxu0 %v197
  %1090 = vmatpush.msra.mxu0 %v193
  %1091 = vmatpush.msra.mxu0 %v189
  %1092 = vmatpush.msra.mxu0 %v185
  %1093 = vmatpush.msra.mxu0 %v181
  %1094 = vmatpush.msra.mxu0 %v177
  %1095 = vmatpush.msra.mxu0 %v173
  %1096 = vmatpush.msra.mxu0 %v169
  %1097 = vmatpush.msra.mxu0 %v165
  %1098 = vmatpush.msra.mxu0 %v161
  %1099 = vmatpush.msra.mxu0 %v157
  %1100 = vmatpush.msra.mxu0 %v153
  %1101 = vmatmul.f32.gmra.mxu0 %v551
  %v1102 = vpop.f32.mrf.mxu0
  %v1103 = vadd.f32 %v1083, %v1102
  %1104 = vdwg.mxu0
  %1105 = vmatpush.msra.mxu0 %v277
  %1106 = vmatpush.msra.mxu0 %v273
  %1107 = vmatpush.msra.mxu0 %v269
  %1108 = vmatpush.msra.mxu0 %v265
  %1109 = vmatpush.msra.mxu0 %v261
  %1110 = vmatpush.msra.mxu0 %v257
  %1111 = vmatpush.msra.mxu0 %v253
  %1112 = vmatpush.msra.mxu0 %v249
  %1113 = vmatpush.msra.mxu0 %v245
  %1114 = vmatpush.msra.mxu0 %v241
  %1115 = vmatpush.msra.mxu0 %v237
  %1116 = vmatpush.msra.mxu0 %v233
  %1117 = vmatpush.msra.mxu0 %v229
  %1118 = vmatpush.msra.mxu0 %v225
  %1119 = vmatpush.msra.mxu0 %v221
  %1120 = vmatpush.msra.mxu0 %v217
  %1121 = vmatmul.f32.gmra.mxu0 %v552
  %v1122 = vpop.f32.mrf.mxu0
  %v1123 = vadd.f32 %v1103, %v1122
  %1124 = vdwg.mxu0
  %1125 = vmatpush.msra.mxu0 %v341
  %1126 = vmatpush.msra.mxu0 %v337
  %1127 = vmatpush.msra.mxu0 %v333
  %1128 = vmatpush.msra.mxu0 %v329
  %1129 = vmatpush.msra.mxu0 %v325
  %1130 = vmatpush.msra.mxu0 %v321
  %1131 = vmatpush.msra.mxu0 %v317
  %1132 = vmatpush.msra.mxu0 %v313
  %1133 = vmatpush.msra.mxu0 %v309
  %1134 = vmatpush.msra.mxu0 %v305
  %1135 = vmatpush.msra.mxu0 %v301
  %1136 = vmatpush.msra.mxu0 %v297
  %1137 = vmatpush.msra.mxu0 %v293
  %1138 = vmatpush.msra.mxu0 %v289
  %1139 = vmatpush.msra.mxu0 %v285
  %1140 = vmatpush.msra.mxu0 %v281
  %1141 = vmatmul.f32.gmra.mxu0 %v553
  %v1142 = vpop.f32.mrf.mxu0
  %v1143 = vadd.f32 %v1123, %v1142
  %1144 = vdwg.mxu0
  %1145 = vmatpush.msra.mxu0 %v405
  %1146 = vmatpush.msra.mxu0 %v401
  %1147 = vmatpush.msra.mxu0 %v397
  %1148 = vmatpush.msra.mxu0 %v393
  %1149 = vmatpush.msra.mxu0 %v389
  %1150 = vmatpush.msra.mxu0 %v385
  %1151 = vmatpush.msra.mxu0 %v381
  %1152 = vmatpush.msra.mxu0 %v377
  %1153 = vmatpush.msra.mxu0 %v373
  %1154 = vmatpush.msra.mxu0 %v369
  %1155 = vmatpush.msra.mxu0 %v365
  %1156 = vmatpush.msra.mxu0 %v361
  %1157 = vmatpush.msra.mxu0 %v357
  %1158 = vmatpush.msra.mxu0 %v353
  %1159 = vmatpush.msra.mxu0 %v349
  %1160 = vmatpush.msra.mxu0 %v345
  %1161 = vmatmul.f32.gmra.mxu0 %v554
  %v1162 = vpop.f32.mrf.mxu0
  %v1163 = vadd.f32 %v1143, %v1162
  %1164 = vdwg.mxu0
  %1165 = vmatpush.msra.mxu0 %v469
  %1166 = vmatpush.msra.mxu0 %v465
  %1167 = vmatpush.msra.mxu0 %v461
  %1168 = vmatpush.msra.mxu0 %v457
  %1169 = vmatpush.msra.mxu0 %v453
  %1170 = vmatpush.msra.mxu0 %v449
  %1171 = vmatpush.msra.mxu0 %v445
  %1172 = vmatpush.msra.mxu0 %v441
  %1173 = vmatpush.msra.mxu0 %v437
  %1174 = vmatpush.msra.mxu0 %v433
  %1175 = vmatpush.msra.mxu0 %v429
  %1176 = vmatpush.msra.mxu0 %v425
  %1177 = vmatpush.msra.mxu0 %v421
  %1178 = vmatpush.msra.mxu0 %v417
  %1179 = vmatpush.msra.mxu0 %v413
  %1180 = vmatpush.msra.mxu0 %v409
  %1181 = vmatmul.f32.gmra.mxu0 %v555
  %v1182 = vpop.f32.mrf.mxu0
  %v1183 = vadd.f32 %v1163, %v1182
  %1184 = vdwg.mxu0
  %1185 = vmatpush.msra.mxu0 %v533
  %1186 = vmatpush.msra.mxu0 %v529
  %1187 = vmatpush.msra.mxu0 %v525
  %1188 = vmatpush.msra.mxu0 %v521
  %1189 = vmatpush.msra.mxu0 %v517
  %1190 = vmatpush.msra.mxu0 %v513
  %1191 = vmatpush.msra.mxu0 %v509
  %1192 = vmatpush.msra.mxu0 %v505
  %1193 = vmatpush.msra.mxu0 %v501
  %1194 = vmatpush.msra.mxu0 %v497
  %1195 = vmatpush.msra.mxu0 %v493
  %1196 = vmatpush.msra.mxu0 %v489
  %1197 = vmatpush.msra.mxu0 %v485
  %1198 = vmatpush.msra.mxu0 %v481
  %1199 = vmatpush.msra.mxu0 %v477
  %1200 = vmatpush.msra.mxu0 %v473
  %1201 = vmatmul.f32.gmra.mxu0 %v556
  %v1202 = vpop.f32.mrf.mxu0
  %v1203 = vadd.f32 %v1183, %v1202
  %1204 = vdwg.mxu0
  %v1205 = vld [vmem:[%s3] sm:$0xff]
  %v1206 = vld [vmem:[%s3 + $0x8] sm:$0xff]
  %v1207 = vld [vmem:[%s3 + $0x10] sm:$0xff]
  %v1208 = vld [vmem:[%s3 + $0x18] sm:$0xff]
  %v1209 = vld [vmem:[%s3 + $0x20] sm:$0xff]
  %v1210 = vld [vmem:[%s3 + $0x28] sm:$0xff]
  %v1211 = vld [vmem:[%s3 + $0x30] sm:$0xff]
  %v1212 = vld [vmem:[%s3 + $0x38] sm:$0xff]
  %v1213 = vld [vmem:[%s3 + $0x40] sm:$0xff]
  %v1214 = vld [vmem:[%s3 + $0x48] sm:$0xff]
  %v1215 = vld [vmem:[%s3 + $0x50] sm:$0xff]
  %v1216 = vld [vmem:[%s3 + $0x58] sm:$0xff]
  %v1217 = vld [vmem:[%s3 + $0x60] sm:$0xff]
  %v1218 = vld [vmem:[%s3 + $0x68] sm:$0xff]
  %v1219 = vld [vmem:[%s3 + $0x70] sm:$0xff]
  %v1220 = vld [vmem:[%s3 + $0x78] sm:$0xff]
  %v1221 = vld [vmem:[%s3 + $0x80] sm:$0xff]
  %v1222 = vld [vmem:[%s3 + $0x88] sm:$0xff]
  %v1223 = vld [vmem:[%s3 + $0x90] sm:$0xff]
  %v1224 = vld [vmem:[%s3 + $0x98] sm:$0xff]
  %v1225 = vld [vmem:[%s3 + $0xa0] sm:$0xff]
  %v1226 = vld [vmem:[%s3 + $0xa8] sm:$0xff]
  %v1227 = vld [vmem:[%s3 + $0xb0] sm:$0xff]
  %v1228 = vld [vmem:[%s3 + $0xb8] sm:$0xff]
  %v1229 = vld [vmem:[%s3 + $0xc0] sm:$0xff]
  %v1230 = vld [vmem:[%s3 + $0xc8] sm:$0xff]
  %v1231 = vld [vmem:[%s3 + $0xd0] sm:$0xff]
  %v1232 = vld [vmem:[%s3 + $0xd8] sm:$0xff]
  %v1233 = vld [vmem:[%s3 + $0xe0] sm:$0xff]
  %v1234 = vld [vmem:[%s3 + $0xe8] sm:$0xff]
  %v1235 = vld [vmem:[%s3 + $0xf0] sm:$0xff]
  %v1236 = vld [vmem:[%s3 + $0xf8] sm:$0xff]
  %v1237 = vld [vmem:[%s3 + $0x100] sm:$0xff]
  %v1238 = vld [vmem:[%s3 + $0x108] sm:$0xff]
  %v1239 = vld [vmem:[%s3 + $0x110] sm:$0xff]
  %v1240 = vld [vmem:[%s3 + $0x118] sm:$0xff]
  %v1241 = vld [vmem:[%s3 + $0x120] sm:$0xff]
  %v1242 = vld [vmem:[%s3 + $0x128] sm:$0xff]
  %v1243 = vld [vmem:[%s3 + $0x130] sm:$0xff]
  %v1244 = vld [vmem:[%s3 + $0x138] sm:$0xff]
  %v1245 = vld [vmem:[%s3 + $0x140] sm:$0xff]
  %v1246 = vld [vmem:[%s3 + $0x148] sm:$0xff]
  %v1247 = vld [vmem:[%s3 + $0x150] sm:$0xff]
  %v1248 = vld [vmem:[%s3 + $0x158] sm:$0xff]
  %v1249 = vld [vmem:[%s3 + $0x160] sm:$0xff]
  %v1250 = vld [vmem:[%s3 + $0x168] sm:$0xff]
  %v1251 = vld [vmem:[%s3 + $0x170] sm:$0xff]
  %v1252 = vld [vmem:[%s3 + $0x178] sm:$0xff]
  %v1253 = vld [vmem:[%s3 + $0x180] sm:$0xff]
  %v1254 = vld [vmem:[%s3 + $0x188] sm:$0xff]
  %v1255 = vld [vmem:[%s3 + $0x190] sm:$0xff]
  %v1256 = vld [vmem:[%s3 + $0x198] sm:$0xff]
  %v1257 = vld [vmem:[%s3 + $0x1a0] sm:$0xff]
  %v1258 = vld [vmem:[%s3 + $0x1a8] sm:$0xff]
  %v1259 = vld [vmem:[%s3 + $0x1b0] sm:$0xff]
  %v1260 = vld [vmem:[%s3 + $0x1b8] sm:$0xff]
  %v1261 = vld [vmem:[%s3 + $0x1c0] sm:$0xff]
  %v1262 = vld [vmem:[%s3 + $0x1c8] sm:$0xff]
  %v1263 = vld [vmem:[%s3 + $0x1d0] sm:$0xff]
  %v1264 = vld [vmem:[%s3 + $0x1d8] sm:$0xff]
  %v1265 = vld [vmem:[%s3 + $0x1e0] sm:$0xff]
  %v1266 = vld [vmem:[%s3 + $0x1e8] sm:$0xff]
  %v1267 = vld [vmem:[%s3 + $0x1f0] sm:$0xff]
  %v1268 = vld [vmem:[%s3 + $0x1f8] sm:$0xff]
  %v1269 = vld [vmem:[%s3 + $0x200] sm:$0xff]
  %v1270 = vld [vmem:[%s3 + $0x208] sm:$0xff]
  %v1271 = vld [vmem:[%s3 + $0x210] sm:$0xff]
  %v1272 = vld [vmem:[%s3 + $0x218] sm:$0xff]
  %v1273 = vld [vmem:[%s3 + $0x220] sm:$0xff]
  %v1274 = vld [vmem:[%s3 + $0x228] sm:$0xff]
  %v1275 = vld [vmem:[%s3 + $0x230] sm:$0xff]
  %v1276 = vld [vmem:[%s3 + $0x238] sm:$0xff]
  %v1277 = vld [vmem:[%s3 + $0x240] sm:$0xff]
  %v1278 = vld [vmem:[%s3 + $0x248] sm:$0xff]
  %v1279 = vld [vmem:[%s3 + $0x250] sm:$0xff]
  %v1280 = vld [vmem:[%s3 + $0x258] sm:$0xff]
  %v1281 = vld [vmem:[%s3 + $0x260] sm:$0xff]
  %v1282 = vld [vmem:[%s3 + $0x268] sm:$0xff]
  %v1283 = vld [vmem:[%s3 + $0x270] sm:$0xff]
  %v1284 = vld [vmem:[%s3 + $0x278] sm:$0xff]
  %v1285 = vld [vmem:[%s3 + $0x280] sm:$0xff]
  %v1286 = vld [vmem:[%s3 + $0x288] sm:$0xff]
  %v1287 = vld [vmem:[%s3 + $0x290] sm:$0xff]
  %v1288 = vld [vmem:[%s3 + $0x298] sm:$0xff]
  %v1289 = vld [vmem:[%s3 + $0x2a0] sm:$0xff]
  %v1290 = vld [vmem:[%s3 + $0x2a8] sm:$0xff]
  %v1291 = vld [vmem:[%s3 + $0x2b0] sm:$0xff]
  %v1292 = vld [vmem:[%s3 + $0x2b8] sm:$0xff]
  %v1293 = vld [vmem:[%s3 + $0x2c0] sm:$0xff]
  %v1294 = vld [vmem:[%s3 + $0x2c8] sm:$0xff]
  %v1295 = vld [vmem:[%s3 + $0x2d0] sm:$0xff]
  %v1296 = vld [vmem:[%s3 + $0x2d8] sm:$0xff]
  %v1297 = vld [vmem:[%s3 + $0x2e0] sm:$0xff]
  %v1298 = vld [vmem:[%s3 + $0x2e8] sm:$0xff]
  %v1299 = vld [vmem:[%s3 + $0x2f0] sm:$0xff]
  %v1300 = vld [vmem:[%s3 + $0x2f8] sm:$0xff]
  %v1301 = vld [vmem:[%s3 + $0x300] sm:$0xff]
  %v1302 = vld [vmem:[%s3 + $0x308] sm:$0xff]
  %v1303 = vld [vmem:[%s3 + $0x310] sm:$0xff]
  %v1304 = vld [vmem:[%s3 + $0x318] sm:$0xff]
  %v1305 = vld [vmem:[%s3 + $0x320] sm:$0xff]
  %v1306 = vld [vmem:[%s3 + $0x328] sm:$0xff]
  %v1307 = vld [vmem:[%s3 + $0x330] sm:$0xff]
  %v1308 = vld [vmem:[%s3 + $0x338] sm:$0xff]
  %v1309 = vld [vmem:[%s3 + $0x340] sm:$0xff]
  %v1310 = vld [vmem:[%s3 + $0x348] sm:$0xff]
  %v1311 = vld [vmem:[%s3 + $0x350] sm:$0xff]
  %v1312 = vld [vmem:[%s3 + $0x358] sm:$0xff]
  %v1313 = vld [vmem:[%s3 + $0x360] sm:$0xff]
  %v1314 = vld [vmem:[%s3 + $0x368] sm:$0xff]
  %v1315 = vld [vmem:[%s3 + $0x370] sm:$0xff]
  %v1316 = vld [vmem:[%s3 + $0x378] sm:$0xff]
  %v1317 = vld [vmem:[%s3 + $0x380] sm:$0xff]
  %v1318 = vld [vmem:[%s3 + $0x388] sm:$0xff]
  %v1319 = vld [vmem:[%s3 + $0x390] sm:$0xff]
  %v1320 = vld [vmem:[%s3 + $0x398] sm:$0xff]
  %v1321 = vld [vmem:[%s3 + $0x3a0] sm:$0xff]
  %v1322 = vld [vmem:[%s3 + $0x3a8] sm:$0xff]
  %v1323 = vld [vmem:[%s3 + $0x3b0] sm:$0xff]
  %v1324 = vld [vmem:[%s3 + $0x3b8] sm:$0xff]
  %v1325 = vld [vmem:[%s3 + $0x3c0] sm:$0xff]
  %v1326 = vld [vmem:[%s3 + $0x3c8] sm:$0xff]
  %v1327 = vld [vmem:[%s3 + $0x3d0] sm:$0xff]
  %v1328 = vld [vmem:[%s3 + $0x3d8] sm:$0xff]
  %v1329 = vld [vmem:[%s3 + $0x3e0] sm:$0xff]
  %v1330 = vld [vmem:[%s3 + $0x3e8] sm:$0xff]
  %v1331 = vld [vmem:[%s3 + $0x3f0] sm:$0xff]
  %v1332 = vld [vmem:[%s3 + $0x3f8] sm:$0xff]
  %v1333 = vld [vmem:[%s3 + $0x400] sm:$0xff]
  %v1334 = vld [vmem:[%s3 + $0x408] sm:$0xff]
  %v1335 = vld [vmem:[%s3 + $0x410] sm:$0xff]
  %v1336 = vld [vmem:[%s3 + $0x418] sm:$0xff]
  %v1337 = vld [vmem:[%s3 + $0x420] sm:$0xff]
  %v1338 = vld [vmem:[%s3 + $0x428] sm:$0xff]
  %v1339 = vld [vmem:[%s3 + $0x430] sm:$0xff]
  %v1340 = vld [vmem:[%s3 + $0x438] sm:$0xff]
  %v1341 = vld [vmem:[%s3 + $0x440] sm:$0xff]
  %v1342 = vld [vmem:[%s3 + $0x448] sm:$0xff]
  %v1343 = vld [vmem:[%s3 + $0x450] sm:$0xff]
  %v1344 = vld [vmem:[%s3 + $0x458] sm:$0xff]
  %v1345 = vld [vmem:[%s3 + $0x460] sm:$0xff]
  %v1346 = vld [vmem:[%s3 + $0x468] sm:$0xff]
  %v1347 = vld [vmem:[%s3 + $0x470] sm:$0xff]
  %v1348 = vld [vmem:[%s3 + $0x478] sm:$0xff]
  %v1349 = vld [vmem:[%s3 + $0x480] sm:$0xff]
  %v1350 = vld [vmem:[%s3 + $0x488] sm:$0xff]
  %v1351 = vld [vmem:[%s3 + $0x490] sm:$0xff]
  %v1352 = vld [vmem:[%s3 + $0x498] sm:$0xff]
  %v1353 = vld [vmem:[%s3 + $0x4a0] sm:$0xff]
  %v1354 = vld [vmem:[%s3 + $0x4a8] sm:$0xff]
  %v1355 = vld [vmem:[%s3 + $0x4b0] sm:$0xff]
  %v1356 = vld [vmem:[%s3 + $0x4b8] sm:$0xff]
  %v1357 = vld [vmem:[%s3 + $0x4c0] sm:$0xff]
  %v1358 = vld [vmem:[%s3 + $0x4c8] sm:$0xff]
  %v1359 = vld [vmem:[%s3 + $0x4d0] sm:$0xff]
  %v1360 = vld [vmem:[%s3 + $0x4d8] sm:$0xff]
  %v1361 = vld [vmem:[%s3 + $0x4e0] sm:$0xff]
  %v1362 = vld [vmem:[%s3 + $0x4e8] sm:$0xff]
  %v1363 = vld [vmem:[%s3 + $0x4f0] sm:$0xff]
  %v1364 = vld [vmem:[%s3 + $0x4f8] sm:$0xff]
  %v1365 = vld [vmem:[%s3 + $0x500] sm:$0xff]
  %v1366 = vld [vmem:[%s3 + $0x508] sm:$0xff]
  %v1367 = vld [vmem:[%s3 + $0x510] sm:$0xff]
  %v1368 = vld [vmem:[%s3 + $0x518] sm:$0xff]
  %v1369 = vld [vmem:[%s3 + $0x520] sm:$0xff]
  %v1370 = vld [vmem:[%s3 + $0x528] sm:$0xff]
  %v1371 = vld [vmem:[%s3 + $0x530] sm:$0xff]
  %v1372 = vld [vmem:[%s3 + $0x538] sm:$0xff]
  %v1373 = vld [vmem:[%s3 + $0x540] sm:$0xff]
  %v1374 = vld [vmem:[%s3 + $0x548] sm:$0xff]
  %v1375 = vld [vmem:[%s3 + $0x550] sm:$0xff]
  %v1376 = vld [vmem:[%s3 + $0x558] sm:$0xff]
  %v1377 = vld [vmem:[%s3 + $0x560] sm:$0xff]
  %v1378 = vld [vmem:[%s3 + $0x568] sm:$0xff]
  %v1379 = vld [vmem:[%s3 + $0x570] sm:$0xff]
  %v1380 = vld [vmem:[%s3 + $0x578] sm:$0xff]
  %v1381 = vld [vmem:[%s3 + $0x580] sm:$0xff]
  %v1382 = vld [vmem:[%s3 + $0x588] sm:$0xff]
  %v1383 = vld [vmem:[%s3 + $0x590] sm:$0xff]
  %v1384 = vld [vmem:[%s3 + $0x598] sm:$0xff]
  %v1385 = vld [vmem:[%s3 + $0x5a0] sm:$0xff]
  %v1386 = vld [vmem:[%s3 + $0x5a8] sm:$0xff]
  %v1387 = vld [vmem:[%s3 + $0x5b0] sm:$0xff]
  %v1388 = vld [vmem:[%s3 + $0x5b8] sm:$0xff]
  %v1389 = vld [vmem:[%s3 + $0x5c0] sm:$0xff]
  %v1390 = vld [vmem:[%s3 + $0x5c8] sm:$0xff]
  %v1391 = vld [vmem:[%s3 + $0x5d0] sm:$0xff]
  %v1392 = vld [vmem:[%s3 + $0x5d8] sm:$0xff]
  %v1393 = vld [vmem:[%s3 + $0x5e0] sm:$0xff]
  %v1394 = vld [vmem:[%s3 + $0x5e8] sm:$0xff]
  %v1395 = vld [vmem:[%s3 + $0x5f0] sm:$0xff]
  %v1396 = vld [vmem:[%s3 + $0x5f8] sm:$0xff]
  %v1397 = vld [vmem:[%s3 + $0x600] sm:$0xff]
  %v1398 = vld [vmem:[%s3 + $0x608] sm:$0xff]
  %v1399 = vld [vmem:[%s3 + $0x610] sm:$0xff]
  %v1400 = vld [vmem:[%s3 + $0x618] sm:$0xff]
  %v1401 = vld [vmem:[%s3 + $0x620] sm:$0xff]
  %v1402 = vld [vmem:[%s3 + $0x628] sm:$0xff]
  %v1403 = vld [vmem:[%s3 + $0x630] sm:$0xff]
  %v1404 = vld [vmem:[%s3 + $0x638] sm:$0xff]
  %v1405 = vld [vmem:[%s3 + $0x640] sm:$0xff]
  %v1406 = vld [vmem:[%s3 + $0x648] sm:$0xff]
  %v1407 = vld [vmem:[%s3 + $0x650] sm:$0xff]
  %v1408 = vld [vmem:[%s3 + $0x658] sm:$0xff]
  %v1409 = vld [vmem:[%s3 + $0x660] sm:$0xff]
  %v1410 = vld [vmem:[%s3 + $0x668] sm:$0xff]
  %v1411 = vld [vmem:[%s3 + $0x670] sm:$0xff]
  %v1412 = vld [vmem:[%s3 + $0x678] sm:$0xff]
  %v1413 = vld [vmem:[%s3 + $0x680] sm:$0xff]
  %v1414 = vld [vmem:[%s3 + $0x688] sm:$0xff]
  %v1415 = vld [vmem:[%s3 + $0x690] sm:$0xff]
  %v1416 = vld [vmem:[%s3 + $0x698] sm:$0xff]
  %v1417 = vld [vmem:[%s3 + $0x6a0] sm:$0xff]
  %v1418 = vld [vmem:[%s3 + $0x6a8] sm:$0xff]
  %v1419 = vld [vmem:[%s3 + $0x6b0] sm:$0xff]
  %v1420 = vld [vmem:[%s3 + $0x6b8] sm:$0xff]
  %v1421 = vld [vmem:[%s3 + $0x6c0] sm:$0xff]
  %v1422 = vld [vmem:[%s3 + $0x6c8] sm:$0xff]
  %v1423 = vld [vmem:[%s3 + $0x6d0] sm:$0xff]
  %v1424 = vld [vmem:[%s3 + $0x6d8] sm:$0xff]
  %v1425 = vld [vmem:[%s3 + $0x6e0] sm:$0xff]
  %v1426 = vld [vmem:[%s3 + $0x6e8] sm:$0xff]
  %v1427 = vld [vmem:[%s3 + $0x6f0] sm:$0xff]
  %v1428 = vld [vmem:[%s3 + $0x6f8] sm:$0xff]
  %v1429 = vld [vmem:[%s3 + $0x700] sm:$0xff]
  %v1430 = vld [vmem:[%s3 + $0x708] sm:$0xff]
  %v1431 = vld [vmem:[%s3 + $0x710] sm:$0xff]
  %v1432 = vld [vmem:[%s3 + $0x718] sm:$0xff]
  %v1433 = vld [vmem:[%s3 + $0x720] sm:$0xff]
  %v1434 = vld [vmem:[%s3 + $0x728] sm:$0xff]
  %v1435 = vld [vmem:[%s3 + $0x730] sm:$0xff]
  %v1436 = vld [vmem:[%s3 + $0x738] sm:$0xff]
  %v1437 = vld [vmem:[%s3 + $0x740] sm:$0xff]
  %v1438 = vld [vmem:[%s3 + $0x748] sm:$0xff]
  %v1439 = vld [vmem:[%s3 + $0x750] sm:$0xff]
  %v1440 = vld [vmem:[%s3 + $0x758] sm:$0xff]
  %v1441 = vld [vmem:[%s3 + $0x760] sm:$0xff]
  %v1442 = vld [vmem:[%s3 + $0x768] sm:$0xff]
  %v1443 = vld [vmem:[%s3 + $0x770] sm:$0xff]
  %v1444 = vld [vmem:[%s3 + $0x778] sm:$0xff]
  %v1445 = vld [vmem:[%s3 + $0x780] sm:$0xff]
  %v1446 = vld [vmem:[%s3 + $0x788] sm:$0xff]
  %v1447 = vld [vmem:[%s3 + $0x790] sm:$0xff]
  %v1448 = vld [vmem:[%s3 + $0x798] sm:$0xff]
  %v1449 = vld [vmem:[%s3 + $0x7a0] sm:$0xff]
  %v1450 = vld [vmem:[%s3 + $0x7a8] sm:$0xff]
  %v1451 = vld [vmem:[%s3 + $0x7b0] sm:$0xff]
  %v1452 = vld [vmem:[%s3 + $0x7b8] sm:$0xff]
  %v1453 = vld [vmem:[%s3 + $0x7c0] sm:$0xff]
  %v1454 = vld [vmem:[%s3 + $0x7c8] sm:$0xff]
  %v1455 = vld [vmem:[%s3 + $0x7d0] sm:$0xff]
  %v1456 = vld [vmem:[%s3 + $0x7d8] sm:$0xff]
  %v1457 = vld [vmem:[%s3 + $0x7e0] sm:$0xff]
  %v1458 = vld [vmem:[%s3 + $0x7e8] sm:$0xff]
  %v1459 = vld [vmem:[%s3 + $0x7f0] sm:$0xff]
  %v1460 = vld [vmem:[%s3 + $0x7f8] sm:$0xff]
  %v1461 = vld [vmem:[%s3 + $0x800] sm:$0xff]
  %v1462 = vld [vmem:[%s3 + $0x808] sm:$0xff]
  %v1463 = vld [vmem:[%s3 + $0x810] sm:$0xff]
  %v1464 = vld [vmem:[%s3 + $0x818] sm:$0xff]
  %v1465 = vld [vmem:[%s3 + $0x820] sm:$0xff]
  %v1466 = vld [vmem:[%s3 + $0x828] sm:$0xff]
  %v1467 = vld [vmem:[%s3 + $0x830] sm:$0xff]
  %v1468 = vld [vmem:[%s3 + $0x838] sm:$0xff]
  %v1469 = vld [vmem:[%s3 + $0x840] sm:$0xff]
  %v1470 = vld [vmem:[%s3 + $0x848] sm:$0xff]
  %v1471 = vld [vmem:[%s3 + $0x850] sm:$0xff]
  %v1472 = vld [vmem:[%s3 + $0x858] sm:$0xff]
  %v1473 = vld [vmem:[%s3 + $0x860] sm:$0xff]
  %v1474 = vld [vmem:[%s3 + $0x868] sm:$0xff]
  %v1475 = vld [vmem:[%s3 + $0x870] sm:$0xff]
  %v1476 = vld [vmem:[%s3 + $0x878] sm:$0xff]
  %v1477 = vld [vmem:[%s3 + $0x880] sm:$0xff]
  %v1478 = vld [vmem:[%s3 + $0x888] sm:$0xff]
  %v1479 = vld [vmem:[%s3 + $0x890] sm:$0xff]
  %v1480 = vld [vmem:[%s3 + $0x898] sm:$0xff]
  %v1481 = vld [vmem:[%s3 + $0x8a0] sm:$0xff]
  %v1482 = vld [vmem:[%s3 + $0x8a8] sm:$0xff]
  %v1483 = vld [vmem:[%s3 + $0x8b0] sm:$0xff]
  %v1484 = vld [vmem:[%s3 + $0x8b8] sm:$0xff]
  %v1485 = vld [vmem:[%s3 + $0x8c0] sm:$0xff]
  %v1486 = vld [vmem:[%s3 + $0x8c8] sm:$0xff]
  %v1487 = vld [vmem:[%s3 + $0x8d0] sm:$0xff]
  %v1488 = vld [vmem:[%s3 + $0x8d8] sm:$0xff]
  %v1489 = vld [vmem:[%s3 + $0x8e0] sm:$0xff]
  %v1490 = vld [vmem:[%s3 + $0x8e8] sm:$0xff]
  %v1491 = vld [vmem:[%s3 + $0x8f0] sm:$0xff]
  %v1492 = vld [vmem:[%s3 + $0x8f8] sm:$0xff]
  %v1493 = vld [vmem:[%s3 + $0x900] sm:$0xff]
  %v1494 = vld [vmem:[%s3 + $0x908] sm:$0xff]
  %v1495 = vld [vmem:[%s3 + $0x910] sm:$0xff]
  %v1496 = vld [vmem:[%s3 + $0x918] sm:$0xff]
  %v1497 = vld [vmem:[%s3 + $0x920] sm:$0xff]
  %v1498 = vld [vmem:[%s3 + $0x928] sm:$0xff]
  %v1499 = vld [vmem:[%s3 + $0x930] sm:$0xff]
  %v1500 = vld [vmem:[%s3 + $0x938] sm:$0xff]
  %v1501 = vld [vmem:[%s3 + $0x940] sm:$0xff]
  %v1502 = vld [vmem:[%s3 + $0x948] sm:$0xff]
  %v1503 = vld [vmem:[%s3 + $0x950] sm:$0xff]
  %v1504 = vld [vmem:[%s3 + $0x958] sm:$0xff]
  %v1505 = vld [vmem:[%s3 + $0x960] sm:$0xff]
  %v1506 = vld [vmem:[%s3 + $0x968] sm:$0xff]
  %v1507 = vld [vmem:[%s3 + $0x970] sm:$0xff]
  %v1508 = vld [vmem:[%s3 + $0x978] sm:$0xff]
  %v1509 = vld [vmem:[%s3 + $0x980] sm:$0xff]
  %v1510 = vld [vmem:[%s3 + $0x988] sm:$0xff]
  %v1511 = vld [vmem:[%s3 + $0x990] sm:$0xff]
  %v1512 = vld [vmem:[%s3 + $0x998] sm:$0xff]
  %v1513 = vld [vmem:[%s3 + $0x9a0] sm:$0xff]
  %v1514 = vld [vmem:[%s3 + $0x9a8] sm:$0xff]
  %v1515 = vld [vmem:[%s3 + $0x9b0] sm:$0xff]
  %v1516 = vld [vmem:[%s3 + $0x9b8] sm:$0xff]
  %v1517 = vld [vmem:[%s3 + $0x9c0] sm:$0xff]
  %v1518 = vld [vmem:[%s3 + $0x9c8] sm:$0xff]
  %v1519 = vld [vmem:[%s3 + $0x9d0] sm:$0xff]
  %v1520 = vld [vmem:[%s3 + $0x9d8] sm:$0xff]
  %v1521 = vld [vmem:[%s3 + $0x9e0] sm:$0xff]
  %v1522 = vld [vmem:[%s3 + $0x9e8] sm:$0xff]
  %v1523 = vld [vmem:[%s3 + $0x9f0] sm:$0xff]
  %v1524 = vld [vmem:[%s3 + $0x9f8] sm:$0xff]
  %v1525 = vld [vmem:[%s3 + $0xa00] sm:$0xff]
  %v1526 = vld [vmem:[%s3 + $0xa08] sm:$0xff]
  %v1527 = vld [vmem:[%s3 + $0xa10] sm:$0xff]
  %v1528 = vld [vmem:[%s3 + $0xa18] sm:$0xff]
  %v1529 = vld [vmem:[%s3 + $0xa20] sm:$0xff]
  %v1530 = vld [vmem:[%s3 + $0xa28] sm:$0xff]
  %v1531 = vld [vmem:[%s3 + $0xa30] sm:$0xff]
  %v1532 = vld [vmem:[%s3 + $0xa38] sm:$0xff]
  %v1533 = vld [vmem:[%s3 + $0xa40] sm:$0xff]
  %v1534 = vld [vmem:[%s3 + $0xa48] sm:$0xff]
  %v1535 = vld [vmem:[%s3 + $0xa50] sm:$0xff]
  %v1536 = vld [vmem:[%s3 + $0xa58] sm:$0xff]
  %v1537 = vld [vmem:[%s3 + $0xa60] sm:$0xff]
  %v1538 = vld [vmem:[%s3 + $0xa68] sm:$0xff]
  %v1539 = vld [vmem:[%s3 + $0xa70] sm:$0xff]
  %v1540 = vld [vmem:[%s3 + $0xa78] sm:$0xff]
  %v1541 = vld [vmem:[%s3 + $0xa80] sm:$0xff]
  %v1542 = vld [vmem:[%s3 + $0xa88] sm:$0xff]
  %v1543 = vld [vmem:[%s3 + $0xa90] sm:$0xff]
  %v1544 = vld [vmem:[%s3 + $0xa98] sm:$0xff]
  %v1545 = vld [vmem:[%s3 + $0xaa0] sm:$0xff]
  %v1546 = vld [vmem:[%s3 + $0xaa8] sm:$0xff]
  %v1547 = vld [vmem:[%s3 + $0xab0] sm:$0xff]
  %v1548 = vld [vmem:[%s3 + $0xab8] sm:$0xff]
  %v1549 = vld [vmem:[%s3 + $0xac0] sm:$0xff]
  %v1550 = vld [vmem:[%s3 + $0xac8] sm:$0xff]
  %v1551 = vld [vmem:[%s3 + $0xad0] sm:$0xff]
  %v1552 = vld [vmem:[%s3 + $0xad8] sm:$0xff]
  %v1553 = vld [vmem:[%s3 + $0xae0] sm:$0xff]
  %v1554 = vld [vmem:[%s3 + $0xae8] sm:$0xff]
  %v1555 = vld [vmem:[%s3 + $0xaf0] sm:$0xff]
  %v1556 = vld [vmem:[%s3 + $0xaf8] sm:$0xff]
  %v1557 = vld [vmem:[%s3 + $0xb00] sm:$0xff]
  %v1558 = vld [vmem:[%s3 + $0xb08] sm:$0xff]
  %v1559 = vld [vmem:[%s3 + $0xb10] sm:$0xff]
  %v1560 = vld [vmem:[%s3 + $0xb18] sm:$0xff]
  %v1561 = vld [vmem:[%s3 + $0xb20] sm:$0xff]
  %v1562 = vld [vmem:[%s3 + $0xb28] sm:$0xff]
  %v1563 = vld [vmem:[%s3 + $0xb30] sm:$0xff]
  %v1564 = vld [vmem:[%s3 + $0xb38] sm:$0xff]
  %v1565 = vld [vmem:[%s3 + $0xb40] sm:$0xff]
  %v1566 = vld [vmem:[%s3 + $0xb48] sm:$0xff]
  %v1567 = vld [vmem:[%s3 + $0xb50] sm:$0xff]
  %v1568 = vld [vmem:[%s3 + $0xb58] sm:$0xff]
  %v1569 = vld [vmem:[%s3 + $0xb60] sm:$0xff]
  %v1570 = vld [vmem:[%s3 + $0xb68] sm:$0xff]
  %v1571 = vld [vmem:[%s3 + $0xb70] sm:$0xff]
  %v1572 = vld [vmem:[%s3 + $0xb78] sm:$0xff]
  %v1573 = vld [vmem:[%s3 + $0xb80] sm:$0xff]
  %v1574 = vld [vmem:[%s3 + $0xb88] sm:$0xff]
  %v1575 = vld [vmem:[%s3 + $0xb90] sm:$0xff]
  %v1576 = vld [vmem:[%s3 + $0xb98] sm:$0xff]
  %v1577 = vld [vmem:[%s3 + $0xba0] sm:$0xff]
  %v1578 = vld [vmem:[%s3 + $0xba8] sm:$0xff]
  %v1579 = vld [vmem:[%s3 + $0xbb0] sm:$0xff]
  %v1580 = vld [vmem:[%s3 + $0xbb8] sm:$0xff]
  %v1581 = vld [vmem:[%s3 + $0xbc0] sm:$0xff]
  %v1582 = vld [vmem:[%s3 + $0xbc8] sm:$0xff]
  %v1583 = vld [vmem:[%s3 + $0xbd0] sm:$0xff]
  %v1584 = vld [vmem:[%s3 + $0xbd8] sm:$0xff]
  %v1585 = vld [vmem:[%s3 + $0xbe0] sm:$0xff]
  %v1586 = vld [vmem:[%s3 + $0xbe8] sm:$0xff]
  %v1587 = vld [vmem:[%s3 + $0xbf0] sm:$0xff]
  %v1588 = vld [vmem:[%s3 + $0xbf8] sm:$0xff]
  %v1589 = vld [vmem:[%s3 + $0xc00] sm:$0xff]
  %v1590 = vld [vmem:[%s3 + $0xc08] sm:$0xff]
  %v1591 = vld [vmem:[%s3 + $0xc10] sm:$0xff]
  %v1592 = vld [vmem:[%s3 + $0xc18] sm:$0xff]
  %v1593 = vld [vmem:[%s3 + $0xc20] sm:$0xff]
  %v1594 = vld [vmem:[%s3 + $0xc28] sm:$0xff]
  %v1595 = vld [vmem:[%s3 + $0xc30] sm:$0xff]
  %v1596 = vld [vmem:[%s3 + $0xc38] sm:$0xff]
  %v1597 = vld [vmem:[%s3 + $0xc40] sm:$0xff]
  %v1598 = vld [vmem:[%s3 + $0xc48] sm:$0xff]
  %v1599 = vld [vmem:[%s3 + $0xc50] sm:$0xff]
  %v1600 = vld [vmem:[%s3 + $0xc58] sm:$0xff]
  %v1601 = vld [vmem:[%s3 + $0xc60] sm:$0xff]
  %v1602 = vld [vmem:[%s3 + $0xc68] sm:$0xff]
  %v1603 = vld [vmem:[%s3 + $0xc70] sm:$0xff]
  %v1604 = vld [vmem:[%s3 + $0xc78] sm:$0xff]
  %v1605 = vld [vmem:[%s3 + $0xc80] sm:$0xff]
  %v1606 = vld [vmem:[%s3 + $0xc88] sm:$0xff]
  %v1607 = vld [vmem:[%s3 + $0xc90] sm:$0xff]
  %v1608 = vld [vmem:[%s3 + $0xc98] sm:$0xff]
  %v1609 = vld [vmem:[%s3 + $0xca0] sm:$0xff]
  %v1610 = vld [vmem:[%s3 + $0xca8] sm:$0xff]
  %v1611 = vld [vmem:[%s3 + $0xcb0] sm:$0xff]
  %v1612 = vld [vmem:[%s3 + $0xcb8] sm:$0xff]
  %v1613 = vld [vmem:[%s3 + $0xcc0] sm:$0xff]
  %v1614 = vld [vmem:[%s3 + $0xcc8] sm:$0xff]
  %v1615 = vld [vmem:[%s3 + $0xcd0] sm:$0xff]
  %v1616 = vld [vmem:[%s3 + $0xcd8] sm:$0xff]
  %v1617 = vld [vmem:[%s3 + $0xce0] sm:$0xff]
  %v1618 = vld [vmem:[%s3 + $0xce8] sm:$0xff]
  %v1619 = vld [vmem:[%s3 + $0xcf0] sm:$0xff]
  %v1620 = vld [vmem:[%s3 + $0xcf8] sm:$0xff]
  %v1621 = vld [vmem:[%s3 + $0xd00] sm:$0xff]
  %v1622 = vld [vmem:[%s3 + $0xd08] sm:$0xff]
  %v1623 = vld [vmem:[%s3 + $0xd10] sm:$0xff]
  %v1624 = vld [vmem:[%s3 + $0xd18] sm:$0xff]
  %v1625 = vld [vmem:[%s3 + $0xd20] sm:$0xff]
  %v1626 = vld [vmem:[%s3 + $0xd28] sm:$0xff]
  %v1627 = vld [vmem:[%s3 + $0xd30] sm:$0xff]
  %v1628 = vld [vmem:[%s3 + $0xd38] sm:$0xff]
  %v1629 = vld [vmem:[%s3 + $0xd40] sm:$0xff]
  %v1630 = vld [vmem:[%s3 + $0xd48] sm:$0xff]
  %v1631 = vld [vmem:[%s3 + $0xd50] sm:$0xff]
  %v1632 = vld [vmem:[%s3 + $0xd58] sm:$0xff]
  %v1633 = vld [vmem:[%s3 + $0xd60] sm:$0xff]
  %v1634 = vld [vmem:[%s3 + $0xd68] sm:$0xff]
  %v1635 = vld [vmem:[%s3 + $0xd70] sm:$0xff]
  %v1636 = vld [vmem:[%s3 + $0xd78] sm:$0xff]
  %v1637 = vld [vmem:[%s3 + $0xd80] sm:$0xff]
  %v1638 = vld [vmem:[%s3 + $0xd88] sm:$0xff]
  %v1639 = vld [vmem:[%s3 + $0xd90] sm:$0xff]
  %v1640 = vld [vmem:[%s3 + $0xd98] sm:$0xff]
  %v1641 = vld [vmem:[%s3 + $0xda0] sm:$0xff]
  %v1642 = vld [vmem:[%s3 + $0xda8] sm:$0xff]
  %v1643 = vld [vmem:[%s3 + $0xdb0] sm:$0xff]
  %v1644 = vld [vmem:[%s3 + $0xdb8] sm:$0xff]
  %v1645 = vld [vmem:[%s3 + $0xdc0] sm:$0xff]
  %v1646 = vld [vmem:[%s3 + $0xdc8] sm:$0xff]
  %v1647 = vld [vmem:[%s3 + $0xdd0] sm:$0xff]
  %v1648 = vld [vmem:[%s3 + $0xdd8] sm:$0xff]
  %v1649 = vld [vmem:[%s3 + $0xde0] sm:$0xff]
  %v1650 = vld [vmem:[%s3 + $0xde8] sm:$0xff]
  %v1651 = vld [vmem:[%s3 + $0xdf0] sm:$0xff]
  %v1652 = vld [vmem:[%s3 + $0xdf8] sm:$0xff]
  %v1653 = vld [vmem:[%s3 + $0xe00] sm:$0xff]
  %v1654 = vld [vmem:[%s3 + $0xe08] sm:$0xff]
  %v1655 = vld [vmem:[%s3 + $0xe10] sm:$0xff]
  %v1656 = vld [vmem:[%s3 + $0xe18] sm:$0xff]
  %v1657 = vld [vmem:[%s3 + $0xe20] sm:$0xff]
  %v1658 = vld [vmem:[%s3 + $0xe28] sm:$0xff]
  %v1659 = vld [vmem:[%s3 + $0xe30] sm:$0xff]
  %v1660 = vld [vmem:[%s3 + $0xe38] sm:$0xff]
  %v1661 = vld [vmem:[%s3 + $0xe40] sm:$0xff]
  %v1662 = vld [vmem:[%s3 + $0xe48] sm:$0xff]
  %v1663 = vld [vmem:[%s3 + $0xe50] sm:$0xff]
  %v1664 = vld [vmem:[%s3 + $0xe58] sm:$0xff]
  %v1665 = vld [vmem:[%s3 + $0xe60] sm:$0xff]
  %v1666 = vld [vmem:[%s3 + $0xe68] sm:$0xff]
  %v1667 = vld [vmem:[%s3 + $0xe70] sm:$0xff]
  %v1668 = vld [vmem:[%s3 + $0xe78] sm:$0xff]
  %v1669 = vld [vmem:[%s3 + $0xe80] sm:$0xff]
  %v1670 = vld [vmem:[%s3 + $0xe88] sm:$0xff]
  %v1671 = vld [vmem:[%s3 + $0xe90] sm:$0xff]
  %v1672 = vld [vmem:[%s3 + $0xe98] sm:$0xff]
  %v1673 = vld [vmem:[%s3 + $0xea0] sm:$0xff]
  %v1674 = vld [vmem:[%s3 + $0xea8] sm:$0xff]
  %v1675 = vld [vmem:[%s3 + $0xeb0] sm:$0xff]
  %v1676 = vld [vmem:[%s3 + $0xeb8] sm:$0xff]
  %v1677 = vld [vmem:[%s3 + $0xec0] sm:$0xff]
  %v1678 = vld [vmem:[%s3 + $0xec8] sm:$0xff]
  %v1679 = vld [vmem:[%s3 + $0xed0] sm:$0xff]
  %v1680 = vld [vmem:[%s3 + $0xed8] sm:$0xff]
  %v1681 = vld [vmem:[%s3 + $0xee0] sm:$0xff]
  %v1682 = vld [vmem:[%s3 + $0xee8] sm:$0xff]
  %v1683 = vld [vmem:[%s3 + $0xef0] sm:$0xff]
  %v1684 = vld [vmem:[%s3 + $0xef8] sm:$0xff]
  %v1685 = vld [vmem:[%s3 + $0xf00] sm:$0xff]
  %v1686 = vld [vmem:[%s3 + $0xf08] sm:$0xff]
  %v1687 = vld [vmem:[%s3 + $0xf10] sm:$0xff]
  %v1688 = vld [vmem:[%s3 + $0xf18] sm:$0xff]
  %v1689 = vld [vmem:[%s3 + $0xf20] sm:$0xff]
  %v1690 = vld [vmem:[%s3 + $0xf28] sm:$0xff]
  %v1691 = vld [vmem:[%s3 + $0xf30] sm:$0xff]
  %v1692 = vld [vmem:[%s3 + $0xf38] sm:$0xff]
  %v1693 = vld [vmem:[%s3 + $0xf40] sm:$0xff]
  %v1694 = vld [vmem:[%s3 + $0xf48] sm:$0xff]
  %v1695 = vld [vmem:[%s3 + $0xf50] sm:$0xff]
  %v1696 = vld [vmem:[%s3 + $0xf58] sm:$0xff]
  %v1697 = vld [vmem:[%s3 + $0xf60] sm:$0xff]
  %v1698 = vld [vmem:[%s3 + $0xf68] sm:$0xff]
  %v1699 = vld [vmem:[%s3 + $0xf70] sm:$0xff]
  %v1700 = vld [vmem:[%s3 + $0xf78] sm:$0xff]
  %v1701 = vld [vmem:[%s3 + $0xf80] sm:$0xff]
  %v1702 = vld [vmem:[%s3 + $0xf88] sm:$0xff]
  %v1703 = vld [vmem:[%s3 + $0xf90] sm:$0xff]
  %v1704 = vld [vmem:[%s3 + $0xf98] sm:$0xff]
  %v1705 = vld [vmem:[%s3 + $0xfa0] sm:$0xff]
  %v1706 = vld [vmem:[%s3 + $0xfa8] sm:$0xff]
  %v1707 = vld [vmem:[%s3 + $0xfb0] sm:$0xff]
  %v1708 = vld [vmem:[%s3 + $0xfb8] sm:$0xff]
  %v1709 = vld [vmem:[%s3 + $0xfc0] sm:$0xff]
  %v1710 = vld [vmem:[%s3 + $0xfc8] sm:$0xff]
  %v1711 = vld [vmem:[%s3 + $0xfd0] sm:$0xff]
  %v1712 = vld [vmem:[%s3 + $0xfd8] sm:$0xff]
  %v1713 = vld [vmem:[%s3 + $0xfe0] sm:$0xff]
  %v1714 = vld [vmem:[%s3 + $0xfe8] sm:$0xff]
  %v1715 = vld [vmem:[%s3 + $0xff0] sm:$0xff]
  %v1716 = vld [vmem:[%s3 + $0xff8] sm:$0xff]
  %v1717 = vld [vmem:[%s4] sm:$0xff]
  %v1719 = vperm.slane %v1717, 0
  %v1720 = vperm.slane %v1717, 1
  %v1721 = vperm.slane %v1717, 2
  %v1722 = vperm.slane %v1717, 3
  %v1723 = vperm.slane %v1717, 4
  %v1724 = vperm.slane %v1717, 5
  %v1725 = vperm.slane %v1717, 6
  %v1726 = vperm.slane %v1717, 7
  %1735 = vmatpush.msra.mxu0 %v1325
  %1736 = vmatpush.msra.mxu0 %v1317
  %1737 = vmatpush.msra.mxu0 %v1309
  %1738 = vmatpush.msra.mxu0 %v1301
  %1739 = vmatpush.msra.mxu0 %v1293
  %1740 = vmatpush.msra.mxu0 %v1285
  %1741 = vmatpush.msra.mxu0 %v1277
  %1742 = vmatpush.msra.mxu0 %v1269
  %1743 = vmatpush.msra.mxu0 %v1261
  %1744 = vmatpush.msra.mxu0 %v1253
  %1745 = vmatpush.msra.mxu0 %v1245
  %1746 = vmatpush.msra.mxu0 %v1237
  %1747 = vmatpush.msra.mxu0 %v1229
  %1748 = vmatpush.msra.mxu0 %v1221
  %1749 = vmatpush.msra.mxu0 %v1213
  %1750 = vmatpush.msra.mxu0 %v1205
  %1751 = vmatmul.f32.gmra.mxu0 %v723
  %v1752 = vpop.f32.mrf.mxu0
  %v1753 = vadd.f32 %v1719, %v1752
  %1754 = vdwg.mxu0
  %1755 = vmatpush.msra.mxu0 %v1453
  %1756 = vmatpush.msra.mxu0 %v1445
  %1757 = vmatpush.msra.mxu0 %v1437
  %1758 = vmatpush.msra.mxu0 %v1429
  %1759 = vmatpush.msra.mxu0 %v1421
  %1760 = vmatpush.msra.mxu0 %v1413
  %1761 = vmatpush.msra.mxu0 %v1405
  %1762 = vmatpush.msra.mxu0 %v1397
  %1763 = vmatpush.msra.mxu0 %v1389
  %1764 = vmatpush.msra.mxu0 %v1381
  %1765 = vmatpush.msra.mxu0 %v1373
  %1766 = vmatpush.msra.mxu0 %v1365
  %1767 = vmatpush.msra.mxu0 %v1357
  %1768 = vmatpush.msra.mxu0 %v1349
  %1769 = vmatpush.msra.mxu0 %v1341
  %1770 = vmatpush.msra.mxu0 %v1333
  %1771 = vmatmul.f32.gmra.mxu0 %v883
  %v1772 = vpop.f32.mrf.mxu0
  %v1773 = vadd.f32 %v1753, %v1772
  %1774 = vdwg.mxu0
  %1775 = vmatpush.msra.mxu0 %v1581
  %1776 = vmatpush.msra.mxu0 %v1573
  %1777 = vmatpush.msra.mxu0 %v1565
  %1778 = vmatpush.msra.mxu0 %v1557
  %1779 = vmatpush.msra.mxu0 %v1549
  %1780 = vmatpush.msra.mxu0 %v1541
  %1781 = vmatpush.msra.mxu0 %v1533
  %1782 = vmatpush.msra.mxu0 %v1525
  %1783 = vmatpush.msra.mxu0 %v1517
  %1784 = vmatpush.msra.mxu0 %v1509
  %1785 = vmatpush.msra.mxu0 %v1501
  %1786 = vmatpush.msra.mxu0 %v1493
  %1787 = vmatpush.msra.mxu0 %v1485
  %1788 = vmatpush.msra.mxu0 %v1477
  %1789 = vmatpush.msra.mxu0 %v1469
  %1790 = vmatpush.msra.mxu0 %v1461
  %1791 = vmatmul.f32.gmra.mxu0 %v1043
  %v1792 = vpop.f32.mrf.mxu0
  %v1793 = vadd.f32 %v1773, %v1792
  %1794 = vdwg.mxu0
  %1795 = vmatpush.msra.mxu0 %v1709
  %1796 = vmatpush.msra.mxu0 %v1701
  %1797 = vmatpush.msra.mxu0 %v1693
  %1798 = vmatpush.msra.mxu0 %v1685
  %1799 = vmatpush.msra.mxu0 %v1677
  %1800 = vmatpush.msra.mxu0 %v1669
  %1801 = vmatpush.msra.mxu0 %v1661
  %1802 = vmatpush.msra.mxu0 %v1653
  %1803 = vmatpush.msra.mxu0 %v1645
  %1804 = vmatpush.msra.mxu0 %v1637
  %1805 = vmatpush.msra.mxu0 %v1629
  %1806 = vmatpush.msra.mxu0 %v1621
  %1807 = vmatpush.msra.mxu0 %v1613
  %1808 = vmatpush.msra.mxu0 %v1605
  %1809 = vmatpush.msra.mxu0 %v1597
  %1810 = vmatpush.msra.mxu0 %v1589
  %1811 = vmatmul.f32.gmra.mxu0 %v1203
  %v1812 = vpop.f32.mrf.mxu0
  %v1813 = vadd.f32 %v1793, %v1812
  %1814 = vdwg.mxu0
  %1815 = vmatpush.msra.mxu0 %v1326
  %1816 = vmatpush.msra.mxu0 %v1318
  %1817 = vmatpush.msra.mxu0 %v1310
  %1818 = vmatpush.msra.mxu0 %v1302
  %1819 = vmatpush.msra.mxu0 %v1294
  %1820 = vmatpush.msra.mxu0 %v1286
  %1821 = vmatpush.msra.mxu0 %v1278
  %1822 = vmatpush.msra.mxu0 %v1270
  %1823 = vmatpush.msra.mxu0 %v1262
  %1824 = vmatpush.msra.mxu0 %v1254
  %1825 = vmatpush.msra.mxu0 %v1246
  %1826 = vmatpush.msra.mxu0 %v1238
  %1827 = vmatpush.msra.mxu0 %v1230
  %1828 = vmatpush.msra.mxu0 %v1222
  %1829 = vmatpush.msra.mxu0 %v1214
  %1830 = vmatpush.msra.mxu0 %v1206
  %1831 = vmatmul.f32.gmra.mxu0 %v723
  %v1832 = vpop.f32.mrf.mxu0
  %v1833 = vadd.f32 %v1720, %v1832
  %1834 = vdwg.mxu0
  %1835 = vmatpush.msra.mxu0 %v1454
  %1836 = vmatpush.msra.mxu0 %v1446
  %1837 = vmatpush.msra.mxu0 %v1438
  %1838 = vmatpush.msra.mxu0 %v1430
  %1839 = vmatpush.msra.mxu0 %v1422
  %1840 = vmatpush.msra.mxu0 %v1414
  %1841 = vmatpush.msra.mxu0 %v1406
  %1842 = vmatpush.msra.mxu0 %v1398
  %1843 = vmatpush.msra.mxu0 %v1390
  %1844 = vmatpush.msra.mxu0 %v1382
  %1845 = vmatpush.msra.mxu0 %v1374
  %1846 = vmatpush.msra.mxu0 %v1366
  %1847 = vmatpush.msra.mxu0 %v1358
  %1848 = vmatpush.msra.mxu0 %v1350
  %1849 = vmatpush.msra.mxu0 %v1342
  %1850 = vmatpush.msra.mxu0 %v1334
  %1851 = vmatmul.f32.gmra.mxu0 %v883
  %v1852 = vpop.f32.mrf.mxu0
  %v1853 = vadd.f32 %v1833, %v1852
  %1854 = vdwg.mxu0
  %1855 = vmatpush.msra.mxu0 %v1582
  %1856 = vmatpush.msra.mxu0 %v1574
  %1857 = vmatpush.msra.mxu0 %v1566
  %1858 = vmatpush.msra.mxu0 %v1558
  %1859 = vmatpush.msra.mxu0 %v1550
  %1860 = vmatpush.msra.mxu0 %v1542
  %1861 = vmatpush.msra.mxu0 %v1534
  %1862 = vmatpush.msra.mxu0 %v1526
  %1863 = vmatpush.msra.mxu0 %v1518
  %1864 = vmatpush.msra.mxu0 %v1510
  %1865 = vmatpush.msra.mxu0 %v1502
  %1866 = vmatpush.msra.mxu0 %v1494
  %1867 = vmatpush.msra.mxu0 %v1486
  %1868 = vmatpush.msra.mxu0 %v1478
  %1869 = vmatpush.msra.mxu0 %v1470
  %1870 = vmatpush.msra.mxu0 %v1462
  %1871 = vmatmul.f32.gmra.mxu0 %v1043
  %v1872 = vpop.f32.mrf.mxu0
  %v1873 = vadd.f32 %v1853, %v1872
  %1874 = vdwg.mxu0
  %1875 = vmatpush.msra.mxu0 %v1710
  %1876 = vmatpush.msra.mxu0 %v1702
  %1877 = vmatpush.msra.mxu0 %v1694
  %1878 = vmatpush.msra.mxu0 %v1686
  %1879 = vmatpush.msra.mxu0 %v1678
  %1880 = vmatpush.msra.mxu0 %v1670
  %1881 = vmatpush.msra.mxu0 %v1662
  %1882 = vmatpush.msra.mxu0 %v1654
  %1883 = vmatpush.msra.mxu0 %v1646
  %1884 = vmatpush.msra.mxu0 %v1638
  %1885 = vmatpush.msra.mxu0 %v1630
  %1886 = vmatpush.msra.mxu0 %v1622
  %1887 = vmatpush.msra.mxu0 %v1614
  %1888 = vmatpush.msra.mxu0 %v1606
  %1889 = vmatpush.msra.mxu0 %v1598
  %1890 = vmatpush.msra.mxu0 %v1590
  %1891 = vmatmul.f32.gmra.mxu0 %v1203
  %v1892 = vpop.f32.mrf.mxu0
  %v1893 = vadd.f32 %v1873, %v1892
  %1894 = vdwg.mxu0
  %1895 = vmatpush.msra.mxu0 %v1327
  %1896 = vmatpush.msra.mxu0 %v1319
  %1897 = vmatpush.msra.mxu0 %v1311
  %1898 = vmatpush.msra.mxu0 %v1303
  %1899 = vmatpush.msra.mxu0 %v1295
  %1900 = vmatpush.msra.mxu0 %v1287
  %1901 = vmatpush.msra.mxu0 %v1279
  %1902 = vmatpush.msra.mxu0 %v1271
  %1903 = vmatpush.msra.mxu0 %v1263
  %1904 = vmatpush.msra.mxu0 %v1255
  %1905 = vmatpush.msra.mxu0 %v1247
  %1906 = vmatpush.msra.mxu0 %v1239
  %1907 = vmatpush.msra.mxu0 %v1231
  %1908 = vmatpush.msra.mxu0 %v1223
  %1909 = vmatpush.msra.mxu0 %v1215
  %1910 = vmatpush.msra.mxu0 %v1207
  %1911 = vmatmul.f32.gmra.mxu0 %v723
  %v1912 = vpop.f32.mrf.mxu0
  %v1913 = vadd.f32 %v1721, %v1912
  %1914 = vdwg.mxu0
  %1915 = vmatpush.msra.mxu0 %v1455
  %1916 = vmatpush.msra.mxu0 %v1447
  %1917 = vmatpush.msra.mxu0 %v1439
  %1918 = vmatpush.msra.mxu0 %v1431
  %1919 = vmatpush.msra.mxu0 %v1423
  %1920 = vmatpush.msra.mxu0 %v1415
  %1921 = vmatpush.msra.mxu0 %v1407
  %1922 = vmatpush.msra.mxu0 %v1399
  %1923 = vmatpush.msra.mxu0 %v1391
  %1924 = vmatpush.msra.mxu0 %v1383
  %1925 = vmatpush.msra.mxu0 %v1375
  %1926 = vmatpush.msra.mxu0 %v1367
  %1927 = vmatpush.msra.mxu0 %v1359
  %1928 = vmatpush.msra.mxu0 %v1351
  %1929 = vmatpush.msra.mxu0 %v1343
  %1930 = vmatpush.msra.mxu0 %v1335
  %1931 = vmatmul.f32.gmra.mxu0 %v883
  %v1932 = vpop.f32.mrf.mxu0
  %v1933 = vadd.f32 %v1913, %v1932
  %1934 = vdwg.mxu0
  %1935 = vmatpush.msra.mxu0 %v1583
  %1936 = vmatpush.msra.mxu0 %v1575
  %1937 = vmatpush.msra.mxu0 %v1567
  %1938 = vmatpush.msra.mxu0 %v1559
  %1939 = vmatpush.msra.mxu0 %v1551
  %1940 = vmatpush.msra.mxu0 %v1543
  %1941 = vmatpush.msra.mxu0 %v1535
  %1942 = vmatpush.msra.mxu0 %v1527
  %1943 = vmatpush.msra.mxu0 %v1519
  %1944 = vmatpush.msra.mxu0 %v1511
  %1945 = vmatpush.msra.mxu0 %v1503
  %1946 = vmatpush.msra.mxu0 %v1495
  %1947 = vmatpush.msra.mxu0 %v1487
  %1948 = vmatpush.msra.mxu0 %v1479
  %1949 = vmatpush.msra.mxu0 %v1471
  %1950 = vmatpush.msra.mxu0 %v1463
  %1951 = vmatmul.f32.gmra.mxu0 %v1043
  %v1952 = vpop.f32.mrf.mxu0
  %v1953 = vadd.f32 %v1933, %v1952
  %1954 = vdwg.mxu0
  %1955 = vmatpush.msra.mxu0 %v1711
  %1956 = vmatpush.msra.mxu0 %v1703
  %1957 = vmatpush.msra.mxu0 %v1695
  %1958 = vmatpush.msra.mxu0 %v1687
  %1959 = vmatpush.msra.mxu0 %v1679
  %1960 = vmatpush.msra.mxu0 %v1671
  %1961 = vmatpush.msra.mxu0 %v1663
  %1962 = vmatpush.msra.mxu0 %v1655
  %1963 = vmatpush.msra.mxu0 %v1647
  %1964 = vmatpush.msra.mxu0 %v1639
  %1965 = vmatpush.msra.mxu0 %v1631
  %1966 = vmatpush.msra.mxu0 %v1623
  %1967 = vmatpush.msra.mxu0 %v1615
  %1968 = vmatpush.msra.mxu0 %v1607
  %1969 = vmatpush.msra.mxu0 %v1599
  %1970 = vmatpush.msra.mxu0 %v1591
  %1971 = vmatmul.f32.gmra.mxu0 %v1203
  %v1972 = vpop.f32.mrf.mxu0
  %v1973 = vadd.f32 %v1953, %v1972
  %1974 = vdwg.mxu0
  %1975 = vmatpush.msra.mxu0 %v1328
  %1976 = vmatpush.msra.mxu0 %v1320
  %1977 = vmatpush.msra.mxu0 %v1312
  %1978 = vmatpush.msra.mxu0 %v1304
  %1979 = vmatpush.msra.mxu0 %v1296
  %1980 = vmatpush.msra.mxu0 %v1288
  %1981 = vmatpush.msra.mxu0 %v1280
  %1982 = vmatpush.msra.mxu0 %v1272
  %1983 = vmatpush.msra.mxu0 %v1264
  %1984 = vmatpush.msra.mxu0 %v1256
  %1985 = vmatpush.msra.mxu0 %v1248
  %1986 = vmatpush.msra.mxu0 %v1240
  %1987 = vmatpush.msra.mxu0 %v1232
  %1988 = vmatpush.msra.mxu0 %v1224
  %1989 = vmatpush.msra.mxu0 %v1216
  %1990 = vmatpush.msra.mxu0 %v1208
  %1991 = vmatmul.f32.gmra.mxu0 %v723
  %v1992 = vpop.f32.mrf.mxu0
  %v1993 = vadd.f32 %v1722, %v1992
  %1994 = vdwg.mxu0
  %1995 = vmatpush.msra.mxu0 %v1456
  %1996 = vmatpush.msra.mxu0 %v1448
  %1997 = vmatpush.msra.mxu0 %v1440
  %1998 = vmatpush.msra.mxu0 %v1432
  %1999 = vmatpush.msra.mxu0 %v1424
  %2000 = vmatpush.msra.mxu0 %v1416
  %2001 = vmatpush.msra.mxu0 %v1408
  %2002 = vmatpush.msra.mxu0 %v1400
  %2003 = vmatpush.msra.mxu0 %v1392
  %2004 = vmatpush.msra.mxu0 %v1384
  %2005 = vmatpush.msra.mxu0 %v1376
  %2006 = vmatpush.msra.mxu0 %v1368
  %2007 = vmatpush.msra.mxu0 %v1360
  %2008 = vmatpush.msra.mxu0 %v1352
  %2009 = vmatpush.msra.mxu0 %v1344
  %2010 = vmatpush.msra.mxu0 %v1336
  %2011 = vmatmul.f32.gmra.mxu0 %v883
  %v2012 = vpop.f32.mrf.mxu0
  %v2013 = vadd.f32 %v1993, %v2012
  %2014 = vdwg.mxu0
  %2015 = vmatpush.msra.mxu0 %v1584
  %2016 = vmatpush.msra.mxu0 %v1576
  %2017 = vmatpush.msra.mxu0 %v1568
  %2018 = vmatpush.msra.mxu0 %v1560
  %2019 = vmatpush.msra.mxu0 %v1552
  %2020 = vmatpush.msra.mxu0 %v1544
  %2021 = vmatpush.msra.mxu0 %v1536
  %2022 = vmatpush.msra.mxu0 %v1528
  %2023 = vmatpush.msra.mxu0 %v1520
  %2024 = vmatpush.msra.mxu0 %v1512
  %2025 = vmatpush.msra.mxu0 %v1504
  %2026 = vmatpush.msra.mxu0 %v1496
  %2027 = vmatpush.msra.mxu0 %v1488
  %2028 = vmatpush.msra.mxu0 %v1480
  %2029 = vmatpush.msra.mxu0 %v1472
  %2030 = vmatpush.msra.mxu0 %v1464
  %2031 = vmatmul.f32.gmra.mxu0 %v1043
  %v2032 = vpop.f32.mrf.mxu0
  %v2033 = vadd.f32 %v2013, %v2032
  %2034 = vdwg.mxu0
  %2035 = vmatpush.msra.mxu0 %v1712
  %2036 = vmatpush.msra.mxu0 %v1704
  %2037 = vmatpush.msra.mxu0 %v1696
  %2038 = vmatpush.msra.mxu0 %v1688
  %2039 = vmatpush.msra.mxu0 %v1680
  %2040 = vmatpush.msra.mxu0 %v1672
  %2041 = vmatpush.msra.mxu0 %v1664
  %2042 = vmatpush.msra.mxu0 %v1656
  %2043 = vmatpush.msra.mxu0 %v1648
  %2044 = vmatpush.msra.mxu0 %v1640
  %2045 = vmatpush.msra.mxu0 %v1632
  %2046 = vmatpush.msra.mxu0 %v1624
  %2047 = vmatpush.msra.mxu0 %v1616
  %2048 = vmatpush.msra.mxu0 %v1608
  %2049 = vmatpush.msra.mxu0 %v1600
  %2050 = vmatpush.msra.mxu0 %v1592
  %2051 = vmatmul.f32.gmra.mxu0 %v1203
  %v2052 = vpop.f32.mrf.mxu0
  %v2053 = vadd.f32 %v2033, %v2052
  %2054 = vdwg.mxu0
  %2055 = vmatpush.msra.mxu0 %v1329
  %2056 = vmatpush.msra.mxu0 %v1321
  %2057 = vmatpush.msra.mxu0 %v1313
  %2058 = vmatpush.msra.mxu0 %v1305
  %2059 = vmatpush.msra.mxu0 %v1297
  %2060 = vmatpush.msra.mxu0 %v1289
  %2061 = vmatpush.msra.mxu0 %v1281
  %2062 = vmatpush.msra.mxu0 %v1273
  %2063 = vmatpush.msra.mxu0 %v1265
  %2064 = vmatpush.msra.mxu0 %v1257
  %2065 = vmatpush.msra.mxu0 %v1249
  %2066 = vmatpush.msra.mxu0 %v1241
  %2067 = vmatpush.msra.mxu0 %v1233
  %2068 = vmatpush.msra.mxu0 %v1225
  %2069 = vmatpush.msra.mxu0 %v1217
  %2070 = vmatpush.msra.mxu0 %v1209
  %2071 = vmatmul.f32.gmra.mxu0 %v723
  %v2072 = vpop.f32.mrf.mxu0
  %v2073 = vadd.f32 %v1723, %v2072
  %2074 = vdwg.mxu0
  %2075 = vmatpush.msra.mxu0 %v1457
  %2076 = vmatpush.msra.mxu0 %v1449
  %2077 = vmatpush.msra.mxu0 %v1441
  %2078 = vmatpush.msra.mxu0 %v1433
  %2079 = vmatpush.msra.mxu0 %v1425
  %2080 = vmatpush.msra.mxu0 %v1417
  %2081 = vmatpush.msra.mxu0 %v1409
  %2082 = vmatpush.msra.mxu0 %v1401
  %2083 = vmatpush.msra.mxu0 %v1393
  %2084 = vmatpush.msra.mxu0 %v1385
  %2085 = vmatpush.msra.mxu0 %v1377
  %2086 = vmatpush.msra.mxu0 %v1369
  %2087 = vmatpush.msra.mxu0 %v1361
  %2088 = vmatpush.msra.mxu0 %v1353
  %2089 = vmatpush.msra.mxu0 %v1345
  %2090 = vmatpush.msra.mxu0 %v1337
  %2091 = vmatmul.f32.gmra.mxu0 %v883
  %v2092 = vpop.f32.mrf.mxu0
  %v2093 = vadd.f32 %v2073, %v2092
  %2094 = vdwg.mxu0
  %2095 = vmatpush.msra.mxu0 %v1585
  %2096 = vmatpush.msra.mxu0 %v1577
  %2097 = vmatpush.msra.mxu0 %v1569
  %2098 = vmatpush.msra.mxu0 %v1561
  %2099 = vmatpush.msra.mxu0 %v1553
  %2100 = vmatpush.msra.mxu0 %v1545
  %2101 = vmatpush.msra.mxu0 %v1537
  %2102 = vmatpush.msra.mxu0 %v1529
  %2103 = vmatpush.msra.mxu0 %v1521
  %2104 = vmatpush.msra.mxu0 %v1513
  %2105 = vmatpush.msra.mxu0 %v1505
  %2106 = vmatpush.msra.mxu0 %v1497
  %2107 = vmatpush.msra.mxu0 %v1489
  %2108 = vmatpush.msra.mxu0 %v1481
  %2109 = vmatpush.msra.mxu0 %v1473
  %2110 = vmatpush.msra.mxu0 %v1465
  %2111 = vmatmul.f32.gmra.mxu0 %v1043
  %v2112 = vpop.f32.mrf.mxu0
  %v2113 = vadd.f32 %v2093, %v2112
  %2114 = vdwg.mxu0
  %2115 = vmatpush.msra.mxu0 %v1713
  %2116 = vmatpush.msra.mxu0 %v1705
  %2117 = vmatpush.msra.mxu0 %v1697
  %2118 = vmatpush.msra.mxu0 %v1689
  %2119 = vmatpush.msra.mxu0 %v1681
  %2120 = vmatpush.msra.mxu0 %v1673
  %2121 = vmatpush.msra.mxu0 %v1665
  %2122 = vmatpush.msra.mxu0 %v1657
  %2123 = vmatpush.msra.mxu0 %v1649
  %2124 = vmatpush.msra.mxu0 %v1641
  %2125 = vmatpush.msra.mxu0 %v1633
  %2126 = vmatpush.msra.mxu0 %v1625
  %2127 = vmatpush.msra.mxu0 %v1617
  %2128 = vmatpush.msra.mxu0 %v1609
  %2129 = vmatpush.msra.mxu0 %v1601
  %2130 = vmatpush.msra.mxu0 %v1593
  %2131 = vmatmul.f32.gmra.mxu0 %v1203
  %v2132 = vpop.f32.mrf.mxu0
  %v2133 = vadd.f32 %v2113, %v2132
  %2134 = vdwg.mxu0
  %2135 = vmatpush.msra.mxu0 %v1330
  %2136 = vmatpush.msra.mxu0 %v1322
  %2137 = vmatpush.msra.mxu0 %v1314
  %2138 = vmatpush.msra.mxu0 %v1306
  %2139 = vmatpush.msra.mxu0 %v1298
  %2140 = vmatpush.msra.mxu0 %v1290
  %2141 = vmatpush.msra.mxu0 %v1282
  %2142 = vmatpush.msra.mxu0 %v1274
  %2143 = vmatpush.msra.mxu0 %v1266
  %2144 = vmatpush.msra.mxu0 %v1258
  %2145 = vmatpush.msra.mxu0 %v1250
  %2146 = vmatpush.msra.mxu0 %v1242
  %2147 = vmatpush.msra.mxu0 %v1234
  %2148 = vmatpush.msra.mxu0 %v1226
  %2149 = vmatpush.msra.mxu0 %v1218
  %2150 = vmatpush.msra.mxu0 %v1210
  %2151 = vmatmul.f32.gmra.mxu0 %v723
  %v2152 = vpop.f32.mrf.mxu0
  %v2153 = vadd.f32 %v1724, %v2152
  %2154 = vdwg.mxu0
  %2155 = vmatpush.msra.mxu0 %v1458
  %2156 = vmatpush.msra.mxu0 %v1450
  %2157 = vmatpush.msra.mxu0 %v1442
  %2158 = vmatpush.msra.mxu0 %v1434
  %2159 = vmatpush.msra.mxu0 %v1426
  %2160 = vmatpush.msra.mxu0 %v1418
  %2161 = vmatpush.msra.mxu0 %v1410
  %2162 = vmatpush.msra.mxu0 %v1402
  %2163 = vmatpush.msra.mxu0 %v1394
  %2164 = vmatpush.msra.mxu0 %v1386
  %2165 = vmatpush.msra.mxu0 %v1378
  %2166 = vmatpush.msra.mxu0 %v1370
  %2167 = vmatpush.msra.mxu0 %v1362
  %2168 = vmatpush.msra.mxu0 %v1354
  %2169 = vmatpush.msra.mxu0 %v1346
  %2170 = vmatpush.msra.mxu0 %v1338
  %2171 = vmatmul.f32.gmra.mxu0 %v883
  %v2172 = vpop.f32.mrf.mxu0
  %v2173 = vadd.f32 %v2153, %v2172
  %2174 = vdwg.mxu0
  %2175 = vmatpush.msra.mxu0 %v1586
  %2176 = vmatpush.msra.mxu0 %v1578
  %2177 = vmatpush.msra.mxu0 %v1570
  %2178 = vmatpush.msra.mxu0 %v1562
  %2179 = vmatpush.msra.mxu0 %v1554
  %2180 = vmatpush.msra.mxu0 %v1546
  %2181 = vmatpush.msra.mxu0 %v1538
  %2182 = vmatpush.msra.mxu0 %v1530
  %2183 = vmatpush.msra.mxu0 %v1522
  %2184 = vmatpush.msra.mxu0 %v1514
  %2185 = vmatpush.msra.mxu0 %v1506
  %2186 = vmatpush.msra.mxu0 %v1498
  %2187 = vmatpush.msra.mxu0 %v1490
  %2188 = vmatpush.msra.mxu0 %v1482
  %2189 = vmatpush.msra.mxu0 %v1474
  %2190 = vmatpush.msra.mxu0 %v1466
  %2191 = vmatmul.f32.gmra.mxu0 %v1043
  %v2192 = vpop.f32.mrf.mxu0
  %v2193 = vadd.f32 %v2173, %v2192
  %2194 = vdwg.mxu0
  %2195 = vmatpush.msra.mxu0 %v1714
  %2196 = vmatpush.msra.mxu0 %v1706
  %2197 = vmatpush.msra.mxu0 %v1698
  %2198 = vmatpush.msra.mxu0 %v1690
  %2199 = vmatpush.msra.mxu0 %v1682
  %2200 = vmatpush.msra.mxu0 %v1674
  %2201 = vmatpush.msra.mxu0 %v1666
  %2202 = vmatpush.msra.mxu0 %v1658
  %2203 = vmatpush.msra.mxu0 %v1650
  %2204 = vmatpush.msra.mxu0 %v1642
  %2205 = vmatpush.msra.mxu0 %v1634
  %2206 = vmatpush.msra.mxu0 %v1626
  %2207 = vmatpush.msra.mxu0 %v1618
  %2208 = vmatpush.msra.mxu0 %v1610
  %2209 = vmatpush.msra.mxu0 %v1602
  %2210 = vmatpush.msra.mxu0 %v1594
  %2211 = vmatmul.f32.gmra.mxu0 %v1203
  %v2212 = vpop.f32.mrf.mxu0
  %v2213 = vadd.f32 %v2193, %v2212
  %2214 = vdwg.mxu0
  %2215 = vmatpush.msra.mxu0 %v1331
  %2216 = vmatpush.msra.mxu0 %v1323
  %2217 = vmatpush.msra.mxu0 %v1315
  %2218 = vmatpush.msra.mxu0 %v1307
  %2219 = vmatpush.msra.mxu0 %v1299
  %2220 = vmatpush.msra.mxu0 %v1291
  %2221 = vmatpush.msra.mxu0 %v1283
  %2222 = vmatpush.msra.mxu0 %v1275
  %2223 = vmatpush.msra.mxu0 %v1267
  %2224 = vmatpush.msra.mxu0 %v1259
  %2225 = vmatpush.msra.mxu0 %v1251
  %2226 = vmatpush.msra.mxu0 %v1243
  %2227 = vmatpush.msra.mxu0 %v1235
  %2228 = vmatpush.msra.mxu0 %v1227
  %2229 = vmatpush.msra.mxu0 %v1219
  %2230 = vmatpush.msra.mxu0 %v1211
  %2231 = vmatmul.f32.gmra.mxu0 %v723
  %v2232 = vpop.f32.mrf.mxu0
  %v2233 = vadd.f32 %v1725, %v2232
  %2234 = vdwg.mxu0
  %2235 = vmatpush.msra.mxu0 %v1459
  %2236 = vmatpush.msra.mxu0 %v1451
  %2237 = vmatpush.msra.mxu0 %v1443
  %2238 = vmatpush.msra.mxu0 %v1435
  %2239 = vmatpush.msra.mxu0 %v1427
  %2240 = vmatpush.msra.mxu0 %v1419
  %2241 = vmatpush.msra.mxu0 %v1411
  %2242 = vmatpush.msra.mxu0 %v1403
  %2243 = vmatpush.msra.mxu0 %v1395
  %2244 = vmatpush.msra.mxu0 %v1387
  %2245 = vmatpush.msra.mxu0 %v1379
  %2246 = vmatpush.msra.mxu0 %v1371
  %2247 = vmatpush.msra.mxu0 %v1363
  %2248 = vmatpush.msra.mxu0 %v1355
  %2249 = vmatpush.msra.mxu0 %v1347
  %2250 = vmatpush.msra.mxu0 %v1339
  %2251 = vmatmul.f32.gmra.mxu0 %v883
  %v2252 = vpop.f32.mrf.mxu0
  %v2253 = vadd.f32 %v2233, %v2252
  %2254 = vdwg.mxu0
  %2255 = vmatpush.msra.mxu0 %v1587
  %2256 = vmatpush.msra.mxu0 %v1579
  %2257 = vmatpush.msra.mxu0 %v1571
  %2258 = vmatpush.msra.mxu0 %v1563
  %2259 = vmatpush.msra.mxu0 %v1555
  %2260 = vmatpush.msra.mxu0 %v1547
  %2261 = vmatpush.msra.mxu0 %v1539
  %2262 = vmatpush.msra.mxu0 %v1531
  %2263 = vmatpush.msra.mxu0 %v1523
  %2264 = vmatpush.msra.mxu0 %v1515
  %2265 = vmatpush.msra.mxu0 %v1507
  %2266 = vmatpush.msra.mxu0 %v1499
  %2267 = vmatpush.msra.mxu0 %v1491
  %2268 = vmatpush.msra.mxu0 %v1483
  %2269 = vmatpush.msra.mxu0 %v1475
  %2270 = vmatpush.msra.mxu0 %v1467
  %2271 = vmatmul.f32.gmra.mxu0 %v1043
  %v2272 = vpop.f32.mrf.mxu0
  %v2273 = vadd.f32 %v2253, %v2272
  %2274 = vdwg.mxu0
  %2275 = vmatpush.msra.mxu0 %v1715
  %2276 = vmatpush.msra.mxu0 %v1707
  %2277 = vmatpush.msra.mxu0 %v1699
  %2278 = vmatpush.msra.mxu0 %v1691
  %2279 = vmatpush.msra.mxu0 %v1683
  %2280 = vmatpush.msra.mxu0 %v1675
  %2281 = vmatpush.msra.mxu0 %v1667
  %2282 = vmatpush.msra.mxu0 %v1659
  %2283 = vmatpush.msra.mxu0 %v1651
  %2284 = vmatpush.msra.mxu0 %v1643
  %2285 = vmatpush.msra.mxu0 %v1635
  %2286 = vmatpush.msra.mxu0 %v1627
  %2287 = vmatpush.msra.mxu0 %v1619
  %2288 = vmatpush.msra.mxu0 %v1611
  %2289 = vmatpush.msra.mxu0 %v1603
  %2290 = vmatpush.msra.mxu0 %v1595
  %2291 = vmatmul.f32.gmra.mxu0 %v1203
  %v2292 = vpop.f32.mrf.mxu0
  %v2293 = vadd.f32 %v2273, %v2292
  %2294 = vdwg.mxu0
  %2295 = vmatpush.msra.mxu0 %v1332
  %2296 = vmatpush.msra.mxu0 %v1324
  %2297 = vmatpush.msra.mxu0 %v1316
  %2298 = vmatpush.msra.mxu0 %v1308
  %2299 = vmatpush.msra.mxu0 %v1300
  %2300 = vmatpush.msra.mxu0 %v1292
  %2301 = vmatpush.msra.mxu0 %v1284
  %2302 = vmatpush.msra.mxu0 %v1276
  %2303 = vmatpush.msra.mxu0 %v1268
  %2304 = vmatpush.msra.mxu0 %v1260
  %2305 = vmatpush.msra.mxu0 %v1252
  %2306 = vmatpush.msra.mxu0 %v1244
  %2307 = vmatpush.msra.mxu0 %v1236
  %2308 = vmatpush.msra.mxu0 %v1228
  %2309 = vmatpush.msra.mxu0 %v1220
  %2310 = vmatpush.msra.mxu0 %v1212
  %2311 = vmatmul.f32.gmra.mxu0 %v723
  %v2312 = vpop.f32.mrf.mxu0
  %v2313 = vadd.f32 %v1726, %v2312
  %2314 = vdwg.mxu0
  %2315 = vmatpush.msra.mxu0 %v1460
  %2316 = vmatpush.msra.mxu0 %v1452
  %2317 = vmatpush.msra.mxu0 %v1444
  %2318 = vmatpush.msra.mxu0 %v1436
  %2319 = vmatpush.msra.mxu0 %v1428
  %2320 = vmatpush.msra.mxu0 %v1420
  %2321 = vmatpush.msra.mxu0 %v1412
  %2322 = vmatpush.msra.mxu0 %v1404
  %2323 = vmatpush.msra.mxu0 %v1396
  %2324 = vmatpush.msra.mxu0 %v1388
  %2325 = vmatpush.msra.mxu0 %v1380
  %2326 = vmatpush.msra.mxu0 %v1372
  %2327 = vmatpush.msra.mxu0 %v1364
  %2328 = vmatpush.msra.mxu0 %v1356
  %2329 = vmatpush.msra.mxu0 %v1348
  %2330 = vmatpush.msra.mxu0 %v1340
  %2331 = vmatmul.f32.gmra.mxu0 %v883
  %v2332 = vpop.f32.mrf.mxu0
  %v2333 = vadd.f32 %v2313, %v2332
  %2334 = vdwg.mxu0
  %2335 = vmatpush.msra.mxu0 %v1588
  %2336 = vmatpush.msra.mxu0 %v1580
  %2337 = vmatpush.msra.mxu0 %v1572
  %2338 = vmatpush.msra.mxu0 %v1564
  %2339 = vmatpush.msra.mxu0 %v1556
  %2340 = vmatpush.msra.mxu0 %v1548
  %2341 = vmatpush.msra.mxu0 %v1540
  %2342 = vmatpush.msra.mxu0 %v1532
  %2343 = vmatpush.msra.mxu0 %v1524
  %2344 = vmatpush.msra.mxu0 %v1516
  %2345 = vmatpush.msra.mxu0 %v1508
  %2346 = vmatpush.msra.mxu0 %v1500
  %2347 = vmatpush.msra.mxu0 %v1492
  %2348 = vmatpush.msra.mxu0 %v1484
  %2349 = vmatpush.msra.mxu0 %v1476
  %2350 = vmatpush.msra.mxu0 %v1468
  %2351 = vmatmul.f32.gmra.mxu0 %v1043
  %v2352 = vpop.f32.mrf.mxu0
  %v2353 = vadd.f32 %v2333, %v2352
  %2354 = vdwg.mxu0
  %2355 = vmatpush.msra.mxu0 %v1716
  %2356 = vmatpush.msra.mxu0 %v1708
  %2357 = vmatpush.msra.mxu0 %v1700
  %2358 = vmatpush.msra.mxu0 %v1692
  %2359 = vmatpush.msra.mxu0 %v1684
  %2360 = vmatpush.msra.mxu0 %v1676
  %2361 = vmatpush.msra.mxu0 %v1668
  %2362 = vmatpush.msra.mxu0 %v1660
  %2363 = vmatpush.msra.mxu0 %v1652
  %2364 = vmatpush.msra.mxu0 %v1644
  %2365 = vmatpush.msra.mxu0 %v1636
  %2366 = vmatpush.msra.mxu0 %v1628
  %2367 = vmatpush.msra.mxu0 %v1620
  %2368 = vmatpush.msra.mxu0 %v1612
  %2369 = vmatpush.msra.mxu0 %v1604
  %2370 = vmatpush.msra.mxu0 %v1596
  %2371 = vmatmul.f32.gmra.mxu0 %v1203
  %v2372 = vpop.f32.mrf.mxu0
  %v2373 = vadd.f32 %v2353, %v2372
  %2374 = vdwg.mxu0
  %v2383 = vrot.slane %v1893, 6
  %v2384 = vrot.slane %v1973, 4
  %v2385 = vrot.slane %v2053, 2
  %v2386 = vrot.slane %v2213, 6
  %v2387 = vrot.slane %v2293, 4
  %v2388 = vrot.slane %v2373, 2
  %vm2389 = vcmask 1041408
  %v2390 = vsel %vm2389, %v1813, %v2383
  %vm2391 = vcmask 1045508
  %v2392 = vsel %vm2391, %v2384, %v2385
  %vm2393 = vcmask 1043456
  %v2394 = vsel %vm2393, %v2390, %v2392
  %v2395 = vsel %vm2389, %v2133, %v2386
  %v2396 = vsel %vm2391, %v2387, %v2388
  %v2397 = vsel %vm2393, %v2395, %v2396
  %2400 = vst [vmem:[%s5] sm:$0xff] %v2394
  %2401 = vst [vmem:[%s5 + $0x8] sm:$0xff] %v2397
  // Predicated region
  $region22: #{fwd.8} parent=0 // pred_check
    _
  $region23: #{fwd.8} parent=0 // pred_check_branch
    %2403 = sbr.rel (0) target = $region25
  $region24: #{fwd.8} parent=0 // pred_region
    _
  $region25: #{fwd.8} parent=0 // pred_fallthru
    _
  // Predicated region
  $region26: #{fwd.8} parent=0 // pred_check
    _
  $region27: #{fwd.8} parent=0 // pred_check_branch
    %2405 = sbr.rel (0) target = $region29
  $region28: #{fwd.8} parent=0 // pred_region
    _
  $region29: #{fwd.8} parent=0 // pred_fallthru
    _

// kernel: fwd.7
$region0: #{fwd.7}
  #allocation0 [shape = 'u32[]', space=smem, size = 0x4, offset = 0x4, fixed_abs, tag = 'smem constant byte address 0x4 - core index']
  #allocation1 [shape = 'u32[72,128]{1,0:T(1,128)}', space=vmem, size = 0x9000, scoped, tag = 'internal scratch']
  %s0 = inlined_call_operand.vmem [shape: f32[512,4], index: 0, kind: input, shape index: {}]
  %s1 = inlined_call_operand.vmem [shape: f32[512,16], index: 1, kind: input, shape index: {}]
  %s2 = inlined_call_operand.vmem [shape: f32[4,16], index: 2, kind: input, shape index: {}]
  %s3 = inlined_call_operand.vmem [shape: f32[1,16], index: 3, kind: input, shape index: {}]
  %s4 = inlined_call_operand.vmem [shape: f32[16,32], index: 4, kind: input, shape index: {}]
  %s5 = inlined_call_operand.vmem [shape: f32[16,32], index: 5, kind: input, shape index: {}]
  %s6 = inlined_call_operand.vmem [shape: f32[1,32], index: 6, kind: input, shape index: {}]
  %s7 = inlined_call_operand.vmem [shape: f32[32,36], index: 7, kind: input, shape index: {}]
  %s8 = inlined_call_operand.vmem [shape: f32[1,36], index: 8, kind: input, shape index: {}]
  %s9 = inlined_call_operand.hbm [shape: f32[512,36], index: 9, kind: output, shape index: {}]
  %s10 = sld [smem:[#allocation0]]
  $region46: #{fwd.7} parent=0
    _
  %s12 = ssub.s32 1, %s10
  %s13 = scalar_select 0, %s12, %s10
  $region1: #{fwd.7} parent=0
    #allocation2 [shape = 'u8[262144]{0}', space=vmem, size = 0x40000, scoped, tag = 'output window, operand 0, single buffered']
    #allocation3 [shape = 's32[1]{0}', space=sflag, size = 0x4, scoped, tag = 'scoped memory for fwd.7']
    %14 = vsyncpa [#allocation3], 0
    // Predicated region
    $region2: #{fwd.7} parent=1 // pred_check
      _
    $region3: #{fwd.7} parent=1 // pred_check_branch
      %16 = sbr.rel (0) target = $region5
    $region4: #{fwd.7} parent=1 // pred_region
      _
    $region5: #{fwd.7} parent=1 // pred_fallthru
      _
    // Predicated region
    $region6: #{fwd.7} parent=1 // pred_check
      _
    $region7: #{fwd.7} parent=1 // pred_check_branch
      %18 = sbr.rel (0) target = $region9
    $region8: #{fwd.7} parent=1 // pred_region
      _
    $region9: #{fwd.7} parent=1 // pred_fallthru
      _
    // Predicated region
    $region10: #{fwd.7} parent=1 // pred_check
      _
    $region11: #{fwd.7} parent=1 // pred_check_branch
      %20 = sbr.rel (0) target = $region13
    $region12: #{fwd.7} parent=1 // pred_region
      _
    $region13: #{fwd.7} parent=1 // pred_fallthru
      _
    // Predicated region
    $region14: #{fwd.7} parent=1 // pred_check
      _
    $region15: #{fwd.7} parent=1 // pred_check_branch
      %22 = sbr.rel (0) target = $region17
    $region16: #{fwd.7} parent=1 // pred_region
      _
    $region17: #{fwd.7} parent=1 // pred_fallthru
      _
    // Predicated region
    $region18: #{fwd.7} parent=1 // pred_check
      _
    $region19: #{fwd.7} parent=1 // pred_check_branch
      %24 = sbr.rel (0) target = $region21
    $region20: #{fwd.7} parent=1 // pred_region
      _
    $region21: #{fwd.7} parent=1 // pred_fallthru
      _
    // Predicated region
    $region22: #{fwd.7} parent=1 // pred_check
      _
    $region23: #{fwd.7} parent=1 // pred_check_branch
      %26 = sbr.rel (0) target = $region25
    $region24: #{fwd.7} parent=1 // pred_region
      _
    $region25: #{fwd.7} parent=1 // pred_fallthru
      _
    // Predicated region
    $region26: #{fwd.7} parent=1 // pred_check
      _
    $region27: #{fwd.7} parent=1 // pred_check_branch
      %28 = sbr.rel (0) target = $region29
    $region28: #{fwd.7} parent=1 // pred_region
      _
    $region29: #{fwd.7} parent=1 // pred_fallthru
      _
    // Predicated region
    $region30: #{fwd.7} parent=1 // pred_check
      _
    $region31: #{fwd.7} parent=1 // pred_check_branch
      %30 = sbr.rel (0) target = $region33
    $region32: #{fwd.7} parent=1 // pred_region
      _
    $region33: #{fwd.7} parent=1 // pred_fallthru
      _
    // Predicated region
    $region34: #{fwd.7} parent=1 // pred_check
      _
    $region35: #{fwd.7} parent=1 // pred_check_branch
      %32 = sbr.rel (0) target = $region37
    $region36: #{fwd.7} parent=1 // pred_region
      _
    $region37: #{fwd.7} parent=1 // pred_fallthru
      _
    %v33 = vld [vmem:[%s0] sm:$0xff]
    %v34 = vld [vmem:[%s0 + $0x8] sm:$0xff]
    %v35 = vld [vmem:[%s0 + $0x10] sm:$0xff]
    %v36 = vld [vmem:[%s0 + $0x18] sm:$0xff]
    %v37 = vld [vmem:[%s0 + $0x20] sm:$0xff]
    %v38 = vld [vmem:[%s0 + $0x28] sm:$0xff]
    %v39 = vld [vmem:[%s0 + $0x30] sm:$0xff]
    %v40 = vld [vmem:[%s0 + $0x38] sm:$0xff]
    %v41 = vld [vmem:[%s0 + $0x40] sm:$0xff]
    %v42 = vld [vmem:[%s0 + $0x48] sm:$0xff]
    %v43 = vld [vmem:[%s0 + $0x50] sm:$0xff]
    %v44 = vld [vmem:[%s0 + $0x58] sm:$0xff]
    %v45 = vld [vmem:[%s0 + $0x60] sm:$0xff]
    %v46 = vld [vmem:[%s0 + $0x68] sm:$0xff]
    %v47 = vld [vmem:[%s0 + $0x70] sm:$0xff]
    %v48 = vld [vmem:[%s0 + $0x78] sm:$0xff]
    %v49 = vld [vmem:[%s0 + $0x80] sm:$0xff]
    %v50 = vld [vmem:[%s0 + $0x88] sm:$0xff]
    %v51 = vld [vmem:[%s0 + $0x90] sm:$0xff]
    %v52 = vld [vmem:[%s0 + $0x98] sm:$0xff]
    %v53 = vld [vmem:[%s0 + $0xa0] sm:$0xff]
    %v54 = vld [vmem:[%s0 + $0xa8] sm:$0xff]
    %v55 = vld [vmem:[%s0 + $0xb0] sm:$0xff]
    %v56 = vld [vmem:[%s0 + $0xb8] sm:$0xff]
    %v57 = vld [vmem:[%s0 + $0xc0] sm:$0xff]
    %v58 = vld [vmem:[%s0 + $0xc8] sm:$0xff]
    %v59 = vld [vmem:[%s0 + $0xd0] sm:$0xff]
    %v60 = vld [vmem:[%s0 + $0xd8] sm:$0xff]
    %v61 = vld [vmem:[%s0 + $0xe0] sm:$0xff]
    %v62 = vld [vmem:[%s0 + $0xe8] sm:$0xff]
    %v63 = vld [vmem:[%s0 + $0xf0] sm:$0xff]
    %v64 = vld [vmem:[%s0 + $0xf8] sm:$0xff]
    %v65 = vld [vmem:[%s0 + $0x100] sm:$0xff]
    %v66 = vld [vmem:[%s0 + $0x108] sm:$0xff]
    %v67 = vld [vmem:[%s0 + $0x110] sm:$0xff]
    %v68 = vld [vmem:[%s0 + $0x118] sm:$0xff]
    %v69 = vld [vmem:[%s0 + $0x120] sm:$0xff]
    %v70 = vld [vmem:[%s0 + $0x128] sm:$0xff]
    %v71 = vld [vmem:[%s0 + $0x130] sm:$0xff]
    %v72 = vld [vmem:[%s0 + $0x138] sm:$0xff]
    %v73 = vld [vmem:[%s0 + $0x140] sm:$0xff]
    %v74 = vld [vmem:[%s0 + $0x148] sm:$0xff]
    %v75 = vld [vmem:[%s0 + $0x150] sm:$0xff]
    %v76 = vld [vmem:[%s0 + $0x158] sm:$0xff]
    %v77 = vld [vmem:[%s0 + $0x160] sm:$0xff]
    %v78 = vld [vmem:[%s0 + $0x168] sm:$0xff]
    %v79 = vld [vmem:[%s0 + $0x170] sm:$0xff]
    %v80 = vld [vmem:[%s0 + $0x178] sm:$0xff]
    %v81 = vld [vmem:[%s0 + $0x180] sm:$0xff]
    %v82 = vld [vmem:[%s0 + $0x188] sm:$0xff]
    %v83 = vld [vmem:[%s0 + $0x190] sm:$0xff]
    %v84 = vld [vmem:[%s0 + $0x198] sm:$0xff]
    %v85 = vld [vmem:[%s0 + $0x1a0] sm:$0xff]
    %v86 = vld [vmem:[%s0 + $0x1a8] sm:$0xff]
    %v87 = vld [vmem:[%s0 + $0x1b0] sm:$0xff]
    %v88 = vld [vmem:[%s0 + $0x1b8] sm:$0xff]
    %v89 = vld [vmem:[%s0 + $0x1c0] sm:$0xff]
    %v90 = vld [vmem:[%s0 + $0x1c8] sm:$0xff]
    %v91 = vld [vmem:[%s0 + $0x1d0] sm:$0xff]
    %v92 = vld [vmem:[%s0 + $0x1d8] sm:$0xff]
    %v93 = vld [vmem:[%s0 + $0x1e0] sm:$0xff]
    %v94 = vld [vmem:[%s0 + $0x1e8] sm:$0xff]
    %v95 = vld [vmem:[%s0 + $0x1f0] sm:$0xff]
    %v96 = vld [vmem:[%s0 + $0x1f8] sm:$0xff]
    %v97 = vld [vmem:[%s2] sm:$0xf]
    %v98 = vld [vmem:[%s3] sm:$0x1]
    %v100 = vperm.slane %v98, 0
    %vm102 = vcmask 31744
    %v104 = vsel %vm102, %v33, 0
    %v107 = vsel %vm102, %v34, 0
    %v110 = vsel %vm102, %v35, 0
    %v113 = vsel %vm102, %v36, 0
    %v116 = vsel %vm102, %v37, 0
    %v119 = vsel %vm102, %v38, 0
    %v122 = vsel %vm102, %v39, 0
    %v125 = vsel %vm102, %v40, 0
    %v128 = vsel %vm102, %v41, 0
    %v131 = vsel %vm102, %v42, 0
    %v134 = vsel %vm102, %v43, 0
    %v137 = vsel %vm102, %v44, 0
    %v140 = vsel %vm102, %v45, 0
    %v143 = vsel %vm102, %v46, 0
    %v146 = vsel %vm102, %v47, 0
    %v149 = vsel %vm102, %v48, 0
    %v152 = vsel %vm102, %v49, 0
    %v155 = vsel %vm102, %v50, 0
    %v158 = vsel %vm102, %v51, 0
    %v161 = vsel %vm102, %v52, 0
    %v164 = vsel %vm102, %v53, 0
    %v167 = vsel %vm102, %v54, 0
    %v170 = vsel %vm102, %v55, 0
    %v173 = vsel %vm102, %v56, 0
    %v176 = vsel %vm102, %v57, 0
    %v179 = vsel %vm102, %v58, 0
    %v182 = vsel %vm102, %v59, 0
    %v185 = vsel %vm102, %v60, 0
    %v188 = vsel %vm102, %v61, 0
    %v191 = vsel %vm102, %v62, 0
    %v194 = vsel %vm102, %v63, 0
    %v197 = vsel %vm102, %v64, 0
    %v200 = vsel %vm102, %v65, 0
    %v203 = vsel %vm102, %v66, 0
    %v206 = vsel %vm102, %v67, 0
    %v209 = vsel %vm102, %v68, 0
    %v212 = vsel %vm102, %v69, 0
    %v215 = vsel %vm102, %v70, 0
    %v218 = vsel %vm102, %v71, 0
    %v221 = vsel %vm102, %v72, 0
    %v224 = vsel %vm102, %v73, 0
    %v227 = vsel %vm102, %v74, 0
    %v230 = vsel %vm102, %v75, 0
    %v233 = vsel %vm102, %v76, 0
    %v236 = vsel %vm102, %v77, 0
    %v239 = vsel %vm102, %v78, 0
    %v242 = vsel %vm102, %v79, 0
    %v245 = vsel %vm102, %v80, 0
    %v248 = vsel %vm102, %v81, 0
    %v251 = vsel %vm102, %v82, 0
    %v254 = vsel %vm102, %v83, 0
    %v257 = vsel %vm102, %v84, 0
    %v260 = vsel %vm102, %v85, 0
    %v263 = vsel %vm102, %v86, 0
    %v266 = vsel %vm102, %v87, 0
    %v269 = vsel %vm102, %v88, 0
    %v272 = vsel %vm102, %v89, 0
    %v275 = vsel %vm102, %v90, 0
    %v278 = vsel %vm102, %v91, 0
    %v281 = vsel %vm102, %v92, 0
    %v284 = vsel %vm102, %v93, 0
    %v287 = vsel %vm102, %v94, 0
    %v290 = vsel %vm102, %v95, 0
    %v293 = vsel %vm102, %v96, 0
    %vm295 = vcmask 1043456
    %v297 = vsel %vm295, %v97, 0
    %299 = vmatpush.msra.mxu0 0.0
    %300 = vmatpush.msra.mxu0 0.0
    %301 = vmatpush.msra.mxu0 0.0
    %302 = vmatpush.msra.mxu0 0.0
    %303 = vmatpush.msra.mxu0 0.0
    %304 = vmatpush.msra.mxu0 0.0
    %305 = vmatpush.msra.mxu0 0.0
    %306 = vmatpush.msra.mxu0 0.0
    %307 = vmatpush.msra.mxu0 0.0
    %308 = vmatpush.msra.mxu0 0.0
    %309 = vmatpush.msra.mxu0 0.0
    %310 = vmatpush.msra.mxu0 0.0
    %311 = vmatpush.msra.mxu0 0.0
    %312 = vmatpush.msra.mxu0 0.0
    %313 = vmatpush.msra.mxu0 0.0
    %314 = vmatpush.msra.mxu0 %v297
    %315 = vmatmul.f32.gmra.mxu0 %v104
    %v316 = vpop.f32.mrf.mxu0
    %v317 = vadd.f32 %v100, %v316
    %318 = vmatmul.f32.gmra.mxu0 %v107
    %v319 = vpop.f32.mrf.mxu0
    %v320 = vadd.f32 %v100, %v319
    %321 = vmatmul.f32.gmra.mxu0 %v110
    %v322 = vpop.f32.mrf.mxu0
    %v323 = vadd.f32 %v100, %v322
    %324 = vmatmul.f32.gmra.mxu0 %v113
    %v325 = vpop.f32.mrf.mxu0
    %v326 = vadd.f32 %v100, %v325
    %327 = vmatmul.f32.gmra.mxu0 %v116
    %v328 = vpop.f32.mrf.mxu0
    %v329 = vadd.f32 %v100, %v328
    %330 = vmatmul.f32.gmra.mxu0 %v119
    %v331 = vpop.f32.mrf.mxu0
    %v332 = vadd.f32 %v100, %v331
    %333 = vmatmul.f32.gmra.mxu0 %v122
    %v334 = vpop.f32.mrf.mxu0
    %v335 = vadd.f32 %v100, %v334
    %336 = vmatmul.f32.gmra.mxu0 %v125
    %v337 = vpop.f32.mrf.mxu0
    %v338 = vadd.f32 %v100, %v337
    %339 = vmatmul.f32.gmra.mxu0 %v128
    %v340 = vpop.f32.mrf.mxu0
    %v341 = vadd.f32 %v100, %v340
    %342 = vmatmul.f32.gmra.mxu0 %v131
    %v343 = vpop.f32.mrf.mxu0
    %v344 = vadd.f32 %v100, %v343
    %345 = vmatmul.f32.gmra.mxu0 %v134
    %v346 = vpop.f32.mrf.mxu0
    %v347 = vadd.f32 %v100, %v346
    %348 = vmatmul.f32.gmra.mxu0 %v137
    %v349 = vpop.f32.mrf.mxu0
    %v350 = vadd.f32 %v100, %v349
    %351 = vmatmul.f32.gmra.mxu0 %v140
    %v352 = vpop.f32.mrf.mxu0
    %v353 = vadd.f32 %v100, %v352
    %354 = vmatmul.f32.gmra.mxu0 %v143
    %v355 = vpop.f32.mrf.mxu0
    %v356 = vadd.f32 %v100, %v355
    %357 = vmatmul.f32.gmra.mxu0 %v146
    %v358 = vpop.f32.mrf.mxu0
    %v359 = vadd.f32 %v100, %v358
    %360 = vmatmul.f32.gmra.mxu0 %v149
    %v361 = vpop.f32.mrf.mxu0
    %v362 = vadd.f32 %v100, %v361
    %363 = vmatmul.f32.gmra.mxu0 %v152
    %v364 = vpop.f32.mrf.mxu0
    %v365 = vadd.f32 %v100, %v364
    %366 = vmatmul.f32.gmra.mxu0 %v155
    %v367 = vpop.f32.mrf.mxu0
    %v368 = vadd.f32 %v100, %v367
    %369 = vmatmul.f32.gmra.mxu0 %v158
    %v370 = vpop.f32.mrf.mxu0
    %v371 = vadd.f32 %v100, %v370
    %372 = vmatmul.f32.gmra.mxu0 %v161
    %v373 = vpop.f32.mrf.mxu0
    %v374 = vadd.f32 %v100, %v373
    %375 = vmatmul.f32.gmra.mxu0 %v164
    %v376 = vpop.f32.mrf.mxu0
    %v377 = vadd.f32 %v100, %v376
    %378 = vmatmul.f32.gmra.mxu0 %v167
    %v379 = vpop.f32.mrf.mxu0
    %v380 = vadd.f32 %v100, %v379
    %381 = vmatmul.f32.gmra.mxu0 %v170
    %v382 = vpop.f32.mrf.mxu0
    %v383 = vadd.f32 %v100, %v382
    %384 = vmatmul.f32.gmra.mxu0 %v173
    %v385 = vpop.f32.mrf.mxu0
    %v386 = vadd.f32 %v100, %v385
    %387 = vmatmul.f32.gmra.mxu0 %v176
    %v388 = vpop.f32.mrf.mxu0
    %v389 = vadd.f32 %v100, %v388
    %390 = vmatmul.f32.gmra.mxu0 %v179
    %v391 = vpop.f32.mrf.mxu0
    %v392 = vadd.f32 %v100, %v391
    %393 = vmatmul.f32.gmra.mxu0 %v182
    %v394 = vpop.f32.mrf.mxu0
    %v395 = vadd.f32 %v100, %v394
    %396 = vmatmul.f32.gmra.mxu0 %v185
    %v397 = vpop.f32.mrf.mxu0
    %v398 = vadd.f32 %v100, %v397
    %399 = vmatmul.f32.gmra.mxu0 %v188
    %v400 = vpop.f32.mrf.mxu0
    %v401 = vadd.f32 %v100, %v400
    %402 = vmatmul.f32.gmra.mxu0 %v191
    %v403 = vpop.f32.mrf.mxu0
    %v404 = vadd.f32 %v100, %v403
    %405 = vmatmul.f32.gmra.mxu0 %v194
    %v406 = vpop.f32.mrf.mxu0
    %v407 = vadd.f32 %v100, %v406
    %408 = vmatmul.f32.gmra.mxu0 %v197
    %v409 = vpop.f32.mrf.mxu0
    %v410 = vadd.f32 %v100, %v409
    %411 = vmatmul.f32.gmra.mxu0 %v200
    %v412 = vpop.f32.mrf.mxu0
    %v413 = vadd.f32 %v100, %v412
    %414 = vmatmul.f32.gmra.mxu0 %v203
    %v415 = vpop.f32.mrf.mxu0
    %v416 = vadd.f32 %v100, %v415
    %417 = vmatmul.f32.gmra.mxu0 %v206
    %v418 = vpop.f32.mrf.mxu0
    %v419 = vadd.f32 %v100, %v418
    %420 = vmatmul.f32.gmra.mxu0 %v209
    %v421 = vpop.f32.mrf.mxu0
    %v422 = vadd.f32 %v100, %v421
    %423 = vmatmul.f32.gmra.mxu0 %v212
    %v424 = vpop.f32.mrf.mxu0
    %v425 = vadd.f32 %v100, %v424
    %426 = vmatmul.f32.gmra.mxu0 %v215
    %v427 = vpop.f32.mrf.mxu0
    %v428 = vadd.f32 %v100, %v427
    %429 = vmatmul.f32.gmra.mxu0 %v218
    %v430 = vpop.f32.mrf.mxu0
    %v431 = vadd.f32 %v100, %v430
    %432 = vmatmul.f32.gmra.mxu0 %v221
    %v433 = vpop.f32.mrf.mxu0
    %v434 = vadd.f32 %v100, %v433
    %435 = vmatmul.f32.gmra.mxu0 %v224
    %v436 = vpop.f32.mrf.mxu0
    %v437 = vadd.f32 %v100, %v436
    %438 = vmatmul.f32.gmra.mxu0 %v227
    %v439 = vpop.f32.mrf.mxu0
    %v440 = vadd.f32 %v100, %v439
    %441 = vmatmul.f32.gmra.mxu0 %v230
    %v442 = vpop.f32.mrf.mxu0
    %v443 = vadd.f32 %v100, %v442
    %444 = vmatmul.f32.gmra.mxu0 %v233
    %v445 = vpop.f32.mrf.mxu0
    %v446 = vadd.f32 %v100, %v445
    %447 = vmatmul.f32.gmra.mxu0 %v236
    %v448 = vpop.f32.mrf.mxu0
    %v449 = vadd.f32 %v100, %v448
    %450 = vmatmul.f32.gmra.mxu0 %v239
    %v451 = vpop.f32.mrf.mxu0
    %v452 = vadd.f32 %v100, %v451
    %453 = vmatmul.f32.gmra.mxu0 %v242
    %v454 = vpop.f32.mrf.mxu0
    %v455 = vadd.f32 %v100, %v454
    %456 = vmatmul.f32.gmra.mxu0 %v245
    %v457 = vpop.f32.mrf.mxu0
    %v458 = vadd.f32 %v100, %v457
    %459 = vmatmul.f32.gmra.mxu0 %v248
    %v460 = vpop.f32.mrf.mxu0
    %v461 = vadd.f32 %v100, %v460
    %462 = vmatmul.f32.gmra.mxu0 %v251
    %v463 = vpop.f32.mrf.mxu0
    %v464 = vadd.f32 %v100, %v463
    %465 = vmatmul.f32.gmra.mxu0 %v254
    %v466 = vpop.f32.mrf.mxu0
    %v467 = vadd.f32 %v100, %v466
    %468 = vmatmul.f32.gmra.mxu0 %v257
    %v469 = vpop.f32.mrf.mxu0
    %v470 = vadd.f32 %v100, %v469
    %471 = vmatmul.f32.gmra.mxu0 %v260
    %v472 = vpop.f32.mrf.mxu0
    %v473 = vadd.f32 %v100, %v472
    %474 = vmatmul.f32.gmra.mxu0 %v263
    %v475 = vpop.f32.mrf.mxu0
    %v476 = vadd.f32 %v100, %v475
    %477 = vmatmul.f32.gmra.mxu0 %v266
    %v478 = vpop.f32.mrf.mxu0
    %v479 = vadd.f32 %v100, %v478
    %480 = vmatmul.f32.gmra.mxu0 %v269
    %v481 = vpop.f32.mrf.mxu0
    %v482 = vadd.f32 %v100, %v481
    %483 = vmatmul.f32.gmra.mxu0 %v272
    %v484 = vpop.f32.mrf.mxu0
    %v485 = vadd.f32 %v100, %v484
    %486 = vmatmul.f32.gmra.mxu0 %v275
    %v487 = vpop.f32.mrf.mxu0
    %v488 = vadd.f32 %v100, %v487
    %489 = vmatmul.f32.gmra.mxu0 %v278
    %v490 = vpop.f32.mrf.mxu0
    %v491 = vadd.f32 %v100, %v490
    %492 = vmatmul.f32.gmra.mxu0 %v281
    %v493 = vpop.f32.mrf.mxu0
    %v494 = vadd.f32 %v100, %v493
    %495 = vmatmul.f32.gmra.mxu0 %v284
    %v496 = vpop.f32.mrf.mxu0
    %v497 = vadd.f32 %v100, %v496
    %498 = vmatmul.f32.gmra.mxu0 %v287
    %v499 = vpop.f32.mrf.mxu0
    %v500 = vadd.f32 %v100, %v499
    %501 = vmatmul.f32.gmra.mxu0 %v290
    %v502 = vpop.f32.mrf.mxu0
    %v503 = vadd.f32 %v100, %v502
    %504 = vmatmul.f32.gmra.mxu0 %v293
    %v505 = vpop.f32.mrf.mxu0
    %v506 = vadd.f32 %v100, %v505
    %507 = vdwg.mxu0
    %v508 = vld [vmem:[%s1] sm:$0xff]
    %v509 = vld [vmem:[%s1 + $0x8] sm:$0xff]
    %v510 = vld [vmem:[%s1 + $0x10] sm:$0xff]
    %v511 = vld [vmem:[%s1 + $0x18] sm:$0xff]
    %v512 = vld [vmem:[%s1 + $0x20] sm:$0xff]
    %v513 = vld [vmem:[%s1 + $0x28] sm:$0xff]
    %v514 = vld [vmem:[%s1 + $0x30] sm:$0xff]
    %v515 = vld [vmem:[%s1 + $0x38] sm:$0xff]
    %v516 = vld [vmem:[%s1 + $0x40] sm:$0xff]
    %v517 = vld [vmem:[%s1 + $0x48] sm:$0xff]
    %v518 = vld [vmem:[%s1 + $0x50] sm:$0xff]
    %v519 = vld [vmem:[%s1 + $0x58] sm:$0xff]
    %v520 = vld [vmem:[%s1 + $0x60] sm:$0xff]
    %v521 = vld [vmem:[%s1 + $0x68] sm:$0xff]
    %v522 = vld [vmem:[%s1 + $0x70] sm:$0xff]
    %v523 = vld [vmem:[%s1 + $0x78] sm:$0xff]
    %v524 = vld [vmem:[%s1 + $0x80] sm:$0xff]
    %v525 = vld [vmem:[%s1 + $0x88] sm:$0xff]
    %v526 = vld [vmem:[%s1 + $0x90] sm:$0xff]
    %v527 = vld [vmem:[%s1 + $0x98] sm:$0xff]
    %v528 = vld [vmem:[%s1 + $0xa0] sm:$0xff]
    %v529 = vld [vmem:[%s1 + $0xa8] sm:$0xff]
    %v530 = vld [vmem:[%s1 + $0xb0] sm:$0xff]
    %v531 = vld [vmem:[%s1 + $0xb8] sm:$0xff]
    %v532 = vld [vmem:[%s1 + $0xc0] sm:$0xff]
    %v533 = vld [vmem:[%s1 + $0xc8] sm:$0xff]
    %v534 = vld [vmem:[%s1 + $0xd0] sm:$0xff]
    %v535 = vld [vmem:[%s1 + $0xd8] sm:$0xff]
    %v536 = vld [vmem:[%s1 + $0xe0] sm:$0xff]
    %v537 = vld [vmem:[%s1 + $0xe8] sm:$0xff]
    %v538 = vld [vmem:[%s1 + $0xf0] sm:$0xff]
    %v539 = vld [vmem:[%s1 + $0xf8] sm:$0xff]
    %v540 = vld [vmem:[%s1 + $0x100] sm:$0xff]
    %v541 = vld [vmem:[%s1 + $0x108] sm:$0xff]
    %v542 = vld [vmem:[%s1 + $0x110] sm:$0xff]
    %v543 = vld [vmem:[%s1 + $0x118] sm:$0xff]
    %v544 = vld [vmem:[%s1 + $0x120] sm:$0xff]
    %v545 = vld [vmem:[%s1 + $0x128] sm:$0xff]
    %v546 = vld [vmem:[%s1 + $0x130] sm:$0xff]
    %v547 = vld [vmem:[%s1 + $0x138] sm:$0xff]
    %v548 = vld [vmem:[%s1 + $0x140] sm:$0xff]
    %v549 = vld [vmem:[%s1 + $0x148] sm:$0xff]
    %v550 = vld [vmem:[%s1 + $0x150] sm:$0xff]
    %v551 = vld [vmem:[%s1 + $0x158] sm:$0xff]
    %v552 = vld [vmem:[%s1 + $0x160] sm:$0xff]
    %v553 = vld [vmem:[%s1 + $0x168] sm:$0xff]
    %v554 = vld [vmem:[%s1 + $0x170] sm:$0xff]
    %v555 = vld [vmem:[%s1 + $0x178] sm:$0xff]
    %v556 = vld [vmem:[%s1 + $0x180] sm:$0xff]
    %v557 = vld [vmem:[%s1 + $0x188] sm:$0xff]
    %v558 = vld [vmem:[%s1 + $0x190] sm:$0xff]
    %v559 = vld [vmem:[%s1 + $0x198] sm:$0xff]
    %v560 = vld [vmem:[%s1 + $0x1a0] sm:$0xff]
    %v561 = vld [vmem:[%s1 + $0x1a8] sm:$0xff]
    %v562 = vld [vmem:[%s1 + $0x1b0] sm:$0xff]
    %v563 = vld [vmem:[%s1 + $0x1b8] sm:$0xff]
    %v564 = vld [vmem:[%s1 + $0x1c0] sm:$0xff]
    %v565 = vld [vmem:[%s1 + $0x1c8] sm:$0xff]
    %v566 = vld [vmem:[%s1 + $0x1d0] sm:$0xff]
    %v567 = vld [vmem:[%s1 + $0x1d8] sm:$0xff]
    %v568 = vld [vmem:[%s1 + $0x1e0] sm:$0xff]
    %v569 = vld [vmem:[%s1 + $0x1e8] sm:$0xff]
    %v570 = vld [vmem:[%s1 + $0x1f0] sm:$0xff]
    %v571 = vld [vmem:[%s1 + $0x1f8] sm:$0xff]
    %v572 = vld [vmem:[%s4] sm:$0xff]
    %v573 = vld [vmem:[%s4 + $0x8] sm:$0xff]
    %v574 = vld [vmem:[%s5] sm:$0xff]
    %v575 = vld [vmem:[%s5 + $0x8] sm:$0xff]
    %vm576 = vcmask 130048
    %v578 = vsel %vm576, %v317, 0
    %v581 = vsel %vm576, %v320, 0
    %v584 = vsel %vm576, %v323, 0
    %v587 = vsel %vm576, %v326, 0
    %v590 = vsel %vm576, %v329, 0
    %v593 = vsel %vm576, %v332, 0
    %v596 = vsel %vm576, %v335, 0
    %v599 = vsel %vm576, %v338, 0
    %v602 = vsel %vm576, %v341, 0
    %v605 = vsel %vm576, %v344, 0
    %v608 = vsel %vm576, %v347, 0
    %v611 = vsel %vm576, %v350, 0
    %v614 = vsel %vm576, %v353, 0
    %v617 = vsel %vm576, %v356, 0
    %v620 = vsel %vm576, %v359, 0
    %v623 = vsel %vm576, %v362, 0
    %v626 = vsel %vm576, %v365, 0
    %v629 = vsel %vm576, %v368, 0
    %v632 = vsel %vm576, %v371, 0
    %v635 = vsel %vm576, %v374, 0
    %v638 = vsel %vm576, %v377, 0
    %v641 = vsel %vm576, %v380, 0
    %v644 = vsel %vm576, %v383, 0
    %v647 = vsel %vm576, %v386, 0
    %v650 = vsel %vm576, %v389, 0
    %v653 = vsel %vm576, %v392, 0
    %v656 = vsel %vm576, %v395, 0
    %v659 = vsel %vm576, %v398, 0
    %v662 = vsel %vm576, %v401, 0
    %v665 = vsel %vm576, %v404, 0
    %v668 = vsel %vm576, %v407, 0
    %v671 = vsel %vm576, %v410, 0
    %v674 = vsel %vm576, %v413, 0
    %v677 = vsel %vm576, %v416, 0
    %v680 = vsel %vm576, %v419, 0
    %v683 = vsel %vm576, %v422, 0
    %v686 = vsel %vm576, %v425, 0
    %v689 = vsel %vm576, %v428, 0
    %v692 = vsel %vm576, %v431, 0
    %v695 = vsel %vm576, %v434, 0
    %v698 = vsel %vm576, %v437, 0
    %v701 = vsel %vm576, %v440, 0
    %v704 = vsel %vm576, %v443, 0
    %v707 = vsel %vm576, %v446, 0
    %v710 = vsel %vm576, %v449, 0
    %v713 = vsel %vm576, %v452, 0
    %v716 = vsel %vm576, %v455, 0
    %v719 = vsel %vm576, %v458, 0
    %v722 = vsel %vm576, %v461, 0
    %v725 = vsel %vm576, %v464, 0
    %v728 = vsel %vm576, %v467, 0
    %v731 = vsel %vm576, %v470, 0
    %v734 = vsel %vm576, %v473, 0
    %v737 = vsel %vm576, %v476, 0
    %v740 = vsel %vm576, %v479, 0
    %v743 = vsel %vm576, %v482, 0
    %v746 = vsel %vm576, %v485, 0
    %v749 = vsel %vm576, %v488, 0
    %v752 = vsel %vm576, %v491, 0
    %v755 = vsel %vm576, %v494, 0
    %v758 = vsel %vm576, %v497, 0
    %v761 = vsel %vm576, %v500, 0
    %v764 = vsel %vm576, %v503, 0
    %v767 = vsel %vm576, %v506, 0
    %769 = vmatpush.msra.mxu0 0.0
    %770 = vmatpush.msra.mxu0 0.0
    %771 = vmatpush.msra.mxu0 0.0
    %772 = vmatpush.msra.mxu0 0.0
    %773 = vmatpush.msra.mxu0 0.0
    %774 = vmatpush.msra.mxu0 0.0
    %775 = vmatpush.msra.mxu0 0.0
    %776 = vmatpush.msra.mxu0 0.0
    %777 = vmatpush.msra.mxu0 0.0
    %778 = vmatpush.msra.mxu0 0.0
    %779 = vmatpush.msra.mxu0 0.0
    %780 = vmatpush.msra.mxu0 0.0
    %781 = vmatpush.msra.mxu0 0.0
    %782 = vmatpush.msra.mxu0 0.0
    %783 = vmatpush.msra.mxu0 %v575
    %784 = vmatpush.msra.mxu0 %v574
    %785 = vmatmul.f32.gmra.mxu0 %v578
    %v786 = vpop.f32.mrf.mxu0
    %v787 = vadd.f32 0.0, %v786
    %788 = vmatmul.f32.gmra.mxu0 %v581
    %v789 = vpop.f32.mrf.mxu0
    %v790 = vadd.f32 0.0, %v789
    %791 = vmatmul.f32.gmra.mxu0 %v584
    %v792 = vpop.f32.mrf.mxu0
    %v793 = vadd.f32 0.0, %v792
    %794 = vmatmul.f32.gmra.mxu0 %v587
    %v795 = vpop.f32.mrf.mxu0
    %v796 = vadd.f32 0.0, %v795
    %797 = vmatmul.f32.gmra.mxu0 %v590
    %v798 = vpop.f32.mrf.mxu0
    %v799 = vadd.f32 0.0, %v798
    %800 = vmatmul.f32.gmra.mxu0 %v593
    %v801 = vpop.f32.mrf.mxu0
    %v802 = vadd.f32 0.0, %v801
    %803 = vmatmul.f32.gmra.mxu0 %v596
    %v804 = vpop.f32.mrf.mxu0
    %v805 = vadd.f32 0.0, %v804
    %806 = vmatmul.f32.gmra.mxu0 %v599
    %v807 = vpop.f32.mrf.mxu0
    %v808 = vadd.f32 0.0, %v807
    %809 = vmatmul.f32.gmra.mxu0 %v602
    %v810 = vpop.f32.mrf.mxu0
    %v811 = vadd.f32 0.0, %v810
    %812 = vmatmul.f32.gmra.mxu0 %v605
    %v813 = vpop.f32.mrf.mxu0
    %v814 = vadd.f32 0.0, %v813
    %815 = vmatmul.f32.gmra.mxu0 %v608
    %v816 = vpop.f32.mrf.mxu0
    %v817 = vadd.f32 0.0, %v816
    %818 = vmatmul.f32.gmra.mxu0 %v611
    %v819 = vpop.f32.mrf.mxu0
    %v820 = vadd.f32 0.0, %v819
    %821 = vmatmul.f32.gmra.mxu0 %v614
    %v822 = vpop.f32.mrf.mxu0
    %v823 = vadd.f32 0.0, %v822
    %824 = vmatmul.f32.gmra.mxu0 %v617
    %v825 = vpop.f32.mrf.mxu0
    %v826 = vadd.f32 0.0, %v825
    %827 = vmatmul.f32.gmra.mxu0 %v620
    %v828 = vpop.f32.mrf.mxu0
    %v829 = vadd.f32 0.0, %v828
    %830 = vmatmul.f32.gmra.mxu0 %v623
    %v831 = vpop.f32.mrf.mxu0
    %v832 = vadd.f32 0.0, %v831
    %833 = vmatmul.f32.gmra.mxu0 %v626
    %v834 = vpop.f32.mrf.mxu0
    %v835 = vadd.f32 0.0, %v834
    %836 = vmatmul.f32.gmra.mxu0 %v629
    %v837 = vpop.f32.mrf.mxu0
    %v838 = vadd.f32 0.0, %v837
    %839 = vmatmul.f32.gmra.mxu0 %v632
    %v840 = vpop.f32.mrf.mxu0
    %v841 = vadd.f32 0.0, %v840
    %842 = vmatmul.f32.gmra.mxu0 %v635
    %v843 = vpop.f32.mrf.mxu0
    %v844 = vadd.f32 0.0, %v843
    %845 = vmatmul.f32.gmra.mxu0 %v638
    %v846 = vpop.f32.mrf.mxu0
    %v847 = vadd.f32 0.0, %v846
    %848 = vmatmul.f32.gmra.mxu0 %v641
    %v849 = vpop.f32.mrf.mxu0
    %v850 = vadd.f32 0.0, %v849
    %851 = vmatmul.f32.gmra.mxu0 %v644
    %v852 = vpop.f32.mrf.mxu0
    %v853 = vadd.f32 0.0, %v852
    %854 = vmatmul.f32.gmra.mxu0 %v647
    %v855 = vpop.f32.mrf.mxu0
    %v856 = vadd.f32 0.0, %v855
    %857 = vmatmul.f32.gmra.mxu0 %v650
    %v858 = vpop.f32.mrf.mxu0
    %v859 = vadd.f32 0.0, %v858
    %860 = vmatmul.f32.gmra.mxu0 %v653
    %v861 = vpop.f32.mrf.mxu0
    %v862 = vadd.f32 0.0, %v861
    %863 = vmatmul.f32.gmra.mxu0 %v656
    %v864 = vpop.f32.mrf.mxu0
    %v865 = vadd.f32 0.0, %v864
    %866 = vmatmul.f32.gmra.mxu0 %v659
    %v867 = vpop.f32.mrf.mxu0
    %v868 = vadd.f32 0.0, %v867
    %869 = vmatmul.f32.gmra.mxu0 %v662
    %v870 = vpop.f32.mrf.mxu0
    %v871 = vadd.f32 0.0, %v870
    %872 = vmatmul.f32.gmra.mxu0 %v665
    %v873 = vpop.f32.mrf.mxu0
    %v874 = vadd.f32 0.0, %v873
    %875 = vmatmul.f32.gmra.mxu0 %v668
    %v876 = vpop.f32.mrf.mxu0
    %v877 = vadd.f32 0.0, %v876
    %878 = vmatmul.f32.gmra.mxu0 %v671
    %v879 = vpop.f32.mrf.mxu0
    %v880 = vadd.f32 0.0, %v879
    %881 = vmatmul.f32.gmra.mxu0 %v674
    %v882 = vpop.f32.mrf.mxu0
    %v883 = vadd.f32 0.0, %v882
    %884 = vmatmul.f32.gmra.mxu0 %v677
    %v885 = vpop.f32.mrf.mxu0
    %v886 = vadd.f32 0.0, %v885
    %887 = vmatmul.f32.gmra.mxu0 %v680
    %v888 = vpop.f32.mrf.mxu0
    %v889 = vadd.f32 0.0, %v888
    %890 = vmatmul.f32.gmra.mxu0 %v683
    %v891 = vpop.f32.mrf.mxu0
    %v892 = vadd.f32 0.0, %v891
    %893 = vmatmul.f32.gmra.mxu0 %v686
    %v894 = vpop.f32.mrf.mxu0
    %v895 = vadd.f32 0.0, %v894
    %896 = vmatmul.f32.gmra.mxu0 %v689
    %v897 = vpop.f32.mrf.mxu0
    %v898 = vadd.f32 0.0, %v897
    %899 = vmatmul.f32.gmra.mxu0 %v692
    %v900 = vpop.f32.mrf.mxu0
    %v901 = vadd.f32 0.0, %v900
    %902 = vmatmul.f32.gmra.mxu0 %v695
    %v903 = vpop.f32.mrf.mxu0
    %v904 = vadd.f32 0.0, %v903
    %905 = vmatmul.f32.gmra.mxu0 %v698
    %v906 = vpop.f32.mrf.mxu0
    %v907 = vadd.f32 0.0, %v906
    %908 = vmatmul.f32.gmra.mxu0 %v701
    %v909 = vpop.f32.mrf.mxu0
    %v910 = vadd.f32 0.0, %v909
    %911 = vmatmul.f32.gmra.mxu0 %v704
    %v912 = vpop.f32.mrf.mxu0
    %v913 = vadd.f32 0.0, %v912
    %914 = vmatmul.f32.gmra.mxu0 %v707
    %v915 = vpop.f32.mrf.mxu0
    %v916 = vadd.f32 0.0, %v915
    %917 = vmatmul.f32.gmra.mxu0 %v710
    %v918 = vpop.f32.mrf.mxu0
    %v919 = vadd.f32 0.0, %v918
    %920 = vmatmul.f32.gmra.mxu0 %v713
    %v921 = vpop.f32.mrf.mxu0
    %v922 = vadd.f32 0.0, %v921
    %923 = vmatmul.f32.gmra.mxu0 %v716
    %v924 = vpop.f32.mrf.mxu0
    %v925 = vadd.f32 0.0, %v924
    %926 = vmatmul.f32.gmra.mxu0 %v719
    %v927 = vpop.f32.mrf.mxu0
    %v928 = vadd.f32 0.0, %v927
    %929 = vmatmul.f32.gmra.mxu0 %v722
    %v930 = vpop.f32.mrf.mxu0
    %v931 = vadd.f32 0.0, %v930
    %932 = vmatmul.f32.gmra.mxu0 %v725
    %v933 = vpop.f32.mrf.mxu0
    %v934 = vadd.f32 0.0, %v933
    %935 = vmatmul.f32.gmra.mxu0 %v728
    %v936 = vpop.f32.mrf.mxu0
    %v937 = vadd.f32 0.0, %v936
    %938 = vmatmul.f32.gmra.mxu0 %v731
    %v939 = vpop.f32.mrf.mxu0
    %v940 = vadd.f32 0.0, %v939
    %941 = vmatmul.f32.gmra.mxu0 %v734
    %v942 = vpop.f32.mrf.mxu0
    %v943 = vadd.f32 0.0, %v942
    %944 = vmatmul.f32.gmra.mxu0 %v737
    %v945 = vpop.f32.mrf.mxu0
    %v946 = vadd.f32 0.0, %v945
    %947 = vmatmul.f32.gmra.mxu0 %v740
    %v948 = vpop.f32.mrf.mxu0
    %v949 = vadd.f32 0.0, %v948
    %950 = vmatmul.f32.gmra.mxu0 %v743
    %v951 = vpop.f32.mrf.mxu0
    %v952 = vadd.f32 0.0, %v951
    %953 = vmatmul.f32.gmra.mxu0 %v746
    %v954 = vpop.f32.mrf.mxu0
    %v955 = vadd.f32 0.0, %v954
    %956 = vmatmul.f32.gmra.mxu0 %v749
    %v957 = vpop.f32.mrf.mxu0
    %v958 = vadd.f32 0.0, %v957
    %959 = vmatmul.f32.gmra.mxu0 %v752
    %v960 = vpop.f32.mrf.mxu0
    %v961 = vadd.f32 0.0, %v960
    %962 = vmatmul.f32.gmra.mxu0 %v755
    %v963 = vpop.f32.mrf.mxu0
    %v964 = vadd.f32 0.0, %v963
    %965 = vmatmul.f32.gmra.mxu0 %v758
    %v966 = vpop.f32.mrf.mxu0
    %v967 = vadd.f32 0.0, %v966
    %968 = vmatmul.f32.gmra.mxu0 %v761
    %v969 = vpop.f32.mrf.mxu0
    %v970 = vadd.f32 0.0, %v969
    %971 = vmatmul.f32.gmra.mxu0 %v764
    %v972 = vpop.f32.mrf.mxu0
    %v973 = vadd.f32 0.0, %v972
    %974 = vmatmul.f32.gmra.mxu0 %v767
    %v975 = vpop.f32.mrf.mxu0
    %v976 = vadd.f32 0.0, %v975
    %977 = vdwg.mxu0
    %v979 = vsel %vm576, %v508, 0
    %v982 = vsel %vm576, %v509, 0
    %v985 = vsel %vm576, %v510, 0
    %v988 = vsel %vm576, %v511, 0
    %v991 = vsel %vm576, %v512, 0
    %v994 = vsel %vm576, %v513, 0
    %v997 = vsel %vm576, %v514, 0
    %v1000 = vsel %vm576, %v515, 0
    %v1003 = vsel %vm576, %v516, 0
    %v1006 = vsel %vm576, %v517, 0
    %v1009 = vsel %vm576, %v518, 0
    %v1012 = vsel %vm576, %v519, 0
    %v1015 = vsel %vm576, %v520, 0
    %v1018 = vsel %vm576, %v521, 0
    %v1021 = vsel %vm576, %v522, 0
    %v1024 = vsel %vm576, %v523, 0
    %v1027 = vsel %vm576, %v524, 0
    %v1030 = vsel %vm576, %v525, 0
    %v1033 = vsel %vm576, %v526, 0
    %v1036 = vsel %vm576, %v527, 0
    %v1039 = vsel %vm576, %v528, 0
    %v1042 = vsel %vm576, %v529, 0
    %v1045 = vsel %vm576, %v530, 0
    %v1048 = vsel %vm576, %v531, 0
    %v1051 = vsel %vm576, %v532, 0
    %v1054 = vsel %vm576, %v533, 0
    %v1057 = vsel %vm576, %v534, 0
    %v1060 = vsel %vm576, %v535, 0
    %v1063 = vsel %vm576, %v536, 0
    %v1066 = vsel %vm576, %v537, 0
    %v1069 = vsel %vm576, %v538, 0
    %v1072 = vsel %vm576, %v539, 0
    %v1075 = vsel %vm576, %v540, 0
    %v1078 = vsel %vm576, %v541, 0
    %v1081 = vsel %vm576, %v542, 0
    %v1084 = vsel %vm576, %v543, 0
    %v1087 = vsel %vm576, %v544, 0
    %v1090 = vsel %vm576, %v545, 0
    %v1093 = vsel %vm576, %v546, 0
    %v1096 = vsel %vm576, %v547, 0
    %v1099 = vsel %vm576, %v548, 0
    %v1102 = vsel %vm576, %v549, 0
    %v1105 = vsel %vm576, %v550, 0
    %v1108 = vsel %vm576, %v551, 0
    %v1111 = vsel %vm576, %v552, 0
    %v1114 = vsel %vm576, %v553, 0
    %v1117 = vsel %vm576, %v554, 0
    %v1120 = vsel %vm576, %v555, 0
    %v1123 = vsel %vm576, %v556, 0
    %v1126 = vsel %vm576, %v557, 0
    %v1129 = vsel %vm576, %v558, 0
    %v1132 = vsel %vm576, %v559, 0
    %v1135 = vsel %vm576, %v560, 0
    %v1138 = vsel %vm576, %v561, 0
    %v1141 = vsel %vm576, %v562, 0
    %v1144 = vsel %vm576, %v563, 0
    %v1147 = vsel %vm576, %v564, 0
    %v1150 = vsel %vm576, %v565, 0
    %v1153 = vsel %vm576, %v566, 0
    %v1156 = vsel %vm576, %v567, 0
    %v1159 = vsel %vm576, %v568, 0
    %v1162 = vsel %vm576, %v569, 0
    %v1165 = vsel %vm576, %v570, 0
    %v1168 = vsel %vm576, %v571, 0
    %1170 = vmatpush.msra.mxu0 0.0
    %1171 = vmatpush.msra.mxu0 0.0
    %1172 = vmatpush.msra.mxu0 0.0
    %1173 = vmatpush.msra.mxu0 0.0
    %1174 = vmatpush.msra.mxu0 0.0
    %1175 = vmatpush.msra.mxu0 0.0
    %1176 = vmatpush.msra.mxu0 0.0
    %1177 = vmatpush.msra.mxu0 0.0
    %1178 = vmatpush.msra.mxu0 0.0
    %1179 = vmatpush.msra.mxu0 0.0
    %1180 = vmatpush.msra.mxu0 0.0
    %1181 = vmatpush.msra.mxu0 0.0
    %1182 = vmatpush.msra.mxu0 0.0
    %1183 = vmatpush.msra.mxu0 0.0
    %1184 = vmatpush.msra.mxu0 %v573
    %1185 = vmatpush.msra.mxu0 %v572
    %1186 = vmatmul.f32.gmra.mxu0 %v979
    %v1187 = vpop.f32.mrf.mxu0
    %v1188 = vadd.f32 %v787, %v1187
    %1189 = vmatmul.f32.gmra.mxu0 %v982
    %v1190 = vpop.f32.mrf.mxu0
    %v1191 = vadd.f32 %v790, %v1190
    %1192 = vmatmul.f32.gmra.mxu0 %v985
    %v1193 = vpop.f32.mrf.mxu0
    %v1194 = vadd.f32 %v793, %v1193
    %1195 = vmatmul.f32.gmra.mxu0 %v988
    %v1196 = vpop.f32.mrf.mxu0
    %v1197 = vadd.f32 %v796, %v1196
    %1198 = vmatmul.f32.gmra.mxu0 %v991
    %v1199 = vpop.f32.mrf.mxu0
    %v1200 = vadd.f32 %v799, %v1199
    %1201 = vmatmul.f32.gmra.mxu0 %v994
    %v1202 = vpop.f32.mrf.mxu0
    %v1203 = vadd.f32 %v802, %v1202
    %1204 = vmatmul.f32.gmra.mxu0 %v997
    %v1205 = vpop.f32.mrf.mxu0
    %v1206 = vadd.f32 %v805, %v1205
    %1207 = vmatmul.f32.gmra.mxu0 %v1000
    %v1208 = vpop.f32.mrf.mxu0
    %v1209 = vadd.f32 %v808, %v1208
    %1210 = vmatmul.f32.gmra.mxu0 %v1003
    %v1211 = vpop.f32.mrf.mxu0
    %v1212 = vadd.f32 %v811, %v1211
    %1213 = vmatmul.f32.gmra.mxu0 %v1006
    %v1214 = vpop.f32.mrf.mxu0
    %v1215 = vadd.f32 %v814, %v1214
    %1216 = vmatmul.f32.gmra.mxu0 %v1009
    %v1217 = vpop.f32.mrf.mxu0
    %v1218 = vadd.f32 %v817, %v1217
    %1219 = vmatmul.f32.gmra.mxu0 %v1012
    %v1220 = vpop.f32.mrf.mxu0
    %v1221 = vadd.f32 %v820, %v1220
    %1222 = vmatmul.f32.gmra.mxu0 %v1015
    %v1223 = vpop.f32.mrf.mxu0
    %v1224 = vadd.f32 %v823, %v1223
    %1225 = vmatmul.f32.gmra.mxu0 %v1018
    %v1226 = vpop.f32.mrf.mxu0
    %v1227 = vadd.f32 %v826, %v1226
    %1228 = vmatmul.f32.gmra.mxu0 %v1021
    %v1229 = vpop.f32.mrf.mxu0
    %v1230 = vadd.f32 %v829, %v1229
    %1231 = vmatmul.f32.gmra.mxu0 %v1024
    %v1232 = vpop.f32.mrf.mxu0
    %v1233 = vadd.f32 %v832, %v1232
    %1234 = vmatmul.f32.gmra.mxu0 %v1027
    %v1235 = vpop.f32.mrf.mxu0
    %v1236 = vadd.f32 %v835, %v1235
    %1237 = vmatmul.f32.gmra.mxu0 %v1030
    %v1238 = vpop.f32.mrf.mxu0
    %v1239 = vadd.f32 %v838, %v1238
    %1240 = vmatmul.f32.gmra.mxu0 %v1033
    %v1241 = vpop.f32.mrf.mxu0
    %v1242 = vadd.f32 %v841, %v1241
    %1243 = vmatmul.f32.gmra.mxu0 %v1036
    %v1244 = vpop.f32.mrf.mxu0
    %v1245 = vadd.f32 %v844, %v1244
    %1246 = vmatmul.f32.gmra.mxu0 %v1039
    %v1247 = vpop.f32.mrf.mxu0
    %v1248 = vadd.f32 %v847, %v1247
    %1249 = vmatmul.f32.gmra.mxu0 %v1042
    %v1250 = vpop.f32.mrf.mxu0
    %v1251 = vadd.f32 %v850, %v1250
    %1252 = vmatmul.f32.gmra.mxu0 %v1045
    %v1253 = vpop.f32.mrf.mxu0
    %v1254 = vadd.f32 %v853, %v1253
    %1255 = vmatmul.f32.gmra.mxu0 %v1048
    %v1256 = vpop.f32.mrf.mxu0
    %v1257 = vadd.f32 %v856, %v1256
    %1258 = vmatmul.f32.gmra.mxu0 %v1051
    %v1259 = vpop.f32.mrf.mxu0
    %v1260 = vadd.f32 %v859, %v1259
    %1261 = vmatmul.f32.gmra.mxu0 %v1054
    %v1262 = vpop.f32.mrf.mxu0
    %v1263 = vadd.f32 %v862, %v1262
    %1264 = vmatmul.f32.gmra.mxu0 %v1057
    %v1265 = vpop.f32.mrf.mxu0
    %v1266 = vadd.f32 %v865, %v1265
    %1267 = vmatmul.f32.gmra.mxu0 %v1060
    %v1268 = vpop.f32.mrf.mxu0
    %v1269 = vadd.f32 %v868, %v1268
    %1270 = vmatmul.f32.gmra.mxu0 %v1063
    %v1271 = vpop.f32.mrf.mxu0
    %v1272 = vadd.f32 %v871, %v1271
    %1273 = vmatmul.f32.gmra.mxu0 %v1066
    %v1274 = vpop.f32.mrf.mxu0
    %v1275 = vadd.f32 %v874, %v1274
    %1276 = vmatmul.f32.gmra.mxu0 %v1069
    %v1277 = vpop.f32.mrf.mxu0
    %v1278 = vadd.f32 %v877, %v1277
    %1279 = vmatmul.f32.gmra.mxu0 %v1072
    %v1280 = vpop.f32.mrf.mxu0
    %v1281 = vadd.f32 %v880, %v1280
    %1282 = vmatmul.f32.gmra.mxu0 %v1075
    %v1283 = vpop.f32.mrf.mxu0
    %v1284 = vadd.f32 %v883, %v1283
    %1285 = vmatmul.f32.gmra.mxu0 %v1078
    %v1286 = vpop.f32.mrf.mxu0
    %v1287 = vadd.f32 %v886, %v1286
    %1288 = vmatmul.f32.gmra.mxu0 %v1081
    %v1289 = vpop.f32.mrf.mxu0
    %v1290 = vadd.f32 %v889, %v1289
    %1291 = vmatmul.f32.gmra.mxu0 %v1084
    %v1292 = vpop.f32.mrf.mxu0
    %v1293 = vadd.f32 %v892, %v1292
    %1294 = vmatmul.f32.gmra.mxu0 %v1087
    %v1295 = vpop.f32.mrf.mxu0
    %v1296 = vadd.f32 %v895, %v1295
    %1297 = vmatmul.f32.gmra.mxu0 %v1090
    %v1298 = vpop.f32.mrf.mxu0
    %v1299 = vadd.f32 %v898, %v1298
    %1300 = vmatmul.f32.gmra.mxu0 %v1093
    %v1301 = vpop.f32.mrf.mxu0
    %v1302 = vadd.f32 %v901, %v1301
    %1303 = vmatmul.f32.gmra.mxu0 %v1096
    %v1304 = vpop.f32.mrf.mxu0
    %v1305 = vadd.f32 %v904, %v1304
    %1306 = vmatmul.f32.gmra.mxu0 %v1099
    %v1307 = vpop.f32.mrf.mxu0
    %v1308 = vadd.f32 %v907, %v1307
    %1309 = vmatmul.f32.gmra.mxu0 %v1102
    %v1310 = vpop.f32.mrf.mxu0
    %v1311 = vadd.f32 %v910, %v1310
    %1312 = vmatmul.f32.gmra.mxu0 %v1105
    %v1313 = vpop.f32.mrf.mxu0
    %v1314 = vadd.f32 %v913, %v1313
    %1315 = vmatmul.f32.gmra.mxu0 %v1108
    %v1316 = vpop.f32.mrf.mxu0
    %v1317 = vadd.f32 %v916, %v1316
    %1318 = vmatmul.f32.gmra.mxu0 %v1111
    %v1319 = vpop.f32.mrf.mxu0
    %v1320 = vadd.f32 %v919, %v1319
    %1321 = vmatmul.f32.gmra.mxu0 %v1114
    %v1322 = vpop.f32.mrf.mxu0
    %v1323 = vadd.f32 %v922, %v1322
    %1324 = vmatmul.f32.gmra.mxu0 %v1117
    %v1325 = vpop.f32.mrf.mxu0
    %v1326 = vadd.f32 %v925, %v1325
    %1327 = vmatmul.f32.gmra.mxu0 %v1120
    %v1328 = vpop.f32.mrf.mxu0
    %v1329 = vadd.f32 %v928, %v1328
    %1330 = vmatmul.f32.gmra.mxu0 %v1123
    %v1331 = vpop.f32.mrf.mxu0
    %v1332 = vadd.f32 %v931, %v1331
    %1333 = vmatmul.f32.gmra.mxu0 %v1126
    %v1334 = vpop.f32.mrf.mxu0
    %v1335 = vadd.f32 %v934, %v1334
    %1336 = vmatmul.f32.gmra.mxu0 %v1129
    %v1337 = vpop.f32.mrf.mxu0
    %v1338 = vadd.f32 %v937, %v1337
    %1339 = vmatmul.f32.gmra.mxu0 %v1132
    %v1340 = vpop.f32.mrf.mxu0
    %v1341 = vadd.f32 %v940, %v1340
    %1342 = vmatmul.f32.gmra.mxu0 %v1135
    %v1343 = vpop.f32.mrf.mxu0
    %v1344 = vadd.f32 %v943, %v1343
    %1345 = vmatmul.f32.gmra.mxu0 %v1138
    %v1346 = vpop.f32.mrf.mxu0
    %v1347 = vadd.f32 %v946, %v1346
    %1348 = vmatmul.f32.gmra.mxu0 %v1141
    %v1349 = vpop.f32.mrf.mxu0
    %v1350 = vadd.f32 %v949, %v1349
    %1351 = vmatmul.f32.gmra.mxu0 %v1144
    %v1352 = vpop.f32.mrf.mxu0
    %v1353 = vadd.f32 %v952, %v1352
    %1354 = vmatmul.f32.gmra.mxu0 %v1147
    %v1355 = vpop.f32.mrf.mxu0
    %v1356 = vadd.f32 %v955, %v1355
    %1357 = vmatmul.f32.gmra.mxu0 %v1150
    %v1358 = vpop.f32.mrf.mxu0
    %v1359 = vadd.f32 %v958, %v1358
    %1360 = vmatmul.f32.gmra.mxu0 %v1153
    %v1361 = vpop.f32.mrf.mxu0
    %v1362 = vadd.f32 %v961, %v1361
    %1363 = vmatmul.f32.gmra.mxu0 %v1156
    %v1364 = vpop.f32.mrf.mxu0
    %v1365 = vadd.f32 %v964, %v1364
    %1366 = vmatmul.f32.gmra.mxu0 %v1159
    %v1367 = vpop.f32.mrf.mxu0
    %v1368 = vadd.f32 %v967, %v1367
    %1369 = vmatmul.f32.gmra.mxu0 %v1162
    %v1370 = vpop.f32.mrf.mxu0
    %v1371 = vadd.f32 %v970, %v1370
    %1372 = vmatmul.f32.gmra.mxu0 %v1165
    %v1373 = vpop.f32.mrf.mxu0
    %v1374 = vadd.f32 %v973, %v1373
    %1375 = vmatmul.f32.gmra.mxu0 %v1168
    %v1376 = vpop.f32.mrf.mxu0
    %v1377 = vadd.f32 %v976, %v1376
    %1378 = vdwg.mxu0
    %v1379 = vld [vmem:[%s6] sm:$0x1]
    %v1381 = vperm.slane %v1379, 0
    %v1383 = vadd.f32 %v1188, %v1381
    %v1384 = vadd.f32 %v1191, %v1381
    %v1385 = vadd.f32 %v1194, %v1381
    %v1386 = vadd.f32 %v1197, %v1381
    %v1387 = vadd.f32 %v1200, %v1381
    %v1388 = vadd.f32 %v1203, %v1381
    %v1389 = vadd.f32 %v1206, %v1381
    %v1390 = vadd.f32 %v1209, %v1381
    %v1391 = vadd.f32 %v1212, %v1381
    %v1392 = vadd.f32 %v1215, %v1381
    %v1393 = vadd.f32 %v1218, %v1381
    %v1394 = vadd.f32 %v1221, %v1381
    %v1395 = vadd.f32 %v1224, %v1381
    %v1396 = vadd.f32 %v1227, %v1381
    %v1397 = vadd.f32 %v1230, %v1381
    %v1398 = vadd.f32 %v1233, %v1381
    %v1399 = vadd.f32 %v1236, %v1381
    %v1400 = vadd.f32 %v1239, %v1381
    %v1401 = vadd.f32 %v1242, %v1381
    %v1402 = vadd.f32 %v1245, %v1381
    %v1403 = vadd.f32 %v1248, %v1381
    %v1404 = vadd.f32 %v1251, %v1381
    %v1405 = vadd.f32 %v1254, %v1381
    %v1406 = vadd.f32 %v1257, %v1381
    %v1407 = vadd.f32 %v1260, %v1381
    %v1408 = vadd.f32 %v1263, %v1381
    %v1409 = vadd.f32 %v1266, %v1381
    %v1410 = vadd.f32 %v1269, %v1381
    %v1411 = vadd.f32 %v1272, %v1381
    %v1412 = vadd.f32 %v1275, %v1381
    %v1413 = vadd.f32 %v1278, %v1381
    %v1414 = vadd.f32 %v1281, %v1381
    %v1415 = vadd.f32 %v1284, %v1381
    %v1416 = vadd.f32 %v1287, %v1381
    %v1417 = vadd.f32 %v1290, %v1381
    %v1418 = vadd.f32 %v1293, %v1381
    %v1419 = vadd.f32 %v1296, %v1381
    %v1420 = vadd.f32 %v1299, %v1381
    %v1421 = vadd.f32 %v1302, %v1381
    %v1422 = vadd.f32 %v1305, %v1381
    %v1423 = vadd.f32 %v1308, %v1381
    %v1424 = vadd.f32 %v1311, %v1381
    %v1425 = vadd.f32 %v1314, %v1381
    %v1426 = vadd.f32 %v1317, %v1381
    %v1427 = vadd.f32 %v1320, %v1381
    %v1428 = vadd.f32 %v1323, %v1381
    %v1429 = vadd.f32 %v1326, %v1381
    %v1430 = vadd.f32 %v1329, %v1381
    %v1431 = vadd.f32 %v1332, %v1381
    %v1432 = vadd.f32 %v1335, %v1381
    %v1433 = vadd.f32 %v1338, %v1381
    %v1434 = vadd.f32 %v1341, %v1381
    %v1435 = vadd.f32 %v1344, %v1381
    %v1436 = vadd.f32 %v1347, %v1381
    %v1437 = vadd.f32 %v1350, %v1381
    %v1438 = vadd.f32 %v1353, %v1381
    %v1439 = vadd.f32 %v1356, %v1381
    %v1440 = vadd.f32 %v1359, %v1381
    %v1441 = vadd.f32 %v1362, %v1381
    %v1442 = vadd.f32 %v1365, %v1381
    %v1443 = vadd.f32 %v1368, %v1381
    %v1444 = vadd.f32 %v1371, %v1381
    %v1445 = vadd.f32 %v1374, %v1381
    %v1446 = vadd.f32 %v1377, %v1381
    %v1447 = vmul.f32 %v1383, 0.2
    %v1448 = vmul.f32 %v1384, 0.2
    %v1449 = vmul.f32 %v1385, 0.2
    %v1450 = vmul.f32 %v1386, 0.2
    %v1451 = vmul.f32 %v1387, 0.2
    %v1452 = vmul.f32 %v1388, 0.2
    %v1453 = vmul.f32 %v1389, 0.2
    %v1454 = vmul.f32 %v1390, 0.2
    %v1455 = vmul.f32 %v1391, 0.2
    %v1456 = vmul.f32 %v1392, 0.2
    %v1457 = vmul.f32 %v1393, 0.2
    %v1458 = vmul.f32 %v1394, 0.2
    %v1459 = vmul.f32 %v1395, 0.2
    %v1460 = vmul.f32 %v1396, 0.2
    %v1461 = vmul.f32 %v1397, 0.2
    %v1462 = vmul.f32 %v1398, 0.2
    %v1463 = vmul.f32 %v1399, 0.2
    %v1464 = vmul.f32 %v1400, 0.2
    %v1465 = vmul.f32 %v1401, 0.2
    %v1466 = vmul.f32 %v1402, 0.2
    %v1467 = vmul.f32 %v1403, 0.2
    %v1468 = vmul.f32 %v1404, 0.2
    %v1469 = vmul.f32 %v1405, 0.2
    %v1470 = vmul.f32 %v1406, 0.2
    %v1471 = vmul.f32 %v1407, 0.2
    %v1472 = vmul.f32 %v1408, 0.2
    %v1473 = vmul.f32 %v1409, 0.2
    %v1474 = vmul.f32 %v1410, 0.2
    %v1475 = vmul.f32 %v1411, 0.2
    %v1476 = vmul.f32 %v1412, 0.2
    %v1477 = vmul.f32 %v1413, 0.2
    %v1478 = vmul.f32 %v1414, 0.2
    %v1479 = vmul.f32 %v1415, 0.2
    %v1480 = vmul.f32 %v1416, 0.2
    %v1481 = vmul.f32 %v1417, 0.2
    %v1482 = vmul.f32 %v1418, 0.2
    %v1483 = vmul.f32 %v1419, 0.2
    %v1484 = vmul.f32 %v1420, 0.2
    %v1485 = vmul.f32 %v1421, 0.2
    %v1486 = vmul.f32 %v1422, 0.2
    %v1487 = vmul.f32 %v1423, 0.2
    %v1488 = vmul.f32 %v1424, 0.2
    %v1489 = vmul.f32 %v1425, 0.2
    %v1490 = vmul.f32 %v1426, 0.2
    %v1491 = vmul.f32 %v1427, 0.2
    %v1492 = vmul.f32 %v1428, 0.2
    %v1493 = vmul.f32 %v1429, 0.2
    %v1494 = vmul.f32 %v1430, 0.2
    %v1495 = vmul.f32 %v1431, 0.2
    %v1496 = vmul.f32 %v1432, 0.2
    %v1497 = vmul.f32 %v1433, 0.2
    %v1498 = vmul.f32 %v1434, 0.2
    %v1499 = vmul.f32 %v1435, 0.2
    %v1500 = vmul.f32 %v1436, 0.2
    %v1501 = vmul.f32 %v1437, 0.2
    %v1502 = vmul.f32 %v1438, 0.2
    %v1503 = vmul.f32 %v1439, 0.2
    %v1504 = vmul.f32 %v1440, 0.2
    %v1505 = vmul.f32 %v1441, 0.2
    %v1506 = vmul.f32 %v1442, 0.2
    %v1507 = vmul.f32 %v1443, 0.2
    %v1508 = vmul.f32 %v1444, 0.2
    %v1509 = vmul.f32 %v1445, 0.2
    %v1510 = vmul.f32 %v1446, 0.2
    %v1511 = vmax.f32 %v1383, %v1447
    %v1512 = vmax.f32 %v1384, %v1448
    %v1513 = vmax.f32 %v1385, %v1449
    %v1514 = vmax.f32 %v1386, %v1450
    %v1515 = vmax.f32 %v1387, %v1451
    %v1516 = vmax.f32 %v1388, %v1452
    %v1517 = vmax.f32 %v1389, %v1453
    %v1518 = vmax.f32 %v1390, %v1454
    %v1519 = vmax.f32 %v1391, %v1455
    %v1520 = vmax.f32 %v1392, %v1456
    %v1521 = vmax.f32 %v1393, %v1457
    %v1522 = vmax.f32 %v1394, %v1458
    %v1523 = vmax.f32 %v1395, %v1459
    %v1524 = vmax.f32 %v1396, %v1460
    %v1525 = vmax.f32 %v1397, %v1461
    %v1526 = vmax.f32 %v1398, %v1462
    %v1527 = vmax.f32 %v1399, %v1463
    %v1528 = vmax.f32 %v1400, %v1464
    %v1529 = vmax.f32 %v1401, %v1465
    %v1530 = vmax.f32 %v1402, %v1466
    %v1531 = vmax.f32 %v1403, %v1467
    %v1532 = vmax.f32 %v1404, %v1468
    %v1533 = vmax.f32 %v1405, %v1469
    %v1534 = vmax.f32 %v1406, %v1470
    %v1535 = vmax.f32 %v1407, %v1471
    %v1536 = vmax.f32 %v1408, %v1472
    %v1537 = vmax.f32 %v1409, %v1473
    %v1538 = vmax.f32 %v1410, %v1474
    %v1539 = vmax.f32 %v1411, %v1475
    %v1540 = vmax.f32 %v1412, %v1476
    %v1541 = vmax.f32 %v1413, %v1477
    %v1542 = vmax.f32 %v1414, %v1478
    %v1543 = vmax.f32 %v1415, %v1479
    %v1544 = vmax.f32 %v1416, %v1480
    %v1545 = vmax.f32 %v1417, %v1481
    %v1546 = vmax.f32 %v1418, %v1482
    %v1547 = vmax.f32 %v1419, %v1483
    %v1548 = vmax.f32 %v1420, %v1484
    %v1549 = vmax.f32 %v1421, %v1485
    %v1550 = vmax.f32 %v1422, %v1486
    %v1551 = vmax.f32 %v1423, %v1487
    %v1552 = vmax.f32 %v1424, %v1488
    %v1553 = vmax.f32 %v1425, %v1489
    %v1554 = vmax.f32 %v1426, %v1490
    %v1555 = vmax.f32 %v1427, %v1491
    %v1556 = vmax.f32 %v1428, %v1492
    %v1557 = vmax.f32 %v1429, %v1493
    %v1558 = vmax.f32 %v1430, %v1494
    %v1559 = vmax.f32 %v1431, %v1495
    %v1560 = vmax.f32 %v1432, %v1496
    %v1561 = vmax.f32 %v1433, %v1497
    %v1562 = vmax.f32 %v1434, %v1498
    %v1563 = vmax.f32 %v1435, %v1499
    %v1564 = vmax.f32 %v1436, %v1500
    %v1565 = vmax.f32 %v1437, %v1501
    %v1566 = vmax.f32 %v1438, %v1502
    %v1567 = vmax.f32 %v1439, %v1503
    %v1568 = vmax.f32 %v1440, %v1504
    %v1569 = vmax.f32 %v1441, %v1505
    %v1570 = vmax.f32 %v1442, %v1506
    %v1571 = vmax.f32 %v1443, %v1507
    %v1572 = vmax.f32 %v1444, %v1508
    %v1573 = vmax.f32 %v1445, %v1509
    %v1574 = vmax.f32 %v1446, %v1510
    %v1575 = vld [vmem:[%s7] sm:$0xff]
    %v1576 = vld [vmem:[%s7 + $0x8] sm:$0xff]
    %v1577 = vld [vmem:[%s7 + $0x10] sm:$0xff]
    %v1578 = vld [vmem:[%s7 + $0x18] sm:$0xff]
    %v1579 = vld [vmem:[%s8] sm:$0x1]
    %v1581 = vperm.slane %v1579, 0
    %vm1583 = vcmask 261120
    %v1585 = vsel %vm1583, %v1511, 0
    %v1588 = vsel %vm1583, %v1512, 0
    %v1591 = vsel %vm1583, %v1513, 0
    %v1594 = vsel %vm1583, %v1514, 0
    %v1597 = vsel %vm1583, %v1515, 0
    %v1600 = vsel %vm1583, %v1516, 0
    %v1603 = vsel %vm1583, %v1517, 0
    %v1606 = vsel %vm1583, %v1518, 0
    %v1609 = vsel %vm1583, %v1519, 0
    %v1612 = vsel %vm1583, %v1520, 0
    %v1615 = vsel %vm1583, %v1521, 0
    %v1618 = vsel %vm1583, %v1522, 0
    %v1621 = vsel %vm1583, %v1523, 0
    %v1624 = vsel %vm1583, %v1524, 0
    %v1627 = vsel %vm1583, %v1525, 0
    %v1630 = vsel %vm1583, %v1526, 0
    %v1633 = vsel %vm1583, %v1527, 0
    %v1636 = vsel %vm1583, %v1528, 0
    %v1639 = vsel %vm1583, %v1529, 0
    %v1642 = vsel %vm1583, %v1530, 0
    %v1645 = vsel %vm1583, %v1531, 0
    %v1648 = vsel %vm1583, %v1532, 0
    %v1651 = vsel %vm1583, %v1533, 0
    %v1654 = vsel %vm1583, %v1534, 0
    %v1657 = vsel %vm1583, %v1535, 0
    %v1660 = vsel %vm1583, %v1536, 0
    %v1663 = vsel %vm1583, %v1537, 0
    %v1666 = vsel %vm1583, %v1538, 0
    %v1669 = vsel %vm1583, %v1539, 0
    %v1672 = vsel %vm1583, %v1540, 0
    %v1675 = vsel %vm1583, %v1541, 0
    %v1678 = vsel %vm1583, %v1542, 0
    %v1681 = vsel %vm1583, %v1543, 0
    %v1684 = vsel %vm1583, %v1544, 0
    %v1687 = vsel %vm1583, %v1545, 0
    %v1690 = vsel %vm1583, %v1546, 0
    %v1693 = vsel %vm1583, %v1547, 0
    %v1696 = vsel %vm1583, %v1548, 0
    %v1699 = vsel %vm1583, %v1549, 0
    %v1702 = vsel %vm1583, %v1550, 0
    %v1705 = vsel %vm1583, %v1551, 0
    %v1708 = vsel %vm1583, %v1552, 0
    %v1711 = vsel %vm1583, %v1553, 0
    %v1714 = vsel %vm1583, %v1554, 0
    %v1717 = vsel %vm1583, %v1555, 0
    %v1720 = vsel %vm1583, %v1556, 0
    %v1723 = vsel %vm1583, %v1557, 0
    %v1726 = vsel %vm1583, %v1558, 0
    %v1729 = vsel %vm1583, %v1559, 0
    %v1732 = vsel %vm1583, %v1560, 0
    %v1735 = vsel %vm1583, %v1561, 0
    %v1738 = vsel %vm1583, %v1562, 0
    %v1741 = vsel %vm1583, %v1563, 0
    %v1744 = vsel %vm1583, %v1564, 0
    %v1747 = vsel %vm1583, %v1565, 0
    %v1750 = vsel %vm1583, %v1566, 0
    %v1753 = vsel %vm1583, %v1567, 0
    %v1756 = vsel %vm1583, %v1568, 0
    %v1759 = vsel %vm1583, %v1569, 0
    %v1762 = vsel %vm1583, %v1570, 0
    %v1765 = vsel %vm1583, %v1571, 0
    %v1768 = vsel %vm1583, %v1572, 0
    %v1771 = vsel %vm1583, %v1573, 0
    %v1774 = vsel %vm1583, %v1574, 0
    %1776 = vmatpush.msra.mxu0 0.0
    %1777 = vmatpush.msra.mxu0 0.0
    %1778 = vmatpush.msra.mxu0 0.0
    %1779 = vmatpush.msra.mxu0 0.0
    %1780 = vmatpush.msra.mxu0 0.0
    %1781 = vmatpush.msra.mxu0 0.0
    %1782 = vmatpush.msra.mxu0 0.0
    %1783 = vmatpush.msra.mxu0 0.0
    %1784 = vmatpush.msra.mxu0 0.0
    %1785 = vmatpush.msra.mxu0 0.0
    %1786 = vmatpush.msra.mxu0 0.0
    %1787 = vmatpush.msra.mxu0 0.0
    %1788 = vmatpush.msra.mxu0 %v1578
    %1789 = vmatpush.msra.mxu0 %v1577
    %1790 = vmatpush.msra.mxu0 %v1576
    %1791 = vmatpush.msra.mxu0 %v1575
    %1792 = vmatmul.f32.gmra.mxu0 %v1585
    %v1793 = vpop.f32.mrf.mxu0
    %v1794 = vadd.f32 %v1581, %v1793
    %1795 = vmatmul.f32.gmra.mxu0 %v1588
    %v1796 = vpop.f32.mrf.mxu0
    %v1797 = vadd.f32 %v1581, %v1796
    %1798 = vmatmul.f32.gmra.mxu0 %v1591
    %v1799 = vpop.f32.mrf.mxu0
    %v1800 = vadd.f32 %v1581, %v1799
    %1801 = vmatmul.f32.gmra.mxu0 %v1594
    %v1802 = vpop.f32.mrf.mxu0
    %v1803 = vadd.f32 %v1581, %v1802
    %1804 = vmatmul.f32.gmra.mxu0 %v1597
    %v1805 = vpop.f32.mrf.mxu0
    %v1806 = vadd.f32 %v1581, %v1805
    %1807 = vmatmul.f32.gmra.mxu0 %v1600
    %v1808 = vpop.f32.mrf.mxu0
    %v1809 = vadd.f32 %v1581, %v1808
    %1810 = vmatmul.f32.gmra.mxu0 %v1603
    %v1811 = vpop.f32.mrf.mxu0
    %v1812 = vadd.f32 %v1581, %v1811
    %1813 = vmatmul.f32.gmra.mxu0 %v1606
    %v1814 = vpop.f32.mrf.mxu0
    %v1815 = vadd.f32 %v1581, %v1814
    %1816 = vmatmul.f32.gmra.mxu0 %v1609
    %v1817 = vpop.f32.mrf.mxu0
    %v1818 = vadd.f32 %v1581, %v1817
    %1819 = vmatmul.f32.gmra.mxu0 %v1612
    %v1820 = vpop.f32.mrf.mxu0
    %v1821 = vadd.f32 %v1581, %v1820
    %1822 = vmatmul.f32.gmra.mxu0 %v1615
    %v1823 = vpop.f32.mrf.mxu0
    %v1824 = vadd.f32 %v1581, %v1823
    %1825 = vmatmul.f32.gmra.mxu0 %v1618
    %v1826 = vpop.f32.mrf.mxu0
    %v1827 = vadd.f32 %v1581, %v1826
    %1828 = vmatmul.f32.gmra.mxu0 %v1621
    %v1829 = vpop.f32.mrf.mxu0
    %v1830 = vadd.f32 %v1581, %v1829
    %1831 = vmatmul.f32.gmra.mxu0 %v1624
    %v1832 = vpop.f32.mrf.mxu0
    %v1833 = vadd.f32 %v1581, %v1832
    %1834 = vmatmul.f32.gmra.mxu0 %v1627
    %v1835 = vpop.f32.mrf.mxu0
    %v1836 = vadd.f32 %v1581, %v1835
    %1837 = vmatmul.f32.gmra.mxu0 %v1630
    %v1838 = vpop.f32.mrf.mxu0
    %v1839 = vadd.f32 %v1581, %v1838
    %1840 = vmatmul.f32.gmra.mxu0 %v1633
    %v1841 = vpop.f32.mrf.mxu0
    %v1842 = vadd.f32 %v1581, %v1841
    %1843 = vmatmul.f32.gmra.mxu0 %v1636
    %v1844 = vpop.f32.mrf.mxu0
    %v1845 = vadd.f32 %v1581, %v1844
    %1846 = vmatmul.f32.gmra.mxu0 %v1639
    %v1847 = vpop.f32.mrf.mxu0
    %v1848 = vadd.f32 %v1581, %v1847
    %1849 = vmatmul.f32.gmra.mxu0 %v1642
    %v1850 = vpop.f32.mrf.mxu0
    %v1851 = vadd.f32 %v1581, %v1850
    %1852 = vmatmul.f32.gmra.mxu0 %v1645
    %v1853 = vpop.f32.mrf.mxu0
    %v1854 = vadd.f32 %v1581, %v1853
    %1855 = vmatmul.f32.gmra.mxu0 %v1648
    %v1856 = vpop.f32.mrf.mxu0
    %v1857 = vadd.f32 %v1581, %v1856
    %1858 = vmatmul.f32.gmra.mxu0 %v1651
    %v1859 = vpop.f32.mrf.mxu0
    %v1860 = vadd.f32 %v1581, %v1859
    %1861 = vmatmul.f32.gmra.mxu0 %v1654
    %v1862 = vpop.f32.mrf.mxu0
    %v1863 = vadd.f32 %v1581, %v1862
    %1864 = vmatmul.f32.gmra.mxu0 %v1657
    %v1865 = vpop.f32.mrf.mxu0
    %v1866 = vadd.f32 %v1581, %v1865
    %1867 = vmatmul.f32.gmra.mxu0 %v1660
    %v1868 = vpop.f32.mrf.mxu0
    %v1869 = vadd.f32 %v1581, %v1868
    %1870 = vmatmul.f32.gmra.mxu0 %v1663
    %v1871 = vpop.f32.mrf.mxu0
    %v1872 = vadd.f32 %v1581, %v1871
    %1873 = vmatmul.f32.gmra.mxu0 %v1666
    %v1874 = vpop.f32.mrf.mxu0
    %v1875 = vadd.f32 %v1581, %v1874
    %1876 = vmatmul.f32.gmra.mxu0 %v1669
    %v1877 = vpop.f32.mrf.mxu0
    %v1878 = vadd.f32 %v1581, %v1877
    %1879 = vmatmul.f32.gmra.mxu0 %v1672
    %v1880 = vpop.f32.mrf.mxu0
    %v1881 = vadd.f32 %v1581, %v1880
    %1882 = vmatmul.f32.gmra.mxu0 %v1675
    %v1883 = vpop.f32.mrf.mxu0
    %v1884 = vadd.f32 %v1581, %v1883
    %1885 = vmatmul.f32.gmra.mxu0 %v1678
    %v1886 = vpop.f32.mrf.mxu0
    %v1887 = vadd.f32 %v1581, %v1886
    %1888 = vmatmul.f32.gmra.mxu0 %v1681
    %v1889 = vpop.f32.mrf.mxu0
    %v1890 = vadd.f32 %v1581, %v1889
    %1891 = vmatmul.f32.gmra.mxu0 %v1684
    %v1892 = vpop.f32.mrf.mxu0
    %v1893 = vadd.f32 %v1581, %v1892
    %1894 = vmatmul.f32.gmra.mxu0 %v1687
    %v1895 = vpop.f32.mrf.mxu0
    %v1896 = vadd.f32 %v1581, %v1895
    %1897 = vmatmul.f32.gmra.mxu0 %v1690
    %v1898 = vpop.f32.mrf.mxu0
    %v1899 = vadd.f32 %v1581, %v1898
    %1900 = vmatmul.f32.gmra.mxu0 %v1693
    %v1901 = vpop.f32.mrf.mxu0
    %v1902 = vadd.f32 %v1581, %v1901
    %1903 = vmatmul.f32.gmra.mxu0 %v1696
    %v1904 = vpop.f32.mrf.mxu0
    %v1905 = vadd.f32 %v1581, %v1904
    %1906 = vmatmul.f32.gmra.mxu0 %v1699
    %v1907 = vpop.f32.mrf.mxu0
    %v1908 = vadd.f32 %v1581, %v1907
    %1909 = vmatmul.f32.gmra.mxu0 %v1702
    %v1910 = vpop.f32.mrf.mxu0
    %v1911 = vadd.f32 %v1581, %v1910
    %1912 = vmatmul.f32.gmra.mxu0 %v1705
    %v1913 = vpop.f32.mrf.mxu0
    %v1914 = vadd.f32 %v1581, %v1913
    %1915 = vmatmul.f32.gmra.mxu0 %v1708
    %v1916 = vpop.f32.mrf.mxu0
    %v1917 = vadd.f32 %v1581, %v1916
    %1918 = vmatmul.f32.gmra.mxu0 %v1711
    %v1919 = vpop.f32.mrf.mxu0
    %v1920 = vadd.f32 %v1581, %v1919
    %1921 = vmatmul.f32.gmra.mxu0 %v1714
    %v1922 = vpop.f32.mrf.mxu0
    %v1923 = vadd.f32 %v1581, %v1922
    %1924 = vmatmul.f32.gmra.mxu0 %v1717
    %v1925 = vpop.f32.mrf.mxu0
    %v1926 = vadd.f32 %v1581, %v1925
    %1927 = vmatmul.f32.gmra.mxu0 %v1720
    %v1928 = vpop.f32.mrf.mxu0
    %v1929 = vadd.f32 %v1581, %v1928
    %1930 = vmatmul.f32.gmra.mxu0 %v1723
    %v1931 = vpop.f32.mrf.mxu0
    %v1932 = vadd.f32 %v1581, %v1931
    %1933 = vmatmul.f32.gmra.mxu0 %v1726
    %v1934 = vpop.f32.mrf.mxu0
    %v1935 = vadd.f32 %v1581, %v1934
    %1936 = vmatmul.f32.gmra.mxu0 %v1729
    %v1937 = vpop.f32.mrf.mxu0
    %v1938 = vadd.f32 %v1581, %v1937
    %1939 = vmatmul.f32.gmra.mxu0 %v1732
    %v1940 = vpop.f32.mrf.mxu0
    %v1941 = vadd.f32 %v1581, %v1940
    %1942 = vmatmul.f32.gmra.mxu0 %v1735
    %v1943 = vpop.f32.mrf.mxu0
    %v1944 = vadd.f32 %v1581, %v1943
    %1945 = vmatmul.f32.gmra.mxu0 %v1738
    %v1946 = vpop.f32.mrf.mxu0
    %v1947 = vadd.f32 %v1581, %v1946
    %1948 = vmatmul.f32.gmra.mxu0 %v1741
    %v1949 = vpop.f32.mrf.mxu0
    %v1950 = vadd.f32 %v1581, %v1949
    %1951 = vmatmul.f32.gmra.mxu0 %v1744
    %v1952 = vpop.f32.mrf.mxu0
    %v1953 = vadd.f32 %v1581, %v1952
    %1954 = vmatmul.f32.gmra.mxu0 %v1747
    %v1955 = vpop.f32.mrf.mxu0
    %v1956 = vadd.f32 %v1581, %v1955
    %1957 = vmatmul.f32.gmra.mxu0 %v1750
    %v1958 = vpop.f32.mrf.mxu0
    %v1959 = vadd.f32 %v1581, %v1958
    %1960 = vmatmul.f32.gmra.mxu0 %v1753
    %v1961 = vpop.f32.mrf.mxu0
    %v1962 = vadd.f32 %v1581, %v1961
    %1963 = vmatmul.f32.gmra.mxu0 %v1756
    %v1964 = vpop.f32.mrf.mxu0
    %v1965 = vadd.f32 %v1581, %v1964
    %1966 = vmatmul.f32.gmra.mxu0 %v1759
    %v1967 = vpop.f32.mrf.mxu0
    %v1968 = vadd.f32 %v1581, %v1967
    %1969 = vmatmul.f32.gmra.mxu0 %v1762
    %v1970 = vpop.f32.mrf.mxu0
    %v1971 = vadd.f32 %v1581, %v1970
    %1972 = vmatmul.f32.gmra.mxu0 %v1765
    %v1973 = vpop.f32.mrf.mxu0
    %v1974 = vadd.f32 %v1581, %v1973
    %1975 = vmatmul.f32.gmra.mxu0 %v1768
    %v1976 = vpop.f32.mrf.mxu0
    %v1977 = vadd.f32 %v1581, %v1976
    %1978 = vmatmul.f32.gmra.mxu0 %v1771
    %v1979 = vpop.f32.mrf.mxu0
    %v1980 = vadd.f32 %v1581, %v1979
    %1981 = vmatmul.f32.gmra.mxu0 %v1774
    %v1982 = vpop.f32.mrf.mxu0
    %v1983 = vadd.f32 %v1581, %v1982
    %1984 = vdwg.mxu0
    %vm1985 = vcmask 293888
    %1986 = vst.msk [vmem:[#allocation2] sm:$0xff] %vm1985, %v1794
    %1987 = vst.msk [vmem:[#allocation2 + $0x8] sm:$0xff] %vm1985, %v1797
    %1988 = vst.msk [vmem:[#allocation2 + $0x10] sm:$0xff] %vm1985, %v1800
    %1989 = vst.msk [vmem:[#allocation2 + $0x18] sm:$0xff] %vm1985, %v1803
    %1990 = vst.msk [vmem:[#allocation2 + $0x20] sm:$0xff] %vm1985, %v1806
    %1991 = vst.msk [vmem:[#allocation2 + $0x28] sm:$0xff] %vm1985, %v1809
    %1992 = vst.msk [vmem:[#allocation2 + $0x30] sm:$0xff] %vm1985, %v1812
    %1993 = vst.msk [vmem:[#allocation2 + $0x38] sm:$0xff] %vm1985, %v1815
    %1994 = vst.msk [vmem:[#allocation2 + $0x40] sm:$0xff] %vm1985, %v1818
    %1995 = vst.msk [vmem:[#allocation2 + $0x48] sm:$0xff] %vm1985, %v1821
    %1996 = vst.msk [vmem:[#allocation2 + $0x50] sm:$0xff] %vm1985, %v1824
    %1997 = vst.msk [vmem:[#allocation2 + $0x58] sm:$0xff] %vm1985, %v1827
    %1998 = vst.msk [vmem:[#allocation2 + $0x60] sm:$0xff] %vm1985, %v1830
    %1999 = vst.msk [vmem:[#allocation2 + $0x68] sm:$0xff] %vm1985, %v1833
    %2000 = vst.msk [vmem:[#allocation2 + $0x70] sm:$0xff] %vm1985, %v1836
    %2001 = vst.msk [vmem:[#allocation2 + $0x78] sm:$0xff] %vm1985, %v1839
    %2002 = vst.msk [vmem:[#allocation2 + $0x80] sm:$0xff] %vm1985, %v1842
    %2003 = vst.msk [vmem:[#allocation2 + $0x88] sm:$0xff] %vm1985, %v1845
    %2004 = vst.msk [vmem:[#allocation2 + $0x90] sm:$0xff] %vm1985, %v1848
    %2005 = vst.msk [vmem:[#allocation2 + $0x98] sm:$0xff] %vm1985, %v1851
    %2006 = vst.msk [vmem:[#allocation2 + $0xa0] sm:$0xff] %vm1985, %v1854
    %2007 = vst.msk [vmem:[#allocation2 + $0xa8] sm:$0xff] %vm1985, %v1857
    %2008 = vst.msk [vmem:[#allocation2 + $0xb0] sm:$0xff] %vm1985, %v1860
    %2009 = vst.msk [vmem:[#allocation2 + $0xb8] sm:$0xff] %vm1985, %v1863
    %2010 = vst.msk [vmem:[#allocation2 + $0xc0] sm:$0xff] %vm1985, %v1866
    %2011 = vst.msk [vmem:[#allocation2 + $0xc8] sm:$0xff] %vm1985, %v1869
    %2012 = vst.msk [vmem:[#allocation2 + $0xd0] sm:$0xff] %vm1985, %v1872
    %2013 = vst.msk [vmem:[#allocation2 + $0xd8] sm:$0xff] %vm1985, %v1875
    %2014 = vst.msk [vmem:[#allocation2 + $0xe0] sm:$0xff] %vm1985, %v1878
    %2015 = vst.msk [vmem:[#allocation2 + $0xe8] sm:$0xff] %vm1985, %v1881
    %2016 = vst.msk [vmem:[#allocation2 + $0xf0] sm:$0xff] %vm1985, %v1884
    %2017 = vst.msk [vmem:[#allocation2 + $0xf8] sm:$0xff] %vm1985, %v1887
    %2018 = vst.msk [vmem:[#allocation2 + $0x100] sm:$0xff] %vm1985, %v1890
    %2019 = vst.msk [vmem:[#allocation2 + $0x108] sm:$0xff] %vm1985, %v1893
    %2020 = vst.msk [vmem:[#allocation2 + $0x110] sm:$0xff] %vm1985, %v1896
    %2021 = vst.msk [vmem:[#allocation2 + $0x118] sm:$0xff] %vm1985, %v1899
    %2022 = vst.msk [vmem:[#allocation2 + $0x120] sm:$0xff] %vm1985, %v1902
    %2023 = vst.msk [vmem:[#allocation2 + $0x128] sm:$0xff] %vm1985, %v1905
    %2024 = vst.msk [vmem:[#allocation2 + $0x130] sm:$0xff] %vm1985, %v1908
    %2025 = vst.msk [vmem:[#allocation2 + $0x138] sm:$0xff] %vm1985, %v1911
    %2026 = vst.msk [vmem:[#allocation2 + $0x140] sm:$0xff] %vm1985, %v1914
    %2027 = vst.msk [vmem:[#allocation2 + $0x148] sm:$0xff] %vm1985, %v1917
    %2028 = vst.msk [vmem:[#allocation2 + $0x150] sm:$0xff] %vm1985, %v1920
    %2029 = vst.msk [vmem:[#allocation2 + $0x158] sm:$0xff] %vm1985, %v1923
    %2030 = vst.msk [vmem:[#allocation2 + $0x160] sm:$0xff] %vm1985, %v1926
    %2031 = vst.msk [vmem:[#allocation2 + $0x168] sm:$0xff] %vm1985, %v1929
    %2032 = vst.msk [vmem:[#allocation2 + $0x170] sm:$0xff] %vm1985, %v1932
    %2033 = vst.msk [vmem:[#allocation2 + $0x178] sm:$0xff] %vm1985, %v1935
    %2034 = vst.msk [vmem:[#allocation2 + $0x180] sm:$0xff] %vm1985, %v1938
    %2035 = vst.msk [vmem:[#allocation2 + $0x188] sm:$0xff] %vm1985, %v1941
    %2036 = vst.msk [vmem:[#allocation2 + $0x190] sm:$0xff] %vm1985, %v1944
    %2037 = vst.msk [vmem:[#allocation2 + $0x198] sm:$0xff] %vm1985, %v1947
    %2038 = vst.msk [vmem:[#allocation2 + $0x1a0] sm:$0xff] %vm1985, %v1950
    %2039 = vst.msk [vmem:[#allocation2 + $0x1a8] sm:$0xff] %vm1985, %v1953
    %2040 = vst.msk [vmem:[#allocation2 + $0x1b0] sm:$0xff] %vm1985, %v1956
    %2041 = vst.msk [vmem:[#allocation2 + $0x1b8] sm:$0xff] %vm1985, %v1959
    %2042 = vst.msk [vmem:[#allocation2 + $0x1c0] sm:$0xff] %vm1985, %v1962
    %2043 = vst.msk [vmem:[#allocation2 + $0x1c8] sm:$0xff] %vm1985, %v1965
    %2044 = vst.msk [vmem:[#allocation2 + $0x1d0] sm:$0xff] %vm1985, %v1968
    %2045 = vst.msk [vmem:[#allocation2 + $0x1d8] sm:$0xff] %vm1985, %v1971
    %2046 = vst.msk [vmem:[#allocation2 + $0x1e0] sm:$0xff] %vm1985, %v1974
    %2047 = vst.msk [vmem:[#allocation2 + $0x1e8] sm:$0xff] %vm1985, %v1977
    %2048 = vst.msk [vmem:[#allocation2 + $0x1f0] sm:$0xff] %vm1985, %v1980
    %2049 = vst.msk [vmem:[#allocation2 + $0x1f8] sm:$0xff] %vm1985, %v1983
    // Predicated region
    $region38: #{fwd.7} parent=1 // pred_check
      _
    $region39: #{fwd.7} parent=1 // pred_check_branch
      %2051 = sbr.rel (0) target = $region41
    $region40: #{fwd.7} parent=1 // pred_region
      %2053 = vsyncadd [#allocation3], 0
      %s2054 = sshll.u32 [#allocation2], 4
      %s2055 = int_to_ptr.vmem [resolvable:$true] %s2054
      %s2056 = sshll.u32 %s9, 4
      %s2057 = int_to_ptr.hbm [resolvable:$true] %s2056
      %2062 = dma.vmem_to_hbm [thread:$0]  %s2055, 8192, %s2057, [#allocation3], 128, 128, 8
    $region41: #{fwd.7} parent=1 // pred_fallthru
      _
    // Predicated region
    $region42: #{fwd.7} parent=1 // pred_check
      _
    $region43: #{fwd.7} parent=1 // pred_check_branch
      %2064 = sbr.rel (0) target = $region45
    $region44: #{fwd.7} parent=1 // pred_region
      %2066 = dma.done [#allocation3], 8192
    $region45: #{fwd.7} parent=1 // pred_fallthru
      _
    %2067 = vsyncpa [#allocation3], 1

</llo_original>
